<compile_context>
chip_gen: v7x
topology: tpu7x:2x2x1
jax: 0.10.0
libtpu: 0.0.40
codegen_flags: <defaults>
</compile_context>

<pallas_src>
import jax
import jax.numpy as jnp
from jax.experimental import pallas as pl
from jax.experimental.pallas import tpu as pltpu

# ---- module hyper-parameters (match DeltaNet.__init__ defaults) -------------
C_DIST = 24
C_RDIR = 72
FEAT_DIM = 128
NUM_FREQS = 4                                  # Trigonometric_kernel L=4
REL_DIST_DIM = C_DIST * (1 + 2 * NUM_FREQS)    # include_input=True -> 216
IN_DIM = REL_DIST_DIM + C_RDIR + FEAT_DIM      # 416
BACKBONE = 256
HEAD = 128
OUT_DIM = 3
OUT_PAD = 128                                  # padded head width (dot only)

DRF_DIM = C_DIST + C_RDIR + FEAT_DIM           # 224: [dist | rdir | feats]
TRIG_DIM = 2 * NUM_FREQS * C_DIST              # 192: [sin f0..3 | cos f0..3]

TN_MAX = 2048                                  # rows per grid step (max)
TN_MIN = 256


def _choose_tn(n_rows):
    """Largest tile <= TN_MAX that keeps >=2 grid steps when rows allow it
    (v7x megacore sharding) and avoids padding tiny inputs to a huge tile."""
    tn = TN_MAX
    while tn > TN_MIN and n_rows <= tn:
        tn //= 2
    return tn


# ----------------------------- Pallas kernel ---------------------------------
def deltanet_kernel(drf_ref, d_ref,
                    w_drf_ref, w_trig_ref, b0_ref,
                    w1_ref, b1_ref, w2_ref, b2_ref, w3_ref, b3_ref,
                    w4_ref, b4_ref, w5_ref, b5_ref,
                    out_ref):
    # ---- layer 0 -------------------------------------------------------
    # Identity part: [dist | rdir | feats] @ W   (K = 224, one weight tile).
    h = jnp.dot(drf_ref[...], w_drf_ref[...],
                preferred_element_type=jnp.float32)            # (TN, 256) f32

    # Positional encoding: sin/cos of dist at frequencies 1, 2, 4, 8.
    # Base band evaluated once in f32; higher bands via double-angle
    # recurrences (cheap VPU mults instead of more trig polynomials).
    d = d_ref[...]                                             # (TN, 24) f32
    s1 = jnp.sin(d)
    c1 = jnp.cos(d)
    s2 = 2.0 * s1 * c1
    c2 = 2.0 * c1 * c1 - 1.0
    s4 = 2.0 * s2 * c2
    c4 = 2.0 * c2 * c2 - 1.0
    s8 = 2.0 * s4 * c4
    c8 = 2.0 * c4 * c4 - 1.0
    trig = jnp.concatenate([s1, s2, s4, s8, c1, c2, c4, c8], axis=-1)  # (TN,192)
    h = h + jnp.dot(trig.astype(jnp.bfloat16), w_trig_ref[...],
                    preferred_element_type=jnp.float32)
    h = jnp.maximum(h + b0_ref[...], 0.0).astype(jnp.bfloat16)

    # ---- backbone + head ----------------------------------------------
    def layer(x, w_ref, b_ref, relu=True):
        y = jnp.dot(x, w_ref[...], preferred_element_type=jnp.float32)
        y = y + b_ref[...]
        if relu:
            return jnp.maximum(y, 0.0).astype(jnp.bfloat16)
        return y

    h = layer(h, w1_ref, b1_ref)
    h = layer(h, w2_ref, b2_ref)
    h = layer(h, w3_ref, b3_ref)
    h = layer(h, w4_ref, b4_ref)
    out = layer(h, w5_ref, b5_ref, relu=False)        # (TN, 128) f32, cols 3.. are junk*0
    out_ref[...] = out[:, :OUT_DIM].astype(out_ref.dtype)      # (TN, 3) store


# ------------------------------- wrapper --------------------------------------
def delta_net_forward(dist, rdir, feats, params):
    prefix = dist.shape[:-1]
    d32 = dist.reshape(-1, C_DIST).astype(jnp.float32)
    r = rdir.reshape(-1, C_RDIR).astype(jnp.float32)
    f = feats.reshape(-1, FEAT_DIM).astype(jnp.float32)

    # Single bf16 matmul operand [dist | rdir | feats]  (K = 224).
    drf = jnp.concatenate([d32, r, f], axis=-1).astype(jnp.bfloat16)   # (N, 224)

    n = drf.shape[0]
    tn = _choose_tn(n)
    n_pad = pl.cdiv(n, tn) * tn
    if n_pad != n:
        drf = jnp.pad(drf, ((0, n_pad - n), (0, 0)))
        d32 = jnp.pad(d32, ((0, n_pad - n), (0, 0)))

    (W0, b0), (W1, b1), (W2, b2), (W3, b3), (W4, b4), (W5, b5) = params

    # Re-group W0 rows to match the kernel's operand layout:
    #   rows 0:24      raw dist, rows 216:416 rdir|feats   -> w_drf  (224, 256)
    #   rows 24:216    PE, reordered to [sin f0..3 | cos f0..3] -> w_trig (192, 256)
    w_drf = jnp.concatenate([W0[:C_DIST], W0[REL_DIST_DIM:]], axis=0)
    pe = W0[C_DIST:REL_DIST_DIM].reshape(NUM_FREQS, 2, C_DIST, BACKBONE)
    w_trig = jnp.concatenate(
        [pe[:, 0].reshape(NUM_FREQS * C_DIST, BACKBONE),
         pe[:, 1].reshape(NUM_FREQS * C_DIST, BACKBONE)], axis=0)       # (192, 256)

    # Pad the 3-wide head to 128 columns for the dot (weight-tile cost is the
    # same); only the 3 real output columns are stored from the kernel.
    W5p = jnp.pad(W5, ((0, 0), (0, OUT_PAD - OUT_DIM)))
    b5p = jnp.pad(b5, ((0, 0), (0, OUT_PAD - OUT_DIM)))

    bf16 = lambda a: a.astype(jnp.bfloat16)
    weights = [bf16(w_drf), bf16(w_trig), b0,
               bf16(W1), b1, bf16(W2), b2, bf16(W3), b3,
               bf16(W4), b4, bf16(W5p), b5p]

    row_spec = lambda c: pl.BlockSpec((tn, c), lambda i: (i, 0))
    full_spec = lambda a: pl.BlockSpec(a.shape, lambda i: (0, 0))

    # v7x has 64 MiB physical VMEM per TensorCore -> keep the scoped request
    # well below it (need at large TN is ~20 MiB incl. double buffering).
    vmem_limit = (48 << 20) if tn >= 2048 else (32 << 20)

    out = pl.pallas_call(
        deltanet_kernel,
        out_shape=jax.ShapeDtypeStruct((n_pad, OUT_DIM), jnp.float32),
        grid_spec=pltpu.PrefetchScalarGridSpec(
            num_scalar_prefetch=0,
            grid=(n_pad // tn,),
            in_specs=[row_spec(DRF_DIM), row_spec(C_DIST)]
                     + [full_spec(w) for w in weights],
            out_specs=pl.BlockSpec((tn, OUT_DIM), lambda i: (i, 0)),
        ),
        compiler_params=pltpu.CompilerParams(
            dimension_semantics=("parallel",),
            vmem_limit_bytes=vmem_limit),
    )(drf, d32, *weights)

    out = out[:n]
    return out.reshape(prefix + (OUT_DIM,))


# --------------------------- parameter init -----------------------------------
def init_params(key):
    """PyTorch-style nn.Linear init: U(-1/sqrt(fan_in), 1/sqrt(fan_in))."""
    dims = [(IN_DIM, BACKBONE), (BACKBONE, BACKBONE), (BACKBONE, BACKBONE),
            (BACKBONE, BACKBONE), (BACKBONE, HEAD), (HEAD, OUT_DIM)]
    params = []
    for fi, fo in dims:
        key, kw, kb = jax.random.split(key, 3)
        bound = 1.0 / (fi ** 0.5)
        W = jax.random.uniform(kw, (fi, fo), jnp.float32, -bound, bound)
        b = jax.random.uniform(kb, (1, fo), jnp.float32, -bound, bound)
        params.append((W, b))
    return params


# ------------------------- pure-JAX reference ---------------------------------
def reference(dist, rdir, feats, params):
    prefix = dist.shape[:-1]
    d = dist.reshape(-1, C_DIST)
    r = rdir.reshape(-1, C_RDIR)
    f = feats.reshape(-1, FEAT_DIM)
    parts = [d]
    for i in range(NUM_FREQS):
        parts.append(jnp.sin(d * (2.0 ** i)))
        parts.append(jnp.cos(d * (2.0 ** i)))
    x = jnp.concatenate(parts + [r, f], axis=-1)
    for li, (W, b) in enumerate(params):
        x = x @ W + b
        if li < len(params) - 1:
            x = jnp.maximum(x, 0.0)
    return x.reshape(prefix + (OUT_DIM,))


if __name__ == "__main__":
    key = jax.random.PRNGKey(0)
    kparams, kd, kr, kf = jax.random.split(key, 4)
    params = init_params(kparams)

    # bins-mode inputs: [B, L, C]  (forward flattens to [B*L, C] internally)
    B, L = 2, 8
    dist = jax.random.normal(kd, (B, L, C_DIST), jnp.float32)
    rdir = jax.random.normal(kr, (B, L, C_RDIR), jnp.float32)
    feats = jax.random.normal(kf, (B, L, FEAT_DIM), jnp.float32)

    fwd = jax.jit(delta_net_forward)
    out = jax.block_until_ready(fwd(dist, rdir, feats, params))

    ref = reference(dist, rdir, feats, params)
    assert out.shape == (B, L, OUT_DIM), out.shape
    err = float(jnp.max(jnp.abs(out - ref)))
    assert err < 5e-2, f"max abs error too large: {err}"
    print("KERNEL_OK")
</pallas_src>

<mosaic_0001>
module attributes {stable_mosaic.version = 11 : i64} {
  func.func @deltanet_kernel(%arg0: i32, %arg1: memref<256x224xbf16, #tpu.memory_space<vmem>>, %arg2: memref<256x24xf32, #tpu.memory_space<vmem>>, %arg3: memref<224x256xbf16, #tpu.memory_space<vmem>>, %arg4: memref<192x256xbf16, #tpu.memory_space<vmem>>, %arg5: memref<1x256xf32, #tpu.memory_space<vmem>>, %arg6: memref<256x256xbf16, #tpu.memory_space<vmem>>, %arg7: memref<1x256xf32, #tpu.memory_space<vmem>>, %arg8: memref<256x256xbf16, #tpu.memory_space<vmem>>, %arg9: memref<1x256xf32, #tpu.memory_space<vmem>>, %arg10: memref<256x256xbf16, #tpu.memory_space<vmem>>, %arg11: memref<1x256xf32, #tpu.memory_space<vmem>>, %arg12: memref<256x128xbf16, #tpu.memory_space<vmem>>, %arg13: memref<1x128xf32, #tpu.memory_space<vmem>>, %arg14: memref<128x128xbf16, #tpu.memory_space<vmem>>, %arg15: memref<1x128xf32, #tpu.memory_space<vmem>>, %arg16: memref<256x3xf32, #tpu.memory_space<vmem>>) attributes {dimension_semantics = [#tpu.dimension_semantics<parallel>], iteration_bounds = array<i64: 1>, scalar_prefetch = 0 : i64, scratch_operands = 0 : i64, tpu.core_type = #tpu.core_type<tc>, window_params = [{transform_indices = @transform_0, window_bounds = array<i64: 256, 224>}, {transform_indices = @transform_1, window_bounds = array<i64: 256, 24>}, {pipeline_mode = #tpu.pipeline_mode<synchronous>, transform_indices = @transform_2, window_bounds = array<i64: 224, 256>}, {pipeline_mode = #tpu.pipeline_mode<synchronous>, transform_indices = @transform_3, window_bounds = array<i64: 192, 256>}, {pipeline_mode = #tpu.pipeline_mode<synchronous>, transform_indices = @transform_4, window_bounds = array<i64: 1, 256>}, {pipeline_mode = #tpu.pipeline_mode<synchronous>, transform_indices = @transform_5, window_bounds = array<i64: 256, 256>}, {pipeline_mode = #tpu.pipeline_mode<synchronous>, transform_indices = @transform_6, window_bounds = array<i64: 1, 256>}, {pipeline_mode = #tpu.pipeline_mode<synchronous>, transform_indices = @transform_7, window_bounds = array<i64: 256, 256>}, {pipeline_mode = #tpu.pipeline_mode<synchronous>, transform_indices = @transform_8, window_bounds = array<i64: 1, 256>}, {pipeline_mode = #tpu.pipeline_mode<synchronous>, transform_indices = @transform_9, window_bounds = array<i64: 256, 256>}, {pipeline_mode = #tpu.pipeline_mode<synchronous>, transform_indices = @transform_10, window_bounds = array<i64: 1, 256>}, {pipeline_mode = #tpu.pipeline_mode<synchronous>, transform_indices = @transform_11, window_bounds = array<i64: 256, 128>}, {pipeline_mode = #tpu.pipeline_mode<synchronous>, transform_indices = @transform_12, window_bounds = array<i64: 1, 128>}, {pipeline_mode = #tpu.pipeline_mode<synchronous>, transform_indices = @transform_13, window_bounds = array<i64: 128, 128>}, {pipeline_mode = #tpu.pipeline_mode<synchronous>, transform_indices = @transform_14, window_bounds = array<i64: 1, 128>}, {transform_indices = @transform_15, window_bounds = array<i64: 256, 3>}]} {
    %c0 = arith.constant 0 : index
    %c0_0 = arith.constant 0 : index
    %0 = vector.load %arg1[%c0, %c0_0] : memref<256x224xbf16, #tpu.memory_space<vmem>>, vector<256x224xbf16>
    %c0_1 = arith.constant 0 : index
    %c0_2 = arith.constant 0 : index
    %1 = vector.load %arg3[%c0_1, %c0_2] : memref<224x256xbf16, #tpu.memory_space<vmem>>, vector<224x256xbf16>
    %cst = arith.constant dense<0.000000e+00> : vector<256x256xf32>
    %2 = tpu.matmul %0, %1, %cst {dimension_numbers = #tpu.dot_dimension_numbers<[1], [0], [0], [1], [0, 0, 1, 1], [], []>} : vector<256x224xbf16>, vector<224x256xbf16>, vector<256x256xf32> -> vector<256x256xf32>
    %c0_3 = arith.constant 0 : index
    %c0_4 = arith.constant 0 : index
    %3 = vector.load %arg2[%c0_3, %c0_4] : memref<256x24xf32, #tpu.memory_space<vmem>>, vector<256x24xf32>
    %4 = math.sin %3 : vector<256x24xf32>
    %5 = math.cos %3 : vector<256x24xf32>
    %cst_5 = arith.constant 2.000000e+00 : f32
    %6 = vector.broadcast %cst_5 : f32 to vector<256x24xf32>
    %7 = arith.mulf %6, %4 : vector<256x24xf32>
    %8 = arith.mulf %7, %5 : vector<256x24xf32>
    %cst_6 = arith.constant 2.000000e+00 : f32
    %9 = vector.broadcast %cst_6 : f32 to vector<256x24xf32>
    %10 = arith.mulf %9, %5 : vector<256x24xf32>
    %11 = arith.mulf %10, %5 : vector<256x24xf32>
    %cst_7 = arith.constant 1.000000e+00 : f32
    %12 = vector.broadcast %cst_7 : f32 to vector<256x24xf32>
    %13 = arith.subf %11, %12 : vector<256x24xf32>
    %cst_8 = arith.constant 2.000000e+00 : f32
    %14 = vector.broadcast %cst_8 : f32 to vector<256x24xf32>
    %15 = arith.mulf %14, %8 : vector<256x24xf32>
    %16 = arith.mulf %15, %13 : vector<256x24xf32>
    %cst_9 = arith.constant 2.000000e+00 : f32
    %17 = vector.broadcast %cst_9 : f32 to vector<256x24xf32>
    %18 = arith.mulf %17, %13 : vector<256x24xf32>
    %19 = arith.mulf %18, %13 : vector<256x24xf32>
    %cst_10 = arith.constant 1.000000e+00 : f32
    %20 = vector.broadcast %cst_10 : f32 to vector<256x24xf32>
    %21 = arith.subf %19, %20 : vector<256x24xf32>
    %cst_11 = arith.constant 2.000000e+00 : f32
    %22 = vector.broadcast %cst_11 : f32 to vector<256x24xf32>
    %23 = arith.mulf %22, %16 : vector<256x24xf32>
    %24 = arith.mulf %23, %21 : vector<256x24xf32>
    %cst_12 = arith.constant 2.000000e+00 : f32
    %25 = vector.broadcast %cst_12 : f32 to vector<256x24xf32>
    %26 = arith.mulf %25, %21 : vector<256x24xf32>
    %27 = arith.mulf %26, %21 : vector<256x24xf32>
    %cst_13 = arith.constant 1.000000e+00 : f32
    %28 = vector.broadcast %cst_13 : f32 to vector<256x24xf32>
    %29 = arith.subf %27, %28 : vector<256x24xf32>
    %30 = tpu.concatenate %4, %8, %16, %24, %5, %13, %21, %29 in 1 : vector<256x24xf32>, vector<256x24xf32>, vector<256x24xf32>, vector<256x24xf32>, vector<256x24xf32>, vector<256x24xf32>, vector<256x24xf32>, vector<256x24xf32> -> vector<256x192xf32>
    %31 = arith.truncf %30 : vector<256x192xf32> to vector<256x192xbf16>
    %c0_14 = arith.constant 0 : index
    %c0_15 = arith.constant 0 : index
    %32 = vector.load %arg4[%c0_14, %c0_15] : memref<192x256xbf16, #tpu.memory_space<vmem>>, vector<192x256xbf16>
    %cst_16 = arith.constant dense<0.000000e+00> : vector<256x256xf32>
    %33 = tpu.matmul %31, %32, %cst_16 {dimension_numbers = #tpu.dot_dimension_numbers<[1], [0], [0], [1], [0, 0, 1, 1], [], []>} : vector<256x192xbf16>, vector<192x256xbf16>, vector<256x256xf32> -> vector<256x256xf32>
    %34 = arith.addf %2, %33 : vector<256x256xf32>
    %c0_17 = arith.constant 0 : index
    %c0_18 = arith.constant 0 : index
    %35 = vector.load %arg5[%c0_17, %c0_18] : memref<1x256xf32, #tpu.memory_space<vmem>>, vector<1x256xf32>
    %36 = vector.broadcast %35 : vector<1x256xf32> to vector<256x256xf32>
    %37 = arith.addf %34, %36 : vector<256x256xf32>
    %cst_19 = arith.constant 0.000000e+00 : f32
    %38 = vector.broadcast %cst_19 : f32 to vector<256x256xf32>
    %39 = arith.maximumf %37, %38 : vector<256x256xf32>
    %40 = arith.truncf %39 : vector<256x256xf32> to vector<256x256xbf16>
    %c0_20 = arith.constant 0 : index
    %c0_21 = arith.constant 0 : index
    %41 = vector.load %arg6[%c0_20, %c0_21] : memref<256x256xbf16, #tpu.memory_space<vmem>>, vector<256x256xbf16>
    %cst_22 = arith.constant dense<0.000000e+00> : vector<256x256xf32>
    %42 = tpu.matmul %40, %41, %cst_22 {dimension_numbers = #tpu.dot_dimension_numbers<[1], [0], [0], [1], [0, 0, 1, 1], [], []>} : vector<256x256xbf16>, vector<256x256xbf16>, vector<256x256xf32> -> vector<256x256xf32>
    %c0_23 = arith.constant 0 : index
    %c0_24 = arith.constant 0 : index
    %43 = vector.load %arg7[%c0_23, %c0_24] : memref<1x256xf32, #tpu.memory_space<vmem>>, vector<1x256xf32>
    %44 = vector.broadcast %43 : vector<1x256xf32> to vector<256x256xf32>
    %45 = arith.addf %42, %44 : vector<256x256xf32>
    %cst_25 = arith.constant 0.000000e+00 : f32
    %46 = vector.broadcast %cst_25 : f32 to vector<256x256xf32>
    %47 = arith.maximumf %45, %46 : vector<256x256xf32>
    %48 = arith.truncf %47 : vector<256x256xf32> to vector<256x256xbf16>
    %c0_26 = arith.constant 0 : index
    %c0_27 = arith.constant 0 : index
    %49 = vector.load %arg8[%c0_26, %c0_27] : memref<256x256xbf16, #tpu.memory_space<vmem>>, vector<256x256xbf16>
    %cst_28 = arith.constant dense<0.000000e+00> : vector<256x256xf32>
    %50 = tpu.matmul %48, %49, %cst_28 {dimension_numbers = #tpu.dot_dimension_numbers<[1], [0], [0], [1], [0, 0, 1, 1], [], []>} : vector<256x256xbf16>, vector<256x256xbf16>, vector<256x256xf32> -> vector<256x256xf32>
    %c0_29 = arith.constant 0 : index
    %c0_30 = arith.constant 0 : index
    %51 = vector.load %arg9[%c0_29, %c0_30] : memref<1x256xf32, #tpu.memory_space<vmem>>, vector<1x256xf32>
    %52 = vector.broadcast %51 : vector<1x256xf32> to vector<256x256xf32>
    %53 = arith.addf %50, %52 : vector<256x256xf32>
    %cst_31 = arith.constant 0.000000e+00 : f32
    %54 = vector.broadcast %cst_31 : f32 to vector<256x256xf32>
    %55 = arith.maximumf %53, %54 : vector<256x256xf32>
    %56 = arith.truncf %55 : vector<256x256xf32> to vector<256x256xbf16>
    %c0_32 = arith.constant 0 : index
    %c0_33 = arith.constant 0 : index
    %57 = vector.load %arg10[%c0_32, %c0_33] : memref<256x256xbf16, #tpu.memory_space<vmem>>, vector<256x256xbf16>
    %cst_34 = arith.constant dense<0.000000e+00> : vector<256x256xf32>
    %58 = tpu.matmul %56, %57, %cst_34 {dimension_numbers = #tpu.dot_dimension_numbers<[1], [0], [0], [1], [0, 0, 1, 1], [], []>} : vector<256x256xbf16>, vector<256x256xbf16>, vector<256x256xf32> -> vector<256x256xf32>
    %c0_35 = arith.constant 0 : index
    %c0_36 = arith.constant 0 : index
    %59 = vector.load %arg11[%c0_35, %c0_36] : memref<1x256xf32, #tpu.memory_space<vmem>>, vector<1x256xf32>
    %60 = vector.broadcast %59 : vector<1x256xf32> to vector<256x256xf32>
    %61 = arith.addf %58, %60 : vector<256x256xf32>
    %cst_37 = arith.constant 0.000000e+00 : f32
    %62 = vector.broadcast %cst_37 : f32 to vector<256x256xf32>
    %63 = arith.maximumf %61, %62 : vector<256x256xf32>
    %64 = arith.truncf %63 : vector<256x256xf32> to vector<256x256xbf16>
    %c0_38 = arith.constant 0 : index
    %c0_39 = arith.constant 0 : index
    %65 = vector.load %arg12[%c0_38, %c0_39] : memref<256x128xbf16, #tpu.memory_space<vmem>>, vector<256x128xbf16>
    %cst_40 = arith.constant dense<0.000000e+00> : vector<256x128xf32>
    %66 = tpu.matmul %64, %65, %cst_40 {dimension_numbers = #tpu.dot_dimension_numbers<[1], [0], [0], [1], [0, 0, 1, 1], [], []>} : vector<256x256xbf16>, vector<256x128xbf16>, vector<256x128xf32> -> vector<256x128xf32>
    %c0_41 = arith.constant 0 : index
    %c0_42 = arith.constant 0 : index
    %67 = vector.load %arg13[%c0_41, %c0_42] : memref<1x128xf32, #tpu.memory_space<vmem>>, vector<1x128xf32>
    %68 = vector.broadcast %67 : vector<1x128xf32> to vector<256x128xf32>
    %69 = arith.addf %66, %68 : vector<256x128xf32>
    %cst_43 = arith.constant 0.000000e+00 : f32
    %70 = vector.broadcast %cst_43 : f32 to vector<256x128xf32>
    %71 = arith.maximumf %69, %70 : vector<256x128xf32>
    %72 = arith.truncf %71 : vector<256x128xf32> to vector<256x128xbf16>
    %c0_44 = arith.constant 0 : index
    %c0_45 = arith.constant 0 : index
    %73 = vector.load %arg14[%c0_44, %c0_45] : memref<128x128xbf16, #tpu.memory_space<vmem>>, vector<128x128xbf16>
    %cst_46 = arith.constant dense<0.000000e+00> : vector<256x128xf32>
    %74 = tpu.matmul %72, %73, %cst_46 {dimension_numbers = #tpu.dot_dimension_numbers<[1], [0], [0], [1], [0, 0, 1, 1], [], []>} : vector<256x128xbf16>, vector<128x128xbf16>, vector<256x128xf32> -> vector<256x128xf32>
    %c0_47 = arith.constant 0 : index
    %c0_48 = arith.constant 0 : index
    %75 = vector.load %arg15[%c0_47, %c0_48] : memref<1x128xf32, #tpu.memory_space<vmem>>, vector<1x128xf32>
    %76 = vector.broadcast %75 : vector<1x128xf32> to vector<256x128xf32>
    %77 = arith.addf %74, %76 : vector<256x128xf32>
    %78 = vector.extract_strided_slice %77 {offsets = [0, 0], sizes = [256, 3], strides = [1, 1]} : vector<256x128xf32> to vector<256x3xf32>
    %c0_49 = arith.constant 0 : index
    %c0_50 = arith.constant 0 : index
    %79 = vector.load %arg16[%c0_49, %c0_50] : memref<256x3xf32, #tpu.memory_space<vmem>>, vector<256x3xf32>
    tpu.vector_store %arg16[%c0_49, %c0_50], %78 {strides = array<i32>} : memref<256x3xf32, #tpu.memory_space<vmem>>, vector<256x3xf32>,
    return
  }
  func.func @transform_0(%arg0: i32) -> (i32, i32) {
    %c0_i32 = arith.constant 0 : i32
    %c0_i32_0 = arith.constant 0 : i32
    return %arg0, %c0_i32 : i32, i32
  }
  func.func @transform_1(%arg0: i32) -> (i32, i32) {
    %c0_i32 = arith.constant 0 : i32
    %c0_i32_0 = arith.constant 0 : i32
    return %arg0, %c0_i32 : i32, i32
  }
  func.func @transform_2(%arg0: i32) -> (i32, i32) {
    %c0_i32 = arith.constant 0 : i32
    %c0_i32_0 = arith.constant 0 : i32
    %c0_i32_1 = arith.constant 0 : i32
    return %c0_i32, %c0_i32_0 : i32, i32
  }
  func.func @transform_3(%arg0: i32) -> (i32, i32) {
    %c0_i32 = arith.constant 0 : i32
    %c0_i32_0 = arith.constant 0 : i32
    %c0_i32_1 = arith.constant 0 : i32
    return %c0_i32, %c0_i32_0 : i32, i32
  }
  func.func @transform_4(%arg0: i32) -> (i32, i32) {
    %c0_i32 = arith.constant 0 : i32
    %c0_i32_0 = arith.constant 0 : i32
    %c0_i32_1 = arith.constant 0 : i32
    return %c0_i32, %c0_i32_0 : i32, i32
  }
  func.func @transform_5(%arg0: i32) -> (i32, i32) {
    %c0_i32 = arith.constant 0 : i32
    %c0_i32_0 = arith.constant 0 : i32
    %c0_i32_1 = arith.constant 0 : i32
    return %c0_i32, %c0_i32_0 : i32, i32
  }
  func.func @transform_6(%arg0: i32) -> (i32, i32) {
    %c0_i32 = arith.constant 0 : i32
    %c0_i32_0 = arith.constant 0 : i32
    %c0_i32_1 = arith.constant 0 : i32
    return %c0_i32, %c0_i32_0 : i32, i32
  }
  func.func @transform_7(%arg0: i32) -> (i32, i32) {
    %c0_i32 = arith.constant 0 : i32
    %c0_i32_0 = arith.constant 0 : i32
    %c0_i32_1 = arith.constant 0 : i32
    return %c0_i32, %c0_i32_0 : i32, i32
  }
  func.func @transform_8(%arg0: i32) -> (i32, i32) {
    %c0_i32 = arith.constant 0 : i32
    %c0_i32_0 = arith.constant 0 : i32
    %c0_i32_1 = arith.constant 0 : i32
    return %c0_i32, %c0_i32_0 : i32, i32
  }
  func.func @transform_9(%arg0: i32) -> (i32, i32) {
    %c0_i32 = arith.constant 0 : i32
    %c0_i32_0 = arith.constant 0 : i32
    %c0_i32_1 = arith.constant 0 : i32
    return %c0_i32, %c0_i32_0 : i32, i32
  }
  func.func @transform_10(%arg0: i32) -> (i32, i32) {
    %c0_i32 = arith.constant 0 : i32
    %c0_i32_0 = arith.constant 0 : i32
    %c0_i32_1 = arith.constant 0 : i32
    return %c0_i32, %c0_i32_0 : i32, i32
  }
  func.func @transform_11(%arg0: i32) -> (i32, i32) {
    %c0_i32 = arith.constant 0 : i32
    %c0_i32_0 = arith.constant 0 : i32
    %c0_i32_1 = arith.constant 0 : i32
    return %c0_i32, %c0_i32_0 : i32, i32
  }
  func.func @transform_12(%arg0: i32) -> (i32, i32) {
    %c0_i32 = arith.constant 0 : i32
    %c0_i32_0 = arith.constant 0 : i32
    %c0_i32_1 = arith.constant 0 : i32
    return %c0_i32, %c0_i32_0 : i32, i32
  }
  func.func @transform_13(%arg0: i32) -> (i32, i32) {
    %c0_i32 = arith.constant 0 : i32
    %c0_i32_0 = arith.constant 0 : i32
    %c0_i32_1 = arith.constant 0 : i32
    return %c0_i32, %c0_i32_0 : i32, i32
  }
  func.func @transform_14(%arg0: i32) -> (i32, i32) {
    %c0_i32 = arith.constant 0 : i32
    %c0_i32_0 = arith.constant 0 : i32
    %c0_i32_1 = arith.constant 0 : i32
    return %c0_i32, %c0_i32_0 : i32, i32
  }
  func.func @transform_15(%arg0: i32) -> (i32, i32) {
    %c0_i32 = arith.constant 0 : i32
    %c0_i32_0 = arith.constant 0 : i32
    return %arg0, %c0_i32 : i32, i32
  }
}

</mosaic_0001>

<llo_original>
// kernel: delta_net_forward.1
$region0: #{delta_net_forward.1}
  #allocation0 [shape = 'u32[]', space=smem, size = 0x4, offset = 0x4, fixed_abs, tag = 'smem constant byte address 0x4 - core index']
  #allocation1 [shape = 'u32[144,128]{1,0:T(1,128)}', space=vmem, size = 0x12000, scoped, tag = 'internal scratch']
  %s0 = inlined_call_operand.vmem [shape: bf16[256,224], index: 0, kind: input, shape index: {}]
  %s1 = inlined_call_operand.vmem [shape: f32[256,24], index: 1, kind: input, shape index: {}]
  %s2 = inlined_call_operand.vmem [shape: bf16[224,256], index: 2, kind: input, shape index: {}]
  %s3 = inlined_call_operand.vmem [shape: bf16[192,256], index: 3, kind: input, shape index: {}]
  %s4 = inlined_call_operand.vmem [shape: f32[1,256], index: 4, kind: input, shape index: {}]
  %s5 = inlined_call_operand.vmem [shape: bf16[256,256], index: 5, kind: input, shape index: {}]
  %s6 = inlined_call_operand.vmem [shape: f32[1,256], index: 6, kind: input, shape index: {}]
  %s7 = inlined_call_operand.vmem [shape: bf16[256,256], index: 7, kind: input, shape index: {}]
  %s8 = inlined_call_operand.vmem [shape: f32[1,256], index: 8, kind: input, shape index: {}]
  %s9 = inlined_call_operand.vmem [shape: bf16[256,256], index: 9, kind: input, shape index: {}]
  %s10 = inlined_call_operand.vmem [shape: f32[1,256], index: 10, kind: input, shape index: {}]
  %s11 = inlined_call_operand.vmem [shape: bf16[256,128], index: 11, kind: input, shape index: {}]
  %s12 = inlined_call_operand.vmem [shape: f32[1,128], index: 12, kind: input, shape index: {}]
  %s13 = inlined_call_operand.vmem [shape: bf16[128,128], index: 13, kind: input, shape index: {}]
  %s14 = inlined_call_operand.vmem [shape: f32[1,128], index: 14, kind: input, shape index: {}]
  %s15 = inlined_call_operand.vmem [shape: f32[256,3], index: 15, kind: output, shape index: {}]
  %s16 = sld [smem:[#allocation0]]
  $region70: #{delta_net_forward.1} parent=0
    _
  %s18 = ssub.s32 1, %s16
  %s19 = scalar_select 0, %s18, %s16
  // Predicated region
  $region2: #{delta_net_forward.1} parent=0 // pred_check
    _
  $region3: #{delta_net_forward.1} parent=0 // pred_check_branch
    %21 = sbr.rel (0) target = $region5
  $region4: #{delta_net_forward.1} parent=0 // pred_region
    _
  $region5: #{delta_net_forward.1} parent=0 // pred_fallthru
    _
  // Predicated region
  $region6: #{delta_net_forward.1} parent=0 // pred_check
    _
  $region7: #{delta_net_forward.1} parent=0 // pred_check_branch
    %23 = sbr.rel (0) target = $region9
  $region8: #{delta_net_forward.1} parent=0 // pred_region
    _
  $region9: #{delta_net_forward.1} parent=0 // pred_fallthru
    _
  // Predicated region
  $region10: #{delta_net_forward.1} parent=0 // pred_check
    _
  $region11: #{delta_net_forward.1} parent=0 // pred_check_branch
    %25 = sbr.rel (0) target = $region13
  $region12: #{delta_net_forward.1} parent=0 // pred_region
    _
  $region13: #{delta_net_forward.1} parent=0 // pred_fallthru
    _
  // Predicated region
  $region14: #{delta_net_forward.1} parent=0 // pred_check
    _
  $region15: #{delta_net_forward.1} parent=0 // pred_check_branch
    %27 = sbr.rel (0) target = $region17
  $region16: #{delta_net_forward.1} parent=0 // pred_region
    _
  $region17: #{delta_net_forward.1} parent=0 // pred_fallthru
    _
  // Predicated region
  $region18: #{delta_net_forward.1} parent=0 // pred_check
    _
  $region19: #{delta_net_forward.1} parent=0 // pred_check_branch
    %29 = sbr.rel (0) target = $region21
  $region20: #{delta_net_forward.1} parent=0 // pred_region
    _
  $region21: #{delta_net_forward.1} parent=0 // pred_fallthru
    _
  // Predicated region
  $region22: #{delta_net_forward.1} parent=0 // pred_check
    _
  $region23: #{delta_net_forward.1} parent=0 // pred_check_branch
    %31 = sbr.rel (0) target = $region25
  $region24: #{delta_net_forward.1} parent=0 // pred_region
    _
  $region25: #{delta_net_forward.1} parent=0 // pred_fallthru
    _
  // Predicated region
  $region26: #{delta_net_forward.1} parent=0 // pred_check
    _
  $region27: #{delta_net_forward.1} parent=0 // pred_check_branch
    %33 = sbr.rel (0) target = $region29
  $region28: #{delta_net_forward.1} parent=0 // pred_region
    _
  $region29: #{delta_net_forward.1} parent=0 // pred_fallthru
    _
  // Predicated region
  $region30: #{delta_net_forward.1} parent=0 // pred_check
    _
  $region31: #{delta_net_forward.1} parent=0 // pred_check_branch
    %35 = sbr.rel (0) target = $region33
  $region32: #{delta_net_forward.1} parent=0 // pred_region
    _
  $region33: #{delta_net_forward.1} parent=0 // pred_fallthru
    _
  // Predicated region
  $region34: #{delta_net_forward.1} parent=0 // pred_check
    _
  $region35: #{delta_net_forward.1} parent=0 // pred_check_branch
    %37 = sbr.rel (0) target = $region37
  $region36: #{delta_net_forward.1} parent=0 // pred_region
    _
  $region37: #{delta_net_forward.1} parent=0 // pred_fallthru
    _
  // Predicated region
  $region38: #{delta_net_forward.1} parent=0 // pred_check
    _
  $region39: #{delta_net_forward.1} parent=0 // pred_check_branch
    %39 = sbr.rel (0) target = $region41
  $region40: #{delta_net_forward.1} parent=0 // pred_region
    _
  $region41: #{delta_net_forward.1} parent=0 // pred_fallthru
    _
  // Predicated region
  $region42: #{delta_net_forward.1} parent=0 // pred_check
    _
  $region43: #{delta_net_forward.1} parent=0 // pred_check_branch
    %41 = sbr.rel (0) target = $region45
  $region44: #{delta_net_forward.1} parent=0 // pred_region
    _
  $region45: #{delta_net_forward.1} parent=0 // pred_fallthru
    _
  // Predicated region
  $region46: #{delta_net_forward.1} parent=0 // pred_check
    _
  $region47: #{delta_net_forward.1} parent=0 // pred_check_branch
    %43 = sbr.rel (0) target = $region49
  $region48: #{delta_net_forward.1} parent=0 // pred_region
    _
  $region49: #{delta_net_forward.1} parent=0 // pred_fallthru
    _
  // Predicated region
  $region50: #{delta_net_forward.1} parent=0 // pred_check
    _
  $region51: #{delta_net_forward.1} parent=0 // pred_check_branch
    %45 = sbr.rel (0) target = $region53
  $region52: #{delta_net_forward.1} parent=0 // pred_region
    _
  $region53: #{delta_net_forward.1} parent=0 // pred_fallthru
    _
  // Predicated region
  $region54: #{delta_net_forward.1} parent=0 // pred_check
    _
  $region55: #{delta_net_forward.1} parent=0 // pred_check_branch
    %47 = sbr.rel (0) target = $region57
  $region56: #{delta_net_forward.1} parent=0 // pred_region
    _
  $region57: #{delta_net_forward.1} parent=0 // pred_fallthru
    _
  // Predicated region
  $region58: #{delta_net_forward.1} parent=0 // pred_check
    _
  $region59: #{delta_net_forward.1} parent=0 // pred_check_branch
    %49 = sbr.rel (0) target = $region61
  $region60: #{delta_net_forward.1} parent=0 // pred_region
    _
  $region61: #{delta_net_forward.1} parent=0 // pred_fallthru
    _
  %v51 = vld [vmem:[%s0] sm:$0xff]
  %v52 = vld [vmem:[%s0 + $0x8] sm:$0xff]
  %v53 = vld [vmem:[%s0 + $0x10] sm:$0xff]
  %v54 = vld [vmem:[%s0 + $0x18] sm:$0xff]
  %v55 = vld [vmem:[%s0 + $0x20] sm:$0xff]
  %v56 = vld [vmem:[%s0 + $0x28] sm:$0xff]
  %v57 = vld [vmem:[%s0 + $0x30] sm:$0xff]
  %v58 = vld [vmem:[%s0 + $0x38] sm:$0xff]
  %v59 = vld [vmem:[%s0 + $0x40] sm:$0xff]
  %v60 = vld [vmem:[%s0 + $0x48] sm:$0xff]
  %v61 = vld [vmem:[%s0 + $0x50] sm:$0xff]
  %v62 = vld [vmem:[%s0 + $0x58] sm:$0xff]
  %v63 = vld [vmem:[%s0 + $0x60] sm:$0xff]
  %v64 = vld [vmem:[%s0 + $0x68] sm:$0xff]
  %v65 = vld [vmem:[%s0 + $0x70] sm:$0xff]
  %v66 = vld [vmem:[%s0 + $0x78] sm:$0xff]
  %v67 = vld [vmem:[%s0 + $0x80] sm:$0xff]
  %v68 = vld [vmem:[%s0 + $0x88] sm:$0xff]
  %v69 = vld [vmem:[%s0 + $0x90] sm:$0xff]
  %v70 = vld [vmem:[%s0 + $0x98] sm:$0xff]
  %v71 = vld [vmem:[%s0 + $0xa0] sm:$0xff]
  %v72 = vld [vmem:[%s0 + $0xa8] sm:$0xff]
  %v73 = vld [vmem:[%s0 + $0xb0] sm:$0xff]
  %v74 = vld [vmem:[%s0 + $0xb8] sm:$0xff]
  %v75 = vld [vmem:[%s0 + $0xc0] sm:$0xff]
  %v76 = vld [vmem:[%s0 + $0xc8] sm:$0xff]
  %v77 = vld [vmem:[%s0 + $0xd0] sm:$0xff]
  %v78 = vld [vmem:[%s0 + $0xd8] sm:$0xff]
  %v79 = vld [vmem:[%s0 + $0xe0] sm:$0xff]
  %v80 = vld [vmem:[%s0 + $0xe8] sm:$0xff]
  %v81 = vld [vmem:[%s0 + $0xf0] sm:$0xff]
  %v82 = vld [vmem:[%s0 + $0xf8] sm:$0xff]
  %v83 = vld [vmem:[%s2] sm:$0xff]
  %v84 = vld [vmem:[%s2 + $0x8] sm:$0xff]
  %v85 = vld [vmem:[%s2 + $0x10] sm:$0xff]
  %v86 = vld [vmem:[%s2 + $0x18] sm:$0xff]
  %v87 = vld [vmem:[%s2 + $0x20] sm:$0xff]
  %v88 = vld [vmem:[%s2 + $0x28] sm:$0xff]
  %v89 = vld [vmem:[%s2 + $0x30] sm:$0xff]
  %v90 = vld [vmem:[%s2 + $0x38] sm:$0xff]
  %v91 = vld [vmem:[%s2 + $0x40] sm:$0xff]
  %v92 = vld [vmem:[%s2 + $0x48] sm:$0xff]
  %v93 = vld [vmem:[%s2 + $0x50] sm:$0xff]
  %v94 = vld [vmem:[%s2 + $0x58] sm:$0xff]
  %v95 = vld [vmem:[%s2 + $0x60] sm:$0xff]
  %v96 = vld [vmem:[%s2 + $0x68] sm:$0xff]
  %v97 = vld [vmem:[%s2 + $0x70] sm:$0xff]
  %v98 = vld [vmem:[%s2 + $0x78] sm:$0xff]
  %v99 = vld [vmem:[%s2 + $0x80] sm:$0xff]
  %v100 = vld [vmem:[%s2 + $0x88] sm:$0xff]
  %v101 = vld [vmem:[%s2 + $0x90] sm:$0xff]
  %v102 = vld [vmem:[%s2 + $0x98] sm:$0xff]
  %v103 = vld [vmem:[%s2 + $0xa0] sm:$0xff]
  %v104 = vld [vmem:[%s2 + $0xa8] sm:$0xff]
  %v105 = vld [vmem:[%s2 + $0xb0] sm:$0xff]
  %v106 = vld [vmem:[%s2 + $0xb8] sm:$0xff]
  %v107 = vld [vmem:[%s2 + $0xc0] sm:$0xff]
  %v108 = vld [vmem:[%s2 + $0xc8] sm:$0xff]
  %v109 = vld [vmem:[%s2 + $0xd0] sm:$0xff]
  %v110 = vld [vmem:[%s2 + $0xd8] sm:$0xff]
  %v111 = vld [vmem:[%s1] sm:$0xff]
  %v112 = vld [vmem:[%s1 + $0x8] sm:$0xff]
  %v113 = vld [vmem:[%s1 + $0x10] sm:$0xff]
  %v114 = vld [vmem:[%s1 + $0x18] sm:$0xff]
  %v115 = vld [vmem:[%s1 + $0x20] sm:$0xff]
  %v116 = vld [vmem:[%s1 + $0x28] sm:$0xff]
  %v117 = vld [vmem:[%s1 + $0x30] sm:$0xff]
  %v118 = vld [vmem:[%s1 + $0x38] sm:$0xff]
  %v119 = vld [vmem:[%s1 + $0x40] sm:$0xff]
  %v120 = vld [vmem:[%s1 + $0x48] sm:$0xff]
  %v121 = vld [vmem:[%s1 + $0x50] sm:$0xff]
  %v122 = vld [vmem:[%s1 + $0x58] sm:$0xff]
  %v123 = vld [vmem:[%s1 + $0x60] sm:$0xff]
  %v124 = vld [vmem:[%s1 + $0x68] sm:$0xff]
  %v125 = vld [vmem:[%s1 + $0x70] sm:$0xff]
  %v126 = vld [vmem:[%s1 + $0x78] sm:$0xff]
  %v127 = vld [vmem:[%s1 + $0x80] sm:$0xff]
  %v128 = vld [vmem:[%s1 + $0x88] sm:$0xff]
  %v129 = vld [vmem:[%s1 + $0x90] sm:$0xff]
  %v130 = vld [vmem:[%s1 + $0x98] sm:$0xff]
  %v131 = vld [vmem:[%s1 + $0xa0] sm:$0xff]
  %v132 = vld [vmem:[%s1 + $0xa8] sm:$0xff]
  %v133 = vld [vmem:[%s1 + $0xb0] sm:$0xff]
  %v134 = vld [vmem:[%s1 + $0xb8] sm:$0xff]
  %v135 = vld [vmem:[%s1 + $0xc0] sm:$0xff]
  %v136 = vld [vmem:[%s1 + $0xc8] sm:$0xff]
  %v137 = vld [vmem:[%s1 + $0xd0] sm:$0xff]
  %v138 = vld [vmem:[%s1 + $0xd8] sm:$0xff]
  %v139 = vld [vmem:[%s1 + $0xe0] sm:$0xff]
  %v140 = vld [vmem:[%s1 + $0xe8] sm:$0xff]
  %v141 = vld [vmem:[%s1 + $0xf0] sm:$0xff]
  %v142 = vld [vmem:[%s1 + $0xf8] sm:$0xff]
  %v143 = vand.u32 2147483647, %v111
  %vm144 = vcmp.le.f32.partialorder %v143, 0.7853982
  %vm145 = vcmp.lt.s32.totalorder %v111, 0
  %v146 = vand.u32 %v111, 2139095040
  %v147 = vshrl.u32 %v146, 23
  %v148 = vsub.s32 %v147, 127
  %v149 = vand.u32 2147483647, %v111
  %v150 = vand.u32 %v149, 8388607
  %v151 = vor.u32 %v150, 8388608
  %v152 = vsub.s32 0, %v151
  %v153 = vadd.s32 %v148, 1
  %vm154 = vcmp.gt.s32.totalorder %v153, 0
  %v155 = vsel %vm154, %v153, 0
  %v156 = vshrl.u32 %v155, 5
  %v157 = vand.u32 %v155, 31
  %v158 = vsub.s32 32, %v157
  %v159 = vshrl.u32 683565275, %v158
  %v160 = vshll.u32 683565275, %v157
  %v161 = vshrl.u32 2475754826, %v158
  %v162 = vor.u32 %v160, %v161
  %v163 = vshll.u32 2475754826, %v157
  %v164 = vshrl.u32 2131351028, %v158
  %v165 = vor.u32 %v163, %v164
  %v166 = vshll.u32 2131351028, %v157
  %v167 = vshrl.u32 2102212464, %v158
  %v168 = vor.u32 %v166, %v167
  %v169 = vshll.u32 2102212464, %v157
  %v170 = vshrl.u32 920167782, %v158
  %v171 = vor.u32 %v169, %v170
  %v172 = vshll.u32 920167782, %v157
  %v173 = vshrl.u32 1326507024, %v158
  %v174 = vor.u32 %v172, %v173
  %vm175 = vcmp.lt.s32.totalorder %v156, 1
  %vm176 = vcmp.lt.s32.totalorder %v156, 2
  %vm177 = vcmp.lt.s32.totalorder %v156, 3
  %vm178 = vcmp.lt.s32.totalorder %v156, 4
  %v179 = vsel %vm175, %v159, %v162
  %v180 = vsel %vm178, %v168, 2102212464
  %v181 = vsel %vm177, %v165, %v180
  %v182 = vsel %vm176, %v179, %v181
  %v183 = vsel %vm175, %v162, %v165
  %v184 = vsel %vm178, %v171, 920167782
  %v185 = vsel %vm177, %v168, %v184
  %v186 = vsel %vm176, %v183, %v185
  %v187 = vsel %vm175, %v165, %v168
  %v188 = vsel %vm178, %v174, 1326507024
  %v189 = vsel %vm177, %v171, %v188
  %v190 = vsel %vm176, %v187, %v189
  %v191 = vshll.u32 %v151, 8
  %v192 = vmul.u32.u64.compose %v191, %v190
  %v193 = vextract.low.u32 %v192
  %v194 = vextract.high.u32 %v192
  %v195 = vmul.u32.u64.compose %v191, %v186
  %v196 = vextract.low.u32 %v195
  %v197 = vextract.high.u32 %v195
  %v198 = vmul.u32 %v191, %v182
  %v199 = vadd.s32 %v194, %v196
  %vm200 = vc.u32 %v194, %v196
  %v201 = vadd.s32 %v197, 1
  %v202 = vsel %vm200, %v201, %v197
  %v203 = vadd.s32 %v198, %v202
  %v204 = vadd.s32 %v203, 536870912
  %v205 = vshrl.u32 %v204, 30
  %v206 = vshll.u32 %v205, 30
  %v207 = vsub.s32 %v203, %v206
  %vm208 = vcmp.lt.s32.totalorder %v207, 0
  %v209 = vsub.s32 0, %v207
  %v210 = vsel %vm208, %v209, %v207
  %v211 = vclz %v210
  %v212 = vsub.s32 %v211, 2
  %vm213 = vcmp.gt.s32.totalorder 0, %v212
  %v214 = vsel %vm213, 0, %v212
  %v215 = vsub.s32 32, %v214
  %v216 = vshll.u32 %v207, %v214
  %v217 = vshrl.u32 %v199, %v215
  %v218 = vor.u32 %v216, %v217
  %v219 = vsub.s32 4294967266, %v214
  %v220 = vadd.s32 %v219, 127
  %v221 = vshll.u32 %v220, 23
  %v222 = vor.u32 4788187, %v221
  %v223 = vand.u32 2147483647, %v222
  %v225 = vcvt.s32.f32 %v218
  %v226 = vmul.f32 %v225, %v223
  %v227 = vxor.u32 %v226, 2147483648
  %v228 = vsel %vm145, %v227, %v226
  %v229 = vsub.s32 4, %v205
  %v230 = vsel %vm145, %v229, %v205
  %v231 = vsel %vm144, %v111, %v228
  %v232 = vsel %vm144, 0, %v230
  %v233 = vcosq.f32.pop %v231
  %v234 = vsinq.f32.pop %v231
  %vm235 = vweird.f32 %v111
  %v236 = vadd.s32 %v232, 3
  %v237 = vand.u32 %v236, 3
  %vm238 = vcmp.lt.s32.totalorder %v237, 2
  %vm239 = vcmp.eq.s32.totalorder %v237, 0
  %v240 = vxor.u32 %v234, 2147483648
  %v241 = vsel %vm239, %v233, %v240
  %vm242 = vcmp.eq.s32.totalorder %v237, 2
  %v243 = vxor.u32 %v233, 2147483648
  %v244 = vsel %vm242, %v243, %v234
  %v245 = vsel %vm238, %v241, %v244
  %v246 = vsel %vm235, nan, %v245
  %v247 = vand.u32 2147483647, %v112
  %vm248 = vcmp.le.f32.partialorder %v247, 0.7853982
  %vm249 = vcmp.lt.s32.totalorder %v112, 0
  %v250 = vand.u32 %v112, 2139095040
  %v251 = vshrl.u32 %v250, 23
  %v252 = vsub.s32 %v251, 127
  %v253 = vand.u32 2147483647, %v112
  %v254 = vand.u32 %v253, 8388607
  %v255 = vor.u32 %v254, 8388608
  %v256 = vsub.s32 0, %v255
  %v257 = vadd.s32 %v252, 1
  %vm258 = vcmp.gt.s32.totalorder %v257, 0
  %v259 = vsel %vm258, %v257, 0
  %v260 = vshrl.u32 %v259, 5
  %v261 = vand.u32 %v259, 31
  %v262 = vsub.s32 32, %v261
  %v263 = vshrl.u32 683565275, %v262
  %v264 = vshll.u32 683565275, %v261
  %v265 = vshrl.u32 2475754826, %v262
  %v266 = vor.u32 %v264, %v265
  %v267 = vshll.u32 2475754826, %v261
  %v268 = vshrl.u32 2131351028, %v262
  %v269 = vor.u32 %v267, %v268
  %v270 = vshll.u32 2131351028, %v261
  %v271 = vshrl.u32 2102212464, %v262
  %v272 = vor.u32 %v270, %v271
  %v273 = vshll.u32 2102212464, %v261
  %v274 = vshrl.u32 920167782, %v262
  %v275 = vor.u32 %v273, %v274
  %v276 = vshll.u32 920167782, %v261
  %v277 = vshrl.u32 1326507024, %v262
  %v278 = vor.u32 %v276, %v277
  %vm279 = vcmp.lt.s32.totalorder %v260, 1
  %vm280 = vcmp.lt.s32.totalorder %v260, 2
  %vm281 = vcmp.lt.s32.totalorder %v260, 3
  %vm282 = vcmp.lt.s32.totalorder %v260, 4
  %v283 = vsel %vm279, %v263, %v266
  %v284 = vsel %vm282, %v272, 2102212464
  %v285 = vsel %vm281, %v269, %v284
  %v286 = vsel %vm280, %v283, %v285
  %v287 = vsel %vm279, %v266, %v269
  %v288 = vsel %vm282, %v275, 920167782
  %v289 = vsel %vm281, %v272, %v288
  %v290 = vsel %vm280, %v287, %v289
  %v291 = vsel %vm279, %v269, %v272
  %v292 = vsel %vm282, %v278, 1326507024
  %v293 = vsel %vm281, %v275, %v292
  %v294 = vsel %vm280, %v291, %v293
  %v295 = vshll.u32 %v255, 8
  %v296 = vmul.u32.u64.compose %v295, %v294
  %v297 = vextract.low.u32 %v296
  %v298 = vextract.high.u32 %v296
  %v299 = vmul.u32.u64.compose %v295, %v290
  %v300 = vextract.low.u32 %v299
  %v301 = vextract.high.u32 %v299
  %v302 = vmul.u32 %v295, %v286
  %v303 = vadd.s32 %v298, %v300
  %vm304 = vc.u32 %v298, %v300
  %v305 = vadd.s32 %v301, 1
  %v306 = vsel %vm304, %v305, %v301
  %v307 = vadd.s32 %v302, %v306
  %v308 = vadd.s32 %v307, 536870912
  %v309 = vshrl.u32 %v308, 30
  %v310 = vshll.u32 %v309, 30
  %v311 = vsub.s32 %v307, %v310
  %vm312 = vcmp.lt.s32.totalorder %v311, 0
  %v313 = vsub.s32 0, %v311
  %v314 = vsel %vm312, %v313, %v311
  %v315 = vclz %v314
  %v316 = vsub.s32 %v315, 2
  %vm317 = vcmp.gt.s32.totalorder 0, %v316
  %v318 = vsel %vm317, 0, %v316
  %v319 = vsub.s32 32, %v318
  %v320 = vshll.u32 %v311, %v318
  %v321 = vshrl.u32 %v303, %v319
  %v322 = vor.u32 %v320, %v321
  %v323 = vsub.s32 4294967266, %v318
  %v324 = vadd.s32 %v323, 127
  %v325 = vshll.u32 %v324, 23
  %v326 = vor.u32 4788187, %v325
  %v327 = vand.u32 2147483647, %v326
  %v329 = vcvt.s32.f32 %v322
  %v330 = vmul.f32 %v329, %v327
  %v331 = vxor.u32 %v330, 2147483648
  %v332 = vsel %vm249, %v331, %v330
  %v333 = vsub.s32 4, %v309
  %v334 = vsel %vm249, %v333, %v309
  %v335 = vsel %vm248, %v112, %v332
  %v336 = vsel %vm248, 0, %v334
  %v337 = vcosq.f32.pop %v335
  %v338 = vsinq.f32.pop %v335
  %vm339 = vweird.f32 %v112
  %v340 = vadd.s32 %v336, 3
  %v341 = vand.u32 %v340, 3
  %vm342 = vcmp.lt.s32.totalorder %v341, 2
  %vm343 = vcmp.eq.s32.totalorder %v341, 0
  %v344 = vxor.u32 %v338, 2147483648
  %v345 = vsel %vm343, %v337, %v344
  %vm346 = vcmp.eq.s32.totalorder %v341, 2
  %v347 = vxor.u32 %v337, 2147483648
  %v348 = vsel %vm346, %v347, %v338
  %v349 = vsel %vm342, %v345, %v348
  %v350 = vsel %vm339, nan, %v349
  %v351 = vand.u32 2147483647, %v113
  %vm352 = vcmp.le.f32.partialorder %v351, 0.7853982
  %vm353 = vcmp.lt.s32.totalorder %v113, 0
  %v354 = vand.u32 %v113, 2139095040
  %v355 = vshrl.u32 %v354, 23
  %v356 = vsub.s32 %v355, 127
  %v357 = vand.u32 2147483647, %v113
  %v358 = vand.u32 %v357, 8388607
  %v359 = vor.u32 %v358, 8388608
  %v360 = vsub.s32 0, %v359
  %v361 = vadd.s32 %v356, 1
  %vm362 = vcmp.gt.s32.totalorder %v361, 0
  %v363 = vsel %vm362, %v361, 0
  %v364 = vshrl.u32 %v363, 5
  %v365 = vand.u32 %v363, 31
  %v366 = vsub.s32 32, %v365
  %v367 = vshrl.u32 683565275, %v366
  %v368 = vshll.u32 683565275, %v365
  %v369 = vshrl.u32 2475754826, %v366
  %v370 = vor.u32 %v368, %v369
  %v371 = vshll.u32 2475754826, %v365
  %v372 = vshrl.u32 2131351028, %v366
  %v373 = vor.u32 %v371, %v372
  %v374 = vshll.u32 2131351028, %v365
  %v375 = vshrl.u32 2102212464, %v366
  %v376 = vor.u32 %v374, %v375
  %v377 = vshll.u32 2102212464, %v365
  %v378 = vshrl.u32 920167782, %v366
  %v379 = vor.u32 %v377, %v378
  %v380 = vshll.u32 920167782, %v365
  %v381 = vshrl.u32 1326507024, %v366
  %v382 = vor.u32 %v380, %v381
  %vm383 = vcmp.lt.s32.totalorder %v364, 1
  %vm384 = vcmp.lt.s32.totalorder %v364, 2
  %vm385 = vcmp.lt.s32.totalorder %v364, 3
  %vm386 = vcmp.lt.s32.totalorder %v364, 4
  %v387 = vsel %vm383, %v367, %v370
  %v388 = vsel %vm386, %v376, 2102212464
  %v389 = vsel %vm385, %v373, %v388
  %v390 = vsel %vm384, %v387, %v389
  %v391 = vsel %vm383, %v370, %v373
  %v392 = vsel %vm386, %v379, 920167782
  %v393 = vsel %vm385, %v376, %v392
  %v394 = vsel %vm384, %v391, %v393
  %v395 = vsel %vm383, %v373, %v376
  %v396 = vsel %vm386, %v382, 1326507024
  %v397 = vsel %vm385, %v379, %v396
  %v398 = vsel %vm384, %v395, %v397
  %v399 = vshll.u32 %v359, 8
  %v400 = vmul.u32.u64.compose %v399, %v398
  %v401 = vextract.low.u32 %v400
  %v402 = vextract.high.u32 %v400
  %v403 = vmul.u32.u64.compose %v399, %v394
  %v404 = vextract.low.u32 %v403
  %v405 = vextract.high.u32 %v403
  %v406 = vmul.u32 %v399, %v390
  %v407 = vadd.s32 %v402, %v404
  %vm408 = vc.u32 %v402, %v404
  %v409 = vadd.s32 %v405, 1
  %v410 = vsel %vm408, %v409, %v405
  %v411 = vadd.s32 %v406, %v410
  %v412 = vadd.s32 %v411, 536870912
  %v413 = vshrl.u32 %v412, 30
  %v414 = vshll.u32 %v413, 30
  %v415 = vsub.s32 %v411, %v414
  %vm416 = vcmp.lt.s32.totalorder %v415, 0
  %v417 = vsub.s32 0, %v415
  %v418 = vsel %vm416, %v417, %v415
  %v419 = vclz %v418
  %v420 = vsub.s32 %v419, 2
  %vm421 = vcmp.gt.s32.totalorder 0, %v420
  %v422 = vsel %vm421, 0, %v420
  %v423 = vsub.s32 32, %v422
  %v424 = vshll.u32 %v415, %v422
  %v425 = vshrl.u32 %v407, %v423
  %v426 = vor.u32 %v424, %v425
  %v427 = vsub.s32 4294967266, %v422
  %v428 = vadd.s32 %v427, 127
  %v429 = vshll.u32 %v428, 23
  %v430 = vor.u32 4788187, %v429
  %v431 = vand.u32 2147483647, %v430
  %v433 = vcvt.s32.f32 %v426
  %v434 = vmul.f32 %v433, %v431
  %v435 = vxor.u32 %v434, 2147483648
  %v436 = vsel %vm353, %v435, %v434
  %v437 = vsub.s32 4, %v413
  %v438 = vsel %vm353, %v437, %v413
  %v439 = vsel %vm352, %v113, %v436
  %v440 = vsel %vm352, 0, %v438
  %v441 = vcosq.f32.pop %v439
  %v442 = vsinq.f32.pop %v439
  %vm443 = vweird.f32 %v113
  %v444 = vadd.s32 %v440, 3
  %v445 = vand.u32 %v444, 3
  %vm446 = vcmp.lt.s32.totalorder %v445, 2
  %vm447 = vcmp.eq.s32.totalorder %v445, 0
  %v448 = vxor.u32 %v442, 2147483648
  %v449 = vsel %vm447, %v441, %v448
  %vm450 = vcmp.eq.s32.totalorder %v445, 2
  %v451 = vxor.u32 %v441, 2147483648
  %v452 = vsel %vm450, %v451, %v442
  %v453 = vsel %vm446, %v449, %v452
  %v454 = vsel %vm443, nan, %v453
  %v455 = vand.u32 2147483647, %v114
  %vm456 = vcmp.le.f32.partialorder %v455, 0.7853982
  %vm457 = vcmp.lt.s32.totalorder %v114, 0
  %v458 = vand.u32 %v114, 2139095040
  %v459 = vshrl.u32 %v458, 23
  %v460 = vsub.s32 %v459, 127
  %v461 = vand.u32 2147483647, %v114
  %v462 = vand.u32 %v461, 8388607
  %v463 = vor.u32 %v462, 8388608
  %v464 = vsub.s32 0, %v463
  %v465 = vadd.s32 %v460, 1
  %vm466 = vcmp.gt.s32.totalorder %v465, 0
  %v467 = vsel %vm466, %v465, 0
  %v468 = vshrl.u32 %v467, 5
  %v469 = vand.u32 %v467, 31
  %v470 = vsub.s32 32, %v469
  %v471 = vshrl.u32 683565275, %v470
  %v472 = vshll.u32 683565275, %v469
  %v473 = vshrl.u32 2475754826, %v470
  %v474 = vor.u32 %v472, %v473
  %v475 = vshll.u32 2475754826, %v469
  %v476 = vshrl.u32 2131351028, %v470
  %v477 = vor.u32 %v475, %v476
  %v478 = vshll.u32 2131351028, %v469
  %v479 = vshrl.u32 2102212464, %v470
  %v480 = vor.u32 %v478, %v479
  %v481 = vshll.u32 2102212464, %v469
  %v482 = vshrl.u32 920167782, %v470
  %v483 = vor.u32 %v481, %v482
  %v484 = vshll.u32 920167782, %v469
  %v485 = vshrl.u32 1326507024, %v470
  %v486 = vor.u32 %v484, %v485
  %vm487 = vcmp.lt.s32.totalorder %v468, 1
  %vm488 = vcmp.lt.s32.totalorder %v468, 2
  %vm489 = vcmp.lt.s32.totalorder %v468, 3
  %vm490 = vcmp.lt.s32.totalorder %v468, 4
  %v491 = vsel %vm487, %v471, %v474
  %v492 = vsel %vm490, %v480, 2102212464
  %v493 = vsel %vm489, %v477, %v492
  %v494 = vsel %vm488, %v491, %v493
  %v495 = vsel %vm487, %v474, %v477
  %v496 = vsel %vm490, %v483, 920167782
  %v497 = vsel %vm489, %v480, %v496
  %v498 = vsel %vm488, %v495, %v497
  %v499 = vsel %vm487, %v477, %v480
  %v500 = vsel %vm490, %v486, 1326507024
  %v501 = vsel %vm489, %v483, %v500
  %v502 = vsel %vm488, %v499, %v501
  %v503 = vshll.u32 %v463, 8
  %v504 = vmul.u32.u64.compose %v503, %v502
  %v505 = vextract.low.u32 %v504
  %v506 = vextract.high.u32 %v504
  %v507 = vmul.u32.u64.compose %v503, %v498
  %v508 = vextract.low.u32 %v507
  %v509 = vextract.high.u32 %v507
  %v510 = vmul.u32 %v503, %v494
  %v511 = vadd.s32 %v506, %v508
  %vm512 = vc.u32 %v506, %v508
  %v513 = vadd.s32 %v509, 1
  %v514 = vsel %vm512, %v513, %v509
  %v515 = vadd.s32 %v510, %v514
  %v516 = vadd.s32 %v515, 536870912
  %v517 = vshrl.u32 %v516, 30
  %v518 = vshll.u32 %v517, 30
  %v519 = vsub.s32 %v515, %v518
  %vm520 = vcmp.lt.s32.totalorder %v519, 0
  %v521 = vsub.s32 0, %v519
  %v522 = vsel %vm520, %v521, %v519
  %v523 = vclz %v522
  %v524 = vsub.s32 %v523, 2
  %vm525 = vcmp.gt.s32.totalorder 0, %v524
  %v526 = vsel %vm525, 0, %v524
  %v527 = vsub.s32 32, %v526
  %v528 = vshll.u32 %v519, %v526
  %v529 = vshrl.u32 %v511, %v527
  %v530 = vor.u32 %v528, %v529
  %v531 = vsub.s32 4294967266, %v526
  %v532 = vadd.s32 %v531, 127
  %v533 = vshll.u32 %v532, 23
  %v534 = vor.u32 4788187, %v533
  %v535 = vand.u32 2147483647, %v534
  %v537 = vcvt.s32.f32 %v530
  %v538 = vmul.f32 %v537, %v535
  %v539 = vxor.u32 %v538, 2147483648
  %v540 = vsel %vm457, %v539, %v538
  %v541 = vsub.s32 4, %v517
  %v542 = vsel %vm457, %v541, %v517
  %v543 = vsel %vm456, %v114, %v540
  %v544 = vsel %vm456, 0, %v542
  %v545 = vcosq.f32.pop %v543
  %v546 = vsinq.f32.pop %v543
  %vm547 = vweird.f32 %v114
  %v548 = vadd.s32 %v544, 3
  %v549 = vand.u32 %v548, 3
  %vm550 = vcmp.lt.s32.totalorder %v549, 2
  %vm551 = vcmp.eq.s32.totalorder %v549, 0
  %v552 = vxor.u32 %v546, 2147483648
  %v553 = vsel %vm551, %v545, %v552
  %vm554 = vcmp.eq.s32.totalorder %v549, 2
  %v555 = vxor.u32 %v545, 2147483648
  %v556 = vsel %vm554, %v555, %v546
  %v557 = vsel %vm550, %v553, %v556
  %v558 = vsel %vm547, nan, %v557
  %v559 = vand.u32 2147483647, %v115
  %vm560 = vcmp.le.f32.partialorder %v559, 0.7853982
  %vm561 = vcmp.lt.s32.totalorder %v115, 0
  %v562 = vand.u32 %v115, 2139095040
  %v563 = vshrl.u32 %v562, 23
  %v564 = vsub.s32 %v563, 127
  %v565 = vand.u32 2147483647, %v115
  %v566 = vand.u32 %v565, 8388607
  %v567 = vor.u32 %v566, 8388608
  %v568 = vsub.s32 0, %v567
  %v569 = vadd.s32 %v564, 1
  %vm570 = vcmp.gt.s32.totalorder %v569, 0
  %v571 = vsel %vm570, %v569, 0
  %v572 = vshrl.u32 %v571, 5
  %v573 = vand.u32 %v571, 31
  %v574 = vsub.s32 32, %v573
  %v575 = vshrl.u32 683565275, %v574
  %v576 = vshll.u32 683565275, %v573
  %v577 = vshrl.u32 2475754826, %v574
  %v578 = vor.u32 %v576, %v577
  %v579 = vshll.u32 2475754826, %v573
  %v580 = vshrl.u32 2131351028, %v574
  %v581 = vor.u32 %v579, %v580
  %v582 = vshll.u32 2131351028, %v573
  %v583 = vshrl.u32 2102212464, %v574
  %v584 = vor.u32 %v582, %v583
  %v585 = vshll.u32 2102212464, %v573
  %v586 = vshrl.u32 920167782, %v574
  %v587 = vor.u32 %v585, %v586
  %v588 = vshll.u32 920167782, %v573
  %v589 = vshrl.u32 1326507024, %v574
  %v590 = vor.u32 %v588, %v589
  %vm591 = vcmp.lt.s32.totalorder %v572, 1
  %vm592 = vcmp.lt.s32.totalorder %v572, 2
  %vm593 = vcmp.lt.s32.totalorder %v572, 3
  %vm594 = vcmp.lt.s32.totalorder %v572, 4
  %v595 = vsel %vm591, %v575, %v578
  %v596 = vsel %vm594, %v584, 2102212464
  %v597 = vsel %vm593, %v581, %v596
  %v598 = vsel %vm592, %v595, %v597
  %v599 = vsel %vm591, %v578, %v581
  %v600 = vsel %vm594, %v587, 920167782
  %v601 = vsel %vm593, %v584, %v600
  %v602 = vsel %vm592, %v599, %v601
  %v603 = vsel %vm591, %v581, %v584
  %v604 = vsel %vm594, %v590, 1326507024
  %v605 = vsel %vm593, %v587, %v604
  %v606 = vsel %vm592, %v603, %v605
  %v607 = vshll.u32 %v567, 8
  %v608 = vmul.u32.u64.compose %v607, %v606
  %v609 = vextract.low.u32 %v608
  %v610 = vextract.high.u32 %v608
  %v611 = vmul.u32.u64.compose %v607, %v602
  %v612 = vextract.low.u32 %v611
  %v613 = vextract.high.u32 %v611
  %v614 = vmul.u32 %v607, %v598
  %v615 = vadd.s32 %v610, %v612
  %vm616 = vc.u32 %v610, %v612
  %v617 = vadd.s32 %v613, 1
  %v618 = vsel %vm616, %v617, %v613
  %v619 = vadd.s32 %v614, %v618
  %v620 = vadd.s32 %v619, 536870912
  %v621 = vshrl.u32 %v620, 30
  %v622 = vshll.u32 %v621, 30
  %v623 = vsub.s32 %v619, %v622
  %vm624 = vcmp.lt.s32.totalorder %v623, 0
  %v625 = vsub.s32 0, %v623
  %v626 = vsel %vm624, %v625, %v623
  %v627 = vclz %v626
  %v628 = vsub.s32 %v627, 2
  %vm629 = vcmp.gt.s32.totalorder 0, %v628
  %v630 = vsel %vm629, 0, %v628
  %v631 = vsub.s32 32, %v630
  %v632 = vshll.u32 %v623, %v630
  %v633 = vshrl.u32 %v615, %v631
  %v634 = vor.u32 %v632, %v633
  %v635 = vsub.s32 4294967266, %v630
  %v636 = vadd.s32 %v635, 127
  %v637 = vshll.u32 %v636, 23
  %v638 = vor.u32 4788187, %v637
  %v639 = vand.u32 2147483647, %v638
  %v641 = vcvt.s32.f32 %v634
  %v642 = vmul.f32 %v641, %v639
  %v643 = vxor.u32 %v642, 2147483648
  %v644 = vsel %vm561, %v643, %v642
  %v645 = vsub.s32 4, %v621
  %v646 = vsel %vm561, %v645, %v621
  %v647 = vsel %vm560, %v115, %v644
  %v648 = vsel %vm560, 0, %v646
  %v649 = vcosq.f32.pop %v647
  %v650 = vsinq.f32.pop %v647
  %vm651 = vweird.f32 %v115
  %v652 = vadd.s32 %v648, 3
  %v653 = vand.u32 %v652, 3
  %vm654 = vcmp.lt.s32.totalorder %v653, 2
  %vm655 = vcmp.eq.s32.totalorder %v653, 0
  %v656 = vxor.u32 %v650, 2147483648
  %v657 = vsel %vm655, %v649, %v656
  %vm658 = vcmp.eq.s32.totalorder %v653, 2
  %v659 = vxor.u32 %v649, 2147483648
  %v660 = vsel %vm658, %v659, %v650
  %v661 = vsel %vm654, %v657, %v660
  %v662 = vsel %vm651, nan, %v661
  %v663 = vand.u32 2147483647, %v116
  %vm664 = vcmp.le.f32.partialorder %v663, 0.7853982
  %vm665 = vcmp.lt.s32.totalorder %v116, 0
  %v666 = vand.u32 %v116, 2139095040
  %v667 = vshrl.u32 %v666, 23
  %v668 = vsub.s32 %v667, 127
  %v669 = vand.u32 2147483647, %v116
  %v670 = vand.u32 %v669, 8388607
  %v671 = vor.u32 %v670, 8388608
  %v672 = vsub.s32 0, %v671
  %v673 = vadd.s32 %v668, 1
  %vm674 = vcmp.gt.s32.totalorder %v673, 0
  %v675 = vsel %vm674, %v673, 0
  %v676 = vshrl.u32 %v675, 5
  %v677 = vand.u32 %v675, 31
  %v678 = vsub.s32 32, %v677
  %v679 = vshrl.u32 683565275, %v678
  %v680 = vshll.u32 683565275, %v677
  %v681 = vshrl.u32 2475754826, %v678
  %v682 = vor.u32 %v680, %v681
  %v683 = vshll.u32 2475754826, %v677
  %v684 = vshrl.u32 2131351028, %v678
  %v685 = vor.u32 %v683, %v684
  %v686 = vshll.u32 2131351028, %v677
  %v687 = vshrl.u32 2102212464, %v678
  %v688 = vor.u32 %v686, %v687
  %v689 = vshll.u32 2102212464, %v677
  %v690 = vshrl.u32 920167782, %v678
  %v691 = vor.u32 %v689, %v690
  %v692 = vshll.u32 920167782, %v677
  %v693 = vshrl.u32 1326507024, %v678
  %v694 = vor.u32 %v692, %v693
  %vm695 = vcmp.lt.s32.totalorder %v676, 1
  %vm696 = vcmp.lt.s32.totalorder %v676, 2
  %vm697 = vcmp.lt.s32.totalorder %v676, 3
  %vm698 = vcmp.lt.s32.totalorder %v676, 4
  %v699 = vsel %vm695, %v679, %v682
  %v700 = vsel %vm698, %v688, 2102212464
  %v701 = vsel %vm697, %v685, %v700
  %v702 = vsel %vm696, %v699, %v701
  %v703 = vsel %vm695, %v682, %v685
  %v704 = vsel %vm698, %v691, 920167782
  %v705 = vsel %vm697, %v688, %v704
  %v706 = vsel %vm696, %v703, %v705
  %v707 = vsel %vm695, %v685, %v688
  %v708 = vsel %vm698, %v694, 1326507024
  %v709 = vsel %vm697, %v691, %v708
  %v710 = vsel %vm696, %v707, %v709
  %v711 = vshll.u32 %v671, 8
  %v712 = vmul.u32.u64.compose %v711, %v710
  %v713 = vextract.low.u32 %v712
  %v714 = vextract.high.u32 %v712
  %v715 = vmul.u32.u64.compose %v711, %v706
  %v716 = vextract.low.u32 %v715
  %v717 = vextract.high.u32 %v715
  %v718 = vmul.u32 %v711, %v702
  %v719 = vadd.s32 %v714, %v716
  %vm720 = vc.u32 %v714, %v716
  %v721 = vadd.s32 %v717, 1
  %v722 = vsel %vm720, %v721, %v717
  %v723 = vadd.s32 %v718, %v722
  %v724 = vadd.s32 %v723, 536870912
  %v725 = vshrl.u32 %v724, 30
  %v726 = vshll.u32 %v725, 30
  %v727 = vsub.s32 %v723, %v726
  %vm728 = vcmp.lt.s32.totalorder %v727, 0
  %v729 = vsub.s32 0, %v727
  %v730 = vsel %vm728, %v729, %v727
  %v731 = vclz %v730
  %v732 = vsub.s32 %v731, 2
  %vm733 = vcmp.gt.s32.totalorder 0, %v732
  %v734 = vsel %vm733, 0, %v732
  %v735 = vsub.s32 32, %v734
  %v736 = vshll.u32 %v727, %v734
  %v737 = vshrl.u32 %v719, %v735
  %v738 = vor.u32 %v736, %v737
  %v739 = vsub.s32 4294967266, %v734
  %v740 = vadd.s32 %v739, 127
  %v741 = vshll.u32 %v740, 23
  %v742 = vor.u32 4788187, %v741
  %v743 = vand.u32 2147483647, %v742
  %v745 = vcvt.s32.f32 %v738
  %v746 = vmul.f32 %v745, %v743
  %v747 = vxor.u32 %v746, 2147483648
  %v748 = vsel %vm665, %v747, %v746
  %v749 = vsub.s32 4, %v725
  %v750 = vsel %vm665, %v749, %v725
  %v751 = vsel %vm664, %v116, %v748
  %v752 = vsel %vm664, 0, %v750
  %v753 = vcosq.f32.pop %v751
  %v754 = vsinq.f32.pop %v751
  %vm755 = vweird.f32 %v116
  %v756 = vadd.s32 %v752, 3
  %v757 = vand.u32 %v756, 3
  %vm758 = vcmp.lt.s32.totalorder %v757, 2
  %vm759 = vcmp.eq.s32.totalorder %v757, 0
  %v760 = vxor.u32 %v754, 2147483648
  %v761 = vsel %vm759, %v753, %v760
  %vm762 = vcmp.eq.s32.totalorder %v757, 2
  %v763 = vxor.u32 %v753, 2147483648
  %v764 = vsel %vm762, %v763, %v754
  %v765 = vsel %vm758, %v761, %v764
  %v766 = vsel %vm755, nan, %v765
  %v767 = vand.u32 2147483647, %v117
  %vm768 = vcmp.le.f32.partialorder %v767, 0.7853982
  %vm769 = vcmp.lt.s32.totalorder %v117, 0
  %v770 = vand.u32 %v117, 2139095040
  %v771 = vshrl.u32 %v770, 23
  %v772 = vsub.s32 %v771, 127
  %v773 = vand.u32 2147483647, %v117
  %v774 = vand.u32 %v773, 8388607
  %v775 = vor.u32 %v774, 8388608
  %v776 = vsub.s32 0, %v775
  %v777 = vadd.s32 %v772, 1
  %vm778 = vcmp.gt.s32.totalorder %v777, 0
  %v779 = vsel %vm778, %v777, 0
  %v780 = vshrl.u32 %v779, 5
  %v781 = vand.u32 %v779, 31
  %v782 = vsub.s32 32, %v781
  %v783 = vshrl.u32 683565275, %v782
  %v784 = vshll.u32 683565275, %v781
  %v785 = vshrl.u32 2475754826, %v782
  %v786 = vor.u32 %v784, %v785
  %v787 = vshll.u32 2475754826, %v781
  %v788 = vshrl.u32 2131351028, %v782
  %v789 = vor.u32 %v787, %v788
  %v790 = vshll.u32 2131351028, %v781
  %v791 = vshrl.u32 2102212464, %v782
  %v792 = vor.u32 %v790, %v791
  %v793 = vshll.u32 2102212464, %v781
  %v794 = vshrl.u32 920167782, %v782
  %v795 = vor.u32 %v793, %v794
  %v796 = vshll.u32 920167782, %v781
  %v797 = vshrl.u32 1326507024, %v782
  %v798 = vor.u32 %v796, %v797
  %vm799 = vcmp.lt.s32.totalorder %v780, 1
  %vm800 = vcmp.lt.s32.totalorder %v780, 2
  %vm801 = vcmp.lt.s32.totalorder %v780, 3
  %vm802 = vcmp.lt.s32.totalorder %v780, 4
  %v803 = vsel %vm799, %v783, %v786
  %v804 = vsel %vm802, %v792, 2102212464
  %v805 = vsel %vm801, %v789, %v804
  %v806 = vsel %vm800, %v803, %v805
  %v807 = vsel %vm799, %v786, %v789
  %v808 = vsel %vm802, %v795, 920167782
  %v809 = vsel %vm801, %v792, %v808
  %v810 = vsel %vm800, %v807, %v809
  %v811 = vsel %vm799, %v789, %v792
  %v812 = vsel %vm802, %v798, 1326507024
  %v813 = vsel %vm801, %v795, %v812
  %v814 = vsel %vm800, %v811, %v813
  %v815 = vshll.u32 %v775, 8
  %v816 = vmul.u32.u64.compose %v815, %v814
  %v817 = vextract.low.u32 %v816
  %v818 = vextract.high.u32 %v816
  %v819 = vmul.u32.u64.compose %v815, %v810
  %v820 = vextract.low.u32 %v819
  %v821 = vextract.high.u32 %v819
  %v822 = vmul.u32 %v815, %v806
  %v823 = vadd.s32 %v818, %v820
  %vm824 = vc.u32 %v818, %v820
  %v825 = vadd.s32 %v821, 1
  %v826 = vsel %vm824, %v825, %v821
  %v827 = vadd.s32 %v822, %v826
  %v828 = vadd.s32 %v827, 536870912
  %v829 = vshrl.u32 %v828, 30
  %v830 = vshll.u32 %v829, 30
  %v831 = vsub.s32 %v827, %v830
  %vm832 = vcmp.lt.s32.totalorder %v831, 0
  %v833 = vsub.s32 0, %v831
  %v834 = vsel %vm832, %v833, %v831
  %v835 = vclz %v834
  %v836 = vsub.s32 %v835, 2
  %vm837 = vcmp.gt.s32.totalorder 0, %v836
  %v838 = vsel %vm837, 0, %v836
  %v839 = vsub.s32 32, %v838
  %v840 = vshll.u32 %v831, %v838
  %v841 = vshrl.u32 %v823, %v839
  %v842 = vor.u32 %v840, %v841
  %v843 = vsub.s32 4294967266, %v838
  %v844 = vadd.s32 %v843, 127
  %v845 = vshll.u32 %v844, 23
  %v846 = vor.u32 4788187, %v845
  %v847 = vand.u32 2147483647, %v846
  %v849 = vcvt.s32.f32 %v842
  %v850 = vmul.f32 %v849, %v847
  %v851 = vxor.u32 %v850, 2147483648
  %v852 = vsel %vm769, %v851, %v850
  %v853 = vsub.s32 4, %v829
  %v854 = vsel %vm769, %v853, %v829
  %v855 = vsel %vm768, %v117, %v852
  %v856 = vsel %vm768, 0, %v854
  %v857 = vcosq.f32.pop %v855
  %v858 = vsinq.f32.pop %v855
  %vm859 = vweird.f32 %v117
  %v860 = vadd.s32 %v856, 3
  %v861 = vand.u32 %v860, 3
  %vm862 = vcmp.lt.s32.totalorder %v861, 2
  %vm863 = vcmp.eq.s32.totalorder %v861, 0
  %v864 = vxor.u32 %v858, 2147483648
  %v865 = vsel %vm863, %v857, %v864
  %vm866 = vcmp.eq.s32.totalorder %v861, 2
  %v867 = vxor.u32 %v857, 2147483648
  %v868 = vsel %vm866, %v867, %v858
  %v869 = vsel %vm862, %v865, %v868
  %v870 = vsel %vm859, nan, %v869
  %v871 = vand.u32 2147483647, %v118
  %vm872 = vcmp.le.f32.partialorder %v871, 0.7853982
  %vm873 = vcmp.lt.s32.totalorder %v118, 0
  %v874 = vand.u32 %v118, 2139095040
  %v875 = vshrl.u32 %v874, 23
  %v876 = vsub.s32 %v875, 127
  %v877 = vand.u32 2147483647, %v118
  %v878 = vand.u32 %v877, 8388607
  %v879 = vor.u32 %v878, 8388608
  %v880 = vsub.s32 0, %v879
  %v881 = vadd.s32 %v876, 1
  %vm882 = vcmp.gt.s32.totalorder %v881, 0
  %v883 = vsel %vm882, %v881, 0
  %v884 = vshrl.u32 %v883, 5
  %v885 = vand.u32 %v883, 31
  %v886 = vsub.s32 32, %v885
  %v887 = vshrl.u32 683565275, %v886
  %v888 = vshll.u32 683565275, %v885
  %v889 = vshrl.u32 2475754826, %v886
  %v890 = vor.u32 %v888, %v889
  %v891 = vshll.u32 2475754826, %v885
  %v892 = vshrl.u32 2131351028, %v886
  %v893 = vor.u32 %v891, %v892
  %v894 = vshll.u32 2131351028, %v885
  %v895 = vshrl.u32 2102212464, %v886
  %v896 = vor.u32 %v894, %v895
  %v897 = vshll.u32 2102212464, %v885
  %v898 = vshrl.u32 920167782, %v886
  %v899 = vor.u32 %v897, %v898
  %v900 = vshll.u32 920167782, %v885
  %v901 = vshrl.u32 1326507024, %v886
  %v902 = vor.u32 %v900, %v901
  %vm903 = vcmp.lt.s32.totalorder %v884, 1
  %vm904 = vcmp.lt.s32.totalorder %v884, 2
  %vm905 = vcmp.lt.s32.totalorder %v884, 3
  %vm906 = vcmp.lt.s32.totalorder %v884, 4
  %v907 = vsel %vm903, %v887, %v890
  %v908 = vsel %vm906, %v896, 2102212464
  %v909 = vsel %vm905, %v893, %v908
  %v910 = vsel %vm904, %v907, %v909
  %v911 = vsel %vm903, %v890, %v893
  %v912 = vsel %vm906, %v899, 920167782
  %v913 = vsel %vm905, %v896, %v912
  %v914 = vsel %vm904, %v911, %v913
  %v915 = vsel %vm903, %v893, %v896
  %v916 = vsel %vm906, %v902, 1326507024
  %v917 = vsel %vm905, %v899, %v916
  %v918 = vsel %vm904, %v915, %v917
  %v919 = vshll.u32 %v879, 8
  %v920 = vmul.u32.u64.compose %v919, %v918
  %v921 = vextract.low.u32 %v920
  %v922 = vextract.high.u32 %v920
  %v923 = vmul.u32.u64.compose %v919, %v914
  %v924 = vextract.low.u32 %v923
  %v925 = vextract.high.u32 %v923
  %v926 = vmul.u32 %v919, %v910
  %v927 = vadd.s32 %v922, %v924
  %vm928 = vc.u32 %v922, %v924
  %v929 = vadd.s32 %v925, 1
  %v930 = vsel %vm928, %v929, %v925
  %v931 = vadd.s32 %v926, %v930
  %v932 = vadd.s32 %v931, 536870912
  %v933 = vshrl.u32 %v932, 30
  %v934 = vshll.u32 %v933, 30
  %v935 = vsub.s32 %v931, %v934
  %vm936 = vcmp.lt.s32.totalorder %v935, 0
  %v937 = vsub.s32 0, %v935
  %v938 = vsel %vm936, %v937, %v935
  %v939 = vclz %v938
  %v940 = vsub.s32 %v939, 2
  %vm941 = vcmp.gt.s32.totalorder 0, %v940
  %v942 = vsel %vm941, 0, %v940
  %v943 = vsub.s32 32, %v942
  %v944 = vshll.u32 %v935, %v942
  %v945 = vshrl.u32 %v927, %v943
  %v946 = vor.u32 %v944, %v945
  %v947 = vsub.s32 4294967266, %v942
  %v948 = vadd.s32 %v947, 127
  %v949 = vshll.u32 %v948, 23
  %v950 = vor.u32 4788187, %v949
  %v951 = vand.u32 2147483647, %v950
  %v953 = vcvt.s32.f32 %v946
  %v954 = vmul.f32 %v953, %v951
  %v955 = vxor.u32 %v954, 2147483648
  %v956 = vsel %vm873, %v955, %v954
  %v957 = vsub.s32 4, %v933
  %v958 = vsel %vm873, %v957, %v933
  %v959 = vsel %vm872, %v118, %v956
  %v960 = vsel %vm872, 0, %v958
  %v961 = vcosq.f32.pop %v959
  %v962 = vsinq.f32.pop %v959
  %vm963 = vweird.f32 %v118
  %v964 = vadd.s32 %v960, 3
  %v965 = vand.u32 %v964, 3
  %vm966 = vcmp.lt.s32.totalorder %v965, 2
  %vm967 = vcmp.eq.s32.totalorder %v965, 0
  %v968 = vxor.u32 %v962, 2147483648
  %v969 = vsel %vm967, %v961, %v968
  %vm970 = vcmp.eq.s32.totalorder %v965, 2
  %v971 = vxor.u32 %v961, 2147483648
  %v972 = vsel %vm970, %v971, %v962
  %v973 = vsel %vm966, %v969, %v972
  %v974 = vsel %vm963, nan, %v973
  %v975 = vand.u32 2147483647, %v119
  %vm976 = vcmp.le.f32.partialorder %v975, 0.7853982
  %vm977 = vcmp.lt.s32.totalorder %v119, 0
  %v978 = vand.u32 %v119, 2139095040
  %v979 = vshrl.u32 %v978, 23
  %v980 = vsub.s32 %v979, 127
  %v981 = vand.u32 2147483647, %v119
  %v982 = vand.u32 %v981, 8388607
  %v983 = vor.u32 %v982, 8388608
  %v984 = vsub.s32 0, %v983
  %v985 = vadd.s32 %v980, 1
  %vm986 = vcmp.gt.s32.totalorder %v985, 0
  %v987 = vsel %vm986, %v985, 0
  %v988 = vshrl.u32 %v987, 5
  %v989 = vand.u32 %v987, 31
  %v990 = vsub.s32 32, %v989
  %v991 = vshrl.u32 683565275, %v990
  %v992 = vshll.u32 683565275, %v989
  %v993 = vshrl.u32 2475754826, %v990
  %v994 = vor.u32 %v992, %v993
  %v995 = vshll.u32 2475754826, %v989
  %v996 = vshrl.u32 2131351028, %v990
  %v997 = vor.u32 %v995, %v996
  %v998 = vshll.u32 2131351028, %v989
  %v999 = vshrl.u32 2102212464, %v990
  %v1000 = vor.u32 %v998, %v999
  %v1001 = vshll.u32 2102212464, %v989
  %v1002 = vshrl.u32 920167782, %v990
  %v1003 = vor.u32 %v1001, %v1002
  %v1004 = vshll.u32 920167782, %v989
  %v1005 = vshrl.u32 1326507024, %v990
  %v1006 = vor.u32 %v1004, %v1005
  %vm1007 = vcmp.lt.s32.totalorder %v988, 1
  %vm1008 = vcmp.lt.s32.totalorder %v988, 2
  %vm1009 = vcmp.lt.s32.totalorder %v988, 3
  %vm1010 = vcmp.lt.s32.totalorder %v988, 4
  %v1011 = vsel %vm1007, %v991, %v994
  %v1012 = vsel %vm1010, %v1000, 2102212464
  %v1013 = vsel %vm1009, %v997, %v1012
  %v1014 = vsel %vm1008, %v1011, %v1013
  %v1015 = vsel %vm1007, %v994, %v997
  %v1016 = vsel %vm1010, %v1003, 920167782
  %v1017 = vsel %vm1009, %v1000, %v1016
  %v1018 = vsel %vm1008, %v1015, %v1017
  %v1019 = vsel %vm1007, %v997, %v1000
  %v1020 = vsel %vm1010, %v1006, 1326507024
  %v1021 = vsel %vm1009, %v1003, %v1020
  %v1022 = vsel %vm1008, %v1019, %v1021
  %v1023 = vshll.u32 %v983, 8
  %v1024 = vmul.u32.u64.compose %v1023, %v1022
  %v1025 = vextract.low.u32 %v1024
  %v1026 = vextract.high.u32 %v1024
  %v1027 = vmul.u32.u64.compose %v1023, %v1018
  %v1028 = vextract.low.u32 %v1027
  %v1029 = vextract.high.u32 %v1027
  %v1030 = vmul.u32 %v1023, %v1014
  %v1031 = vadd.s32 %v1026, %v1028
  %vm1032 = vc.u32 %v1026, %v1028
  %v1033 = vadd.s32 %v1029, 1
  %v1034 = vsel %vm1032, %v1033, %v1029
  %v1035 = vadd.s32 %v1030, %v1034
  %v1036 = vadd.s32 %v1035, 536870912
  %v1037 = vshrl.u32 %v1036, 30
  %v1038 = vshll.u32 %v1037, 30
  %v1039 = vsub.s32 %v1035, %v1038
  %vm1040 = vcmp.lt.s32.totalorder %v1039, 0
  %v1041 = vsub.s32 0, %v1039
  %v1042 = vsel %vm1040, %v1041, %v1039
  %v1043 = vclz %v1042
  %v1044 = vsub.s32 %v1043, 2
  %vm1045 = vcmp.gt.s32.totalorder 0, %v1044
  %v1046 = vsel %vm1045, 0, %v1044
  %v1047 = vsub.s32 32, %v1046
  %v1048 = vshll.u32 %v1039, %v1046
  %v1049 = vshrl.u32 %v1031, %v1047
  %v1050 = vor.u32 %v1048, %v1049
  %v1051 = vsub.s32 4294967266, %v1046
  %v1052 = vadd.s32 %v1051, 127
  %v1053 = vshll.u32 %v1052, 23
  %v1054 = vor.u32 4788187, %v1053
  %v1055 = vand.u32 2147483647, %v1054
  %v1057 = vcvt.s32.f32 %v1050
  %v1058 = vmul.f32 %v1057, %v1055
  %v1059 = vxor.u32 %v1058, 2147483648
  %v1060 = vsel %vm977, %v1059, %v1058
  %v1061 = vsub.s32 4, %v1037
  %v1062 = vsel %vm977, %v1061, %v1037
  %v1063 = vsel %vm976, %v119, %v1060
  %v1064 = vsel %vm976, 0, %v1062
  %v1065 = vcosq.f32.pop %v1063
  %v1066 = vsinq.f32.pop %v1063
  %vm1067 = vweird.f32 %v119
  %v1068 = vadd.s32 %v1064, 3
  %v1069 = vand.u32 %v1068, 3
  %vm1070 = vcmp.lt.s32.totalorder %v1069, 2
  %vm1071 = vcmp.eq.s32.totalorder %v1069, 0
  %v1072 = vxor.u32 %v1066, 2147483648
  %v1073 = vsel %vm1071, %v1065, %v1072
  %vm1074 = vcmp.eq.s32.totalorder %v1069, 2
  %v1075 = vxor.u32 %v1065, 2147483648
  %v1076 = vsel %vm1074, %v1075, %v1066
  %v1077 = vsel %vm1070, %v1073, %v1076
  %v1078 = vsel %vm1067, nan, %v1077
  %v1079 = vand.u32 2147483647, %v120
  %vm1080 = vcmp.le.f32.partialorder %v1079, 0.7853982
  %vm1081 = vcmp.lt.s32.totalorder %v120, 0
  %v1082 = vand.u32 %v120, 2139095040
  %v1083 = vshrl.u32 %v1082, 23
  %v1084 = vsub.s32 %v1083, 127
  %v1085 = vand.u32 2147483647, %v120
  %v1086 = vand.u32 %v1085, 8388607
  %v1087 = vor.u32 %v1086, 8388608
  %v1088 = vsub.s32 0, %v1087
  %v1089 = vadd.s32 %v1084, 1
  %vm1090 = vcmp.gt.s32.totalorder %v1089, 0
  %v1091 = vsel %vm1090, %v1089, 0
  %v1092 = vshrl.u32 %v1091, 5
  %v1093 = vand.u32 %v1091, 31
  %v1094 = vsub.s32 32, %v1093
  %v1095 = vshrl.u32 683565275, %v1094
  %v1096 = vshll.u32 683565275, %v1093
  %v1097 = vshrl.u32 2475754826, %v1094
  %v1098 = vor.u32 %v1096, %v1097
  %v1099 = vshll.u32 2475754826, %v1093
  %v1100 = vshrl.u32 2131351028, %v1094
  %v1101 = vor.u32 %v1099, %v1100
  %v1102 = vshll.u32 2131351028, %v1093
  %v1103 = vshrl.u32 2102212464, %v1094
  %v1104 = vor.u32 %v1102, %v1103
  %v1105 = vshll.u32 2102212464, %v1093
  %v1106 = vshrl.u32 920167782, %v1094
  %v1107 = vor.u32 %v1105, %v1106
  %v1108 = vshll.u32 920167782, %v1093
  %v1109 = vshrl.u32 1326507024, %v1094
  %v1110 = vor.u32 %v1108, %v1109
  %vm1111 = vcmp.lt.s32.totalorder %v1092, 1
  %vm1112 = vcmp.lt.s32.totalorder %v1092, 2
  %vm1113 = vcmp.lt.s32.totalorder %v1092, 3
  %vm1114 = vcmp.lt.s32.totalorder %v1092, 4
  %v1115 = vsel %vm1111, %v1095, %v1098
  %v1116 = vsel %vm1114, %v1104, 2102212464
  %v1117 = vsel %vm1113, %v1101, %v1116
  %v1118 = vsel %vm1112, %v1115, %v1117
  %v1119 = vsel %vm1111, %v1098, %v1101
  %v1120 = vsel %vm1114, %v1107, 920167782
  %v1121 = vsel %vm1113, %v1104, %v1120
  %v1122 = vsel %vm1112, %v1119, %v1121
  %v1123 = vsel %vm1111, %v1101, %v1104
  %v1124 = vsel %vm1114, %v1110, 1326507024
  %v1125 = vsel %vm1113, %v1107, %v1124
  %v1126 = vsel %vm1112, %v1123, %v1125
  %v1127 = vshll.u32 %v1087, 8
  %v1128 = vmul.u32.u64.compose %v1127, %v1126
  %v1129 = vextract.low.u32 %v1128
  %v1130 = vextract.high.u32 %v1128
  %v1131 = vmul.u32.u64.compose %v1127, %v1122
  %v1132 = vextract.low.u32 %v1131
  %v1133 = vextract.high.u32 %v1131
  %v1134 = vmul.u32 %v1127, %v1118
  %v1135 = vadd.s32 %v1130, %v1132
  %vm1136 = vc.u32 %v1130, %v1132
  %v1137 = vadd.s32 %v1133, 1
  %v1138 = vsel %vm1136, %v1137, %v1133
  %v1139 = vadd.s32 %v1134, %v1138
  %v1140 = vadd.s32 %v1139, 536870912
  %v1141 = vshrl.u32 %v1140, 30
  %v1142 = vshll.u32 %v1141, 30
  %v1143 = vsub.s32 %v1139, %v1142
  %vm1144 = vcmp.lt.s32.totalorder %v1143, 0
  %v1145 = vsub.s32 0, %v1143
  %v1146 = vsel %vm1144, %v1145, %v1143
  %v1147 = vclz %v1146
  %v1148 = vsub.s32 %v1147, 2
  %vm1149 = vcmp.gt.s32.totalorder 0, %v1148
  %v1150 = vsel %vm1149, 0, %v1148
  %v1151 = vsub.s32 32, %v1150
  %v1152 = vshll.u32 %v1143, %v1150
  %v1153 = vshrl.u32 %v1135, %v1151
  %v1154 = vor.u32 %v1152, %v1153
  %v1155 = vsub.s32 4294967266, %v1150
  %v1156 = vadd.s32 %v1155, 127
  %v1157 = vshll.u32 %v1156, 23
  %v1158 = vor.u32 4788187, %v1157
  %v1159 = vand.u32 2147483647, %v1158
  %v1161 = vcvt.s32.f32 %v1154
  %v1162 = vmul.f32 %v1161, %v1159
  %v1163 = vxor.u32 %v1162, 2147483648
  %v1164 = vsel %vm1081, %v1163, %v1162
  %v1165 = vsub.s32 4, %v1141
  %v1166 = vsel %vm1081, %v1165, %v1141
  %v1167 = vsel %vm1080, %v120, %v1164
  %v1168 = vsel %vm1080, 0, %v1166
  %v1169 = vcosq.f32.pop %v1167
  %v1170 = vsinq.f32.pop %v1167
  %vm1171 = vweird.f32 %v120
  %v1172 = vadd.s32 %v1168, 3
  %v1173 = vand.u32 %v1172, 3
  %vm1174 = vcmp.lt.s32.totalorder %v1173, 2
  %vm1175 = vcmp.eq.s32.totalorder %v1173, 0
  %v1176 = vxor.u32 %v1170, 2147483648
  %v1177 = vsel %vm1175, %v1169, %v1176
  %vm1178 = vcmp.eq.s32.totalorder %v1173, 2
  %v1179 = vxor.u32 %v1169, 2147483648
  %v1180 = vsel %vm1178, %v1179, %v1170
  %v1181 = vsel %vm1174, %v1177, %v1180
  %v1182 = vsel %vm1171, nan, %v1181
  %v1183 = vand.u32 2147483647, %v121
  %vm1184 = vcmp.le.f32.partialorder %v1183, 0.7853982
  %vm1185 = vcmp.lt.s32.totalorder %v121, 0
  %v1186 = vand.u32 %v121, 2139095040
  %v1187 = vshrl.u32 %v1186, 23
  %v1188 = vsub.s32 %v1187, 127
  %v1189 = vand.u32 2147483647, %v121
  %v1190 = vand.u32 %v1189, 8388607
  %v1191 = vor.u32 %v1190, 8388608
  %v1192 = vsub.s32 0, %v1191
  %v1193 = vadd.s32 %v1188, 1
  %vm1194 = vcmp.gt.s32.totalorder %v1193, 0
  %v1195 = vsel %vm1194, %v1193, 0
  %v1196 = vshrl.u32 %v1195, 5
  %v1197 = vand.u32 %v1195, 31
  %v1198 = vsub.s32 32, %v1197
  %v1199 = vshrl.u32 683565275, %v1198
  %v1200 = vshll.u32 683565275, %v1197
  %v1201 = vshrl.u32 2475754826, %v1198
  %v1202 = vor.u32 %v1200, %v1201
  %v1203 = vshll.u32 2475754826, %v1197
  %v1204 = vshrl.u32 2131351028, %v1198
  %v1205 = vor.u32 %v1203, %v1204
  %v1206 = vshll.u32 2131351028, %v1197
  %v1207 = vshrl.u32 2102212464, %v1198
  %v1208 = vor.u32 %v1206, %v1207
  %v1209 = vshll.u32 2102212464, %v1197
  %v1210 = vshrl.u32 920167782, %v1198
  %v1211 = vor.u32 %v1209, %v1210
  %v1212 = vshll.u32 920167782, %v1197
  %v1213 = vshrl.u32 1326507024, %v1198
  %v1214 = vor.u32 %v1212, %v1213
  %vm1215 = vcmp.lt.s32.totalorder %v1196, 1
  %vm1216 = vcmp.lt.s32.totalorder %v1196, 2
  %vm1217 = vcmp.lt.s32.totalorder %v1196, 3
  %vm1218 = vcmp.lt.s32.totalorder %v1196, 4
  %v1219 = vsel %vm1215, %v1199, %v1202
  %v1220 = vsel %vm1218, %v1208, 2102212464
  %v1221 = vsel %vm1217, %v1205, %v1220
  %v1222 = vsel %vm1216, %v1219, %v1221
  %v1223 = vsel %vm1215, %v1202, %v1205
  %v1224 = vsel %vm1218, %v1211, 920167782
  %v1225 = vsel %vm1217, %v1208, %v1224
  %v1226 = vsel %vm1216, %v1223, %v1225
  %v1227 = vsel %vm1215, %v1205, %v1208
  %v1228 = vsel %vm1218, %v1214, 1326507024
  %v1229 = vsel %vm1217, %v1211, %v1228
  %v1230 = vsel %vm1216, %v1227, %v1229
  %v1231 = vshll.u32 %v1191, 8
  %v1232 = vmul.u32.u64.compose %v1231, %v1230
  %v1233 = vextract.low.u32 %v1232
  %v1234 = vextract.high.u32 %v1232
  %v1235 = vmul.u32.u64.compose %v1231, %v1226
  %v1236 = vextract.low.u32 %v1235
  %v1237 = vextract.high.u32 %v1235
  %v1238 = vmul.u32 %v1231, %v1222
  %v1239 = vadd.s32 %v1234, %v1236
  %vm1240 = vc.u32 %v1234, %v1236
  %v1241 = vadd.s32 %v1237, 1
  %v1242 = vsel %vm1240, %v1241, %v1237
  %v1243 = vadd.s32 %v1238, %v1242
  %v1244 = vadd.s32 %v1243, 536870912
  %v1245 = vshrl.u32 %v1244, 30
  %v1246 = vshll.u32 %v1245, 30
  %v1247 = vsub.s32 %v1243, %v1246
  %vm1248 = vcmp.lt.s32.totalorder %v1247, 0
  %v1249 = vsub.s32 0, %v1247
  %v1250 = vsel %vm1248, %v1249, %v1247
  %v1251 = vclz %v1250
  %v1252 = vsub.s32 %v1251, 2
  %vm1253 = vcmp.gt.s32.totalorder 0, %v1252
  %v1254 = vsel %vm1253, 0, %v1252
  %v1255 = vsub.s32 32, %v1254
  %v1256 = vshll.u32 %v1247, %v1254
  %v1257 = vshrl.u32 %v1239, %v1255
  %v1258 = vor.u32 %v1256, %v1257
  %v1259 = vsub.s32 4294967266, %v1254
  %v1260 = vadd.s32 %v1259, 127
  %v1261 = vshll.u32 %v1260, 23
  %v1262 = vor.u32 4788187, %v1261
  %v1263 = vand.u32 2147483647, %v1262
  %v1265 = vcvt.s32.f32 %v1258
  %v1266 = vmul.f32 %v1265, %v1263
  %v1267 = vxor.u32 %v1266, 2147483648
  %v1268 = vsel %vm1185, %v1267, %v1266
  %v1269 = vsub.s32 4, %v1245
  %v1270 = vsel %vm1185, %v1269, %v1245
  %v1271 = vsel %vm1184, %v121, %v1268
  %v1272 = vsel %vm1184, 0, %v1270
  %v1273 = vcosq.f32.pop %v1271
  %v1274 = vsinq.f32.pop %v1271
  %vm1275 = vweird.f32 %v121
  %v1276 = vadd.s32 %v1272, 3
  %v1277 = vand.u32 %v1276, 3
  %vm1278 = vcmp.lt.s32.totalorder %v1277, 2
  %vm1279 = vcmp.eq.s32.totalorder %v1277, 0
  %v1280 = vxor.u32 %v1274, 2147483648
  %v1281 = vsel %vm1279, %v1273, %v1280
  %vm1282 = vcmp.eq.s32.totalorder %v1277, 2
  %v1283 = vxor.u32 %v1273, 2147483648
  %v1284 = vsel %vm1282, %v1283, %v1274
  %v1285 = vsel %vm1278, %v1281, %v1284
  %v1286 = vsel %vm1275, nan, %v1285
  %v1287 = vand.u32 2147483647, %v122
  %vm1288 = vcmp.le.f32.partialorder %v1287, 0.7853982
  %vm1289 = vcmp.lt.s32.totalorder %v122, 0
  %v1290 = vand.u32 %v122, 2139095040
  %v1291 = vshrl.u32 %v1290, 23
  %v1292 = vsub.s32 %v1291, 127
  %v1293 = vand.u32 2147483647, %v122
  %v1294 = vand.u32 %v1293, 8388607
  %v1295 = vor.u32 %v1294, 8388608
  %v1296 = vsub.s32 0, %v1295
  %v1297 = vadd.s32 %v1292, 1
  %vm1298 = vcmp.gt.s32.totalorder %v1297, 0
  %v1299 = vsel %vm1298, %v1297, 0
  %v1300 = vshrl.u32 %v1299, 5
  %v1301 = vand.u32 %v1299, 31
  %v1302 = vsub.s32 32, %v1301
  %v1303 = vshrl.u32 683565275, %v1302
  %v1304 = vshll.u32 683565275, %v1301
  %v1305 = vshrl.u32 2475754826, %v1302
  %v1306 = vor.u32 %v1304, %v1305
  %v1307 = vshll.u32 2475754826, %v1301
  %v1308 = vshrl.u32 2131351028, %v1302
  %v1309 = vor.u32 %v1307, %v1308
  %v1310 = vshll.u32 2131351028, %v1301
  %v1311 = vshrl.u32 2102212464, %v1302
  %v1312 = vor.u32 %v1310, %v1311
  %v1313 = vshll.u32 2102212464, %v1301
  %v1314 = vshrl.u32 920167782, %v1302
  %v1315 = vor.u32 %v1313, %v1314
  %v1316 = vshll.u32 920167782, %v1301
  %v1317 = vshrl.u32 1326507024, %v1302
  %v1318 = vor.u32 %v1316, %v1317
  %vm1319 = vcmp.lt.s32.totalorder %v1300, 1
  %vm1320 = vcmp.lt.s32.totalorder %v1300, 2
  %vm1321 = vcmp.lt.s32.totalorder %v1300, 3
  %vm1322 = vcmp.lt.s32.totalorder %v1300, 4
  %v1323 = vsel %vm1319, %v1303, %v1306
  %v1324 = vsel %vm1322, %v1312, 2102212464
  %v1325 = vsel %vm1321, %v1309, %v1324
  %v1326 = vsel %vm1320, %v1323, %v1325
  %v1327 = vsel %vm1319, %v1306, %v1309
  %v1328 = vsel %vm1322, %v1315, 920167782
  %v1329 = vsel %vm1321, %v1312, %v1328
  %v1330 = vsel %vm1320, %v1327, %v1329
  %v1331 = vsel %vm1319, %v1309, %v1312
  %v1332 = vsel %vm1322, %v1318, 1326507024
  %v1333 = vsel %vm1321, %v1315, %v1332
  %v1334 = vsel %vm1320, %v1331, %v1333
  %v1335 = vshll.u32 %v1295, 8
  %v1336 = vmul.u32.u64.compose %v1335, %v1334
  %v1337 = vextract.low.u32 %v1336
  %v1338 = vextract.high.u32 %v1336
  %v1339 = vmul.u32.u64.compose %v1335, %v1330
  %v1340 = vextract.low.u32 %v1339
  %v1341 = vextract.high.u32 %v1339
  %v1342 = vmul.u32 %v1335, %v1326
  %v1343 = vadd.s32 %v1338, %v1340
  %vm1344 = vc.u32 %v1338, %v1340
  %v1345 = vadd.s32 %v1341, 1
  %v1346 = vsel %vm1344, %v1345, %v1341
  %v1347 = vadd.s32 %v1342, %v1346
  %v1348 = vadd.s32 %v1347, 536870912
  %v1349 = vshrl.u32 %v1348, 30
  %v1350 = vshll.u32 %v1349, 30
  %v1351 = vsub.s32 %v1347, %v1350
  %vm1352 = vcmp.lt.s32.totalorder %v1351, 0
  %v1353 = vsub.s32 0, %v1351
  %v1354 = vsel %vm1352, %v1353, %v1351
  %v1355 = vclz %v1354
  %v1356 = vsub.s32 %v1355, 2
  %vm1357 = vcmp.gt.s32.totalorder 0, %v1356
  %v1358 = vsel %vm1357, 0, %v1356
  %v1359 = vsub.s32 32, %v1358
  %v1360 = vshll.u32 %v1351, %v1358
  %v1361 = vshrl.u32 %v1343, %v1359
  %v1362 = vor.u32 %v1360, %v1361
  %v1363 = vsub.s32 4294967266, %v1358
  %v1364 = vadd.s32 %v1363, 127
  %v1365 = vshll.u32 %v1364, 23
  %v1366 = vor.u32 4788187, %v1365
  %v1367 = vand.u32 2147483647, %v1366
  %v1369 = vcvt.s32.f32 %v1362
  %v1370 = vmul.f32 %v1369, %v1367
  %v1371 = vxor.u32 %v1370, 2147483648
  %v1372 = vsel %vm1289, %v1371, %v1370
  %v1373 = vsub.s32 4, %v1349
  %v1374 = vsel %vm1289, %v1373, %v1349
  %v1375 = vsel %vm1288, %v122, %v1372
  %v1376 = vsel %vm1288, 0, %v1374
  %v1377 = vcosq.f32.pop %v1375
  %v1378 = vsinq.f32.pop %v1375
  %vm1379 = vweird.f32 %v122
  %v1380 = vadd.s32 %v1376, 3
  %v1381 = vand.u32 %v1380, 3
  %vm1382 = vcmp.lt.s32.totalorder %v1381, 2
  %vm1383 = vcmp.eq.s32.totalorder %v1381, 0
  %v1384 = vxor.u32 %v1378, 2147483648
  %v1385 = vsel %vm1383, %v1377, %v1384
  %vm1386 = vcmp.eq.s32.totalorder %v1381, 2
  %v1387 = vxor.u32 %v1377, 2147483648
  %v1388 = vsel %vm1386, %v1387, %v1378
  %v1389 = vsel %vm1382, %v1385, %v1388
  %v1390 = vsel %vm1379, nan, %v1389
  %v1391 = vand.u32 2147483647, %v123
  %vm1392 = vcmp.le.f32.partialorder %v1391, 0.7853982
  %vm1393 = vcmp.lt.s32.totalorder %v123, 0
  %v1394 = vand.u32 %v123, 2139095040
  %v1395 = vshrl.u32 %v1394, 23
  %v1396 = vsub.s32 %v1395, 127
  %v1397 = vand.u32 2147483647, %v123
  %v1398 = vand.u32 %v1397, 8388607
  %v1399 = vor.u32 %v1398, 8388608
  %v1400 = vsub.s32 0, %v1399
  %v1401 = vadd.s32 %v1396, 1
  %vm1402 = vcmp.gt.s32.totalorder %v1401, 0
  %v1403 = vsel %vm1402, %v1401, 0
  %v1404 = vshrl.u32 %v1403, 5
  %v1405 = vand.u32 %v1403, 31
  %v1406 = vsub.s32 32, %v1405
  %v1407 = vshrl.u32 683565275, %v1406
  %v1408 = vshll.u32 683565275, %v1405
  %v1409 = vshrl.u32 2475754826, %v1406
  %v1410 = vor.u32 %v1408, %v1409
  %v1411 = vshll.u32 2475754826, %v1405
  %v1412 = vshrl.u32 2131351028, %v1406
  %v1413 = vor.u32 %v1411, %v1412
  %v1414 = vshll.u32 2131351028, %v1405
  %v1415 = vshrl.u32 2102212464, %v1406
  %v1416 = vor.u32 %v1414, %v1415
  %v1417 = vshll.u32 2102212464, %v1405
  %v1418 = vshrl.u32 920167782, %v1406
  %v1419 = vor.u32 %v1417, %v1418
  %v1420 = vshll.u32 920167782, %v1405
  %v1421 = vshrl.u32 1326507024, %v1406
  %v1422 = vor.u32 %v1420, %v1421
  %vm1423 = vcmp.lt.s32.totalorder %v1404, 1
  %vm1424 = vcmp.lt.s32.totalorder %v1404, 2
  %vm1425 = vcmp.lt.s32.totalorder %v1404, 3
  %vm1426 = vcmp.lt.s32.totalorder %v1404, 4
  %v1427 = vsel %vm1423, %v1407, %v1410
  %v1428 = vsel %vm1426, %v1416, 2102212464
  %v1429 = vsel %vm1425, %v1413, %v1428
  %v1430 = vsel %vm1424, %v1427, %v1429
  %v1431 = vsel %vm1423, %v1410, %v1413
  %v1432 = vsel %vm1426, %v1419, 920167782
  %v1433 = vsel %vm1425, %v1416, %v1432
  %v1434 = vsel %vm1424, %v1431, %v1433
  %v1435 = vsel %vm1423, %v1413, %v1416
  %v1436 = vsel %vm1426, %v1422, 1326507024
  %v1437 = vsel %vm1425, %v1419, %v1436
  %v1438 = vsel %vm1424, %v1435, %v1437
  %v1439 = vshll.u32 %v1399, 8
  %v1440 = vmul.u32.u64.compose %v1439, %v1438
  %v1441 = vextract.low.u32 %v1440
  %v1442 = vextract.high.u32 %v1440
  %v1443 = vmul.u32.u64.compose %v1439, %v1434
  %v1444 = vextract.low.u32 %v1443
  %v1445 = vextract.high.u32 %v1443
  %v1446 = vmul.u32 %v1439, %v1430
  %v1447 = vadd.s32 %v1442, %v1444
  %vm1448 = vc.u32 %v1442, %v1444
  %v1449 = vadd.s32 %v1445, 1
  %v1450 = vsel %vm1448, %v1449, %v1445
  %v1451 = vadd.s32 %v1446, %v1450
  %v1452 = vadd.s32 %v1451, 536870912
  %v1453 = vshrl.u32 %v1452, 30
  %v1454 = vshll.u32 %v1453, 30
  %v1455 = vsub.s32 %v1451, %v1454
  %vm1456 = vcmp.lt.s32.totalorder %v1455, 0
  %v1457 = vsub.s32 0, %v1455
  %v1458 = vsel %vm1456, %v1457, %v1455
  %v1459 = vclz %v1458
  %v1460 = vsub.s32 %v1459, 2
  %vm1461 = vcmp.gt.s32.totalorder 0, %v1460
  %v1462 = vsel %vm1461, 0, %v1460
  %v1463 = vsub.s32 32, %v1462
  %v1464 = vshll.u32 %v1455, %v1462
  %v1465 = vshrl.u32 %v1447, %v1463
  %v1466 = vor.u32 %v1464, %v1465
  %v1467 = vsub.s32 4294967266, %v1462
  %v1468 = vadd.s32 %v1467, 127
  %v1469 = vshll.u32 %v1468, 23
  %v1470 = vor.u32 4788187, %v1469
  %v1471 = vand.u32 2147483647, %v1470
  %v1473 = vcvt.s32.f32 %v1466
  %v1474 = vmul.f32 %v1473, %v1471
  %v1475 = vxor.u32 %v1474, 2147483648
  %v1476 = vsel %vm1393, %v1475, %v1474
  %v1477 = vsub.s32 4, %v1453
  %v1478 = vsel %vm1393, %v1477, %v1453
  %v1479 = vsel %vm1392, %v123, %v1476
  %v1480 = vsel %vm1392, 0, %v1478
  %v1481 = vcosq.f32.pop %v1479
  %v1482 = vsinq.f32.pop %v1479
  %vm1483 = vweird.f32 %v123
  %v1484 = vadd.s32 %v1480, 3
  %v1485 = vand.u32 %v1484, 3
  %vm1486 = vcmp.lt.s32.totalorder %v1485, 2
  %vm1487 = vcmp.eq.s32.totalorder %v1485, 0
  %v1488 = vxor.u32 %v1482, 2147483648
  %v1489 = vsel %vm1487, %v1481, %v1488
  %vm1490 = vcmp.eq.s32.totalorder %v1485, 2
  %v1491 = vxor.u32 %v1481, 2147483648
  %v1492 = vsel %vm1490, %v1491, %v1482
  %v1493 = vsel %vm1486, %v1489, %v1492
  %v1494 = vsel %vm1483, nan, %v1493
  %v1495 = vand.u32 2147483647, %v124
  %vm1496 = vcmp.le.f32.partialorder %v1495, 0.7853982
  %vm1497 = vcmp.lt.s32.totalorder %v124, 0
  %v1498 = vand.u32 %v124, 2139095040
  %v1499 = vshrl.u32 %v1498, 23
  %v1500 = vsub.s32 %v1499, 127
  %v1501 = vand.u32 2147483647, %v124
  %v1502 = vand.u32 %v1501, 8388607
  %v1503 = vor.u32 %v1502, 8388608
  %v1504 = vsub.s32 0, %v1503
  %v1505 = vadd.s32 %v1500, 1
  %vm1506 = vcmp.gt.s32.totalorder %v1505, 0
  %v1507 = vsel %vm1506, %v1505, 0
  %v1508 = vshrl.u32 %v1507, 5
  %v1509 = vand.u32 %v1507, 31
  %v1510 = vsub.s32 32, %v1509
  %v1511 = vshrl.u32 683565275, %v1510
  %v1512 = vshll.u32 683565275, %v1509
  %v1513 = vshrl.u32 2475754826, %v1510
  %v1514 = vor.u32 %v1512, %v1513
  %v1515 = vshll.u32 2475754826, %v1509
  %v1516 = vshrl.u32 2131351028, %v1510
  %v1517 = vor.u32 %v1515, %v1516
  %v1518 = vshll.u32 2131351028, %v1509
  %v1519 = vshrl.u32 2102212464, %v1510
  %v1520 = vor.u32 %v1518, %v1519
  %v1521 = vshll.u32 2102212464, %v1509
  %v1522 = vshrl.u32 920167782, %v1510
  %v1523 = vor.u32 %v1521, %v1522
  %v1524 = vshll.u32 920167782, %v1509
  %v1525 = vshrl.u32 1326507024, %v1510
  %v1526 = vor.u32 %v1524, %v1525
  %vm1527 = vcmp.lt.s32.totalorder %v1508, 1
  %vm1528 = vcmp.lt.s32.totalorder %v1508, 2
  %vm1529 = vcmp.lt.s32.totalorder %v1508, 3
  %vm1530 = vcmp.lt.s32.totalorder %v1508, 4
  %v1531 = vsel %vm1527, %v1511, %v1514
  %v1532 = vsel %vm1530, %v1520, 2102212464
  %v1533 = vsel %vm1529, %v1517, %v1532
  %v1534 = vsel %vm1528, %v1531, %v1533
  %v1535 = vsel %vm1527, %v1514, %v1517
  %v1536 = vsel %vm1530, %v1523, 920167782
  %v1537 = vsel %vm1529, %v1520, %v1536
  %v1538 = vsel %vm1528, %v1535, %v1537
  %v1539 = vsel %vm1527, %v1517, %v1520
  %v1540 = vsel %vm1530, %v1526, 1326507024
  %v1541 = vsel %vm1529, %v1523, %v1540
  %v1542 = vsel %vm1528, %v1539, %v1541
  %v1543 = vshll.u32 %v1503, 8
  %v1544 = vmul.u32.u64.compose %v1543, %v1542
  %v1545 = vextract.low.u32 %v1544
  %v1546 = vextract.high.u32 %v1544
  %v1547 = vmul.u32.u64.compose %v1543, %v1538
  %v1548 = vextract.low.u32 %v1547
  %v1549 = vextract.high.u32 %v1547
  %v1550 = vmul.u32 %v1543, %v1534
  %v1551 = vadd.s32 %v1546, %v1548
  %vm1552 = vc.u32 %v1546, %v1548
  %v1553 = vadd.s32 %v1549, 1
  %v1554 = vsel %vm1552, %v1553, %v1549
  %v1555 = vadd.s32 %v1550, %v1554
  %v1556 = vadd.s32 %v1555, 536870912
  %v1557 = vshrl.u32 %v1556, 30
  %v1558 = vshll.u32 %v1557, 30
  %v1559 = vsub.s32 %v1555, %v1558
  %vm1560 = vcmp.lt.s32.totalorder %v1559, 0
  %v1561 = vsub.s32 0, %v1559
  %v1562 = vsel %vm1560, %v1561, %v1559
  %v1563 = vclz %v1562
  %v1564 = vsub.s32 %v1563, 2
  %vm1565 = vcmp.gt.s32.totalorder 0, %v1564
  %v1566 = vsel %vm1565, 0, %v1564
  %v1567 = vsub.s32 32, %v1566
  %v1568 = vshll.u32 %v1559, %v1566
  %v1569 = vshrl.u32 %v1551, %v1567
  %v1570 = vor.u32 %v1568, %v1569
  %v1571 = vsub.s32 4294967266, %v1566
  %v1572 = vadd.s32 %v1571, 127
  %v1573 = vshll.u32 %v1572, 23
  %v1574 = vor.u32 4788187, %v1573
  %v1575 = vand.u32 2147483647, %v1574
  %v1577 = vcvt.s32.f32 %v1570
  %v1578 = vmul.f32 %v1577, %v1575
  %v1579 = vxor.u32 %v1578, 2147483648
  %v1580 = vsel %vm1497, %v1579, %v1578
  %v1581 = vsub.s32 4, %v1557
  %v1582 = vsel %vm1497, %v1581, %v1557
  %v1583 = vsel %vm1496, %v124, %v1580
  %v1584 = vsel %vm1496, 0, %v1582
  %v1585 = vcosq.f32.pop %v1583
  %v1586 = vsinq.f32.pop %v1583
  %vm1587 = vweird.f32 %v124
  %v1588 = vadd.s32 %v1584, 3
  %v1589 = vand.u32 %v1588, 3
  %vm1590 = vcmp.lt.s32.totalorder %v1589, 2
  %vm1591 = vcmp.eq.s32.totalorder %v1589, 0
  %v1592 = vxor.u32 %v1586, 2147483648
  %v1593 = vsel %vm1591, %v1585, %v1592
  %vm1594 = vcmp.eq.s32.totalorder %v1589, 2
  %v1595 = vxor.u32 %v1585, 2147483648
  %v1596 = vsel %vm1594, %v1595, %v1586
  %v1597 = vsel %vm1590, %v1593, %v1596
  %v1598 = vsel %vm1587, nan, %v1597
  %v1599 = vand.u32 2147483647, %v125
  %vm1600 = vcmp.le.f32.partialorder %v1599, 0.7853982
  %vm1601 = vcmp.lt.s32.totalorder %v125, 0
  %v1602 = vand.u32 %v125, 2139095040
  %v1603 = vshrl.u32 %v1602, 23
  %v1604 = vsub.s32 %v1603, 127
  %v1605 = vand.u32 2147483647, %v125
  %v1606 = vand.u32 %v1605, 8388607
  %v1607 = vor.u32 %v1606, 8388608
  %v1608 = vsub.s32 0, %v1607
  %v1609 = vadd.s32 %v1604, 1
  %vm1610 = vcmp.gt.s32.totalorder %v1609, 0
  %v1611 = vsel %vm1610, %v1609, 0
  %v1612 = vshrl.u32 %v1611, 5
  %v1613 = vand.u32 %v1611, 31
  %v1614 = vsub.s32 32, %v1613
  %v1615 = vshrl.u32 683565275, %v1614
  %v1616 = vshll.u32 683565275, %v1613
  %v1617 = vshrl.u32 2475754826, %v1614
  %v1618 = vor.u32 %v1616, %v1617
  %v1619 = vshll.u32 2475754826, %v1613
  %v1620 = vshrl.u32 2131351028, %v1614
  %v1621 = vor.u32 %v1619, %v1620
  %v1622 = vshll.u32 2131351028, %v1613
  %v1623 = vshrl.u32 2102212464, %v1614
  %v1624 = vor.u32 %v1622, %v1623
  %v1625 = vshll.u32 2102212464, %v1613
  %v1626 = vshrl.u32 920167782, %v1614
  %v1627 = vor.u32 %v1625, %v1626
  %v1628 = vshll.u32 920167782, %v1613
  %v1629 = vshrl.u32 1326507024, %v1614
  %v1630 = vor.u32 %v1628, %v1629
  %vm1631 = vcmp.lt.s32.totalorder %v1612, 1
  %vm1632 = vcmp.lt.s32.totalorder %v1612, 2
  %vm1633 = vcmp.lt.s32.totalorder %v1612, 3
  %vm1634 = vcmp.lt.s32.totalorder %v1612, 4
  %v1635 = vsel %vm1631, %v1615, %v1618
  %v1636 = vsel %vm1634, %v1624, 2102212464
  %v1637 = vsel %vm1633, %v1621, %v1636
  %v1638 = vsel %vm1632, %v1635, %v1637
  %v1639 = vsel %vm1631, %v1618, %v1621
  %v1640 = vsel %vm1634, %v1627, 920167782
  %v1641 = vsel %vm1633, %v1624, %v1640
  %v1642 = vsel %vm1632, %v1639, %v1641
  %v1643 = vsel %vm1631, %v1621, %v1624
  %v1644 = vsel %vm1634, %v1630, 1326507024
  %v1645 = vsel %vm1633, %v1627, %v1644
  %v1646 = vsel %vm1632, %v1643, %v1645
  %v1647 = vshll.u32 %v1607, 8
  %v1648 = vmul.u32.u64.compose %v1647, %v1646
  %v1649 = vextract.low.u32 %v1648
  %v1650 = vextract.high.u32 %v1648
  %v1651 = vmul.u32.u64.compose %v1647, %v1642
  %v1652 = vextract.low.u32 %v1651
  %v1653 = vextract.high.u32 %v1651
  %v1654 = vmul.u32 %v1647, %v1638
  %v1655 = vadd.s32 %v1650, %v1652
  %vm1656 = vc.u32 %v1650, %v1652
  %v1657 = vadd.s32 %v1653, 1
  %v1658 = vsel %vm1656, %v1657, %v1653
  %v1659 = vadd.s32 %v1654, %v1658
  %v1660 = vadd.s32 %v1659, 536870912
  %v1661 = vshrl.u32 %v1660, 30
  %v1662 = vshll.u32 %v1661, 30
  %v1663 = vsub.s32 %v1659, %v1662
  %vm1664 = vcmp.lt.s32.totalorder %v1663, 0
  %v1665 = vsub.s32 0, %v1663
  %v1666 = vsel %vm1664, %v1665, %v1663
  %v1667 = vclz %v1666
  %v1668 = vsub.s32 %v1667, 2
  %vm1669 = vcmp.gt.s32.totalorder 0, %v1668
  %v1670 = vsel %vm1669, 0, %v1668
  %v1671 = vsub.s32 32, %v1670
  %v1672 = vshll.u32 %v1663, %v1670
  %v1673 = vshrl.u32 %v1655, %v1671
  %v1674 = vor.u32 %v1672, %v1673
  %v1675 = vsub.s32 4294967266, %v1670
  %v1676 = vadd.s32 %v1675, 127
  %v1677 = vshll.u32 %v1676, 23
  %v1678 = vor.u32 4788187, %v1677
  %v1679 = vand.u32 2147483647, %v1678
  %v1681 = vcvt.s32.f32 %v1674
  %v1682 = vmul.f32 %v1681, %v1679
  %v1683 = vxor.u32 %v1682, 2147483648
  %v1684 = vsel %vm1601, %v1683, %v1682
  %v1685 = vsub.s32 4, %v1661
  %v1686 = vsel %vm1601, %v1685, %v1661
  %v1687 = vsel %vm1600, %v125, %v1684
  %v1688 = vsel %vm1600, 0, %v1686
  %v1689 = vcosq.f32.pop %v1687
  %v1690 = vsinq.f32.pop %v1687
  %vm1691 = vweird.f32 %v125
  %v1692 = vadd.s32 %v1688, 3
  %v1693 = vand.u32 %v1692, 3
  %vm1694 = vcmp.lt.s32.totalorder %v1693, 2
  %vm1695 = vcmp.eq.s32.totalorder %v1693, 0
  %v1696 = vxor.u32 %v1690, 2147483648
  %v1697 = vsel %vm1695, %v1689, %v1696
  %vm1698 = vcmp.eq.s32.totalorder %v1693, 2
  %v1699 = vxor.u32 %v1689, 2147483648
  %v1700 = vsel %vm1698, %v1699, %v1690
  %v1701 = vsel %vm1694, %v1697, %v1700
  %v1702 = vsel %vm1691, nan, %v1701
  %v1703 = vand.u32 2147483647, %v126
  %vm1704 = vcmp.le.f32.partialorder %v1703, 0.7853982
  %vm1705 = vcmp.lt.s32.totalorder %v126, 0
  %v1706 = vand.u32 %v126, 2139095040
  %v1707 = vshrl.u32 %v1706, 23
  %v1708 = vsub.s32 %v1707, 127
  %v1709 = vand.u32 2147483647, %v126
  %v1710 = vand.u32 %v1709, 8388607
  %v1711 = vor.u32 %v1710, 8388608
  %v1712 = vsub.s32 0, %v1711
  %v1713 = vadd.s32 %v1708, 1
  %vm1714 = vcmp.gt.s32.totalorder %v1713, 0
  %v1715 = vsel %vm1714, %v1713, 0
  %v1716 = vshrl.u32 %v1715, 5
  %v1717 = vand.u32 %v1715, 31
  %v1718 = vsub.s32 32, %v1717
  %v1719 = vshrl.u32 683565275, %v1718
  %v1720 = vshll.u32 683565275, %v1717
  %v1721 = vshrl.u32 2475754826, %v1718
  %v1722 = vor.u32 %v1720, %v1721
  %v1723 = vshll.u32 2475754826, %v1717
  %v1724 = vshrl.u32 2131351028, %v1718
  %v1725 = vor.u32 %v1723, %v1724
  %v1726 = vshll.u32 2131351028, %v1717
  %v1727 = vshrl.u32 2102212464, %v1718
  %v1728 = vor.u32 %v1726, %v1727
  %v1729 = vshll.u32 2102212464, %v1717
  %v1730 = vshrl.u32 920167782, %v1718
  %v1731 = vor.u32 %v1729, %v1730
  %v1732 = vshll.u32 920167782, %v1717
  %v1733 = vshrl.u32 1326507024, %v1718
  %v1734 = vor.u32 %v1732, %v1733
  %vm1735 = vcmp.lt.s32.totalorder %v1716, 1
  %vm1736 = vcmp.lt.s32.totalorder %v1716, 2
  %vm1737 = vcmp.lt.s32.totalorder %v1716, 3
  %vm1738 = vcmp.lt.s32.totalorder %v1716, 4
  %v1739 = vsel %vm1735, %v1719, %v1722
  %v1740 = vsel %vm1738, %v1728, 2102212464
  %v1741 = vsel %vm1737, %v1725, %v1740
  %v1742 = vsel %vm1736, %v1739, %v1741
  %v1743 = vsel %vm1735, %v1722, %v1725
  %v1744 = vsel %vm1738, %v1731, 920167782
  %v1745 = vsel %vm1737, %v1728, %v1744
  %v1746 = vsel %vm1736, %v1743, %v1745
  %v1747 = vsel %vm1735, %v1725, %v1728
  %v1748 = vsel %vm1738, %v1734, 1326507024
  %v1749 = vsel %vm1737, %v1731, %v1748
  %v1750 = vsel %vm1736, %v1747, %v1749
  %v1751 = vshll.u32 %v1711, 8
  %v1752 = vmul.u32.u64.compose %v1751, %v1750
  %v1753 = vextract.low.u32 %v1752
  %v1754 = vextract.high.u32 %v1752
  %v1755 = vmul.u32.u64.compose %v1751, %v1746
  %v1756 = vextract.low.u32 %v1755
  %v1757 = vextract.high.u32 %v1755
  %v1758 = vmul.u32 %v1751, %v1742
  %v1759 = vadd.s32 %v1754, %v1756
  %vm1760 = vc.u32 %v1754, %v1756
  %v1761 = vadd.s32 %v1757, 1
  %v1762 = vsel %vm1760, %v1761, %v1757
  %v1763 = vadd.s32 %v1758, %v1762
  %v1764 = vadd.s32 %v1763, 536870912
  %v1765 = vshrl.u32 %v1764, 30
  %v1766 = vshll.u32 %v1765, 30
  %v1767 = vsub.s32 %v1763, %v1766
  %vm1768 = vcmp.lt.s32.totalorder %v1767, 0
  %v1769 = vsub.s32 0, %v1767
  %v1770 = vsel %vm1768, %v1769, %v1767
  %v1771 = vclz %v1770
  %v1772 = vsub.s32 %v1771, 2
  %vm1773 = vcmp.gt.s32.totalorder 0, %v1772
  %v1774 = vsel %vm1773, 0, %v1772
  %v1775 = vsub.s32 32, %v1774
  %v1776 = vshll.u32 %v1767, %v1774
  %v1777 = vshrl.u32 %v1759, %v1775
  %v1778 = vor.u32 %v1776, %v1777
  %v1779 = vsub.s32 4294967266, %v1774
  %v1780 = vadd.s32 %v1779, 127
  %v1781 = vshll.u32 %v1780, 23
  %v1782 = vor.u32 4788187, %v1781
  %v1783 = vand.u32 2147483647, %v1782
  %v1785 = vcvt.s32.f32 %v1778
  %v1786 = vmul.f32 %v1785, %v1783
  %v1787 = vxor.u32 %v1786, 2147483648
  %v1788 = vsel %vm1705, %v1787, %v1786
  %v1789 = vsub.s32 4, %v1765
  %v1790 = vsel %vm1705, %v1789, %v1765
  %v1791 = vsel %vm1704, %v126, %v1788
  %v1792 = vsel %vm1704, 0, %v1790
  %v1793 = vcosq.f32.pop %v1791
  %v1794 = vsinq.f32.pop %v1791
  %vm1795 = vweird.f32 %v126
  %v1796 = vadd.s32 %v1792, 3
  %v1797 = vand.u32 %v1796, 3
  %vm1798 = vcmp.lt.s32.totalorder %v1797, 2
  %vm1799 = vcmp.eq.s32.totalorder %v1797, 0
  %v1800 = vxor.u32 %v1794, 2147483648
  %v1801 = vsel %vm1799, %v1793, %v1800
  %vm1802 = vcmp.eq.s32.totalorder %v1797, 2
  %v1803 = vxor.u32 %v1793, 2147483648
  %v1804 = vsel %vm1802, %v1803, %v1794
  %v1805 = vsel %vm1798, %v1801, %v1804
  %v1806 = vsel %vm1795, nan, %v1805
  %v1807 = vand.u32 2147483647, %v127
  %vm1808 = vcmp.le.f32.partialorder %v1807, 0.7853982
  %vm1809 = vcmp.lt.s32.totalorder %v127, 0
  %v1810 = vand.u32 %v127, 2139095040
  %v1811 = vshrl.u32 %v1810, 23
  %v1812 = vsub.s32 %v1811, 127
  %v1813 = vand.u32 2147483647, %v127
  %v1814 = vand.u32 %v1813, 8388607
  %v1815 = vor.u32 %v1814, 8388608
  %v1816 = vsub.s32 0, %v1815
  %v1817 = vadd.s32 %v1812, 1
  %vm1818 = vcmp.gt.s32.totalorder %v1817, 0
  %v1819 = vsel %vm1818, %v1817, 0
  %v1820 = vshrl.u32 %v1819, 5
  %v1821 = vand.u32 %v1819, 31
  %v1822 = vsub.s32 32, %v1821
  %v1823 = vshrl.u32 683565275, %v1822
  %v1824 = vshll.u32 683565275, %v1821
  %v1825 = vshrl.u32 2475754826, %v1822
  %v1826 = vor.u32 %v1824, %v1825
  %v1827 = vshll.u32 2475754826, %v1821
  %v1828 = vshrl.u32 2131351028, %v1822
  %v1829 = vor.u32 %v1827, %v1828
  %v1830 = vshll.u32 2131351028, %v1821
  %v1831 = vshrl.u32 2102212464, %v1822
  %v1832 = vor.u32 %v1830, %v1831
  %v1833 = vshll.u32 2102212464, %v1821
  %v1834 = vshrl.u32 920167782, %v1822
  %v1835 = vor.u32 %v1833, %v1834
  %v1836 = vshll.u32 920167782, %v1821
  %v1837 = vshrl.u32 1326507024, %v1822
  %v1838 = vor.u32 %v1836, %v1837
  %vm1839 = vcmp.lt.s32.totalorder %v1820, 1
  %vm1840 = vcmp.lt.s32.totalorder %v1820, 2
  %vm1841 = vcmp.lt.s32.totalorder %v1820, 3
  %vm1842 = vcmp.lt.s32.totalorder %v1820, 4
  %v1843 = vsel %vm1839, %v1823, %v1826
  %v1844 = vsel %vm1842, %v1832, 2102212464
  %v1845 = vsel %vm1841, %v1829, %v1844
  %v1846 = vsel %vm1840, %v1843, %v1845
  %v1847 = vsel %vm1839, %v1826, %v1829
  %v1848 = vsel %vm1842, %v1835, 920167782
  %v1849 = vsel %vm1841, %v1832, %v1848
  %v1850 = vsel %vm1840, %v1847, %v1849
  %v1851 = vsel %vm1839, %v1829, %v1832
  %v1852 = vsel %vm1842, %v1838, 1326507024
  %v1853 = vsel %vm1841, %v1835, %v1852
  %v1854 = vsel %vm1840, %v1851, %v1853
  %v1855 = vshll.u32 %v1815, 8
  %v1856 = vmul.u32.u64.compose %v1855, %v1854
  %v1857 = vextract.low.u32 %v1856
  %v1858 = vextract.high.u32 %v1856
  %v1859 = vmul.u32.u64.compose %v1855, %v1850
  %v1860 = vextract.low.u32 %v1859
  %v1861 = vextract.high.u32 %v1859
  %v1862 = vmul.u32 %v1855, %v1846
  %v1863 = vadd.s32 %v1858, %v1860
  %vm1864 = vc.u32 %v1858, %v1860
  %v1865 = vadd.s32 %v1861, 1
  %v1866 = vsel %vm1864, %v1865, %v1861
  %v1867 = vadd.s32 %v1862, %v1866
  %v1868 = vadd.s32 %v1867, 536870912
  %v1869 = vshrl.u32 %v1868, 30
  %v1870 = vshll.u32 %v1869, 30
  %v1871 = vsub.s32 %v1867, %v1870
  %vm1872 = vcmp.lt.s32.totalorder %v1871, 0
  %v1873 = vsub.s32 0, %v1871
  %v1874 = vsel %vm1872, %v1873, %v1871
  %v1875 = vclz %v1874
  %v1876 = vsub.s32 %v1875, 2
  %vm1877 = vcmp.gt.s32.totalorder 0, %v1876
  %v1878 = vsel %vm1877, 0, %v1876
  %v1879 = vsub.s32 32, %v1878
  %v1880 = vshll.u32 %v1871, %v1878
  %v1881 = vshrl.u32 %v1863, %v1879
  %v1882 = vor.u32 %v1880, %v1881
  %v1883 = vsub.s32 4294967266, %v1878
  %v1884 = vadd.s32 %v1883, 127
  %v1885 = vshll.u32 %v1884, 23
  %v1886 = vor.u32 4788187, %v1885
  %v1887 = vand.u32 2147483647, %v1886
  %v1889 = vcvt.s32.f32 %v1882
  %v1890 = vmul.f32 %v1889, %v1887
  %v1891 = vxor.u32 %v1890, 2147483648
  %v1892 = vsel %vm1809, %v1891, %v1890
  %v1893 = vsub.s32 4, %v1869
  %v1894 = vsel %vm1809, %v1893, %v1869
  %v1895 = vsel %vm1808, %v127, %v1892
  %v1896 = vsel %vm1808, 0, %v1894
  %v1897 = vcosq.f32.pop %v1895
  %v1898 = vsinq.f32.pop %v1895
  %vm1899 = vweird.f32 %v127
  %v1900 = vadd.s32 %v1896, 3
  %v1901 = vand.u32 %v1900, 3
  %vm1902 = vcmp.lt.s32.totalorder %v1901, 2
  %vm1903 = vcmp.eq.s32.totalorder %v1901, 0
  %v1904 = vxor.u32 %v1898, 2147483648
  %v1905 = vsel %vm1903, %v1897, %v1904
  %vm1906 = vcmp.eq.s32.totalorder %v1901, 2
  %v1907 = vxor.u32 %v1897, 2147483648
  %v1908 = vsel %vm1906, %v1907, %v1898
  %v1909 = vsel %vm1902, %v1905, %v1908
  %v1910 = vsel %vm1899, nan, %v1909
  %v1911 = vand.u32 2147483647, %v128
  %vm1912 = vcmp.le.f32.partialorder %v1911, 0.7853982
  %vm1913 = vcmp.lt.s32.totalorder %v128, 0
  %v1914 = vand.u32 %v128, 2139095040
  %v1915 = vshrl.u32 %v1914, 23
  %v1916 = vsub.s32 %v1915, 127
  %v1917 = vand.u32 2147483647, %v128
  %v1918 = vand.u32 %v1917, 8388607
  %v1919 = vor.u32 %v1918, 8388608
  %v1920 = vsub.s32 0, %v1919
  %v1921 = vadd.s32 %v1916, 1
  %vm1922 = vcmp.gt.s32.totalorder %v1921, 0
  %v1923 = vsel %vm1922, %v1921, 0
  %v1924 = vshrl.u32 %v1923, 5
  %v1925 = vand.u32 %v1923, 31
  %v1926 = vsub.s32 32, %v1925
  %v1927 = vshrl.u32 683565275, %v1926
  %v1928 = vshll.u32 683565275, %v1925
  %v1929 = vshrl.u32 2475754826, %v1926
  %v1930 = vor.u32 %v1928, %v1929
  %v1931 = vshll.u32 2475754826, %v1925
  %v1932 = vshrl.u32 2131351028, %v1926
  %v1933 = vor.u32 %v1931, %v1932
  %v1934 = vshll.u32 2131351028, %v1925
  %v1935 = vshrl.u32 2102212464, %v1926
  %v1936 = vor.u32 %v1934, %v1935
  %v1937 = vshll.u32 2102212464, %v1925
  %v1938 = vshrl.u32 920167782, %v1926
  %v1939 = vor.u32 %v1937, %v1938
  %v1940 = vshll.u32 920167782, %v1925
  %v1941 = vshrl.u32 1326507024, %v1926
  %v1942 = vor.u32 %v1940, %v1941
  %vm1943 = vcmp.lt.s32.totalorder %v1924, 1
  %vm1944 = vcmp.lt.s32.totalorder %v1924, 2
  %vm1945 = vcmp.lt.s32.totalorder %v1924, 3
  %vm1946 = vcmp.lt.s32.totalorder %v1924, 4
  %v1947 = vsel %vm1943, %v1927, %v1930
  %v1948 = vsel %vm1946, %v1936, 2102212464
  %v1949 = vsel %vm1945, %v1933, %v1948
  %v1950 = vsel %vm1944, %v1947, %v1949
  %v1951 = vsel %vm1943, %v1930, %v1933
  %v1952 = vsel %vm1946, %v1939, 920167782
  %v1953 = vsel %vm1945, %v1936, %v1952
  %v1954 = vsel %vm1944, %v1951, %v1953
  %v1955 = vsel %vm1943, %v1933, %v1936
  %v1956 = vsel %vm1946, %v1942, 1326507024
  %v1957 = vsel %vm1945, %v1939, %v1956
  %v1958 = vsel %vm1944, %v1955, %v1957
  %v1959 = vshll.u32 %v1919, 8
  %v1960 = vmul.u32.u64.compose %v1959, %v1958
  %v1961 = vextract.low.u32 %v1960
  %v1962 = vextract.high.u32 %v1960
  %v1963 = vmul.u32.u64.compose %v1959, %v1954
  %v1964 = vextract.low.u32 %v1963
  %v1965 = vextract.high.u32 %v1963
  %v1966 = vmul.u32 %v1959, %v1950
  %v1967 = vadd.s32 %v1962, %v1964
  %vm1968 = vc.u32 %v1962, %v1964
  %v1969 = vadd.s32 %v1965, 1
  %v1970 = vsel %vm1968, %v1969, %v1965
  %v1971 = vadd.s32 %v1966, %v1970
  %v1972 = vadd.s32 %v1971, 536870912
  %v1973 = vshrl.u32 %v1972, 30
  %v1974 = vshll.u32 %v1973, 30
  %v1975 = vsub.s32 %v1971, %v1974
  %vm1976 = vcmp.lt.s32.totalorder %v1975, 0
  %v1977 = vsub.s32 0, %v1975
  %v1978 = vsel %vm1976, %v1977, %v1975
  %v1979 = vclz %v1978
  %v1980 = vsub.s32 %v1979, 2
  %vm1981 = vcmp.gt.s32.totalorder 0, %v1980
  %v1982 = vsel %vm1981, 0, %v1980
  %v1983 = vsub.s32 32, %v1982
  %v1984 = vshll.u32 %v1975, %v1982
  %v1985 = vshrl.u32 %v1967, %v1983
  %v1986 = vor.u32 %v1984, %v1985
  %v1987 = vsub.s32 4294967266, %v1982
  %v1988 = vadd.s32 %v1987, 127
  %v1989 = vshll.u32 %v1988, 23
  %v1990 = vor.u32 4788187, %v1989
  %v1991 = vand.u32 2147483647, %v1990
  %v1993 = vcvt.s32.f32 %v1986
  %v1994 = vmul.f32 %v1993, %v1991
  %v1995 = vxor.u32 %v1994, 2147483648
  %v1996 = vsel %vm1913, %v1995, %v1994
  %v1997 = vsub.s32 4, %v1973
  %v1998 = vsel %vm1913, %v1997, %v1973
  %v1999 = vsel %vm1912, %v128, %v1996
  %v2000 = vsel %vm1912, 0, %v1998
  %v2001 = vcosq.f32.pop %v1999
  %v2002 = vsinq.f32.pop %v1999
  %vm2003 = vweird.f32 %v128
  %v2004 = vadd.s32 %v2000, 3
  %v2005 = vand.u32 %v2004, 3
  %vm2006 = vcmp.lt.s32.totalorder %v2005, 2
  %vm2007 = vcmp.eq.s32.totalorder %v2005, 0
  %v2008 = vxor.u32 %v2002, 2147483648
  %v2009 = vsel %vm2007, %v2001, %v2008
  %vm2010 = vcmp.eq.s32.totalorder %v2005, 2
  %v2011 = vxor.u32 %v2001, 2147483648
  %v2012 = vsel %vm2010, %v2011, %v2002
  %v2013 = vsel %vm2006, %v2009, %v2012
  %v2014 = vsel %vm2003, nan, %v2013
  %v2015 = vand.u32 2147483647, %v129
  %vm2016 = vcmp.le.f32.partialorder %v2015, 0.7853982
  %vm2017 = vcmp.lt.s32.totalorder %v129, 0
  %v2018 = vand.u32 %v129, 2139095040
  %v2019 = vshrl.u32 %v2018, 23
  %v2020 = vsub.s32 %v2019, 127
  %v2021 = vand.u32 2147483647, %v129
  %v2022 = vand.u32 %v2021, 8388607
  %v2023 = vor.u32 %v2022, 8388608
  %v2024 = vsub.s32 0, %v2023
  %v2025 = vadd.s32 %v2020, 1
  %vm2026 = vcmp.gt.s32.totalorder %v2025, 0
  %v2027 = vsel %vm2026, %v2025, 0
  %v2028 = vshrl.u32 %v2027, 5
  %v2029 = vand.u32 %v2027, 31
  %v2030 = vsub.s32 32, %v2029
  %v2031 = vshrl.u32 683565275, %v2030
  %v2032 = vshll.u32 683565275, %v2029
  %v2033 = vshrl.u32 2475754826, %v2030
  %v2034 = vor.u32 %v2032, %v2033
  %v2035 = vshll.u32 2475754826, %v2029
  %v2036 = vshrl.u32 2131351028, %v2030
  %v2037 = vor.u32 %v2035, %v2036
  %v2038 = vshll.u32 2131351028, %v2029
  %v2039 = vshrl.u32 2102212464, %v2030
  %v2040 = vor.u32 %v2038, %v2039
  %v2041 = vshll.u32 2102212464, %v2029
  %v2042 = vshrl.u32 920167782, %v2030
  %v2043 = vor.u32 %v2041, %v2042
  %v2044 = vshll.u32 920167782, %v2029
  %v2045 = vshrl.u32 1326507024, %v2030
  %v2046 = vor.u32 %v2044, %v2045
  %vm2047 = vcmp.lt.s32.totalorder %v2028, 1
  %vm2048 = vcmp.lt.s32.totalorder %v2028, 2
  %vm2049 = vcmp.lt.s32.totalorder %v2028, 3
  %vm2050 = vcmp.lt.s32.totalorder %v2028, 4
  %v2051 = vsel %vm2047, %v2031, %v2034
  %v2052 = vsel %vm2050, %v2040, 2102212464
  %v2053 = vsel %vm2049, %v2037, %v2052
  %v2054 = vsel %vm2048, %v2051, %v2053
  %v2055 = vsel %vm2047, %v2034, %v2037
  %v2056 = vsel %vm2050, %v2043, 920167782
  %v2057 = vsel %vm2049, %v2040, %v2056
  %v2058 = vsel %vm2048, %v2055, %v2057
  %v2059 = vsel %vm2047, %v2037, %v2040
  %v2060 = vsel %vm2050, %v2046, 1326507024
  %v2061 = vsel %vm2049, %v2043, %v2060
  %v2062 = vsel %vm2048, %v2059, %v2061
  %v2063 = vshll.u32 %v2023, 8
  %v2064 = vmul.u32.u64.compose %v2063, %v2062
  %v2065 = vextract.low.u32 %v2064
  %v2066 = vextract.high.u32 %v2064
  %v2067 = vmul.u32.u64.compose %v2063, %v2058
  %v2068 = vextract.low.u32 %v2067
  %v2069 = vextract.high.u32 %v2067
  %v2070 = vmul.u32 %v2063, %v2054
  %v2071 = vadd.s32 %v2066, %v2068
  %vm2072 = vc.u32 %v2066, %v2068
  %v2073 = vadd.s32 %v2069, 1
  %v2074 = vsel %vm2072, %v2073, %v2069
  %v2075 = vadd.s32 %v2070, %v2074
  %v2076 = vadd.s32 %v2075, 536870912
  %v2077 = vshrl.u32 %v2076, 30
  %v2078 = vshll.u32 %v2077, 30
  %v2079 = vsub.s32 %v2075, %v2078
  %vm2080 = vcmp.lt.s32.totalorder %v2079, 0
  %v2081 = vsub.s32 0, %v2079
  %v2082 = vsel %vm2080, %v2081, %v2079
  %v2083 = vclz %v2082
  %v2084 = vsub.s32 %v2083, 2
  %vm2085 = vcmp.gt.s32.totalorder 0, %v2084
  %v2086 = vsel %vm2085, 0, %v2084
  %v2087 = vsub.s32 32, %v2086
  %v2088 = vshll.u32 %v2079, %v2086
  %v2089 = vshrl.u32 %v2071, %v2087
  %v2090 = vor.u32 %v2088, %v2089
  %v2091 = vsub.s32 4294967266, %v2086
  %v2092 = vadd.s32 %v2091, 127
  %v2093 = vshll.u32 %v2092, 23
  %v2094 = vor.u32 4788187, %v2093
  %v2095 = vand.u32 2147483647, %v2094
  %v2097 = vcvt.s32.f32 %v2090
  %v2098 = vmul.f32 %v2097, %v2095
  %v2099 = vxor.u32 %v2098, 2147483648
  %v2100 = vsel %vm2017, %v2099, %v2098
  %v2101 = vsub.s32 4, %v2077
  %v2102 = vsel %vm2017, %v2101, %v2077
  %v2103 = vsel %vm2016, %v129, %v2100
  %v2104 = vsel %vm2016, 0, %v2102
  %v2105 = vcosq.f32.pop %v2103
  %v2106 = vsinq.f32.pop %v2103
  %vm2107 = vweird.f32 %v129
  %v2108 = vadd.s32 %v2104, 3
  %v2109 = vand.u32 %v2108, 3
  %vm2110 = vcmp.lt.s32.totalorder %v2109, 2
  %vm2111 = vcmp.eq.s32.totalorder %v2109, 0
  %v2112 = vxor.u32 %v2106, 2147483648
  %v2113 = vsel %vm2111, %v2105, %v2112
  %vm2114 = vcmp.eq.s32.totalorder %v2109, 2
  %v2115 = vxor.u32 %v2105, 2147483648
  %v2116 = vsel %vm2114, %v2115, %v2106
  %v2117 = vsel %vm2110, %v2113, %v2116
  %v2118 = vsel %vm2107, nan, %v2117
  %v2119 = vand.u32 2147483647, %v130
  %vm2120 = vcmp.le.f32.partialorder %v2119, 0.7853982
  %vm2121 = vcmp.lt.s32.totalorder %v130, 0
  %v2122 = vand.u32 %v130, 2139095040
  %v2123 = vshrl.u32 %v2122, 23
  %v2124 = vsub.s32 %v2123, 127
  %v2125 = vand.u32 2147483647, %v130
  %v2126 = vand.u32 %v2125, 8388607
  %v2127 = vor.u32 %v2126, 8388608
  %v2128 = vsub.s32 0, %v2127
  %v2129 = vadd.s32 %v2124, 1
  %vm2130 = vcmp.gt.s32.totalorder %v2129, 0
  %v2131 = vsel %vm2130, %v2129, 0
  %v2132 = vshrl.u32 %v2131, 5
  %v2133 = vand.u32 %v2131, 31
  %v2134 = vsub.s32 32, %v2133
  %v2135 = vshrl.u32 683565275, %v2134
  %v2136 = vshll.u32 683565275, %v2133
  %v2137 = vshrl.u32 2475754826, %v2134
  %v2138 = vor.u32 %v2136, %v2137
  %v2139 = vshll.u32 2475754826, %v2133
  %v2140 = vshrl.u32 2131351028, %v2134
  %v2141 = vor.u32 %v2139, %v2140
  %v2142 = vshll.u32 2131351028, %v2133
  %v2143 = vshrl.u32 2102212464, %v2134
  %v2144 = vor.u32 %v2142, %v2143
  %v2145 = vshll.u32 2102212464, %v2133
  %v2146 = vshrl.u32 920167782, %v2134
  %v2147 = vor.u32 %v2145, %v2146
  %v2148 = vshll.u32 920167782, %v2133
  %v2149 = vshrl.u32 1326507024, %v2134
  %v2150 = vor.u32 %v2148, %v2149
  %vm2151 = vcmp.lt.s32.totalorder %v2132, 1
  %vm2152 = vcmp.lt.s32.totalorder %v2132, 2
  %vm2153 = vcmp.lt.s32.totalorder %v2132, 3
  %vm2154 = vcmp.lt.s32.totalorder %v2132, 4
  %v2155 = vsel %vm2151, %v2135, %v2138
  %v2156 = vsel %vm2154, %v2144, 2102212464
  %v2157 = vsel %vm2153, %v2141, %v2156
  %v2158 = vsel %vm2152, %v2155, %v2157
  %v2159 = vsel %vm2151, %v2138, %v2141
  %v2160 = vsel %vm2154, %v2147, 920167782
  %v2161 = vsel %vm2153, %v2144, %v2160
  %v2162 = vsel %vm2152, %v2159, %v2161
  %v2163 = vsel %vm2151, %v2141, %v2144
  %v2164 = vsel %vm2154, %v2150, 1326507024
  %v2165 = vsel %vm2153, %v2147, %v2164
  %v2166 = vsel %vm2152, %v2163, %v2165
  %v2167 = vshll.u32 %v2127, 8
  %v2168 = vmul.u32.u64.compose %v2167, %v2166
  %v2169 = vextract.low.u32 %v2168
  %v2170 = vextract.high.u32 %v2168
  %v2171 = vmul.u32.u64.compose %v2167, %v2162
  %v2172 = vextract.low.u32 %v2171
  %v2173 = vextract.high.u32 %v2171
  %v2174 = vmul.u32 %v2167, %v2158
  %v2175 = vadd.s32 %v2170, %v2172
  %vm2176 = vc.u32 %v2170, %v2172
  %v2177 = vadd.s32 %v2173, 1
  %v2178 = vsel %vm2176, %v2177, %v2173
  %v2179 = vadd.s32 %v2174, %v2178
  %v2180 = vadd.s32 %v2179, 536870912
  %v2181 = vshrl.u32 %v2180, 30
  %v2182 = vshll.u32 %v2181, 30
  %v2183 = vsub.s32 %v2179, %v2182
  %vm2184 = vcmp.lt.s32.totalorder %v2183, 0
  %v2185 = vsub.s32 0, %v2183
  %v2186 = vsel %vm2184, %v2185, %v2183
  %v2187 = vclz %v2186
  %v2188 = vsub.s32 %v2187, 2
  %vm2189 = vcmp.gt.s32.totalorder 0, %v2188
  %v2190 = vsel %vm2189, 0, %v2188
  %v2191 = vsub.s32 32, %v2190
  %v2192 = vshll.u32 %v2183, %v2190
  %v2193 = vshrl.u32 %v2175, %v2191
  %v2194 = vor.u32 %v2192, %v2193
  %v2195 = vsub.s32 4294967266, %v2190
  %v2196 = vadd.s32 %v2195, 127
  %v2197 = vshll.u32 %v2196, 23
  %v2198 = vor.u32 4788187, %v2197
  %v2199 = vand.u32 2147483647, %v2198
  %v2201 = vcvt.s32.f32 %v2194
  %v2202 = vmul.f32 %v2201, %v2199
  %v2203 = vxor.u32 %v2202, 2147483648
  %v2204 = vsel %vm2121, %v2203, %v2202
  %v2205 = vsub.s32 4, %v2181
  %v2206 = vsel %vm2121, %v2205, %v2181
  %v2207 = vsel %vm2120, %v130, %v2204
  %v2208 = vsel %vm2120, 0, %v2206
  %v2209 = vcosq.f32.pop %v2207
  %v2210 = vsinq.f32.pop %v2207
  %vm2211 = vweird.f32 %v130
  %v2212 = vadd.s32 %v2208, 3
  %v2213 = vand.u32 %v2212, 3
  %vm2214 = vcmp.lt.s32.totalorder %v2213, 2
  %vm2215 = vcmp.eq.s32.totalorder %v2213, 0
  %v2216 = vxor.u32 %v2210, 2147483648
  %v2217 = vsel %vm2215, %v2209, %v2216
  %vm2218 = vcmp.eq.s32.totalorder %v2213, 2
  %v2219 = vxor.u32 %v2209, 2147483648
  %v2220 = vsel %vm2218, %v2219, %v2210
  %v2221 = vsel %vm2214, %v2217, %v2220
  %v2222 = vsel %vm2211, nan, %v2221
  %v2223 = vand.u32 2147483647, %v131
  %vm2224 = vcmp.le.f32.partialorder %v2223, 0.7853982
  %vm2225 = vcmp.lt.s32.totalorder %v131, 0
  %v2226 = vand.u32 %v131, 2139095040
  %v2227 = vshrl.u32 %v2226, 23
  %v2228 = vsub.s32 %v2227, 127
  %v2229 = vand.u32 2147483647, %v131
  %v2230 = vand.u32 %v2229, 8388607
  %v2231 = vor.u32 %v2230, 8388608
  %v2232 = vsub.s32 0, %v2231
  %v2233 = vadd.s32 %v2228, 1
  %vm2234 = vcmp.gt.s32.totalorder %v2233, 0
  %v2235 = vsel %vm2234, %v2233, 0
  %v2236 = vshrl.u32 %v2235, 5
  %v2237 = vand.u32 %v2235, 31
  %v2238 = vsub.s32 32, %v2237
  %v2239 = vshrl.u32 683565275, %v2238
  %v2240 = vshll.u32 683565275, %v2237
  %v2241 = vshrl.u32 2475754826, %v2238
  %v2242 = vor.u32 %v2240, %v2241
  %v2243 = vshll.u32 2475754826, %v2237
  %v2244 = vshrl.u32 2131351028, %v2238
  %v2245 = vor.u32 %v2243, %v2244
  %v2246 = vshll.u32 2131351028, %v2237
  %v2247 = vshrl.u32 2102212464, %v2238
  %v2248 = vor.u32 %v2246, %v2247
  %v2249 = vshll.u32 2102212464, %v2237
  %v2250 = vshrl.u32 920167782, %v2238
  %v2251 = vor.u32 %v2249, %v2250
  %v2252 = vshll.u32 920167782, %v2237
  %v2253 = vshrl.u32 1326507024, %v2238
  %v2254 = vor.u32 %v2252, %v2253
  %vm2255 = vcmp.lt.s32.totalorder %v2236, 1
  %vm2256 = vcmp.lt.s32.totalorder %v2236, 2
  %vm2257 = vcmp.lt.s32.totalorder %v2236, 3
  %vm2258 = vcmp.lt.s32.totalorder %v2236, 4
  %v2259 = vsel %vm2255, %v2239, %v2242
  %v2260 = vsel %vm2258, %v2248, 2102212464
  %v2261 = vsel %vm2257, %v2245, %v2260
  %v2262 = vsel %vm2256, %v2259, %v2261
  %v2263 = vsel %vm2255, %v2242, %v2245
  %v2264 = vsel %vm2258, %v2251, 920167782
  %v2265 = vsel %vm2257, %v2248, %v2264
  %v2266 = vsel %vm2256, %v2263, %v2265
  %v2267 = vsel %vm2255, %v2245, %v2248
  %v2268 = vsel %vm2258, %v2254, 1326507024
  %v2269 = vsel %vm2257, %v2251, %v2268
  %v2270 = vsel %vm2256, %v2267, %v2269
  %v2271 = vshll.u32 %v2231, 8
  %v2272 = vmul.u32.u64.compose %v2271, %v2270
  %v2273 = vextract.low.u32 %v2272
  %v2274 = vextract.high.u32 %v2272
  %v2275 = vmul.u32.u64.compose %v2271, %v2266
  %v2276 = vextract.low.u32 %v2275
  %v2277 = vextract.high.u32 %v2275
  %v2278 = vmul.u32 %v2271, %v2262
  %v2279 = vadd.s32 %v2274, %v2276
  %vm2280 = vc.u32 %v2274, %v2276
  %v2281 = vadd.s32 %v2277, 1
  %v2282 = vsel %vm2280, %v2281, %v2277
  %v2283 = vadd.s32 %v2278, %v2282
  %v2284 = vadd.s32 %v2283, 536870912
  %v2285 = vshrl.u32 %v2284, 30
  %v2286 = vshll.u32 %v2285, 30
  %v2287 = vsub.s32 %v2283, %v2286
  %vm2288 = vcmp.lt.s32.totalorder %v2287, 0
  %v2289 = vsub.s32 0, %v2287
  %v2290 = vsel %vm2288, %v2289, %v2287
  %v2291 = vclz %v2290
  %v2292 = vsub.s32 %v2291, 2
  %vm2293 = vcmp.gt.s32.totalorder 0, %v2292
  %v2294 = vsel %vm2293, 0, %v2292
  %v2295 = vsub.s32 32, %v2294
  %v2296 = vshll.u32 %v2287, %v2294
  %v2297 = vshrl.u32 %v2279, %v2295
  %v2298 = vor.u32 %v2296, %v2297
  %v2299 = vsub.s32 4294967266, %v2294
  %v2300 = vadd.s32 %v2299, 127
  %v2301 = vshll.u32 %v2300, 23
  %v2302 = vor.u32 4788187, %v2301
  %v2303 = vand.u32 2147483647, %v2302
  %v2305 = vcvt.s32.f32 %v2298
  %v2306 = vmul.f32 %v2305, %v2303
  %v2307 = vxor.u32 %v2306, 2147483648
  %v2308 = vsel %vm2225, %v2307, %v2306
  %v2309 = vsub.s32 4, %v2285
  %v2310 = vsel %vm2225, %v2309, %v2285
  %v2311 = vsel %vm2224, %v131, %v2308
  %v2312 = vsel %vm2224, 0, %v2310
  %v2313 = vcosq.f32.pop %v2311
  %v2314 = vsinq.f32.pop %v2311
  %vm2315 = vweird.f32 %v131
  %v2316 = vadd.s32 %v2312, 3
  %v2317 = vand.u32 %v2316, 3
  %vm2318 = vcmp.lt.s32.totalorder %v2317, 2
  %vm2319 = vcmp.eq.s32.totalorder %v2317, 0
  %v2320 = vxor.u32 %v2314, 2147483648
  %v2321 = vsel %vm2319, %v2313, %v2320
  %vm2322 = vcmp.eq.s32.totalorder %v2317, 2
  %v2323 = vxor.u32 %v2313, 2147483648
  %v2324 = vsel %vm2322, %v2323, %v2314
  %v2325 = vsel %vm2318, %v2321, %v2324
  %v2326 = vsel %vm2315, nan, %v2325
  %v2327 = vand.u32 2147483647, %v132
  %vm2328 = vcmp.le.f32.partialorder %v2327, 0.7853982
  %vm2329 = vcmp.lt.s32.totalorder %v132, 0
  %v2330 = vand.u32 %v132, 2139095040
  %v2331 = vshrl.u32 %v2330, 23
  %v2332 = vsub.s32 %v2331, 127
  %v2333 = vand.u32 2147483647, %v132
  %v2334 = vand.u32 %v2333, 8388607
  %v2335 = vor.u32 %v2334, 8388608
  %v2336 = vsub.s32 0, %v2335
  %v2337 = vadd.s32 %v2332, 1
  %vm2338 = vcmp.gt.s32.totalorder %v2337, 0
  %v2339 = vsel %vm2338, %v2337, 0
  %v2340 = vshrl.u32 %v2339, 5
  %v2341 = vand.u32 %v2339, 31
  %v2342 = vsub.s32 32, %v2341
  %v2343 = vshrl.u32 683565275, %v2342
  %v2344 = vshll.u32 683565275, %v2341
  %v2345 = vshrl.u32 2475754826, %v2342
  %v2346 = vor.u32 %v2344, %v2345
  %v2347 = vshll.u32 2475754826, %v2341
  %v2348 = vshrl.u32 2131351028, %v2342
  %v2349 = vor.u32 %v2347, %v2348
  %v2350 = vshll.u32 2131351028, %v2341
  %v2351 = vshrl.u32 2102212464, %v2342
  %v2352 = vor.u32 %v2350, %v2351
  %v2353 = vshll.u32 2102212464, %v2341
  %v2354 = vshrl.u32 920167782, %v2342
  %v2355 = vor.u32 %v2353, %v2354
  %v2356 = vshll.u32 920167782, %v2341
  %v2357 = vshrl.u32 1326507024, %v2342
  %v2358 = vor.u32 %v2356, %v2357
  %vm2359 = vcmp.lt.s32.totalorder %v2340, 1
  %vm2360 = vcmp.lt.s32.totalorder %v2340, 2
  %vm2361 = vcmp.lt.s32.totalorder %v2340, 3
  %vm2362 = vcmp.lt.s32.totalorder %v2340, 4
  %v2363 = vsel %vm2359, %v2343, %v2346
  %v2364 = vsel %vm2362, %v2352, 2102212464
  %v2365 = vsel %vm2361, %v2349, %v2364
  %v2366 = vsel %vm2360, %v2363, %v2365
  %v2367 = vsel %vm2359, %v2346, %v2349
  %v2368 = vsel %vm2362, %v2355, 920167782
  %v2369 = vsel %vm2361, %v2352, %v2368
  %v2370 = vsel %vm2360, %v2367, %v2369
  %v2371 = vsel %vm2359, %v2349, %v2352
  %v2372 = vsel %vm2362, %v2358, 1326507024
  %v2373 = vsel %vm2361, %v2355, %v2372
  %v2374 = vsel %vm2360, %v2371, %v2373
  %v2375 = vshll.u32 %v2335, 8
  %v2376 = vmul.u32.u64.compose %v2375, %v2374
  %v2377 = vextract.low.u32 %v2376
  %v2378 = vextract.high.u32 %v2376
  %v2379 = vmul.u32.u64.compose %v2375, %v2370
  %v2380 = vextract.low.u32 %v2379
  %v2381 = vextract.high.u32 %v2379
  %v2382 = vmul.u32 %v2375, %v2366
  %v2383 = vadd.s32 %v2378, %v2380
  %vm2384 = vc.u32 %v2378, %v2380
  %v2385 = vadd.s32 %v2381, 1
  %v2386 = vsel %vm2384, %v2385, %v2381
  %v2387 = vadd.s32 %v2382, %v2386
  %v2388 = vadd.s32 %v2387, 536870912
  %v2389 = vshrl.u32 %v2388, 30
  %v2390 = vshll.u32 %v2389, 30
  %v2391 = vsub.s32 %v2387, %v2390
  %vm2392 = vcmp.lt.s32.totalorder %v2391, 0
  %v2393 = vsub.s32 0, %v2391
  %v2394 = vsel %vm2392, %v2393, %v2391
  %v2395 = vclz %v2394
  %v2396 = vsub.s32 %v2395, 2
  %vm2397 = vcmp.gt.s32.totalorder 0, %v2396
  %v2398 = vsel %vm2397, 0, %v2396
  %v2399 = vsub.s32 32, %v2398
  %v2400 = vshll.u32 %v2391, %v2398
  %v2401 = vshrl.u32 %v2383, %v2399
  %v2402 = vor.u32 %v2400, %v2401
  %v2403 = vsub.s32 4294967266, %v2398
  %v2404 = vadd.s32 %v2403, 127
  %v2405 = vshll.u32 %v2404, 23
  %v2406 = vor.u32 4788187, %v2405
  %v2407 = vand.u32 2147483647, %v2406
  %v2409 = vcvt.s32.f32 %v2402
  %v2410 = vmul.f32 %v2409, %v2407
  %v2411 = vxor.u32 %v2410, 2147483648
  %v2412 = vsel %vm2329, %v2411, %v2410
  %v2413 = vsub.s32 4, %v2389
  %v2414 = vsel %vm2329, %v2413, %v2389
  %v2415 = vsel %vm2328, %v132, %v2412
  %v2416 = vsel %vm2328, 0, %v2414
  %v2417 = vcosq.f32.pop %v2415
  %v2418 = vsinq.f32.pop %v2415
  %vm2419 = vweird.f32 %v132
  %v2420 = vadd.s32 %v2416, 3
  %v2421 = vand.u32 %v2420, 3
  %vm2422 = vcmp.lt.s32.totalorder %v2421, 2
  %vm2423 = vcmp.eq.s32.totalorder %v2421, 0
  %v2424 = vxor.u32 %v2418, 2147483648
  %v2425 = vsel %vm2423, %v2417, %v2424
  %vm2426 = vcmp.eq.s32.totalorder %v2421, 2
  %v2427 = vxor.u32 %v2417, 2147483648
  %v2428 = vsel %vm2426, %v2427, %v2418
  %v2429 = vsel %vm2422, %v2425, %v2428
  %v2430 = vsel %vm2419, nan, %v2429
  %v2431 = vand.u32 2147483647, %v133
  %vm2432 = vcmp.le.f32.partialorder %v2431, 0.7853982
  %vm2433 = vcmp.lt.s32.totalorder %v133, 0
  %v2434 = vand.u32 %v133, 2139095040
  %v2435 = vshrl.u32 %v2434, 23
  %v2436 = vsub.s32 %v2435, 127
  %v2437 = vand.u32 2147483647, %v133
  %v2438 = vand.u32 %v2437, 8388607
  %v2439 = vor.u32 %v2438, 8388608
  %v2440 = vsub.s32 0, %v2439
  %v2441 = vadd.s32 %v2436, 1
  %vm2442 = vcmp.gt.s32.totalorder %v2441, 0
  %v2443 = vsel %vm2442, %v2441, 0
  %v2444 = vshrl.u32 %v2443, 5
  %v2445 = vand.u32 %v2443, 31
  %v2446 = vsub.s32 32, %v2445
  %v2447 = vshrl.u32 683565275, %v2446
  %v2448 = vshll.u32 683565275, %v2445
  %v2449 = vshrl.u32 2475754826, %v2446
  %v2450 = vor.u32 %v2448, %v2449
  %v2451 = vshll.u32 2475754826, %v2445
  %v2452 = vshrl.u32 2131351028, %v2446
  %v2453 = vor.u32 %v2451, %v2452
  %v2454 = vshll.u32 2131351028, %v2445
  %v2455 = vshrl.u32 2102212464, %v2446
  %v2456 = vor.u32 %v2454, %v2455
  %v2457 = vshll.u32 2102212464, %v2445
  %v2458 = vshrl.u32 920167782, %v2446
  %v2459 = vor.u32 %v2457, %v2458
  %v2460 = vshll.u32 920167782, %v2445
  %v2461 = vshrl.u32 1326507024, %v2446
  %v2462 = vor.u32 %v2460, %v2461
  %vm2463 = vcmp.lt.s32.totalorder %v2444, 1
  %vm2464 = vcmp.lt.s32.totalorder %v2444, 2
  %vm2465 = vcmp.lt.s32.totalorder %v2444, 3
  %vm2466 = vcmp.lt.s32.totalorder %v2444, 4
  %v2467 = vsel %vm2463, %v2447, %v2450
  %v2468 = vsel %vm2466, %v2456, 2102212464
  %v2469 = vsel %vm2465, %v2453, %v2468
  %v2470 = vsel %vm2464, %v2467, %v2469
  %v2471 = vsel %vm2463, %v2450, %v2453
  %v2472 = vsel %vm2466, %v2459, 920167782
  %v2473 = vsel %vm2465, %v2456, %v2472
  %v2474 = vsel %vm2464, %v2471, %v2473
  %v2475 = vsel %vm2463, %v2453, %v2456
  %v2476 = vsel %vm2466, %v2462, 1326507024
  %v2477 = vsel %vm2465, %v2459, %v2476
  %v2478 = vsel %vm2464, %v2475, %v2477
  %v2479 = vshll.u32 %v2439, 8
  %v2480 = vmul.u32.u64.compose %v2479, %v2478
  %v2481 = vextract.low.u32 %v2480
  %v2482 = vextract.high.u32 %v2480
  %v2483 = vmul.u32.u64.compose %v2479, %v2474
  %v2484 = vextract.low.u32 %v2483
  %v2485 = vextract.high.u32 %v2483
  %v2486 = vmul.u32 %v2479, %v2470
  %v2487 = vadd.s32 %v2482, %v2484
  %vm2488 = vc.u32 %v2482, %v2484
  %v2489 = vadd.s32 %v2485, 1
  %v2490 = vsel %vm2488, %v2489, %v2485
  %v2491 = vadd.s32 %v2486, %v2490
  %v2492 = vadd.s32 %v2491, 536870912
  %v2493 = vshrl.u32 %v2492, 30
  %v2494 = vshll.u32 %v2493, 30
  %v2495 = vsub.s32 %v2491, %v2494
  %vm2496 = vcmp.lt.s32.totalorder %v2495, 0
  %v2497 = vsub.s32 0, %v2495
  %v2498 = vsel %vm2496, %v2497, %v2495
  %v2499 = vclz %v2498
  %v2500 = vsub.s32 %v2499, 2
  %vm2501 = vcmp.gt.s32.totalorder 0, %v2500
  %v2502 = vsel %vm2501, 0, %v2500
  %v2503 = vsub.s32 32, %v2502
  %v2504 = vshll.u32 %v2495, %v2502
  %v2505 = vshrl.u32 %v2487, %v2503
  %v2506 = vor.u32 %v2504, %v2505
  %v2507 = vsub.s32 4294967266, %v2502
  %v2508 = vadd.s32 %v2507, 127
  %v2509 = vshll.u32 %v2508, 23
  %v2510 = vor.u32 4788187, %v2509
  %v2511 = vand.u32 2147483647, %v2510
  %v2513 = vcvt.s32.f32 %v2506
  %v2514 = vmul.f32 %v2513, %v2511
  %v2515 = vxor.u32 %v2514, 2147483648
  %v2516 = vsel %vm2433, %v2515, %v2514
  %v2517 = vsub.s32 4, %v2493
  %v2518 = vsel %vm2433, %v2517, %v2493
  %v2519 = vsel %vm2432, %v133, %v2516
  %v2520 = vsel %vm2432, 0, %v2518
  %v2521 = vcosq.f32.pop %v2519
  %v2522 = vsinq.f32.pop %v2519
  %vm2523 = vweird.f32 %v133
  %v2524 = vadd.s32 %v2520, 3
  %v2525 = vand.u32 %v2524, 3
  %vm2526 = vcmp.lt.s32.totalorder %v2525, 2
  %vm2527 = vcmp.eq.s32.totalorder %v2525, 0
  %v2528 = vxor.u32 %v2522, 2147483648
  %v2529 = vsel %vm2527, %v2521, %v2528
  %vm2530 = vcmp.eq.s32.totalorder %v2525, 2
  %v2531 = vxor.u32 %v2521, 2147483648
  %v2532 = vsel %vm2530, %v2531, %v2522
  %v2533 = vsel %vm2526, %v2529, %v2532
  %v2534 = vsel %vm2523, nan, %v2533
  %v2535 = vand.u32 2147483647, %v134
  %vm2536 = vcmp.le.f32.partialorder %v2535, 0.7853982
  %vm2537 = vcmp.lt.s32.totalorder %v134, 0
  %v2538 = vand.u32 %v134, 2139095040
  %v2539 = vshrl.u32 %v2538, 23
  %v2540 = vsub.s32 %v2539, 127
  %v2541 = vand.u32 2147483647, %v134
  %v2542 = vand.u32 %v2541, 8388607
  %v2543 = vor.u32 %v2542, 8388608
  %v2544 = vsub.s32 0, %v2543
  %v2545 = vadd.s32 %v2540, 1
  %vm2546 = vcmp.gt.s32.totalorder %v2545, 0
  %v2547 = vsel %vm2546, %v2545, 0
  %v2548 = vshrl.u32 %v2547, 5
  %v2549 = vand.u32 %v2547, 31
  %v2550 = vsub.s32 32, %v2549
  %v2551 = vshrl.u32 683565275, %v2550
  %v2552 = vshll.u32 683565275, %v2549
  %v2553 = vshrl.u32 2475754826, %v2550
  %v2554 = vor.u32 %v2552, %v2553
  %v2555 = vshll.u32 2475754826, %v2549
  %v2556 = vshrl.u32 2131351028, %v2550
  %v2557 = vor.u32 %v2555, %v2556
  %v2558 = vshll.u32 2131351028, %v2549
  %v2559 = vshrl.u32 2102212464, %v2550
  %v2560 = vor.u32 %v2558, %v2559
  %v2561 = vshll.u32 2102212464, %v2549
  %v2562 = vshrl.u32 920167782, %v2550
  %v2563 = vor.u32 %v2561, %v2562
  %v2564 = vshll.u32 920167782, %v2549
  %v2565 = vshrl.u32 1326507024, %v2550
  %v2566 = vor.u32 %v2564, %v2565
  %vm2567 = vcmp.lt.s32.totalorder %v2548, 1
  %vm2568 = vcmp.lt.s32.totalorder %v2548, 2
  %vm2569 = vcmp.lt.s32.totalorder %v2548, 3
  %vm2570 = vcmp.lt.s32.totalorder %v2548, 4
  %v2571 = vsel %vm2567, %v2551, %v2554
  %v2572 = vsel %vm2570, %v2560, 2102212464
  %v2573 = vsel %vm2569, %v2557, %v2572
  %v2574 = vsel %vm2568, %v2571, %v2573
  %v2575 = vsel %vm2567, %v2554, %v2557
  %v2576 = vsel %vm2570, %v2563, 920167782
  %v2577 = vsel %vm2569, %v2560, %v2576
  %v2578 = vsel %vm2568, %v2575, %v2577
  %v2579 = vsel %vm2567, %v2557, %v2560
  %v2580 = vsel %vm2570, %v2566, 1326507024
  %v2581 = vsel %vm2569, %v2563, %v2580
  %v2582 = vsel %vm2568, %v2579, %v2581
  %v2583 = vshll.u32 %v2543, 8
  %v2584 = vmul.u32.u64.compose %v2583, %v2582
  %v2585 = vextract.low.u32 %v2584
  %v2586 = vextract.high.u32 %v2584
  %v2587 = vmul.u32.u64.compose %v2583, %v2578
  %v2588 = vextract.low.u32 %v2587
  %v2589 = vextract.high.u32 %v2587
  %v2590 = vmul.u32 %v2583, %v2574
  %v2591 = vadd.s32 %v2586, %v2588
  %vm2592 = vc.u32 %v2586, %v2588
  %v2593 = vadd.s32 %v2589, 1
  %v2594 = vsel %vm2592, %v2593, %v2589
  %v2595 = vadd.s32 %v2590, %v2594
  %v2596 = vadd.s32 %v2595, 536870912
  %v2597 = vshrl.u32 %v2596, 30
  %v2598 = vshll.u32 %v2597, 30
  %v2599 = vsub.s32 %v2595, %v2598
  %vm2600 = vcmp.lt.s32.totalorder %v2599, 0
  %v2601 = vsub.s32 0, %v2599
  %v2602 = vsel %vm2600, %v2601, %v2599
  %v2603 = vclz %v2602
  %v2604 = vsub.s32 %v2603, 2
  %vm2605 = vcmp.gt.s32.totalorder 0, %v2604
  %v2606 = vsel %vm2605, 0, %v2604
  %v2607 = vsub.s32 32, %v2606
  %v2608 = vshll.u32 %v2599, %v2606
  %v2609 = vshrl.u32 %v2591, %v2607
  %v2610 = vor.u32 %v2608, %v2609
  %v2611 = vsub.s32 4294967266, %v2606
  %v2612 = vadd.s32 %v2611, 127
  %v2613 = vshll.u32 %v2612, 23
  %v2614 = vor.u32 4788187, %v2613
  %v2615 = vand.u32 2147483647, %v2614
  %v2617 = vcvt.s32.f32 %v2610
  %v2618 = vmul.f32 %v2617, %v2615
  %v2619 = vxor.u32 %v2618, 2147483648
  %v2620 = vsel %vm2537, %v2619, %v2618
  %v2621 = vsub.s32 4, %v2597
  %v2622 = vsel %vm2537, %v2621, %v2597
  %v2623 = vsel %vm2536, %v134, %v2620
  %v2624 = vsel %vm2536, 0, %v2622
  %v2625 = vcosq.f32.pop %v2623
  %v2626 = vsinq.f32.pop %v2623
  %vm2627 = vweird.f32 %v134
  %v2628 = vadd.s32 %v2624, 3
  %v2629 = vand.u32 %v2628, 3
  %vm2630 = vcmp.lt.s32.totalorder %v2629, 2
  %vm2631 = vcmp.eq.s32.totalorder %v2629, 0
  %v2632 = vxor.u32 %v2626, 2147483648
  %v2633 = vsel %vm2631, %v2625, %v2632
  %vm2634 = vcmp.eq.s32.totalorder %v2629, 2
  %v2635 = vxor.u32 %v2625, 2147483648
  %v2636 = vsel %vm2634, %v2635, %v2626
  %v2637 = vsel %vm2630, %v2633, %v2636
  %v2638 = vsel %vm2627, nan, %v2637
  %v2639 = vand.u32 2147483647, %v135
  %vm2640 = vcmp.le.f32.partialorder %v2639, 0.7853982
  %vm2641 = vcmp.lt.s32.totalorder %v135, 0
  %v2642 = vand.u32 %v135, 2139095040
  %v2643 = vshrl.u32 %v2642, 23
  %v2644 = vsub.s32 %v2643, 127
  %v2645 = vand.u32 2147483647, %v135
  %v2646 = vand.u32 %v2645, 8388607
  %v2647 = vor.u32 %v2646, 8388608
  %v2648 = vsub.s32 0, %v2647
  %v2649 = vadd.s32 %v2644, 1
  %vm2650 = vcmp.gt.s32.totalorder %v2649, 0
  %v2651 = vsel %vm2650, %v2649, 0
  %v2652 = vshrl.u32 %v2651, 5
  %v2653 = vand.u32 %v2651, 31
  %v2654 = vsub.s32 32, %v2653
  %v2655 = vshrl.u32 683565275, %v2654
  %v2656 = vshll.u32 683565275, %v2653
  %v2657 = vshrl.u32 2475754826, %v2654
  %v2658 = vor.u32 %v2656, %v2657
  %v2659 = vshll.u32 2475754826, %v2653
  %v2660 = vshrl.u32 2131351028, %v2654
  %v2661 = vor.u32 %v2659, %v2660
  %v2662 = vshll.u32 2131351028, %v2653
  %v2663 = vshrl.u32 2102212464, %v2654
  %v2664 = vor.u32 %v2662, %v2663
  %v2665 = vshll.u32 2102212464, %v2653
  %v2666 = vshrl.u32 920167782, %v2654
  %v2667 = vor.u32 %v2665, %v2666
  %v2668 = vshll.u32 920167782, %v2653
  %v2669 = vshrl.u32 1326507024, %v2654
  %v2670 = vor.u32 %v2668, %v2669
  %vm2671 = vcmp.lt.s32.totalorder %v2652, 1
  %vm2672 = vcmp.lt.s32.totalorder %v2652, 2
  %vm2673 = vcmp.lt.s32.totalorder %v2652, 3
  %vm2674 = vcmp.lt.s32.totalorder %v2652, 4
  %v2675 = vsel %vm2671, %v2655, %v2658
  %v2676 = vsel %vm2674, %v2664, 2102212464
  %v2677 = vsel %vm2673, %v2661, %v2676
  %v2678 = vsel %vm2672, %v2675, %v2677
  %v2679 = vsel %vm2671, %v2658, %v2661
  %v2680 = vsel %vm2674, %v2667, 920167782
  %v2681 = vsel %vm2673, %v2664, %v2680
  %v2682 = vsel %vm2672, %v2679, %v2681
  %v2683 = vsel %vm2671, %v2661, %v2664
  %v2684 = vsel %vm2674, %v2670, 1326507024
  %v2685 = vsel %vm2673, %v2667, %v2684
  %v2686 = vsel %vm2672, %v2683, %v2685
  %v2687 = vshll.u32 %v2647, 8
  %v2688 = vmul.u32.u64.compose %v2687, %v2686
  %v2689 = vextract.low.u32 %v2688
  %v2690 = vextract.high.u32 %v2688
  %v2691 = vmul.u32.u64.compose %v2687, %v2682
  %v2692 = vextract.low.u32 %v2691
  %v2693 = vextract.high.u32 %v2691
  %v2694 = vmul.u32 %v2687, %v2678
  %v2695 = vadd.s32 %v2690, %v2692
  %vm2696 = vc.u32 %v2690, %v2692
  %v2697 = vadd.s32 %v2693, 1
  %v2698 = vsel %vm2696, %v2697, %v2693
  %v2699 = vadd.s32 %v2694, %v2698
  %v2700 = vadd.s32 %v2699, 536870912
  %v2701 = vshrl.u32 %v2700, 30
  %v2702 = vshll.u32 %v2701, 30
  %v2703 = vsub.s32 %v2699, %v2702
  %vm2704 = vcmp.lt.s32.totalorder %v2703, 0
  %v2705 = vsub.s32 0, %v2703
  %v2706 = vsel %vm2704, %v2705, %v2703
  %v2707 = vclz %v2706
  %v2708 = vsub.s32 %v2707, 2
  %vm2709 = vcmp.gt.s32.totalorder 0, %v2708
  %v2710 = vsel %vm2709, 0, %v2708
  %v2711 = vsub.s32 32, %v2710
  %v2712 = vshll.u32 %v2703, %v2710
  %v2713 = vshrl.u32 %v2695, %v2711
  %v2714 = vor.u32 %v2712, %v2713
  %v2715 = vsub.s32 4294967266, %v2710
  %v2716 = vadd.s32 %v2715, 127
  %v2717 = vshll.u32 %v2716, 23
  %v2718 = vor.u32 4788187, %v2717
  %v2719 = vand.u32 2147483647, %v2718
  %v2721 = vcvt.s32.f32 %v2714
  %v2722 = vmul.f32 %v2721, %v2719
  %v2723 = vxor.u32 %v2722, 2147483648
  %v2724 = vsel %vm2641, %v2723, %v2722
  %v2725 = vsub.s32 4, %v2701
  %v2726 = vsel %vm2641, %v2725, %v2701
  %v2727 = vsel %vm2640, %v135, %v2724
  %v2728 = vsel %vm2640, 0, %v2726
  %v2729 = vcosq.f32.pop %v2727
  %v2730 = vsinq.f32.pop %v2727
  %vm2731 = vweird.f32 %v135
  %v2732 = vadd.s32 %v2728, 3
  %v2733 = vand.u32 %v2732, 3
  %vm2734 = vcmp.lt.s32.totalorder %v2733, 2
  %vm2735 = vcmp.eq.s32.totalorder %v2733, 0
  %v2736 = vxor.u32 %v2730, 2147483648
  %v2737 = vsel %vm2735, %v2729, %v2736
  %vm2738 = vcmp.eq.s32.totalorder %v2733, 2
  %v2739 = vxor.u32 %v2729, 2147483648
  %v2740 = vsel %vm2738, %v2739, %v2730
  %v2741 = vsel %vm2734, %v2737, %v2740
  %v2742 = vsel %vm2731, nan, %v2741
  %v2743 = vand.u32 2147483647, %v136
  %vm2744 = vcmp.le.f32.partialorder %v2743, 0.7853982
  %vm2745 = vcmp.lt.s32.totalorder %v136, 0
  %v2746 = vand.u32 %v136, 2139095040
  %v2747 = vshrl.u32 %v2746, 23
  %v2748 = vsub.s32 %v2747, 127
  %v2749 = vand.u32 2147483647, %v136
  %v2750 = vand.u32 %v2749, 8388607
  %v2751 = vor.u32 %v2750, 8388608
  %v2752 = vsub.s32 0, %v2751
  %v2753 = vadd.s32 %v2748, 1
  %vm2754 = vcmp.gt.s32.totalorder %v2753, 0
  %v2755 = vsel %vm2754, %v2753, 0
  %v2756 = vshrl.u32 %v2755, 5
  %v2757 = vand.u32 %v2755, 31
  %v2758 = vsub.s32 32, %v2757
  %v2759 = vshrl.u32 683565275, %v2758
  %v2760 = vshll.u32 683565275, %v2757
  %v2761 = vshrl.u32 2475754826, %v2758
  %v2762 = vor.u32 %v2760, %v2761
  %v2763 = vshll.u32 2475754826, %v2757
  %v2764 = vshrl.u32 2131351028, %v2758
  %v2765 = vor.u32 %v2763, %v2764
  %v2766 = vshll.u32 2131351028, %v2757
  %v2767 = vshrl.u32 2102212464, %v2758
  %v2768 = vor.u32 %v2766, %v2767
  %v2769 = vshll.u32 2102212464, %v2757
  %v2770 = vshrl.u32 920167782, %v2758
  %v2771 = vor.u32 %v2769, %v2770
  %v2772 = vshll.u32 920167782, %v2757
  %v2773 = vshrl.u32 1326507024, %v2758
  %v2774 = vor.u32 %v2772, %v2773
  %vm2775 = vcmp.lt.s32.totalorder %v2756, 1
  %vm2776 = vcmp.lt.s32.totalorder %v2756, 2
  %vm2777 = vcmp.lt.s32.totalorder %v2756, 3
  %vm2778 = vcmp.lt.s32.totalorder %v2756, 4
  %v2779 = vsel %vm2775, %v2759, %v2762
  %v2780 = vsel %vm2778, %v2768, 2102212464
  %v2781 = vsel %vm2777, %v2765, %v2780
  %v2782 = vsel %vm2776, %v2779, %v2781
  %v2783 = vsel %vm2775, %v2762, %v2765
  %v2784 = vsel %vm2778, %v2771, 920167782
  %v2785 = vsel %vm2777, %v2768, %v2784
  %v2786 = vsel %vm2776, %v2783, %v2785
  %v2787 = vsel %vm2775, %v2765, %v2768
  %v2788 = vsel %vm2778, %v2774, 1326507024
  %v2789 = vsel %vm2777, %v2771, %v2788
  %v2790 = vsel %vm2776, %v2787, %v2789
  %v2791 = vshll.u32 %v2751, 8
  %v2792 = vmul.u32.u64.compose %v2791, %v2790
  %v2793 = vextract.low.u32 %v2792
  %v2794 = vextract.high.u32 %v2792
  %v2795 = vmul.u32.u64.compose %v2791, %v2786
  %v2796 = vextract.low.u32 %v2795
  %v2797 = vextract.high.u32 %v2795
  %v2798 = vmul.u32 %v2791, %v2782
  %v2799 = vadd.s32 %v2794, %v2796
  %vm2800 = vc.u32 %v2794, %v2796
  %v2801 = vadd.s32 %v2797, 1
  %v2802 = vsel %vm2800, %v2801, %v2797
  %v2803 = vadd.s32 %v2798, %v2802
  %v2804 = vadd.s32 %v2803, 536870912
  %v2805 = vshrl.u32 %v2804, 30
  %v2806 = vshll.u32 %v2805, 30
  %v2807 = vsub.s32 %v2803, %v2806
  %vm2808 = vcmp.lt.s32.totalorder %v2807, 0
  %v2809 = vsub.s32 0, %v2807
  %v2810 = vsel %vm2808, %v2809, %v2807
  %v2811 = vclz %v2810
  %v2812 = vsub.s32 %v2811, 2
  %vm2813 = vcmp.gt.s32.totalorder 0, %v2812
  %v2814 = vsel %vm2813, 0, %v2812
  %v2815 = vsub.s32 32, %v2814
  %v2816 = vshll.u32 %v2807, %v2814
  %v2817 = vshrl.u32 %v2799, %v2815
  %v2818 = vor.u32 %v2816, %v2817
  %v2819 = vsub.s32 4294967266, %v2814
  %v2820 = vadd.s32 %v2819, 127
  %v2821 = vshll.u32 %v2820, 23
  %v2822 = vor.u32 4788187, %v2821
  %v2823 = vand.u32 2147483647, %v2822
  %v2825 = vcvt.s32.f32 %v2818
  %v2826 = vmul.f32 %v2825, %v2823
  %v2827 = vxor.u32 %v2826, 2147483648
  %v2828 = vsel %vm2745, %v2827, %v2826
  %v2829 = vsub.s32 4, %v2805
  %v2830 = vsel %vm2745, %v2829, %v2805
  %v2831 = vsel %vm2744, %v136, %v2828
  %v2832 = vsel %vm2744, 0, %v2830
  %v2833 = vcosq.f32.pop %v2831
  %v2834 = vsinq.f32.pop %v2831
  %vm2835 = vweird.f32 %v136
  %v2836 = vadd.s32 %v2832, 3
  %v2837 = vand.u32 %v2836, 3
  %vm2838 = vcmp.lt.s32.totalorder %v2837, 2
  %vm2839 = vcmp.eq.s32.totalorder %v2837, 0
  %v2840 = vxor.u32 %v2834, 2147483648
  %v2841 = vsel %vm2839, %v2833, %v2840
  %vm2842 = vcmp.eq.s32.totalorder %v2837, 2
  %v2843 = vxor.u32 %v2833, 2147483648
  %v2844 = vsel %vm2842, %v2843, %v2834
  %v2845 = vsel %vm2838, %v2841, %v2844
  %v2846 = vsel %vm2835, nan, %v2845
  %v2847 = vand.u32 2147483647, %v137
  %vm2848 = vcmp.le.f32.partialorder %v2847, 0.7853982
  %vm2849 = vcmp.lt.s32.totalorder %v137, 0
  %v2850 = vand.u32 %v137, 2139095040
  %v2851 = vshrl.u32 %v2850, 23
  %v2852 = vsub.s32 %v2851, 127
  %v2853 = vand.u32 2147483647, %v137
  %v2854 = vand.u32 %v2853, 8388607
  %v2855 = vor.u32 %v2854, 8388608
  %v2856 = vsub.s32 0, %v2855
  %v2857 = vadd.s32 %v2852, 1
  %vm2858 = vcmp.gt.s32.totalorder %v2857, 0
  %v2859 = vsel %vm2858, %v2857, 0
  %v2860 = vshrl.u32 %v2859, 5
  %v2861 = vand.u32 %v2859, 31
  %v2862 = vsub.s32 32, %v2861
  %v2863 = vshrl.u32 683565275, %v2862
  %v2864 = vshll.u32 683565275, %v2861
  %v2865 = vshrl.u32 2475754826, %v2862
  %v2866 = vor.u32 %v2864, %v2865
  %v2867 = vshll.u32 2475754826, %v2861
  %v2868 = vshrl.u32 2131351028, %v2862
  %v2869 = vor.u32 %v2867, %v2868
  %v2870 = vshll.u32 2131351028, %v2861
  %v2871 = vshrl.u32 2102212464, %v2862
  %v2872 = vor.u32 %v2870, %v2871
  %v2873 = vshll.u32 2102212464, %v2861
  %v2874 = vshrl.u32 920167782, %v2862
  %v2875 = vor.u32 %v2873, %v2874
  %v2876 = vshll.u32 920167782, %v2861
  %v2877 = vshrl.u32 1326507024, %v2862
  %v2878 = vor.u32 %v2876, %v2877
  %vm2879 = vcmp.lt.s32.totalorder %v2860, 1
  %vm2880 = vcmp.lt.s32.totalorder %v2860, 2
  %vm2881 = vcmp.lt.s32.totalorder %v2860, 3
  %vm2882 = vcmp.lt.s32.totalorder %v2860, 4
  %v2883 = vsel %vm2879, %v2863, %v2866
  %v2884 = vsel %vm2882, %v2872, 2102212464
  %v2885 = vsel %vm2881, %v2869, %v2884
  %v2886 = vsel %vm2880, %v2883, %v2885
  %v2887 = vsel %vm2879, %v2866, %v2869
  %v2888 = vsel %vm2882, %v2875, 920167782
  %v2889 = vsel %vm2881, %v2872, %v2888
  %v2890 = vsel %vm2880, %v2887, %v2889
  %v2891 = vsel %vm2879, %v2869, %v2872
  %v2892 = vsel %vm2882, %v2878, 1326507024
  %v2893 = vsel %vm2881, %v2875, %v2892
  %v2894 = vsel %vm2880, %v2891, %v2893
  %v2895 = vshll.u32 %v2855, 8
  %v2896 = vmul.u32.u64.compose %v2895, %v2894
  %v2897 = vextract.low.u32 %v2896
  %v2898 = vextract.high.u32 %v2896
  %v2899 = vmul.u32.u64.compose %v2895, %v2890
  %v2900 = vextract.low.u32 %v2899
  %v2901 = vextract.high.u32 %v2899
  %v2902 = vmul.u32 %v2895, %v2886
  %v2903 = vadd.s32 %v2898, %v2900
  %vm2904 = vc.u32 %v2898, %v2900
  %v2905 = vadd.s32 %v2901, 1
  %v2906 = vsel %vm2904, %v2905, %v2901
  %v2907 = vadd.s32 %v2902, %v2906
  %v2908 = vadd.s32 %v2907, 536870912
  %v2909 = vshrl.u32 %v2908, 30
  %v2910 = vshll.u32 %v2909, 30
  %v2911 = vsub.s32 %v2907, %v2910
  %vm2912 = vcmp.lt.s32.totalorder %v2911, 0
  %v2913 = vsub.s32 0, %v2911
  %v2914 = vsel %vm2912, %v2913, %v2911
  %v2915 = vclz %v2914
  %v2916 = vsub.s32 %v2915, 2
  %vm2917 = vcmp.gt.s32.totalorder 0, %v2916
  %v2918 = vsel %vm2917, 0, %v2916
  %v2919 = vsub.s32 32, %v2918
  %v2920 = vshll.u32 %v2911, %v2918
  %v2921 = vshrl.u32 %v2903, %v2919
  %v2922 = vor.u32 %v2920, %v2921
  %v2923 = vsub.s32 4294967266, %v2918
  %v2924 = vadd.s32 %v2923, 127
  %v2925 = vshll.u32 %v2924, 23
  %v2926 = vor.u32 4788187, %v2925
  %v2927 = vand.u32 2147483647, %v2926
  %v2929 = vcvt.s32.f32 %v2922
  %v2930 = vmul.f32 %v2929, %v2927
  %v2931 = vxor.u32 %v2930, 2147483648
  %v2932 = vsel %vm2849, %v2931, %v2930
  %v2933 = vsub.s32 4, %v2909
  %v2934 = vsel %vm2849, %v2933, %v2909
  %v2935 = vsel %vm2848, %v137, %v2932
  %v2936 = vsel %vm2848, 0, %v2934
  %v2937 = vcosq.f32.pop %v2935
  %v2938 = vsinq.f32.pop %v2935
  %vm2939 = vweird.f32 %v137
  %v2940 = vadd.s32 %v2936, 3
  %v2941 = vand.u32 %v2940, 3
  %vm2942 = vcmp.lt.s32.totalorder %v2941, 2
  %vm2943 = vcmp.eq.s32.totalorder %v2941, 0
  %v2944 = vxor.u32 %v2938, 2147483648
  %v2945 = vsel %vm2943, %v2937, %v2944
  %vm2946 = vcmp.eq.s32.totalorder %v2941, 2
  %v2947 = vxor.u32 %v2937, 2147483648
  %v2948 = vsel %vm2946, %v2947, %v2938
  %v2949 = vsel %vm2942, %v2945, %v2948
  %v2950 = vsel %vm2939, nan, %v2949
  %v2951 = vand.u32 2147483647, %v138
  %vm2952 = vcmp.le.f32.partialorder %v2951, 0.7853982
  %vm2953 = vcmp.lt.s32.totalorder %v138, 0
  %v2954 = vand.u32 %v138, 2139095040
  %v2955 = vshrl.u32 %v2954, 23
  %v2956 = vsub.s32 %v2955, 127
  %v2957 = vand.u32 2147483647, %v138
  %v2958 = vand.u32 %v2957, 8388607
  %v2959 = vor.u32 %v2958, 8388608
  %v2960 = vsub.s32 0, %v2959
  %v2961 = vadd.s32 %v2956, 1
  %vm2962 = vcmp.gt.s32.totalorder %v2961, 0
  %v2963 = vsel %vm2962, %v2961, 0
  %v2964 = vshrl.u32 %v2963, 5
  %v2965 = vand.u32 %v2963, 31
  %v2966 = vsub.s32 32, %v2965
  %v2967 = vshrl.u32 683565275, %v2966
  %v2968 = vshll.u32 683565275, %v2965
  %v2969 = vshrl.u32 2475754826, %v2966
  %v2970 = vor.u32 %v2968, %v2969
  %v2971 = vshll.u32 2475754826, %v2965
  %v2972 = vshrl.u32 2131351028, %v2966
  %v2973 = vor.u32 %v2971, %v2972
  %v2974 = vshll.u32 2131351028, %v2965
  %v2975 = vshrl.u32 2102212464, %v2966
  %v2976 = vor.u32 %v2974, %v2975
  %v2977 = vshll.u32 2102212464, %v2965
  %v2978 = vshrl.u32 920167782, %v2966
  %v2979 = vor.u32 %v2977, %v2978
  %v2980 = vshll.u32 920167782, %v2965
  %v2981 = vshrl.u32 1326507024, %v2966
  %v2982 = vor.u32 %v2980, %v2981
  %vm2983 = vcmp.lt.s32.totalorder %v2964, 1
  %vm2984 = vcmp.lt.s32.totalorder %v2964, 2
  %vm2985 = vcmp.lt.s32.totalorder %v2964, 3
  %vm2986 = vcmp.lt.s32.totalorder %v2964, 4
  %v2987 = vsel %vm2983, %v2967, %v2970
  %v2988 = vsel %vm2986, %v2976, 2102212464
  %v2989 = vsel %vm2985, %v2973, %v2988
  %v2990 = vsel %vm2984, %v2987, %v2989
  %v2991 = vsel %vm2983, %v2970, %v2973
  %v2992 = vsel %vm2986, %v2979, 920167782
  %v2993 = vsel %vm2985, %v2976, %v2992
  %v2994 = vsel %vm2984, %v2991, %v2993
  %v2995 = vsel %vm2983, %v2973, %v2976
  %v2996 = vsel %vm2986, %v2982, 1326507024
  %v2997 = vsel %vm2985, %v2979, %v2996
  %v2998 = vsel %vm2984, %v2995, %v2997
  %v2999 = vshll.u32 %v2959, 8
  %v3000 = vmul.u32.u64.compose %v2999, %v2998
  %v3001 = vextract.low.u32 %v3000
  %v3002 = vextract.high.u32 %v3000
  %v3003 = vmul.u32.u64.compose %v2999, %v2994
  %v3004 = vextract.low.u32 %v3003
  %v3005 = vextract.high.u32 %v3003
  %v3006 = vmul.u32 %v2999, %v2990
  %v3007 = vadd.s32 %v3002, %v3004
  %vm3008 = vc.u32 %v3002, %v3004
  %v3009 = vadd.s32 %v3005, 1
  %v3010 = vsel %vm3008, %v3009, %v3005
  %v3011 = vadd.s32 %v3006, %v3010
  %v3012 = vadd.s32 %v3011, 536870912
  %v3013 = vshrl.u32 %v3012, 30
  %v3014 = vshll.u32 %v3013, 30
  %v3015 = vsub.s32 %v3011, %v3014
  %vm3016 = vcmp.lt.s32.totalorder %v3015, 0
  %v3017 = vsub.s32 0, %v3015
  %v3018 = vsel %vm3016, %v3017, %v3015
  %v3019 = vclz %v3018
  %v3020 = vsub.s32 %v3019, 2
  %vm3021 = vcmp.gt.s32.totalorder 0, %v3020
  %v3022 = vsel %vm3021, 0, %v3020
  %v3023 = vsub.s32 32, %v3022
  %v3024 = vshll.u32 %v3015, %v3022
  %v3025 = vshrl.u32 %v3007, %v3023
  %v3026 = vor.u32 %v3024, %v3025
  %v3027 = vsub.s32 4294967266, %v3022
  %v3028 = vadd.s32 %v3027, 127
  %v3029 = vshll.u32 %v3028, 23
  %v3030 = vor.u32 4788187, %v3029
  %v3031 = vand.u32 2147483647, %v3030
  %v3033 = vcvt.s32.f32 %v3026
  %v3034 = vmul.f32 %v3033, %v3031
  %v3035 = vxor.u32 %v3034, 2147483648
  %v3036 = vsel %vm2953, %v3035, %v3034
  %v3037 = vsub.s32 4, %v3013
  %v3038 = vsel %vm2953, %v3037, %v3013
  %v3039 = vsel %vm2952, %v138, %v3036
  %v3040 = vsel %vm2952, 0, %v3038
  %v3041 = vcosq.f32.pop %v3039
  %v3042 = vsinq.f32.pop %v3039
  %vm3043 = vweird.f32 %v138
  %v3044 = vadd.s32 %v3040, 3
  %v3045 = vand.u32 %v3044, 3
  %vm3046 = vcmp.lt.s32.totalorder %v3045, 2
  %vm3047 = vcmp.eq.s32.totalorder %v3045, 0
  %v3048 = vxor.u32 %v3042, 2147483648
  %v3049 = vsel %vm3047, %v3041, %v3048
  %vm3050 = vcmp.eq.s32.totalorder %v3045, 2
  %v3051 = vxor.u32 %v3041, 2147483648
  %v3052 = vsel %vm3050, %v3051, %v3042
  %v3053 = vsel %vm3046, %v3049, %v3052
  %v3054 = vsel %vm3043, nan, %v3053
  %v3055 = vand.u32 2147483647, %v139
  %vm3056 = vcmp.le.f32.partialorder %v3055, 0.7853982
  %vm3057 = vcmp.lt.s32.totalorder %v139, 0
  %v3058 = vand.u32 %v139, 2139095040
  %v3059 = vshrl.u32 %v3058, 23
  %v3060 = vsub.s32 %v3059, 127
  %v3061 = vand.u32 2147483647, %v139
  %v3062 = vand.u32 %v3061, 8388607
  %v3063 = vor.u32 %v3062, 8388608
  %v3064 = vsub.s32 0, %v3063
  %v3065 = vadd.s32 %v3060, 1
  %vm3066 = vcmp.gt.s32.totalorder %v3065, 0
  %v3067 = vsel %vm3066, %v3065, 0
  %v3068 = vshrl.u32 %v3067, 5
  %v3069 = vand.u32 %v3067, 31
  %v3070 = vsub.s32 32, %v3069
  %v3071 = vshrl.u32 683565275, %v3070
  %v3072 = vshll.u32 683565275, %v3069
  %v3073 = vshrl.u32 2475754826, %v3070
  %v3074 = vor.u32 %v3072, %v3073
  %v3075 = vshll.u32 2475754826, %v3069
  %v3076 = vshrl.u32 2131351028, %v3070
  %v3077 = vor.u32 %v3075, %v3076
  %v3078 = vshll.u32 2131351028, %v3069
  %v3079 = vshrl.u32 2102212464, %v3070
  %v3080 = vor.u32 %v3078, %v3079
  %v3081 = vshll.u32 2102212464, %v3069
  %v3082 = vshrl.u32 920167782, %v3070
  %v3083 = vor.u32 %v3081, %v3082
  %v3084 = vshll.u32 920167782, %v3069
  %v3085 = vshrl.u32 1326507024, %v3070
  %v3086 = vor.u32 %v3084, %v3085
  %vm3087 = vcmp.lt.s32.totalorder %v3068, 1
  %vm3088 = vcmp.lt.s32.totalorder %v3068, 2
  %vm3089 = vcmp.lt.s32.totalorder %v3068, 3
  %vm3090 = vcmp.lt.s32.totalorder %v3068, 4
  %v3091 = vsel %vm3087, %v3071, %v3074
  %v3092 = vsel %vm3090, %v3080, 2102212464
  %v3093 = vsel %vm3089, %v3077, %v3092
  %v3094 = vsel %vm3088, %v3091, %v3093
  %v3095 = vsel %vm3087, %v3074, %v3077
  %v3096 = vsel %vm3090, %v3083, 920167782
  %v3097 = vsel %vm3089, %v3080, %v3096
  %v3098 = vsel %vm3088, %v3095, %v3097
  %v3099 = vsel %vm3087, %v3077, %v3080
  %v3100 = vsel %vm3090, %v3086, 1326507024
  %v3101 = vsel %vm3089, %v3083, %v3100
  %v3102 = vsel %vm3088, %v3099, %v3101
  %v3103 = vshll.u32 %v3063, 8
  %v3104 = vmul.u32.u64.compose %v3103, %v3102
  %v3105 = vextract.low.u32 %v3104
  %v3106 = vextract.high.u32 %v3104
  %v3107 = vmul.u32.u64.compose %v3103, %v3098
  %v3108 = vextract.low.u32 %v3107
  %v3109 = vextract.high.u32 %v3107
  %v3110 = vmul.u32 %v3103, %v3094
  %v3111 = vadd.s32 %v3106, %v3108
  %vm3112 = vc.u32 %v3106, %v3108
  %v3113 = vadd.s32 %v3109, 1
  %v3114 = vsel %vm3112, %v3113, %v3109
  %v3115 = vadd.s32 %v3110, %v3114
  %v3116 = vadd.s32 %v3115, 536870912
  %v3117 = vshrl.u32 %v3116, 30
  %v3118 = vshll.u32 %v3117, 30
  %v3119 = vsub.s32 %v3115, %v3118
  %vm3120 = vcmp.lt.s32.totalorder %v3119, 0
  %v3121 = vsub.s32 0, %v3119
  %v3122 = vsel %vm3120, %v3121, %v3119
  %v3123 = vclz %v3122
  %v3124 = vsub.s32 %v3123, 2
  %vm3125 = vcmp.gt.s32.totalorder 0, %v3124
  %v3126 = vsel %vm3125, 0, %v3124
  %v3127 = vsub.s32 32, %v3126
  %v3128 = vshll.u32 %v3119, %v3126
  %v3129 = vshrl.u32 %v3111, %v3127
  %v3130 = vor.u32 %v3128, %v3129
  %v3131 = vsub.s32 4294967266, %v3126
  %v3132 = vadd.s32 %v3131, 127
  %v3133 = vshll.u32 %v3132, 23
  %v3134 = vor.u32 4788187, %v3133
  %v3135 = vand.u32 2147483647, %v3134
  %v3137 = vcvt.s32.f32 %v3130
  %v3138 = vmul.f32 %v3137, %v3135
  %v3139 = vxor.u32 %v3138, 2147483648
  %v3140 = vsel %vm3057, %v3139, %v3138
  %v3141 = vsub.s32 4, %v3117
  %v3142 = vsel %vm3057, %v3141, %v3117
  %v3143 = vsel %vm3056, %v139, %v3140
  %v3144 = vsel %vm3056, 0, %v3142
  %v3145 = vcosq.f32.pop %v3143
  %v3146 = vsinq.f32.pop %v3143
  %vm3147 = vweird.f32 %v139
  %v3148 = vadd.s32 %v3144, 3
  %v3149 = vand.u32 %v3148, 3
  %vm3150 = vcmp.lt.s32.totalorder %v3149, 2
  %vm3151 = vcmp.eq.s32.totalorder %v3149, 0
  %v3152 = vxor.u32 %v3146, 2147483648
  %v3153 = vsel %vm3151, %v3145, %v3152
  %vm3154 = vcmp.eq.s32.totalorder %v3149, 2
  %v3155 = vxor.u32 %v3145, 2147483648
  %v3156 = vsel %vm3154, %v3155, %v3146
  %v3157 = vsel %vm3150, %v3153, %v3156
  %v3158 = vsel %vm3147, nan, %v3157
  %v3159 = vand.u32 2147483647, %v140
  %vm3160 = vcmp.le.f32.partialorder %v3159, 0.7853982
  %vm3161 = vcmp.lt.s32.totalorder %v140, 0
  %v3162 = vand.u32 %v140, 2139095040
  %v3163 = vshrl.u32 %v3162, 23
  %v3164 = vsub.s32 %v3163, 127
  %v3165 = vand.u32 2147483647, %v140
  %v3166 = vand.u32 %v3165, 8388607
  %v3167 = vor.u32 %v3166, 8388608
  %v3168 = vsub.s32 0, %v3167
  %v3169 = vadd.s32 %v3164, 1
  %vm3170 = vcmp.gt.s32.totalorder %v3169, 0
  %v3171 = vsel %vm3170, %v3169, 0
  %v3172 = vshrl.u32 %v3171, 5
  %v3173 = vand.u32 %v3171, 31
  %v3174 = vsub.s32 32, %v3173
  %v3175 = vshrl.u32 683565275, %v3174
  %v3176 = vshll.u32 683565275, %v3173
  %v3177 = vshrl.u32 2475754826, %v3174
  %v3178 = vor.u32 %v3176, %v3177
  %v3179 = vshll.u32 2475754826, %v3173
  %v3180 = vshrl.u32 2131351028, %v3174
  %v3181 = vor.u32 %v3179, %v3180
  %v3182 = vshll.u32 2131351028, %v3173
  %v3183 = vshrl.u32 2102212464, %v3174
  %v3184 = vor.u32 %v3182, %v3183
  %v3185 = vshll.u32 2102212464, %v3173
  %v3186 = vshrl.u32 920167782, %v3174
  %v3187 = vor.u32 %v3185, %v3186
  %v3188 = vshll.u32 920167782, %v3173
  %v3189 = vshrl.u32 1326507024, %v3174
  %v3190 = vor.u32 %v3188, %v3189
  %vm3191 = vcmp.lt.s32.totalorder %v3172, 1
  %vm3192 = vcmp.lt.s32.totalorder %v3172, 2
  %vm3193 = vcmp.lt.s32.totalorder %v3172, 3
  %vm3194 = vcmp.lt.s32.totalorder %v3172, 4
  %v3195 = vsel %vm3191, %v3175, %v3178
  %v3196 = vsel %vm3194, %v3184, 2102212464
  %v3197 = vsel %vm3193, %v3181, %v3196
  %v3198 = vsel %vm3192, %v3195, %v3197
  %v3199 = vsel %vm3191, %v3178, %v3181
  %v3200 = vsel %vm3194, %v3187, 920167782
  %v3201 = vsel %vm3193, %v3184, %v3200
  %v3202 = vsel %vm3192, %v3199, %v3201
  %v3203 = vsel %vm3191, %v3181, %v3184
  %v3204 = vsel %vm3194, %v3190, 1326507024
  %v3205 = vsel %vm3193, %v3187, %v3204
  %v3206 = vsel %vm3192, %v3203, %v3205
  %v3207 = vshll.u32 %v3167, 8
  %v3208 = vmul.u32.u64.compose %v3207, %v3206
  %v3209 = vextract.low.u32 %v3208
  %v3210 = vextract.high.u32 %v3208
  %v3211 = vmul.u32.u64.compose %v3207, %v3202
  %v3212 = vextract.low.u32 %v3211
  %v3213 = vextract.high.u32 %v3211
  %v3214 = vmul.u32 %v3207, %v3198
  %v3215 = vadd.s32 %v3210, %v3212
  %vm3216 = vc.u32 %v3210, %v3212
  %v3217 = vadd.s32 %v3213, 1
  %v3218 = vsel %vm3216, %v3217, %v3213
  %v3219 = vadd.s32 %v3214, %v3218
  %v3220 = vadd.s32 %v3219, 536870912
  %v3221 = vshrl.u32 %v3220, 30
  %v3222 = vshll.u32 %v3221, 30
  %v3223 = vsub.s32 %v3219, %v3222
  %vm3224 = vcmp.lt.s32.totalorder %v3223, 0
  %v3225 = vsub.s32 0, %v3223
  %v3226 = vsel %vm3224, %v3225, %v3223
  %v3227 = vclz %v3226
  %v3228 = vsub.s32 %v3227, 2
  %vm3229 = vcmp.gt.s32.totalorder 0, %v3228
  %v3230 = vsel %vm3229, 0, %v3228
  %v3231 = vsub.s32 32, %v3230
  %v3232 = vshll.u32 %v3223, %v3230
  %v3233 = vshrl.u32 %v3215, %v3231
  %v3234 = vor.u32 %v3232, %v3233
  %v3235 = vsub.s32 4294967266, %v3230
  %v3236 = vadd.s32 %v3235, 127
  %v3237 = vshll.u32 %v3236, 23
  %v3238 = vor.u32 4788187, %v3237
  %v3239 = vand.u32 2147483647, %v3238
  %v3241 = vcvt.s32.f32 %v3234
  %v3242 = vmul.f32 %v3241, %v3239
  %v3243 = vxor.u32 %v3242, 2147483648
  %v3244 = vsel %vm3161, %v3243, %v3242
  %v3245 = vsub.s32 4, %v3221
  %v3246 = vsel %vm3161, %v3245, %v3221
  %v3247 = vsel %vm3160, %v140, %v3244
  %v3248 = vsel %vm3160, 0, %v3246
  %v3249 = vcosq.f32.pop %v3247
  %v3250 = vsinq.f32.pop %v3247
  %vm3251 = vweird.f32 %v140
  %v3252 = vadd.s32 %v3248, 3
  %v3253 = vand.u32 %v3252, 3
  %vm3254 = vcmp.lt.s32.totalorder %v3253, 2
  %vm3255 = vcmp.eq.s32.totalorder %v3253, 0
  %v3256 = vxor.u32 %v3250, 2147483648
  %v3257 = vsel %vm3255, %v3249, %v3256
  %vm3258 = vcmp.eq.s32.totalorder %v3253, 2
  %v3259 = vxor.u32 %v3249, 2147483648
  %v3260 = vsel %vm3258, %v3259, %v3250
  %v3261 = vsel %vm3254, %v3257, %v3260
  %v3262 = vsel %vm3251, nan, %v3261
  %v3263 = vand.u32 2147483647, %v141
  %vm3264 = vcmp.le.f32.partialorder %v3263, 0.7853982
  %vm3265 = vcmp.lt.s32.totalorder %v141, 0
  %v3266 = vand.u32 %v141, 2139095040
  %v3267 = vshrl.u32 %v3266, 23
  %v3268 = vsub.s32 %v3267, 127
  %v3269 = vand.u32 2147483647, %v141
  %v3270 = vand.u32 %v3269, 8388607
  %v3271 = vor.u32 %v3270, 8388608
  %v3272 = vsub.s32 0, %v3271
  %v3273 = vadd.s32 %v3268, 1
  %vm3274 = vcmp.gt.s32.totalorder %v3273, 0
  %v3275 = vsel %vm3274, %v3273, 0
  %v3276 = vshrl.u32 %v3275, 5
  %v3277 = vand.u32 %v3275, 31
  %v3278 = vsub.s32 32, %v3277
  %v3279 = vshrl.u32 683565275, %v3278
  %v3280 = vshll.u32 683565275, %v3277
  %v3281 = vshrl.u32 2475754826, %v3278
  %v3282 = vor.u32 %v3280, %v3281
  %v3283 = vshll.u32 2475754826, %v3277
  %v3284 = vshrl.u32 2131351028, %v3278
  %v3285 = vor.u32 %v3283, %v3284
  %v3286 = vshll.u32 2131351028, %v3277
  %v3287 = vshrl.u32 2102212464, %v3278
  %v3288 = vor.u32 %v3286, %v3287
  %v3289 = vshll.u32 2102212464, %v3277
  %v3290 = vshrl.u32 920167782, %v3278
  %v3291 = vor.u32 %v3289, %v3290
  %v3292 = vshll.u32 920167782, %v3277
  %v3293 = vshrl.u32 1326507024, %v3278
  %v3294 = vor.u32 %v3292, %v3293
  %vm3295 = vcmp.lt.s32.totalorder %v3276, 1
  %vm3296 = vcmp.lt.s32.totalorder %v3276, 2
  %vm3297 = vcmp.lt.s32.totalorder %v3276, 3
  %vm3298 = vcmp.lt.s32.totalorder %v3276, 4
  %v3299 = vsel %vm3295, %v3279, %v3282
  %v3300 = vsel %vm3298, %v3288, 2102212464
  %v3301 = vsel %vm3297, %v3285, %v3300
  %v3302 = vsel %vm3296, %v3299, %v3301
  %v3303 = vsel %vm3295, %v3282, %v3285
  %v3304 = vsel %vm3298, %v3291, 920167782
  %v3305 = vsel %vm3297, %v3288, %v3304
  %v3306 = vsel %vm3296, %v3303, %v3305
  %v3307 = vsel %vm3295, %v3285, %v3288
  %v3308 = vsel %vm3298, %v3294, 1326507024
  %v3309 = vsel %vm3297, %v3291, %v3308
  %v3310 = vsel %vm3296, %v3307, %v3309
  %v3311 = vshll.u32 %v3271, 8
  %v3312 = vmul.u32.u64.compose %v3311, %v3310
  %v3313 = vextract.low.u32 %v3312
  %v3314 = vextract.high.u32 %v3312
  %v3315 = vmul.u32.u64.compose %v3311, %v3306
  %v3316 = vextract.low.u32 %v3315
  %v3317 = vextract.high.u32 %v3315
  %v3318 = vmul.u32 %v3311, %v3302
  %v3319 = vadd.s32 %v3314, %v3316
  %vm3320 = vc.u32 %v3314, %v3316
  %v3321 = vadd.s32 %v3317, 1
  %v3322 = vsel %vm3320, %v3321, %v3317
  %v3323 = vadd.s32 %v3318, %v3322
  %v3324 = vadd.s32 %v3323, 536870912
  %v3325 = vshrl.u32 %v3324, 30
  %v3326 = vshll.u32 %v3325, 30
  %v3327 = vsub.s32 %v3323, %v3326
  %vm3328 = vcmp.lt.s32.totalorder %v3327, 0
  %v3329 = vsub.s32 0, %v3327
  %v3330 = vsel %vm3328, %v3329, %v3327
  %v3331 = vclz %v3330
  %v3332 = vsub.s32 %v3331, 2
  %vm3333 = vcmp.gt.s32.totalorder 0, %v3332
  %v3334 = vsel %vm3333, 0, %v3332
  %v3335 = vsub.s32 32, %v3334
  %v3336 = vshll.u32 %v3327, %v3334
  %v3337 = vshrl.u32 %v3319, %v3335
  %v3338 = vor.u32 %v3336, %v3337
  %v3339 = vsub.s32 4294967266, %v3334
  %v3340 = vadd.s32 %v3339, 127
  %v3341 = vshll.u32 %v3340, 23
  %v3342 = vor.u32 4788187, %v3341
  %v3343 = vand.u32 2147483647, %v3342
  %v3345 = vcvt.s32.f32 %v3338
  %v3346 = vmul.f32 %v3345, %v3343
  %v3347 = vxor.u32 %v3346, 2147483648
  %v3348 = vsel %vm3265, %v3347, %v3346
  %v3349 = vsub.s32 4, %v3325
  %v3350 = vsel %vm3265, %v3349, %v3325
  %v3351 = vsel %vm3264, %v141, %v3348
  %v3352 = vsel %vm3264, 0, %v3350
  %v3353 = vcosq.f32.pop %v3351
  %v3354 = vsinq.f32.pop %v3351
  %vm3355 = vweird.f32 %v141
  %v3356 = vadd.s32 %v3352, 3
  %v3357 = vand.u32 %v3356, 3
  %vm3358 = vcmp.lt.s32.totalorder %v3357, 2
  %vm3359 = vcmp.eq.s32.totalorder %v3357, 0
  %v3360 = vxor.u32 %v3354, 2147483648
  %v3361 = vsel %vm3359, %v3353, %v3360
  %vm3362 = vcmp.eq.s32.totalorder %v3357, 2
  %v3363 = vxor.u32 %v3353, 2147483648
  %v3364 = vsel %vm3362, %v3363, %v3354
  %v3365 = vsel %vm3358, %v3361, %v3364
  %v3366 = vsel %vm3355, nan, %v3365
  %v3367 = vand.u32 2147483647, %v142
  %vm3368 = vcmp.le.f32.partialorder %v3367, 0.7853982
  %vm3369 = vcmp.lt.s32.totalorder %v142, 0
  %v3370 = vand.u32 %v142, 2139095040
  %v3371 = vshrl.u32 %v3370, 23
  %v3372 = vsub.s32 %v3371, 127
  %v3373 = vand.u32 2147483647, %v142
  %v3374 = vand.u32 %v3373, 8388607
  %v3375 = vor.u32 %v3374, 8388608
  %v3376 = vsub.s32 0, %v3375
  %v3377 = vadd.s32 %v3372, 1
  %vm3378 = vcmp.gt.s32.totalorder %v3377, 0
  %v3379 = vsel %vm3378, %v3377, 0
  %v3380 = vshrl.u32 %v3379, 5
  %v3381 = vand.u32 %v3379, 31
  %v3382 = vsub.s32 32, %v3381
  %v3383 = vshrl.u32 683565275, %v3382
  %v3384 = vshll.u32 683565275, %v3381
  %v3385 = vshrl.u32 2475754826, %v3382
  %v3386 = vor.u32 %v3384, %v3385
  %v3387 = vshll.u32 2475754826, %v3381
  %v3388 = vshrl.u32 2131351028, %v3382
  %v3389 = vor.u32 %v3387, %v3388
  %v3390 = vshll.u32 2131351028, %v3381
  %v3391 = vshrl.u32 2102212464, %v3382
  %v3392 = vor.u32 %v3390, %v3391
  %v3393 = vshll.u32 2102212464, %v3381
  %v3394 = vshrl.u32 920167782, %v3382
  %v3395 = vor.u32 %v3393, %v3394
  %v3396 = vshll.u32 920167782, %v3381
  %v3397 = vshrl.u32 1326507024, %v3382
  %v3398 = vor.u32 %v3396, %v3397
  %vm3399 = vcmp.lt.s32.totalorder %v3380, 1
  %vm3400 = vcmp.lt.s32.totalorder %v3380, 2
  %vm3401 = vcmp.lt.s32.totalorder %v3380, 3
  %vm3402 = vcmp.lt.s32.totalorder %v3380, 4
  %v3403 = vsel %vm3399, %v3383, %v3386
  %v3404 = vsel %vm3402, %v3392, 2102212464
  %v3405 = vsel %vm3401, %v3389, %v3404
  %v3406 = vsel %vm3400, %v3403, %v3405
  %v3407 = vsel %vm3399, %v3386, %v3389
  %v3408 = vsel %vm3402, %v3395, 920167782
  %v3409 = vsel %vm3401, %v3392, %v3408
  %v3410 = vsel %vm3400, %v3407, %v3409
  %v3411 = vsel %vm3399, %v3389, %v3392
  %v3412 = vsel %vm3402, %v3398, 1326507024
  %v3413 = vsel %vm3401, %v3395, %v3412
  %v3414 = vsel %vm3400, %v3411, %v3413
  %v3415 = vshll.u32 %v3375, 8
  %v3416 = vmul.u32.u64.compose %v3415, %v3414
  %v3417 = vextract.low.u32 %v3416
  %v3418 = vextract.high.u32 %v3416
  %v3419 = vmul.u32.u64.compose %v3415, %v3410
  %v3420 = vextract.low.u32 %v3419
  %v3421 = vextract.high.u32 %v3419
  %v3422 = vmul.u32 %v3415, %v3406
  %v3423 = vadd.s32 %v3418, %v3420
  %vm3424 = vc.u32 %v3418, %v3420
  %v3425 = vadd.s32 %v3421, 1
  %v3426 = vsel %vm3424, %v3425, %v3421
  %v3427 = vadd.s32 %v3422, %v3426
  %v3428 = vadd.s32 %v3427, 536870912
  %v3429 = vshrl.u32 %v3428, 30
  %v3430 = vshll.u32 %v3429, 30
  %v3431 = vsub.s32 %v3427, %v3430
  %vm3432 = vcmp.lt.s32.totalorder %v3431, 0
  %v3433 = vsub.s32 0, %v3431
  %v3434 = vsel %vm3432, %v3433, %v3431
  %v3435 = vclz %v3434
  %v3436 = vsub.s32 %v3435, 2
  %vm3437 = vcmp.gt.s32.totalorder 0, %v3436
  %v3438 = vsel %vm3437, 0, %v3436
  %v3439 = vsub.s32 32, %v3438
  %v3440 = vshll.u32 %v3431, %v3438
  %v3441 = vshrl.u32 %v3423, %v3439
  %v3442 = vor.u32 %v3440, %v3441
  %v3443 = vsub.s32 4294967266, %v3438
  %v3444 = vadd.s32 %v3443, 127
  %v3445 = vshll.u32 %v3444, 23
  %v3446 = vor.u32 4788187, %v3445
  %v3447 = vand.u32 2147483647, %v3446
  %v3449 = vcvt.s32.f32 %v3442
  %v3450 = vmul.f32 %v3449, %v3447
  %v3451 = vxor.u32 %v3450, 2147483648
  %v3452 = vsel %vm3369, %v3451, %v3450
  %v3453 = vsub.s32 4, %v3429
  %v3454 = vsel %vm3369, %v3453, %v3429
  %v3455 = vsel %vm3368, %v142, %v3452
  %v3456 = vsel %vm3368, 0, %v3454
  %v3457 = vcosq.f32.pop %v3455
  %v3458 = vsinq.f32.pop %v3455
  %vm3459 = vweird.f32 %v142
  %v3460 = vadd.s32 %v3456, 3
  %v3461 = vand.u32 %v3460, 3
  %vm3462 = vcmp.lt.s32.totalorder %v3461, 2
  %vm3463 = vcmp.eq.s32.totalorder %v3461, 0
  %v3464 = vxor.u32 %v3458, 2147483648
  %v3465 = vsel %vm3463, %v3457, %v3464
  %vm3466 = vcmp.eq.s32.totalorder %v3461, 2
  %v3467 = vxor.u32 %v3457, 2147483648
  %v3468 = vsel %vm3466, %v3467, %v3458
  %v3469 = vsel %vm3462, %v3465, %v3468
  %v3470 = vsel %vm3459, nan, %v3469
  %v3471 = vand.u32 2147483647, %v111
  %vm3472 = vcmp.le.f32.partialorder %v3471, 0.7853982
  %vm3473 = vcmp.lt.s32.totalorder %v111, 0
  %v3474 = vand.u32 %v111, 2139095040
  %v3475 = vshrl.u32 %v3474, 23
  %v3476 = vsub.s32 %v3475, 127
  %v3477 = vand.u32 2147483647, %v111
  %v3478 = vand.u32 %v3477, 8388607
  %v3479 = vor.u32 %v3478, 8388608
  %v3480 = vsub.s32 0, %v3479
  %v3481 = vadd.s32 %v3476, 1
  %vm3482 = vcmp.gt.s32.totalorder %v3481, 0
  %v3483 = vsel %vm3482, %v3481, 0
  %v3484 = vshrl.u32 %v3483, 5
  %v3485 = vand.u32 %v3483, 31
  %v3486 = vsub.s32 32, %v3485
  %v3487 = vshrl.u32 683565275, %v3486
  %v3488 = vshll.u32 683565275, %v3485
  %v3489 = vshrl.u32 2475754826, %v3486
  %v3490 = vor.u32 %v3488, %v3489
  %v3491 = vshll.u32 2475754826, %v3485
  %v3492 = vshrl.u32 2131351028, %v3486
  %v3493 = vor.u32 %v3491, %v3492
  %v3494 = vshll.u32 2131351028, %v3485
  %v3495 = vshrl.u32 2102212464, %v3486
  %v3496 = vor.u32 %v3494, %v3495
  %v3497 = vshll.u32 2102212464, %v3485
  %v3498 = vshrl.u32 920167782, %v3486
  %v3499 = vor.u32 %v3497, %v3498
  %v3500 = vshll.u32 920167782, %v3485
  %v3501 = vshrl.u32 1326507024, %v3486
  %v3502 = vor.u32 %v3500, %v3501
  %vm3503 = vcmp.lt.s32.totalorder %v3484, 1
  %vm3504 = vcmp.lt.s32.totalorder %v3484, 2
  %vm3505 = vcmp.lt.s32.totalorder %v3484, 3
  %vm3506 = vcmp.lt.s32.totalorder %v3484, 4
  %v3507 = vsel %vm3503, %v3487, %v3490
  %v3508 = vsel %vm3506, %v3496, 2102212464
  %v3509 = vsel %vm3505, %v3493, %v3508
  %v3510 = vsel %vm3504, %v3507, %v3509
  %v3511 = vsel %vm3503, %v3490, %v3493
  %v3512 = vsel %vm3506, %v3499, 920167782
  %v3513 = vsel %vm3505, %v3496, %v3512
  %v3514 = vsel %vm3504, %v3511, %v3513
  %v3515 = vsel %vm3503, %v3493, %v3496
  %v3516 = vsel %vm3506, %v3502, 1326507024
  %v3517 = vsel %vm3505, %v3499, %v3516
  %v3518 = vsel %vm3504, %v3515, %v3517
  %v3519 = vshll.u32 %v3479, 8
  %v3520 = vmul.u32.u64.compose %v3519, %v3518
  %v3521 = vextract.low.u32 %v3520
  %v3522 = vextract.high.u32 %v3520
  %v3523 = vmul.u32.u64.compose %v3519, %v3514
  %v3524 = vextract.low.u32 %v3523
  %v3525 = vextract.high.u32 %v3523
  %v3526 = vmul.u32 %v3519, %v3510
  %v3527 = vadd.s32 %v3522, %v3524
  %vm3528 = vc.u32 %v3522, %v3524
  %v3529 = vadd.s32 %v3525, 1
  %v3530 = vsel %vm3528, %v3529, %v3525
  %v3531 = vadd.s32 %v3526, %v3530
  %v3532 = vadd.s32 %v3531, 536870912
  %v3533 = vshrl.u32 %v3532, 30
  %v3534 = vshll.u32 %v3533, 30
  %v3535 = vsub.s32 %v3531, %v3534
  %vm3536 = vcmp.lt.s32.totalorder %v3535, 0
  %v3537 = vsub.s32 0, %v3535
  %v3538 = vsel %vm3536, %v3537, %v3535
  %v3539 = vclz %v3538
  %v3540 = vsub.s32 %v3539, 2
  %vm3541 = vcmp.gt.s32.totalorder 0, %v3540
  %v3542 = vsel %vm3541, 0, %v3540
  %v3543 = vsub.s32 32, %v3542
  %v3544 = vshll.u32 %v3535, %v3542
  %v3545 = vshrl.u32 %v3527, %v3543
  %v3546 = vor.u32 %v3544, %v3545
  %v3547 = vsub.s32 4294967266, %v3542
  %v3548 = vadd.s32 %v3547, 127
  %v3549 = vshll.u32 %v3548, 23
  %v3550 = vor.u32 4788187, %v3549
  %v3551 = vand.u32 2147483647, %v3550
  %v3553 = vcvt.s32.f32 %v3546
  %v3554 = vmul.f32 %v3553, %v3551
  %v3555 = vxor.u32 %v3554, 2147483648
  %v3556 = vsel %vm3473, %v3555, %v3554
  %v3557 = vsub.s32 4, %v3533
  %v3558 = vsel %vm3473, %v3557, %v3533
  %v3559 = vsel %vm3472, %v111, %v3556
  %v3560 = vsel %vm3472, 0, %v3558
  %v3561 = vcosq.f32.pop %v3559
  %v3562 = vsinq.f32.pop %v3559
  %vm3563 = vweird.f32 %v111
  %v3564 = vand.u32 %v3560, 3
  %vm3565 = vcmp.lt.s32.totalorder %v3564, 2
  %vm3566 = vcmp.eq.s32.totalorder %v3564, 0
  %v3567 = vxor.u32 %v3562, 2147483648
  %v3568 = vsel %vm3566, %v3561, %v3567
  %vm3569 = vcmp.eq.s32.totalorder %v3564, 2
  %v3570 = vxor.u32 %v3561, 2147483648
  %v3571 = vsel %vm3569, %v3570, %v3562
  %v3572 = vsel %vm3565, %v3568, %v3571
  %v3573 = vsel %vm3563, nan, %v3572
  %v3574 = vand.u32 2147483647, %v112
  %vm3575 = vcmp.le.f32.partialorder %v3574, 0.7853982
  %vm3576 = vcmp.lt.s32.totalorder %v112, 0
  %v3577 = vand.u32 %v112, 2139095040
  %v3578 = vshrl.u32 %v3577, 23
  %v3579 = vsub.s32 %v3578, 127
  %v3580 = vand.u32 2147483647, %v112
  %v3581 = vand.u32 %v3580, 8388607
  %v3582 = vor.u32 %v3581, 8388608
  %v3583 = vsub.s32 0, %v3582
  %v3584 = vadd.s32 %v3579, 1
  %vm3585 = vcmp.gt.s32.totalorder %v3584, 0
  %v3586 = vsel %vm3585, %v3584, 0
  %v3587 = vshrl.u32 %v3586, 5
  %v3588 = vand.u32 %v3586, 31
  %v3589 = vsub.s32 32, %v3588
  %v3590 = vshrl.u32 683565275, %v3589
  %v3591 = vshll.u32 683565275, %v3588
  %v3592 = vshrl.u32 2475754826, %v3589
  %v3593 = vor.u32 %v3591, %v3592
  %v3594 = vshll.u32 2475754826, %v3588
  %v3595 = vshrl.u32 2131351028, %v3589
  %v3596 = vor.u32 %v3594, %v3595
  %v3597 = vshll.u32 2131351028, %v3588
  %v3598 = vshrl.u32 2102212464, %v3589
  %v3599 = vor.u32 %v3597, %v3598
  %v3600 = vshll.u32 2102212464, %v3588
  %v3601 = vshrl.u32 920167782, %v3589
  %v3602 = vor.u32 %v3600, %v3601
  %v3603 = vshll.u32 920167782, %v3588
  %v3604 = vshrl.u32 1326507024, %v3589
  %v3605 = vor.u32 %v3603, %v3604
  %vm3606 = vcmp.lt.s32.totalorder %v3587, 1
  %vm3607 = vcmp.lt.s32.totalorder %v3587, 2
  %vm3608 = vcmp.lt.s32.totalorder %v3587, 3
  %vm3609 = vcmp.lt.s32.totalorder %v3587, 4
  %v3610 = vsel %vm3606, %v3590, %v3593
  %v3611 = vsel %vm3609, %v3599, 2102212464
  %v3612 = vsel %vm3608, %v3596, %v3611
  %v3613 = vsel %vm3607, %v3610, %v3612
  %v3614 = vsel %vm3606, %v3593, %v3596
  %v3615 = vsel %vm3609, %v3602, 920167782
  %v3616 = vsel %vm3608, %v3599, %v3615
  %v3617 = vsel %vm3607, %v3614, %v3616
  %v3618 = vsel %vm3606, %v3596, %v3599
  %v3619 = vsel %vm3609, %v3605, 1326507024
  %v3620 = vsel %vm3608, %v3602, %v3619
  %v3621 = vsel %vm3607, %v3618, %v3620
  %v3622 = vshll.u32 %v3582, 8
  %v3623 = vmul.u32.u64.compose %v3622, %v3621
  %v3624 = vextract.low.u32 %v3623
  %v3625 = vextract.high.u32 %v3623
  %v3626 = vmul.u32.u64.compose %v3622, %v3617
  %v3627 = vextract.low.u32 %v3626
  %v3628 = vextract.high.u32 %v3626
  %v3629 = vmul.u32 %v3622, %v3613
  %v3630 = vadd.s32 %v3625, %v3627
  %vm3631 = vc.u32 %v3625, %v3627
  %v3632 = vadd.s32 %v3628, 1
  %v3633 = vsel %vm3631, %v3632, %v3628
  %v3634 = vadd.s32 %v3629, %v3633
  %v3635 = vadd.s32 %v3634, 536870912
  %v3636 = vshrl.u32 %v3635, 30
  %v3637 = vshll.u32 %v3636, 30
  %v3638 = vsub.s32 %v3634, %v3637
  %vm3639 = vcmp.lt.s32.totalorder %v3638, 0
  %v3640 = vsub.s32 0, %v3638
  %v3641 = vsel %vm3639, %v3640, %v3638
  %v3642 = vclz %v3641
  %v3643 = vsub.s32 %v3642, 2
  %vm3644 = vcmp.gt.s32.totalorder 0, %v3643
  %v3645 = vsel %vm3644, 0, %v3643
  %v3646 = vsub.s32 32, %v3645
  %v3647 = vshll.u32 %v3638, %v3645
  %v3648 = vshrl.u32 %v3630, %v3646
  %v3649 = vor.u32 %v3647, %v3648
  %v3650 = vsub.s32 4294967266, %v3645
  %v3651 = vadd.s32 %v3650, 127
  %v3652 = vshll.u32 %v3651, 23
  %v3653 = vor.u32 4788187, %v3652
  %v3654 = vand.u32 2147483647, %v3653
  %v3656 = vcvt.s32.f32 %v3649
  %v3657 = vmul.f32 %v3656, %v3654
  %v3658 = vxor.u32 %v3657, 2147483648
  %v3659 = vsel %vm3576, %v3658, %v3657
  %v3660 = vsub.s32 4, %v3636
  %v3661 = vsel %vm3576, %v3660, %v3636
  %v3662 = vsel %vm3575, %v112, %v3659
  %v3663 = vsel %vm3575, 0, %v3661
  %v3664 = vcosq.f32.pop %v3662
  %v3665 = vsinq.f32.pop %v3662
  %vm3666 = vweird.f32 %v112
  %v3667 = vand.u32 %v3663, 3
  %vm3668 = vcmp.lt.s32.totalorder %v3667, 2
  %vm3669 = vcmp.eq.s32.totalorder %v3667, 0
  %v3670 = vxor.u32 %v3665, 2147483648
  %v3671 = vsel %vm3669, %v3664, %v3670
  %vm3672 = vcmp.eq.s32.totalorder %v3667, 2
  %v3673 = vxor.u32 %v3664, 2147483648
  %v3674 = vsel %vm3672, %v3673, %v3665
  %v3675 = vsel %vm3668, %v3671, %v3674
  %v3676 = vsel %vm3666, nan, %v3675
  %v3677 = vand.u32 2147483647, %v113
  %vm3678 = vcmp.le.f32.partialorder %v3677, 0.7853982
  %vm3679 = vcmp.lt.s32.totalorder %v113, 0
  %v3680 = vand.u32 %v113, 2139095040
  %v3681 = vshrl.u32 %v3680, 23
  %v3682 = vsub.s32 %v3681, 127
  %v3683 = vand.u32 2147483647, %v113
  %v3684 = vand.u32 %v3683, 8388607
  %v3685 = vor.u32 %v3684, 8388608
  %v3686 = vsub.s32 0, %v3685
  %v3687 = vadd.s32 %v3682, 1
  %vm3688 = vcmp.gt.s32.totalorder %v3687, 0
  %v3689 = vsel %vm3688, %v3687, 0
  %v3690 = vshrl.u32 %v3689, 5
  %v3691 = vand.u32 %v3689, 31
  %v3692 = vsub.s32 32, %v3691
  %v3693 = vshrl.u32 683565275, %v3692
  %v3694 = vshll.u32 683565275, %v3691
  %v3695 = vshrl.u32 2475754826, %v3692
  %v3696 = vor.u32 %v3694, %v3695
  %v3697 = vshll.u32 2475754826, %v3691
  %v3698 = vshrl.u32 2131351028, %v3692
  %v3699 = vor.u32 %v3697, %v3698
  %v3700 = vshll.u32 2131351028, %v3691
  %v3701 = vshrl.u32 2102212464, %v3692
  %v3702 = vor.u32 %v3700, %v3701
  %v3703 = vshll.u32 2102212464, %v3691
  %v3704 = vshrl.u32 920167782, %v3692
  %v3705 = vor.u32 %v3703, %v3704
  %v3706 = vshll.u32 920167782, %v3691
  %v3707 = vshrl.u32 1326507024, %v3692
  %v3708 = vor.u32 %v3706, %v3707
  %vm3709 = vcmp.lt.s32.totalorder %v3690, 1
  %vm3710 = vcmp.lt.s32.totalorder %v3690, 2
  %vm3711 = vcmp.lt.s32.totalorder %v3690, 3
  %vm3712 = vcmp.lt.s32.totalorder %v3690, 4
  %v3713 = vsel %vm3709, %v3693, %v3696
  %v3714 = vsel %vm3712, %v3702, 2102212464
  %v3715 = vsel %vm3711, %v3699, %v3714
  %v3716 = vsel %vm3710, %v3713, %v3715
  %v3717 = vsel %vm3709, %v3696, %v3699
  %v3718 = vsel %vm3712, %v3705, 920167782
  %v3719 = vsel %vm3711, %v3702, %v3718
  %v3720 = vsel %vm3710, %v3717, %v3719
  %v3721 = vsel %vm3709, %v3699, %v3702
  %v3722 = vsel %vm3712, %v3708, 1326507024
  %v3723 = vsel %vm3711, %v3705, %v3722
  %v3724 = vsel %vm3710, %v3721, %v3723
  %v3725 = vshll.u32 %v3685, 8
  %v3726 = vmul.u32.u64.compose %v3725, %v3724
  %v3727 = vextract.low.u32 %v3726
  %v3728 = vextract.high.u32 %v3726
  %v3729 = vmul.u32.u64.compose %v3725, %v3720
  %v3730 = vextract.low.u32 %v3729
  %v3731 = vextract.high.u32 %v3729
  %v3732 = vmul.u32 %v3725, %v3716
  %v3733 = vadd.s32 %v3728, %v3730
  %vm3734 = vc.u32 %v3728, %v3730
  %v3735 = vadd.s32 %v3731, 1
  %v3736 = vsel %vm3734, %v3735, %v3731
  %v3737 = vadd.s32 %v3732, %v3736
  %v3738 = vadd.s32 %v3737, 536870912
  %v3739 = vshrl.u32 %v3738, 30
  %v3740 = vshll.u32 %v3739, 30
  %v3741 = vsub.s32 %v3737, %v3740
  %vm3742 = vcmp.lt.s32.totalorder %v3741, 0
  %v3743 = vsub.s32 0, %v3741
  %v3744 = vsel %vm3742, %v3743, %v3741
  %v3745 = vclz %v3744
  %v3746 = vsub.s32 %v3745, 2
  %vm3747 = vcmp.gt.s32.totalorder 0, %v3746
  %v3748 = vsel %vm3747, 0, %v3746
  %v3749 = vsub.s32 32, %v3748
  %v3750 = vshll.u32 %v3741, %v3748
  %v3751 = vshrl.u32 %v3733, %v3749
  %v3752 = vor.u32 %v3750, %v3751
  %v3753 = vsub.s32 4294967266, %v3748
  %v3754 = vadd.s32 %v3753, 127
  %v3755 = vshll.u32 %v3754, 23
  %v3756 = vor.u32 4788187, %v3755
  %v3757 = vand.u32 2147483647, %v3756
  %v3759 = vcvt.s32.f32 %v3752
  %v3760 = vmul.f32 %v3759, %v3757
  %v3761 = vxor.u32 %v3760, 2147483648
  %v3762 = vsel %vm3679, %v3761, %v3760
  %v3763 = vsub.s32 4, %v3739
  %v3764 = vsel %vm3679, %v3763, %v3739
  %v3765 = vsel %vm3678, %v113, %v3762
  %v3766 = vsel %vm3678, 0, %v3764
  %v3767 = vcosq.f32.pop %v3765
  %v3768 = vsinq.f32.pop %v3765
  %vm3769 = vweird.f32 %v113
  %v3770 = vand.u32 %v3766, 3
  %vm3771 = vcmp.lt.s32.totalorder %v3770, 2
  %vm3772 = vcmp.eq.s32.totalorder %v3770, 0
  %v3773 = vxor.u32 %v3768, 2147483648
  %v3774 = vsel %vm3772, %v3767, %v3773
  %vm3775 = vcmp.eq.s32.totalorder %v3770, 2
  %v3776 = vxor.u32 %v3767, 2147483648
  %v3777 = vsel %vm3775, %v3776, %v3768
  %v3778 = vsel %vm3771, %v3774, %v3777
  %v3779 = vsel %vm3769, nan, %v3778
  %v3780 = vand.u32 2147483647, %v114
  %vm3781 = vcmp.le.f32.partialorder %v3780, 0.7853982
  %vm3782 = vcmp.lt.s32.totalorder %v114, 0
  %v3783 = vand.u32 %v114, 2139095040
  %v3784 = vshrl.u32 %v3783, 23
  %v3785 = vsub.s32 %v3784, 127
  %v3786 = vand.u32 2147483647, %v114
  %v3787 = vand.u32 %v3786, 8388607
  %v3788 = vor.u32 %v3787, 8388608
  %v3789 = vsub.s32 0, %v3788
  %v3790 = vadd.s32 %v3785, 1
  %vm3791 = vcmp.gt.s32.totalorder %v3790, 0
  %v3792 = vsel %vm3791, %v3790, 0
  %v3793 = vshrl.u32 %v3792, 5
  %v3794 = vand.u32 %v3792, 31
  %v3795 = vsub.s32 32, %v3794
  %v3796 = vshrl.u32 683565275, %v3795
  %v3797 = vshll.u32 683565275, %v3794
  %v3798 = vshrl.u32 2475754826, %v3795
  %v3799 = vor.u32 %v3797, %v3798
  %v3800 = vshll.u32 2475754826, %v3794
  %v3801 = vshrl.u32 2131351028, %v3795
  %v3802 = vor.u32 %v3800, %v3801
  %v3803 = vshll.u32 2131351028, %v3794
  %v3804 = vshrl.u32 2102212464, %v3795
  %v3805 = vor.u32 %v3803, %v3804
  %v3806 = vshll.u32 2102212464, %v3794
  %v3807 = vshrl.u32 920167782, %v3795
  %v3808 = vor.u32 %v3806, %v3807
  %v3809 = vshll.u32 920167782, %v3794
  %v3810 = vshrl.u32 1326507024, %v3795
  %v3811 = vor.u32 %v3809, %v3810
  %vm3812 = vcmp.lt.s32.totalorder %v3793, 1
  %vm3813 = vcmp.lt.s32.totalorder %v3793, 2
  %vm3814 = vcmp.lt.s32.totalorder %v3793, 3
  %vm3815 = vcmp.lt.s32.totalorder %v3793, 4
  %v3816 = vsel %vm3812, %v3796, %v3799
  %v3817 = vsel %vm3815, %v3805, 2102212464
  %v3818 = vsel %vm3814, %v3802, %v3817
  %v3819 = vsel %vm3813, %v3816, %v3818
  %v3820 = vsel %vm3812, %v3799, %v3802
  %v3821 = vsel %vm3815, %v3808, 920167782
  %v3822 = vsel %vm3814, %v3805, %v3821
  %v3823 = vsel %vm3813, %v3820, %v3822
  %v3824 = vsel %vm3812, %v3802, %v3805
  %v3825 = vsel %vm3815, %v3811, 1326507024
  %v3826 = vsel %vm3814, %v3808, %v3825
  %v3827 = vsel %vm3813, %v3824, %v3826
  %v3828 = vshll.u32 %v3788, 8
  %v3829 = vmul.u32.u64.compose %v3828, %v3827
  %v3830 = vextract.low.u32 %v3829
  %v3831 = vextract.high.u32 %v3829
  %v3832 = vmul.u32.u64.compose %v3828, %v3823
  %v3833 = vextract.low.u32 %v3832
  %v3834 = vextract.high.u32 %v3832
  %v3835 = vmul.u32 %v3828, %v3819
  %v3836 = vadd.s32 %v3831, %v3833
  %vm3837 = vc.u32 %v3831, %v3833
  %v3838 = vadd.s32 %v3834, 1
  %v3839 = vsel %vm3837, %v3838, %v3834
  %v3840 = vadd.s32 %v3835, %v3839
  %v3841 = vadd.s32 %v3840, 536870912
  %v3842 = vshrl.u32 %v3841, 30
  %v3843 = vshll.u32 %v3842, 30
  %v3844 = vsub.s32 %v3840, %v3843
  %vm3845 = vcmp.lt.s32.totalorder %v3844, 0
  %v3846 = vsub.s32 0, %v3844
  %v3847 = vsel %vm3845, %v3846, %v3844
  %v3848 = vclz %v3847
  %v3849 = vsub.s32 %v3848, 2
  %vm3850 = vcmp.gt.s32.totalorder 0, %v3849
  %v3851 = vsel %vm3850, 0, %v3849
  %v3852 = vsub.s32 32, %v3851
  %v3853 = vshll.u32 %v3844, %v3851
  %v3854 = vshrl.u32 %v3836, %v3852
  %v3855 = vor.u32 %v3853, %v3854
  %v3856 = vsub.s32 4294967266, %v3851
  %v3857 = vadd.s32 %v3856, 127
  %v3858 = vshll.u32 %v3857, 23
  %v3859 = vor.u32 4788187, %v3858
  %v3860 = vand.u32 2147483647, %v3859
  %v3862 = vcvt.s32.f32 %v3855
  %v3863 = vmul.f32 %v3862, %v3860
  %v3864 = vxor.u32 %v3863, 2147483648
  %v3865 = vsel %vm3782, %v3864, %v3863
  %v3866 = vsub.s32 4, %v3842
  %v3867 = vsel %vm3782, %v3866, %v3842
  %v3868 = vsel %vm3781, %v114, %v3865
  %v3869 = vsel %vm3781, 0, %v3867
  %v3870 = vcosq.f32.pop %v3868
  %v3871 = vsinq.f32.pop %v3868
  %vm3872 = vweird.f32 %v114
  %v3873 = vand.u32 %v3869, 3
  %vm3874 = vcmp.lt.s32.totalorder %v3873, 2
  %vm3875 = vcmp.eq.s32.totalorder %v3873, 0
  %v3876 = vxor.u32 %v3871, 2147483648
  %v3877 = vsel %vm3875, %v3870, %v3876
  %vm3878 = vcmp.eq.s32.totalorder %v3873, 2
  %v3879 = vxor.u32 %v3870, 2147483648
  %v3880 = vsel %vm3878, %v3879, %v3871
  %v3881 = vsel %vm3874, %v3877, %v3880
  %v3882 = vsel %vm3872, nan, %v3881
  %v3883 = vand.u32 2147483647, %v115
  %vm3884 = vcmp.le.f32.partialorder %v3883, 0.7853982
  %vm3885 = vcmp.lt.s32.totalorder %v115, 0
  %v3886 = vand.u32 %v115, 2139095040
  %v3887 = vshrl.u32 %v3886, 23
  %v3888 = vsub.s32 %v3887, 127
  %v3889 = vand.u32 2147483647, %v115
  %v3890 = vand.u32 %v3889, 8388607
  %v3891 = vor.u32 %v3890, 8388608
  %v3892 = vsub.s32 0, %v3891
  %v3893 = vadd.s32 %v3888, 1
  %vm3894 = vcmp.gt.s32.totalorder %v3893, 0
  %v3895 = vsel %vm3894, %v3893, 0
  %v3896 = vshrl.u32 %v3895, 5
  %v3897 = vand.u32 %v3895, 31
  %v3898 = vsub.s32 32, %v3897
  %v3899 = vshrl.u32 683565275, %v3898
  %v3900 = vshll.u32 683565275, %v3897
  %v3901 = vshrl.u32 2475754826, %v3898
  %v3902 = vor.u32 %v3900, %v3901
  %v3903 = vshll.u32 2475754826, %v3897
  %v3904 = vshrl.u32 2131351028, %v3898
  %v3905 = vor.u32 %v3903, %v3904
  %v3906 = vshll.u32 2131351028, %v3897
  %v3907 = vshrl.u32 2102212464, %v3898
  %v3908 = vor.u32 %v3906, %v3907
  %v3909 = vshll.u32 2102212464, %v3897
  %v3910 = vshrl.u32 920167782, %v3898
  %v3911 = vor.u32 %v3909, %v3910
  %v3912 = vshll.u32 920167782, %v3897
  %v3913 = vshrl.u32 1326507024, %v3898
  %v3914 = vor.u32 %v3912, %v3913
  %vm3915 = vcmp.lt.s32.totalorder %v3896, 1
  %vm3916 = vcmp.lt.s32.totalorder %v3896, 2
  %vm3917 = vcmp.lt.s32.totalorder %v3896, 3
  %vm3918 = vcmp.lt.s32.totalorder %v3896, 4
  %v3919 = vsel %vm3915, %v3899, %v3902
  %v3920 = vsel %vm3918, %v3908, 2102212464
  %v3921 = vsel %vm3917, %v3905, %v3920
  %v3922 = vsel %vm3916, %v3919, %v3921
  %v3923 = vsel %vm3915, %v3902, %v3905
  %v3924 = vsel %vm3918, %v3911, 920167782
  %v3925 = vsel %vm3917, %v3908, %v3924
  %v3926 = vsel %vm3916, %v3923, %v3925
  %v3927 = vsel %vm3915, %v3905, %v3908
  %v3928 = vsel %vm3918, %v3914, 1326507024
  %v3929 = vsel %vm3917, %v3911, %v3928
  %v3930 = vsel %vm3916, %v3927, %v3929
  %v3931 = vshll.u32 %v3891, 8
  %v3932 = vmul.u32.u64.compose %v3931, %v3930
  %v3933 = vextract.low.u32 %v3932
  %v3934 = vextract.high.u32 %v3932
  %v3935 = vmul.u32.u64.compose %v3931, %v3926
  %v3936 = vextract.low.u32 %v3935
  %v3937 = vextract.high.u32 %v3935
  %v3938 = vmul.u32 %v3931, %v3922
  %v3939 = vadd.s32 %v3934, %v3936
  %vm3940 = vc.u32 %v3934, %v3936
  %v3941 = vadd.s32 %v3937, 1
  %v3942 = vsel %vm3940, %v3941, %v3937
  %v3943 = vadd.s32 %v3938, %v3942
  %v3944 = vadd.s32 %v3943, 536870912
  %v3945 = vshrl.u32 %v3944, 30
  %v3946 = vshll.u32 %v3945, 30
  %v3947 = vsub.s32 %v3943, %v3946
  %vm3948 = vcmp.lt.s32.totalorder %v3947, 0
  %v3949 = vsub.s32 0, %v3947
  %v3950 = vsel %vm3948, %v3949, %v3947
  %v3951 = vclz %v3950
  %v3952 = vsub.s32 %v3951, 2
  %vm3953 = vcmp.gt.s32.totalorder 0, %v3952
  %v3954 = vsel %vm3953, 0, %v3952
  %v3955 = vsub.s32 32, %v3954
  %v3956 = vshll.u32 %v3947, %v3954
  %v3957 = vshrl.u32 %v3939, %v3955
  %v3958 = vor.u32 %v3956, %v3957
  %v3959 = vsub.s32 4294967266, %v3954
  %v3960 = vadd.s32 %v3959, 127
  %v3961 = vshll.u32 %v3960, 23
  %v3962 = vor.u32 4788187, %v3961
  %v3963 = vand.u32 2147483647, %v3962
  %v3965 = vcvt.s32.f32 %v3958
  %v3966 = vmul.f32 %v3965, %v3963
  %v3967 = vxor.u32 %v3966, 2147483648
  %v3968 = vsel %vm3885, %v3967, %v3966
  %v3969 = vsub.s32 4, %v3945
  %v3970 = vsel %vm3885, %v3969, %v3945
  %v3971 = vsel %vm3884, %v115, %v3968
  %v3972 = vsel %vm3884, 0, %v3970
  %v3973 = vcosq.f32.pop %v3971
  %v3974 = vsinq.f32.pop %v3971
  %vm3975 = vweird.f32 %v115
  %v3976 = vand.u32 %v3972, 3
  %vm3977 = vcmp.lt.s32.totalorder %v3976, 2
  %vm3978 = vcmp.eq.s32.totalorder %v3976, 0
  %v3979 = vxor.u32 %v3974, 2147483648
  %v3980 = vsel %vm3978, %v3973, %v3979
  %vm3981 = vcmp.eq.s32.totalorder %v3976, 2
  %v3982 = vxor.u32 %v3973, 2147483648
  %v3983 = vsel %vm3981, %v3982, %v3974
  %v3984 = vsel %vm3977, %v3980, %v3983
  %v3985 = vsel %vm3975, nan, %v3984
  %v3986 = vand.u32 2147483647, %v116
  %vm3987 = vcmp.le.f32.partialorder %v3986, 0.7853982
  %vm3988 = vcmp.lt.s32.totalorder %v116, 0
  %v3989 = vand.u32 %v116, 2139095040
  %v3990 = vshrl.u32 %v3989, 23
  %v3991 = vsub.s32 %v3990, 127
  %v3992 = vand.u32 2147483647, %v116
  %v3993 = vand.u32 %v3992, 8388607
  %v3994 = vor.u32 %v3993, 8388608
  %v3995 = vsub.s32 0, %v3994
  %v3996 = vadd.s32 %v3991, 1
  %vm3997 = vcmp.gt.s32.totalorder %v3996, 0
  %v3998 = vsel %vm3997, %v3996, 0
  %v3999 = vshrl.u32 %v3998, 5
  %v4000 = vand.u32 %v3998, 31
  %v4001 = vsub.s32 32, %v4000
  %v4002 = vshrl.u32 683565275, %v4001
  %v4003 = vshll.u32 683565275, %v4000
  %v4004 = vshrl.u32 2475754826, %v4001
  %v4005 = vor.u32 %v4003, %v4004
  %v4006 = vshll.u32 2475754826, %v4000
  %v4007 = vshrl.u32 2131351028, %v4001
  %v4008 = vor.u32 %v4006, %v4007
  %v4009 = vshll.u32 2131351028, %v4000
  %v4010 = vshrl.u32 2102212464, %v4001
  %v4011 = vor.u32 %v4009, %v4010
  %v4012 = vshll.u32 2102212464, %v4000
  %v4013 = vshrl.u32 920167782, %v4001
  %v4014 = vor.u32 %v4012, %v4013
  %v4015 = vshll.u32 920167782, %v4000
  %v4016 = vshrl.u32 1326507024, %v4001
  %v4017 = vor.u32 %v4015, %v4016
  %vm4018 = vcmp.lt.s32.totalorder %v3999, 1
  %vm4019 = vcmp.lt.s32.totalorder %v3999, 2
  %vm4020 = vcmp.lt.s32.totalorder %v3999, 3
  %vm4021 = vcmp.lt.s32.totalorder %v3999, 4
  %v4022 = vsel %vm4018, %v4002, %v4005
  %v4023 = vsel %vm4021, %v4011, 2102212464
  %v4024 = vsel %vm4020, %v4008, %v4023
  %v4025 = vsel %vm4019, %v4022, %v4024
  %v4026 = vsel %vm4018, %v4005, %v4008
  %v4027 = vsel %vm4021, %v4014, 920167782
  %v4028 = vsel %vm4020, %v4011, %v4027
  %v4029 = vsel %vm4019, %v4026, %v4028
  %v4030 = vsel %vm4018, %v4008, %v4011
  %v4031 = vsel %vm4021, %v4017, 1326507024
  %v4032 = vsel %vm4020, %v4014, %v4031
  %v4033 = vsel %vm4019, %v4030, %v4032
  %v4034 = vshll.u32 %v3994, 8
  %v4035 = vmul.u32.u64.compose %v4034, %v4033
  %v4036 = vextract.low.u32 %v4035
  %v4037 = vextract.high.u32 %v4035
  %v4038 = vmul.u32.u64.compose %v4034, %v4029
  %v4039 = vextract.low.u32 %v4038
  %v4040 = vextract.high.u32 %v4038
  %v4041 = vmul.u32 %v4034, %v4025
  %v4042 = vadd.s32 %v4037, %v4039
  %vm4043 = vc.u32 %v4037, %v4039
  %v4044 = vadd.s32 %v4040, 1
  %v4045 = vsel %vm4043, %v4044, %v4040
  %v4046 = vadd.s32 %v4041, %v4045
  %v4047 = vadd.s32 %v4046, 536870912
  %v4048 = vshrl.u32 %v4047, 30
  %v4049 = vshll.u32 %v4048, 30
  %v4050 = vsub.s32 %v4046, %v4049
  %vm4051 = vcmp.lt.s32.totalorder %v4050, 0
  %v4052 = vsub.s32 0, %v4050
  %v4053 = vsel %vm4051, %v4052, %v4050
  %v4054 = vclz %v4053
  %v4055 = vsub.s32 %v4054, 2
  %vm4056 = vcmp.gt.s32.totalorder 0, %v4055
  %v4057 = vsel %vm4056, 0, %v4055
  %v4058 = vsub.s32 32, %v4057
  %v4059 = vshll.u32 %v4050, %v4057
  %v4060 = vshrl.u32 %v4042, %v4058
  %v4061 = vor.u32 %v4059, %v4060
  %v4062 = vsub.s32 4294967266, %v4057
  %v4063 = vadd.s32 %v4062, 127
  %v4064 = vshll.u32 %v4063, 23
  %v4065 = vor.u32 4788187, %v4064
  %v4066 = vand.u32 2147483647, %v4065
  %v4068 = vcvt.s32.f32 %v4061
  %v4069 = vmul.f32 %v4068, %v4066
  %v4070 = vxor.u32 %v4069, 2147483648
  %v4071 = vsel %vm3988, %v4070, %v4069
  %v4072 = vsub.s32 4, %v4048
  %v4073 = vsel %vm3988, %v4072, %v4048
  %v4074 = vsel %vm3987, %v116, %v4071
  %v4075 = vsel %vm3987, 0, %v4073
  %v4076 = vcosq.f32.pop %v4074
  %v4077 = vsinq.f32.pop %v4074
  %vm4078 = vweird.f32 %v116
  %v4079 = vand.u32 %v4075, 3
  %vm4080 = vcmp.lt.s32.totalorder %v4079, 2
  %vm4081 = vcmp.eq.s32.totalorder %v4079, 0
  %v4082 = vxor.u32 %v4077, 2147483648
  %v4083 = vsel %vm4081, %v4076, %v4082
  %vm4084 = vcmp.eq.s32.totalorder %v4079, 2
  %v4085 = vxor.u32 %v4076, 2147483648
  %v4086 = vsel %vm4084, %v4085, %v4077
  %v4087 = vsel %vm4080, %v4083, %v4086
  %v4088 = vsel %vm4078, nan, %v4087
  %v4089 = vand.u32 2147483647, %v117
  %vm4090 = vcmp.le.f32.partialorder %v4089, 0.7853982
  %vm4091 = vcmp.lt.s32.totalorder %v117, 0
  %v4092 = vand.u32 %v117, 2139095040
  %v4093 = vshrl.u32 %v4092, 23
  %v4094 = vsub.s32 %v4093, 127
  %v4095 = vand.u32 2147483647, %v117
  %v4096 = vand.u32 %v4095, 8388607
  %v4097 = vor.u32 %v4096, 8388608
  %v4098 = vsub.s32 0, %v4097
  %v4099 = vadd.s32 %v4094, 1
  %vm4100 = vcmp.gt.s32.totalorder %v4099, 0
  %v4101 = vsel %vm4100, %v4099, 0
  %v4102 = vshrl.u32 %v4101, 5
  %v4103 = vand.u32 %v4101, 31
  %v4104 = vsub.s32 32, %v4103
  %v4105 = vshrl.u32 683565275, %v4104
  %v4106 = vshll.u32 683565275, %v4103
  %v4107 = vshrl.u32 2475754826, %v4104
  %v4108 = vor.u32 %v4106, %v4107
  %v4109 = vshll.u32 2475754826, %v4103
  %v4110 = vshrl.u32 2131351028, %v4104
  %v4111 = vor.u32 %v4109, %v4110
  %v4112 = vshll.u32 2131351028, %v4103
  %v4113 = vshrl.u32 2102212464, %v4104
  %v4114 = vor.u32 %v4112, %v4113
  %v4115 = vshll.u32 2102212464, %v4103
  %v4116 = vshrl.u32 920167782, %v4104
  %v4117 = vor.u32 %v4115, %v4116
  %v4118 = vshll.u32 920167782, %v4103
  %v4119 = vshrl.u32 1326507024, %v4104
  %v4120 = vor.u32 %v4118, %v4119
  %vm4121 = vcmp.lt.s32.totalorder %v4102, 1
  %vm4122 = vcmp.lt.s32.totalorder %v4102, 2
  %vm4123 = vcmp.lt.s32.totalorder %v4102, 3
  %vm4124 = vcmp.lt.s32.totalorder %v4102, 4
  %v4125 = vsel %vm4121, %v4105, %v4108
  %v4126 = vsel %vm4124, %v4114, 2102212464
  %v4127 = vsel %vm4123, %v4111, %v4126
  %v4128 = vsel %vm4122, %v4125, %v4127
  %v4129 = vsel %vm4121, %v4108, %v4111
  %v4130 = vsel %vm4124, %v4117, 920167782
  %v4131 = vsel %vm4123, %v4114, %v4130
  %v4132 = vsel %vm4122, %v4129, %v4131
  %v4133 = vsel %vm4121, %v4111, %v4114
  %v4134 = vsel %vm4124, %v4120, 1326507024
  %v4135 = vsel %vm4123, %v4117, %v4134
  %v4136 = vsel %vm4122, %v4133, %v4135
  %v4137 = vshll.u32 %v4097, 8
  %v4138 = vmul.u32.u64.compose %v4137, %v4136
  %v4139 = vextract.low.u32 %v4138
  %v4140 = vextract.high.u32 %v4138
  %v4141 = vmul.u32.u64.compose %v4137, %v4132
  %v4142 = vextract.low.u32 %v4141
  %v4143 = vextract.high.u32 %v4141
  %v4144 = vmul.u32 %v4137, %v4128
  %v4145 = vadd.s32 %v4140, %v4142
  %vm4146 = vc.u32 %v4140, %v4142
  %v4147 = vadd.s32 %v4143, 1
  %v4148 = vsel %vm4146, %v4147, %v4143
  %v4149 = vadd.s32 %v4144, %v4148
  %v4150 = vadd.s32 %v4149, 536870912
  %v4151 = vshrl.u32 %v4150, 30
  %v4152 = vshll.u32 %v4151, 30
  %v4153 = vsub.s32 %v4149, %v4152
  %vm4154 = vcmp.lt.s32.totalorder %v4153, 0
  %v4155 = vsub.s32 0, %v4153
  %v4156 = vsel %vm4154, %v4155, %v4153
  %v4157 = vclz %v4156
  %v4158 = vsub.s32 %v4157, 2
  %vm4159 = vcmp.gt.s32.totalorder 0, %v4158
  %v4160 = vsel %vm4159, 0, %v4158
  %v4161 = vsub.s32 32, %v4160
  %v4162 = vshll.u32 %v4153, %v4160
  %v4163 = vshrl.u32 %v4145, %v4161
  %v4164 = vor.u32 %v4162, %v4163
  %v4165 = vsub.s32 4294967266, %v4160
  %v4166 = vadd.s32 %v4165, 127
  %v4167 = vshll.u32 %v4166, 23
  %v4168 = vor.u32 4788187, %v4167
  %v4169 = vand.u32 2147483647, %v4168
  %v4171 = vcvt.s32.f32 %v4164
  %v4172 = vmul.f32 %v4171, %v4169
  %v4173 = vxor.u32 %v4172, 2147483648
  %v4174 = vsel %vm4091, %v4173, %v4172
  %v4175 = vsub.s32 4, %v4151
  %v4176 = vsel %vm4091, %v4175, %v4151
  %v4177 = vsel %vm4090, %v117, %v4174
  %v4178 = vsel %vm4090, 0, %v4176
  %v4179 = vcosq.f32.pop %v4177
  %v4180 = vsinq.f32.pop %v4177
  %vm4181 = vweird.f32 %v117
  %v4182 = vand.u32 %v4178, 3
  %vm4183 = vcmp.lt.s32.totalorder %v4182, 2
  %vm4184 = vcmp.eq.s32.totalorder %v4182, 0
  %v4185 = vxor.u32 %v4180, 2147483648
  %v4186 = vsel %vm4184, %v4179, %v4185
  %vm4187 = vcmp.eq.s32.totalorder %v4182, 2
  %v4188 = vxor.u32 %v4179, 2147483648
  %v4189 = vsel %vm4187, %v4188, %v4180
  %v4190 = vsel %vm4183, %v4186, %v4189
  %v4191 = vsel %vm4181, nan, %v4190
  %v4192 = vand.u32 2147483647, %v118
  %vm4193 = vcmp.le.f32.partialorder %v4192, 0.7853982
  %vm4194 = vcmp.lt.s32.totalorder %v118, 0
  %v4195 = vand.u32 %v118, 2139095040
  %v4196 = vshrl.u32 %v4195, 23
  %v4197 = vsub.s32 %v4196, 127
  %v4198 = vand.u32 2147483647, %v118
  %v4199 = vand.u32 %v4198, 8388607
  %v4200 = vor.u32 %v4199, 8388608
  %v4201 = vsub.s32 0, %v4200
  %v4202 = vadd.s32 %v4197, 1
  %vm4203 = vcmp.gt.s32.totalorder %v4202, 0
  %v4204 = vsel %vm4203, %v4202, 0
  %v4205 = vshrl.u32 %v4204, 5
  %v4206 = vand.u32 %v4204, 31
  %v4207 = vsub.s32 32, %v4206
  %v4208 = vshrl.u32 683565275, %v4207
  %v4209 = vshll.u32 683565275, %v4206
  %v4210 = vshrl.u32 2475754826, %v4207
  %v4211 = vor.u32 %v4209, %v4210
  %v4212 = vshll.u32 2475754826, %v4206
  %v4213 = vshrl.u32 2131351028, %v4207
  %v4214 = vor.u32 %v4212, %v4213
  %v4215 = vshll.u32 2131351028, %v4206
  %v4216 = vshrl.u32 2102212464, %v4207
  %v4217 = vor.u32 %v4215, %v4216
  %v4218 = vshll.u32 2102212464, %v4206
  %v4219 = vshrl.u32 920167782, %v4207
  %v4220 = vor.u32 %v4218, %v4219
  %v4221 = vshll.u32 920167782, %v4206
  %v4222 = vshrl.u32 1326507024, %v4207
  %v4223 = vor.u32 %v4221, %v4222
  %vm4224 = vcmp.lt.s32.totalorder %v4205, 1
  %vm4225 = vcmp.lt.s32.totalorder %v4205, 2
  %vm4226 = vcmp.lt.s32.totalorder %v4205, 3
  %vm4227 = vcmp.lt.s32.totalorder %v4205, 4
  %v4228 = vsel %vm4224, %v4208, %v4211
  %v4229 = vsel %vm4227, %v4217, 2102212464
  %v4230 = vsel %vm4226, %v4214, %v4229
  %v4231 = vsel %vm4225, %v4228, %v4230
  %v4232 = vsel %vm4224, %v4211, %v4214
  %v4233 = vsel %vm4227, %v4220, 920167782
  %v4234 = vsel %vm4226, %v4217, %v4233
  %v4235 = vsel %vm4225, %v4232, %v4234
  %v4236 = vsel %vm4224, %v4214, %v4217
  %v4237 = vsel %vm4227, %v4223, 1326507024
  %v4238 = vsel %vm4226, %v4220, %v4237
  %v4239 = vsel %vm4225, %v4236, %v4238
  %v4240 = vshll.u32 %v4200, 8
  %v4241 = vmul.u32.u64.compose %v4240, %v4239
  %v4242 = vextract.low.u32 %v4241
  %v4243 = vextract.high.u32 %v4241
  %v4244 = vmul.u32.u64.compose %v4240, %v4235
  %v4245 = vextract.low.u32 %v4244
  %v4246 = vextract.high.u32 %v4244
  %v4247 = vmul.u32 %v4240, %v4231
  %v4248 = vadd.s32 %v4243, %v4245
  %vm4249 = vc.u32 %v4243, %v4245
  %v4250 = vadd.s32 %v4246, 1
  %v4251 = vsel %vm4249, %v4250, %v4246
  %v4252 = vadd.s32 %v4247, %v4251
  %v4253 = vadd.s32 %v4252, 536870912
  %v4254 = vshrl.u32 %v4253, 30
  %v4255 = vshll.u32 %v4254, 30
  %v4256 = vsub.s32 %v4252, %v4255
  %vm4257 = vcmp.lt.s32.totalorder %v4256, 0
  %v4258 = vsub.s32 0, %v4256
  %v4259 = vsel %vm4257, %v4258, %v4256
  %v4260 = vclz %v4259
  %v4261 = vsub.s32 %v4260, 2
  %vm4262 = vcmp.gt.s32.totalorder 0, %v4261
  %v4263 = vsel %vm4262, 0, %v4261
  %v4264 = vsub.s32 32, %v4263
  %v4265 = vshll.u32 %v4256, %v4263
  %v4266 = vshrl.u32 %v4248, %v4264
  %v4267 = vor.u32 %v4265, %v4266
  %v4268 = vsub.s32 4294967266, %v4263
  %v4269 = vadd.s32 %v4268, 127
  %v4270 = vshll.u32 %v4269, 23
  %v4271 = vor.u32 4788187, %v4270
  %v4272 = vand.u32 2147483647, %v4271
  %v4274 = vcvt.s32.f32 %v4267
  %v4275 = vmul.f32 %v4274, %v4272
  %v4276 = vxor.u32 %v4275, 2147483648
  %v4277 = vsel %vm4194, %v4276, %v4275
  %v4278 = vsub.s32 4, %v4254
  %v4279 = vsel %vm4194, %v4278, %v4254
  %v4280 = vsel %vm4193, %v118, %v4277
  %v4281 = vsel %vm4193, 0, %v4279
  %v4282 = vcosq.f32.pop %v4280
  %v4283 = vsinq.f32.pop %v4280
  %vm4284 = vweird.f32 %v118
  %v4285 = vand.u32 %v4281, 3
  %vm4286 = vcmp.lt.s32.totalorder %v4285, 2
  %vm4287 = vcmp.eq.s32.totalorder %v4285, 0
  %v4288 = vxor.u32 %v4283, 2147483648
  %v4289 = vsel %vm4287, %v4282, %v4288
  %vm4290 = vcmp.eq.s32.totalorder %v4285, 2
  %v4291 = vxor.u32 %v4282, 2147483648
  %v4292 = vsel %vm4290, %v4291, %v4283
  %v4293 = vsel %vm4286, %v4289, %v4292
  %v4294 = vsel %vm4284, nan, %v4293
  %v4295 = vand.u32 2147483647, %v119
  %vm4296 = vcmp.le.f32.partialorder %v4295, 0.7853982
  %vm4297 = vcmp.lt.s32.totalorder %v119, 0
  %v4298 = vand.u32 %v119, 2139095040
  %v4299 = vshrl.u32 %v4298, 23
  %v4300 = vsub.s32 %v4299, 127
  %v4301 = vand.u32 2147483647, %v119
  %v4302 = vand.u32 %v4301, 8388607
  %v4303 = vor.u32 %v4302, 8388608
  %v4304 = vsub.s32 0, %v4303
  %v4305 = vadd.s32 %v4300, 1
  %vm4306 = vcmp.gt.s32.totalorder %v4305, 0
  %v4307 = vsel %vm4306, %v4305, 0
  %v4308 = vshrl.u32 %v4307, 5
  %v4309 = vand.u32 %v4307, 31
  %v4310 = vsub.s32 32, %v4309
  %v4311 = vshrl.u32 683565275, %v4310
  %v4312 = vshll.u32 683565275, %v4309
  %v4313 = vshrl.u32 2475754826, %v4310
  %v4314 = vor.u32 %v4312, %v4313
  %v4315 = vshll.u32 2475754826, %v4309
  %v4316 = vshrl.u32 2131351028, %v4310
  %v4317 = vor.u32 %v4315, %v4316
  %v4318 = vshll.u32 2131351028, %v4309
  %v4319 = vshrl.u32 2102212464, %v4310
  %v4320 = vor.u32 %v4318, %v4319
  %v4321 = vshll.u32 2102212464, %v4309
  %v4322 = vshrl.u32 920167782, %v4310
  %v4323 = vor.u32 %v4321, %v4322
  %v4324 = vshll.u32 920167782, %v4309
  %v4325 = vshrl.u32 1326507024, %v4310
  %v4326 = vor.u32 %v4324, %v4325
  %vm4327 = vcmp.lt.s32.totalorder %v4308, 1
  %vm4328 = vcmp.lt.s32.totalorder %v4308, 2
  %vm4329 = vcmp.lt.s32.totalorder %v4308, 3
  %vm4330 = vcmp.lt.s32.totalorder %v4308, 4
  %v4331 = vsel %vm4327, %v4311, %v4314
  %v4332 = vsel %vm4330, %v4320, 2102212464
  %v4333 = vsel %vm4329, %v4317, %v4332
  %v4334 = vsel %vm4328, %v4331, %v4333
  %v4335 = vsel %vm4327, %v4314, %v4317
  %v4336 = vsel %vm4330, %v4323, 920167782
  %v4337 = vsel %vm4329, %v4320, %v4336
  %v4338 = vsel %vm4328, %v4335, %v4337
  %v4339 = vsel %vm4327, %v4317, %v4320
  %v4340 = vsel %vm4330, %v4326, 1326507024
  %v4341 = vsel %vm4329, %v4323, %v4340
  %v4342 = vsel %vm4328, %v4339, %v4341
  %v4343 = vshll.u32 %v4303, 8
  %v4344 = vmul.u32.u64.compose %v4343, %v4342
  %v4345 = vextract.low.u32 %v4344
  %v4346 = vextract.high.u32 %v4344
  %v4347 = vmul.u32.u64.compose %v4343, %v4338
  %v4348 = vextract.low.u32 %v4347
  %v4349 = vextract.high.u32 %v4347
  %v4350 = vmul.u32 %v4343, %v4334
  %v4351 = vadd.s32 %v4346, %v4348
  %vm4352 = vc.u32 %v4346, %v4348
  %v4353 = vadd.s32 %v4349, 1
  %v4354 = vsel %vm4352, %v4353, %v4349
  %v4355 = vadd.s32 %v4350, %v4354
  %v4356 = vadd.s32 %v4355, 536870912
  %v4357 = vshrl.u32 %v4356, 30
  %v4358 = vshll.u32 %v4357, 30
  %v4359 = vsub.s32 %v4355, %v4358
  %vm4360 = vcmp.lt.s32.totalorder %v4359, 0
  %v4361 = vsub.s32 0, %v4359
  %v4362 = vsel %vm4360, %v4361, %v4359
  %v4363 = vclz %v4362
  %v4364 = vsub.s32 %v4363, 2
  %vm4365 = vcmp.gt.s32.totalorder 0, %v4364
  %v4366 = vsel %vm4365, 0, %v4364
  %v4367 = vsub.s32 32, %v4366
  %v4368 = vshll.u32 %v4359, %v4366
  %v4369 = vshrl.u32 %v4351, %v4367
  %v4370 = vor.u32 %v4368, %v4369
  %v4371 = vsub.s32 4294967266, %v4366
  %v4372 = vadd.s32 %v4371, 127
  %v4373 = vshll.u32 %v4372, 23
  %v4374 = vor.u32 4788187, %v4373
  %v4375 = vand.u32 2147483647, %v4374
  %v4377 = vcvt.s32.f32 %v4370
  %v4378 = vmul.f32 %v4377, %v4375
  %v4379 = vxor.u32 %v4378, 2147483648
  %v4380 = vsel %vm4297, %v4379, %v4378
  %v4381 = vsub.s32 4, %v4357
  %v4382 = vsel %vm4297, %v4381, %v4357
  %v4383 = vsel %vm4296, %v119, %v4380
  %v4384 = vsel %vm4296, 0, %v4382
  %v4385 = vcosq.f32.pop %v4383
  %v4386 = vsinq.f32.pop %v4383
  %vm4387 = vweird.f32 %v119
  %v4388 = vand.u32 %v4384, 3
  %vm4389 = vcmp.lt.s32.totalorder %v4388, 2
  %vm4390 = vcmp.eq.s32.totalorder %v4388, 0
  %v4391 = vxor.u32 %v4386, 2147483648
  %v4392 = vsel %vm4390, %v4385, %v4391
  %vm4393 = vcmp.eq.s32.totalorder %v4388, 2
  %v4394 = vxor.u32 %v4385, 2147483648
  %v4395 = vsel %vm4393, %v4394, %v4386
  %v4396 = vsel %vm4389, %v4392, %v4395
  %v4397 = vsel %vm4387, nan, %v4396
  %v4398 = vand.u32 2147483647, %v120
  %vm4399 = vcmp.le.f32.partialorder %v4398, 0.7853982
  %vm4400 = vcmp.lt.s32.totalorder %v120, 0
  %v4401 = vand.u32 %v120, 2139095040
  %v4402 = vshrl.u32 %v4401, 23
  %v4403 = vsub.s32 %v4402, 127
  %v4404 = vand.u32 2147483647, %v120
  %v4405 = vand.u32 %v4404, 8388607
  %v4406 = vor.u32 %v4405, 8388608
  %v4407 = vsub.s32 0, %v4406
  %v4408 = vadd.s32 %v4403, 1
  %vm4409 = vcmp.gt.s32.totalorder %v4408, 0
  %v4410 = vsel %vm4409, %v4408, 0
  %v4411 = vshrl.u32 %v4410, 5
  %v4412 = vand.u32 %v4410, 31
  %v4413 = vsub.s32 32, %v4412
  %v4414 = vshrl.u32 683565275, %v4413
  %v4415 = vshll.u32 683565275, %v4412
  %v4416 = vshrl.u32 2475754826, %v4413
  %v4417 = vor.u32 %v4415, %v4416
  %v4418 = vshll.u32 2475754826, %v4412
  %v4419 = vshrl.u32 2131351028, %v4413
  %v4420 = vor.u32 %v4418, %v4419
  %v4421 = vshll.u32 2131351028, %v4412
  %v4422 = vshrl.u32 2102212464, %v4413
  %v4423 = vor.u32 %v4421, %v4422
  %v4424 = vshll.u32 2102212464, %v4412
  %v4425 = vshrl.u32 920167782, %v4413
  %v4426 = vor.u32 %v4424, %v4425
  %v4427 = vshll.u32 920167782, %v4412
  %v4428 = vshrl.u32 1326507024, %v4413
  %v4429 = vor.u32 %v4427, %v4428
  %vm4430 = vcmp.lt.s32.totalorder %v4411, 1
  %vm4431 = vcmp.lt.s32.totalorder %v4411, 2
  %vm4432 = vcmp.lt.s32.totalorder %v4411, 3
  %vm4433 = vcmp.lt.s32.totalorder %v4411, 4
  %v4434 = vsel %vm4430, %v4414, %v4417
  %v4435 = vsel %vm4433, %v4423, 2102212464
  %v4436 = vsel %vm4432, %v4420, %v4435
  %v4437 = vsel %vm4431, %v4434, %v4436
  %v4438 = vsel %vm4430, %v4417, %v4420
  %v4439 = vsel %vm4433, %v4426, 920167782
  %v4440 = vsel %vm4432, %v4423, %v4439
  %v4441 = vsel %vm4431, %v4438, %v4440
  %v4442 = vsel %vm4430, %v4420, %v4423
  %v4443 = vsel %vm4433, %v4429, 1326507024
  %v4444 = vsel %vm4432, %v4426, %v4443
  %v4445 = vsel %vm4431, %v4442, %v4444
  %v4446 = vshll.u32 %v4406, 8
  %v4447 = vmul.u32.u64.compose %v4446, %v4445
  %v4448 = vextract.low.u32 %v4447
  %v4449 = vextract.high.u32 %v4447
  %v4450 = vmul.u32.u64.compose %v4446, %v4441
  %v4451 = vextract.low.u32 %v4450
  %v4452 = vextract.high.u32 %v4450
  %v4453 = vmul.u32 %v4446, %v4437
  %v4454 = vadd.s32 %v4449, %v4451
  %vm4455 = vc.u32 %v4449, %v4451
  %v4456 = vadd.s32 %v4452, 1
  %v4457 = vsel %vm4455, %v4456, %v4452
  %v4458 = vadd.s32 %v4453, %v4457
  %v4459 = vadd.s32 %v4458, 536870912
  %v4460 = vshrl.u32 %v4459, 30
  %v4461 = vshll.u32 %v4460, 30
  %v4462 = vsub.s32 %v4458, %v4461
  %vm4463 = vcmp.lt.s32.totalorder %v4462, 0
  %v4464 = vsub.s32 0, %v4462
  %v4465 = vsel %vm4463, %v4464, %v4462
  %v4466 = vclz %v4465
  %v4467 = vsub.s32 %v4466, 2
  %vm4468 = vcmp.gt.s32.totalorder 0, %v4467
  %v4469 = vsel %vm4468, 0, %v4467
  %v4470 = vsub.s32 32, %v4469
  %v4471 = vshll.u32 %v4462, %v4469
  %v4472 = vshrl.u32 %v4454, %v4470
  %v4473 = vor.u32 %v4471, %v4472
  %v4474 = vsub.s32 4294967266, %v4469
  %v4475 = vadd.s32 %v4474, 127
  %v4476 = vshll.u32 %v4475, 23
  %v4477 = vor.u32 4788187, %v4476
  %v4478 = vand.u32 2147483647, %v4477
  %v4480 = vcvt.s32.f32 %v4473
  %v4481 = vmul.f32 %v4480, %v4478
  %v4482 = vxor.u32 %v4481, 2147483648
  %v4483 = vsel %vm4400, %v4482, %v4481
  %v4484 = vsub.s32 4, %v4460
  %v4485 = vsel %vm4400, %v4484, %v4460
  %v4486 = vsel %vm4399, %v120, %v4483
  %v4487 = vsel %vm4399, 0, %v4485
  %v4488 = vcosq.f32.pop %v4486
  %v4489 = vsinq.f32.pop %v4486
  %vm4490 = vweird.f32 %v120
  %v4491 = vand.u32 %v4487, 3
  %vm4492 = vcmp.lt.s32.totalorder %v4491, 2
  %vm4493 = vcmp.eq.s32.totalorder %v4491, 0
  %v4494 = vxor.u32 %v4489, 2147483648
  %v4495 = vsel %vm4493, %v4488, %v4494
  %vm4496 = vcmp.eq.s32.totalorder %v4491, 2
  %v4497 = vxor.u32 %v4488, 2147483648
  %v4498 = vsel %vm4496, %v4497, %v4489
  %v4499 = vsel %vm4492, %v4495, %v4498
  %v4500 = vsel %vm4490, nan, %v4499
  %v4501 = vand.u32 2147483647, %v121
  %vm4502 = vcmp.le.f32.partialorder %v4501, 0.7853982
  %vm4503 = vcmp.lt.s32.totalorder %v121, 0
  %v4504 = vand.u32 %v121, 2139095040
  %v4505 = vshrl.u32 %v4504, 23
  %v4506 = vsub.s32 %v4505, 127
  %v4507 = vand.u32 2147483647, %v121
  %v4508 = vand.u32 %v4507, 8388607
  %v4509 = vor.u32 %v4508, 8388608
  %v4510 = vsub.s32 0, %v4509
  %v4511 = vadd.s32 %v4506, 1
  %vm4512 = vcmp.gt.s32.totalorder %v4511, 0
  %v4513 = vsel %vm4512, %v4511, 0
  %v4514 = vshrl.u32 %v4513, 5
  %v4515 = vand.u32 %v4513, 31
  %v4516 = vsub.s32 32, %v4515
  %v4517 = vshrl.u32 683565275, %v4516
  %v4518 = vshll.u32 683565275, %v4515
  %v4519 = vshrl.u32 2475754826, %v4516
  %v4520 = vor.u32 %v4518, %v4519
  %v4521 = vshll.u32 2475754826, %v4515
  %v4522 = vshrl.u32 2131351028, %v4516
  %v4523 = vor.u32 %v4521, %v4522
  %v4524 = vshll.u32 2131351028, %v4515
  %v4525 = vshrl.u32 2102212464, %v4516
  %v4526 = vor.u32 %v4524, %v4525
  %v4527 = vshll.u32 2102212464, %v4515
  %v4528 = vshrl.u32 920167782, %v4516
  %v4529 = vor.u32 %v4527, %v4528
  %v4530 = vshll.u32 920167782, %v4515
  %v4531 = vshrl.u32 1326507024, %v4516
  %v4532 = vor.u32 %v4530, %v4531
  %vm4533 = vcmp.lt.s32.totalorder %v4514, 1
  %vm4534 = vcmp.lt.s32.totalorder %v4514, 2
  %vm4535 = vcmp.lt.s32.totalorder %v4514, 3
  %vm4536 = vcmp.lt.s32.totalorder %v4514, 4
  %v4537 = vsel %vm4533, %v4517, %v4520
  %v4538 = vsel %vm4536, %v4526, 2102212464
  %v4539 = vsel %vm4535, %v4523, %v4538
  %v4540 = vsel %vm4534, %v4537, %v4539
  %v4541 = vsel %vm4533, %v4520, %v4523
  %v4542 = vsel %vm4536, %v4529, 920167782
  %v4543 = vsel %vm4535, %v4526, %v4542
  %v4544 = vsel %vm4534, %v4541, %v4543
  %v4545 = vsel %vm4533, %v4523, %v4526
  %v4546 = vsel %vm4536, %v4532, 1326507024
  %v4547 = vsel %vm4535, %v4529, %v4546
  %v4548 = vsel %vm4534, %v4545, %v4547
  %v4549 = vshll.u32 %v4509, 8
  %v4550 = vmul.u32.u64.compose %v4549, %v4548
  %v4551 = vextract.low.u32 %v4550
  %v4552 = vextract.high.u32 %v4550
  %v4553 = vmul.u32.u64.compose %v4549, %v4544
  %v4554 = vextract.low.u32 %v4553
  %v4555 = vextract.high.u32 %v4553
  %v4556 = vmul.u32 %v4549, %v4540
  %v4557 = vadd.s32 %v4552, %v4554
  %vm4558 = vc.u32 %v4552, %v4554
  %v4559 = vadd.s32 %v4555, 1
  %v4560 = vsel %vm4558, %v4559, %v4555
  %v4561 = vadd.s32 %v4556, %v4560
  %v4562 = vadd.s32 %v4561, 536870912
  %v4563 = vshrl.u32 %v4562, 30
  %v4564 = vshll.u32 %v4563, 30
  %v4565 = vsub.s32 %v4561, %v4564
  %vm4566 = vcmp.lt.s32.totalorder %v4565, 0
  %v4567 = vsub.s32 0, %v4565
  %v4568 = vsel %vm4566, %v4567, %v4565
  %v4569 = vclz %v4568
  %v4570 = vsub.s32 %v4569, 2
  %vm4571 = vcmp.gt.s32.totalorder 0, %v4570
  %v4572 = vsel %vm4571, 0, %v4570
  %v4573 = vsub.s32 32, %v4572
  %v4574 = vshll.u32 %v4565, %v4572
  %v4575 = vshrl.u32 %v4557, %v4573
  %v4576 = vor.u32 %v4574, %v4575
  %v4577 = vsub.s32 4294967266, %v4572
  %v4578 = vadd.s32 %v4577, 127
  %v4579 = vshll.u32 %v4578, 23
  %v4580 = vor.u32 4788187, %v4579
  %v4581 = vand.u32 2147483647, %v4580
  %v4583 = vcvt.s32.f32 %v4576
  %v4584 = vmul.f32 %v4583, %v4581
  %v4585 = vxor.u32 %v4584, 2147483648
  %v4586 = vsel %vm4503, %v4585, %v4584
  %v4587 = vsub.s32 4, %v4563
  %v4588 = vsel %vm4503, %v4587, %v4563
  %v4589 = vsel %vm4502, %v121, %v4586
  %v4590 = vsel %vm4502, 0, %v4588
  %v4591 = vcosq.f32.pop %v4589
  %v4592 = vsinq.f32.pop %v4589
  %vm4593 = vweird.f32 %v121
  %v4594 = vand.u32 %v4590, 3
  %vm4595 = vcmp.lt.s32.totalorder %v4594, 2
  %vm4596 = vcmp.eq.s32.totalorder %v4594, 0
  %v4597 = vxor.u32 %v4592, 2147483648
  %v4598 = vsel %vm4596, %v4591, %v4597
  %vm4599 = vcmp.eq.s32.totalorder %v4594, 2
  %v4600 = vxor.u32 %v4591, 2147483648
  %v4601 = vsel %vm4599, %v4600, %v4592
  %v4602 = vsel %vm4595, %v4598, %v4601
  %v4603 = vsel %vm4593, nan, %v4602
  %v4604 = vand.u32 2147483647, %v122
  %vm4605 = vcmp.le.f32.partialorder %v4604, 0.7853982
  %vm4606 = vcmp.lt.s32.totalorder %v122, 0
  %v4607 = vand.u32 %v122, 2139095040
  %v4608 = vshrl.u32 %v4607, 23
  %v4609 = vsub.s32 %v4608, 127
  %v4610 = vand.u32 2147483647, %v122
  %v4611 = vand.u32 %v4610, 8388607
  %v4612 = vor.u32 %v4611, 8388608
  %v4613 = vsub.s32 0, %v4612
  %v4614 = vadd.s32 %v4609, 1
  %vm4615 = vcmp.gt.s32.totalorder %v4614, 0
  %v4616 = vsel %vm4615, %v4614, 0
  %v4617 = vshrl.u32 %v4616, 5
  %v4618 = vand.u32 %v4616, 31
  %v4619 = vsub.s32 32, %v4618
  %v4620 = vshrl.u32 683565275, %v4619
  %v4621 = vshll.u32 683565275, %v4618
  %v4622 = vshrl.u32 2475754826, %v4619
  %v4623 = vor.u32 %v4621, %v4622
  %v4624 = vshll.u32 2475754826, %v4618
  %v4625 = vshrl.u32 2131351028, %v4619
  %v4626 = vor.u32 %v4624, %v4625
  %v4627 = vshll.u32 2131351028, %v4618
  %v4628 = vshrl.u32 2102212464, %v4619
  %v4629 = vor.u32 %v4627, %v4628
  %v4630 = vshll.u32 2102212464, %v4618
  %v4631 = vshrl.u32 920167782, %v4619
  %v4632 = vor.u32 %v4630, %v4631
  %v4633 = vshll.u32 920167782, %v4618
  %v4634 = vshrl.u32 1326507024, %v4619
  %v4635 = vor.u32 %v4633, %v4634
  %vm4636 = vcmp.lt.s32.totalorder %v4617, 1
  %vm4637 = vcmp.lt.s32.totalorder %v4617, 2
  %vm4638 = vcmp.lt.s32.totalorder %v4617, 3
  %vm4639 = vcmp.lt.s32.totalorder %v4617, 4
  %v4640 = vsel %vm4636, %v4620, %v4623
  %v4641 = vsel %vm4639, %v4629, 2102212464
  %v4642 = vsel %vm4638, %v4626, %v4641
  %v4643 = vsel %vm4637, %v4640, %v4642
  %v4644 = vsel %vm4636, %v4623, %v4626
  %v4645 = vsel %vm4639, %v4632, 920167782
  %v4646 = vsel %vm4638, %v4629, %v4645
  %v4647 = vsel %vm4637, %v4644, %v4646
  %v4648 = vsel %vm4636, %v4626, %v4629
  %v4649 = vsel %vm4639, %v4635, 1326507024
  %v4650 = vsel %vm4638, %v4632, %v4649
  %v4651 = vsel %vm4637, %v4648, %v4650
  %v4652 = vshll.u32 %v4612, 8
  %v4653 = vmul.u32.u64.compose %v4652, %v4651
  %v4654 = vextract.low.u32 %v4653
  %v4655 = vextract.high.u32 %v4653
  %v4656 = vmul.u32.u64.compose %v4652, %v4647
  %v4657 = vextract.low.u32 %v4656
  %v4658 = vextract.high.u32 %v4656
  %v4659 = vmul.u32 %v4652, %v4643
  %v4660 = vadd.s32 %v4655, %v4657
  %vm4661 = vc.u32 %v4655, %v4657
  %v4662 = vadd.s32 %v4658, 1
  %v4663 = vsel %vm4661, %v4662, %v4658
  %v4664 = vadd.s32 %v4659, %v4663
  %v4665 = vadd.s32 %v4664, 536870912
  %v4666 = vshrl.u32 %v4665, 30
  %v4667 = vshll.u32 %v4666, 30
  %v4668 = vsub.s32 %v4664, %v4667
  %vm4669 = vcmp.lt.s32.totalorder %v4668, 0
  %v4670 = vsub.s32 0, %v4668
  %v4671 = vsel %vm4669, %v4670, %v4668
  %v4672 = vclz %v4671
  %v4673 = vsub.s32 %v4672, 2
  %vm4674 = vcmp.gt.s32.totalorder 0, %v4673
  %v4675 = vsel %vm4674, 0, %v4673
  %v4676 = vsub.s32 32, %v4675
  %v4677 = vshll.u32 %v4668, %v4675
  %v4678 = vshrl.u32 %v4660, %v4676
  %v4679 = vor.u32 %v4677, %v4678
  %v4680 = vsub.s32 4294967266, %v4675
  %v4681 = vadd.s32 %v4680, 127
  %v4682 = vshll.u32 %v4681, 23
  %v4683 = vor.u32 4788187, %v4682
  %v4684 = vand.u32 2147483647, %v4683
  %v4686 = vcvt.s32.f32 %v4679
  %v4687 = vmul.f32 %v4686, %v4684
  %v4688 = vxor.u32 %v4687, 2147483648
  %v4689 = vsel %vm4606, %v4688, %v4687
  %v4690 = vsub.s32 4, %v4666
  %v4691 = vsel %vm4606, %v4690, %v4666
  %v4692 = vsel %vm4605, %v122, %v4689
  %v4693 = vsel %vm4605, 0, %v4691
  %v4694 = vcosq.f32.pop %v4692
  %v4695 = vsinq.f32.pop %v4692
  %vm4696 = vweird.f32 %v122
  %v4697 = vand.u32 %v4693, 3
  %vm4698 = vcmp.lt.s32.totalorder %v4697, 2
  %vm4699 = vcmp.eq.s32.totalorder %v4697, 0
  %v4700 = vxor.u32 %v4695, 2147483648
  %v4701 = vsel %vm4699, %v4694, %v4700
  %vm4702 = vcmp.eq.s32.totalorder %v4697, 2
  %v4703 = vxor.u32 %v4694, 2147483648
  %v4704 = vsel %vm4702, %v4703, %v4695
  %v4705 = vsel %vm4698, %v4701, %v4704
  %v4706 = vsel %vm4696, nan, %v4705
  %v4707 = vand.u32 2147483647, %v123
  %vm4708 = vcmp.le.f32.partialorder %v4707, 0.7853982
  %vm4709 = vcmp.lt.s32.totalorder %v123, 0
  %v4710 = vand.u32 %v123, 2139095040
  %v4711 = vshrl.u32 %v4710, 23
  %v4712 = vsub.s32 %v4711, 127
  %v4713 = vand.u32 2147483647, %v123
  %v4714 = vand.u32 %v4713, 8388607
  %v4715 = vor.u32 %v4714, 8388608
  %v4716 = vsub.s32 0, %v4715
  %v4717 = vadd.s32 %v4712, 1
  %vm4718 = vcmp.gt.s32.totalorder %v4717, 0
  %v4719 = vsel %vm4718, %v4717, 0
  %v4720 = vshrl.u32 %v4719, 5
  %v4721 = vand.u32 %v4719, 31
  %v4722 = vsub.s32 32, %v4721
  %v4723 = vshrl.u32 683565275, %v4722
  %v4724 = vshll.u32 683565275, %v4721
  %v4725 = vshrl.u32 2475754826, %v4722
  %v4726 = vor.u32 %v4724, %v4725
  %v4727 = vshll.u32 2475754826, %v4721
  %v4728 = vshrl.u32 2131351028, %v4722
  %v4729 = vor.u32 %v4727, %v4728
  %v4730 = vshll.u32 2131351028, %v4721
  %v4731 = vshrl.u32 2102212464, %v4722
  %v4732 = vor.u32 %v4730, %v4731
  %v4733 = vshll.u32 2102212464, %v4721
  %v4734 = vshrl.u32 920167782, %v4722
  %v4735 = vor.u32 %v4733, %v4734
  %v4736 = vshll.u32 920167782, %v4721
  %v4737 = vshrl.u32 1326507024, %v4722
  %v4738 = vor.u32 %v4736, %v4737
  %vm4739 = vcmp.lt.s32.totalorder %v4720, 1
  %vm4740 = vcmp.lt.s32.totalorder %v4720, 2
  %vm4741 = vcmp.lt.s32.totalorder %v4720, 3
  %vm4742 = vcmp.lt.s32.totalorder %v4720, 4
  %v4743 = vsel %vm4739, %v4723, %v4726
  %v4744 = vsel %vm4742, %v4732, 2102212464
  %v4745 = vsel %vm4741, %v4729, %v4744
  %v4746 = vsel %vm4740, %v4743, %v4745
  %v4747 = vsel %vm4739, %v4726, %v4729
  %v4748 = vsel %vm4742, %v4735, 920167782
  %v4749 = vsel %vm4741, %v4732, %v4748
  %v4750 = vsel %vm4740, %v4747, %v4749
  %v4751 = vsel %vm4739, %v4729, %v4732
  %v4752 = vsel %vm4742, %v4738, 1326507024
  %v4753 = vsel %vm4741, %v4735, %v4752
  %v4754 = vsel %vm4740, %v4751, %v4753
  %v4755 = vshll.u32 %v4715, 8
  %v4756 = vmul.u32.u64.compose %v4755, %v4754
  %v4757 = vextract.low.u32 %v4756
  %v4758 = vextract.high.u32 %v4756
  %v4759 = vmul.u32.u64.compose %v4755, %v4750
  %v4760 = vextract.low.u32 %v4759
  %v4761 = vextract.high.u32 %v4759
  %v4762 = vmul.u32 %v4755, %v4746
  %v4763 = vadd.s32 %v4758, %v4760
  %vm4764 = vc.u32 %v4758, %v4760
  %v4765 = vadd.s32 %v4761, 1
  %v4766 = vsel %vm4764, %v4765, %v4761
  %v4767 = vadd.s32 %v4762, %v4766
  %v4768 = vadd.s32 %v4767, 536870912
  %v4769 = vshrl.u32 %v4768, 30
  %v4770 = vshll.u32 %v4769, 30
  %v4771 = vsub.s32 %v4767, %v4770
  %vm4772 = vcmp.lt.s32.totalorder %v4771, 0
  %v4773 = vsub.s32 0, %v4771
  %v4774 = vsel %vm4772, %v4773, %v4771
  %v4775 = vclz %v4774
  %v4776 = vsub.s32 %v4775, 2
  %vm4777 = vcmp.gt.s32.totalorder 0, %v4776
  %v4778 = vsel %vm4777, 0, %v4776
  %v4779 = vsub.s32 32, %v4778
  %v4780 = vshll.u32 %v4771, %v4778
  %v4781 = vshrl.u32 %v4763, %v4779
  %v4782 = vor.u32 %v4780, %v4781
  %v4783 = vsub.s32 4294967266, %v4778
  %v4784 = vadd.s32 %v4783, 127
  %v4785 = vshll.u32 %v4784, 23
  %v4786 = vor.u32 4788187, %v4785
  %v4787 = vand.u32 2147483647, %v4786
  %v4789 = vcvt.s32.f32 %v4782
  %v4790 = vmul.f32 %v4789, %v4787
  %v4791 = vxor.u32 %v4790, 2147483648
  %v4792 = vsel %vm4709, %v4791, %v4790
  %v4793 = vsub.s32 4, %v4769
  %v4794 = vsel %vm4709, %v4793, %v4769
  %v4795 = vsel %vm4708, %v123, %v4792
  %v4796 = vsel %vm4708, 0, %v4794
  %v4797 = vcosq.f32.pop %v4795
  %v4798 = vsinq.f32.pop %v4795
  %vm4799 = vweird.f32 %v123
  %v4800 = vand.u32 %v4796, 3
  %vm4801 = vcmp.lt.s32.totalorder %v4800, 2
  %vm4802 = vcmp.eq.s32.totalorder %v4800, 0
  %v4803 = vxor.u32 %v4798, 2147483648
  %v4804 = vsel %vm4802, %v4797, %v4803
  %vm4805 = vcmp.eq.s32.totalorder %v4800, 2
  %v4806 = vxor.u32 %v4797, 2147483648
  %v4807 = vsel %vm4805, %v4806, %v4798
  %v4808 = vsel %vm4801, %v4804, %v4807
  %v4809 = vsel %vm4799, nan, %v4808
  %v4810 = vand.u32 2147483647, %v124
  %vm4811 = vcmp.le.f32.partialorder %v4810, 0.7853982
  %vm4812 = vcmp.lt.s32.totalorder %v124, 0
  %v4813 = vand.u32 %v124, 2139095040
  %v4814 = vshrl.u32 %v4813, 23
  %v4815 = vsub.s32 %v4814, 127
  %v4816 = vand.u32 2147483647, %v124
  %v4817 = vand.u32 %v4816, 8388607
  %v4818 = vor.u32 %v4817, 8388608
  %v4819 = vsub.s32 0, %v4818
  %v4820 = vadd.s32 %v4815, 1
  %vm4821 = vcmp.gt.s32.totalorder %v4820, 0
  %v4822 = vsel %vm4821, %v4820, 0
  %v4823 = vshrl.u32 %v4822, 5
  %v4824 = vand.u32 %v4822, 31
  %v4825 = vsub.s32 32, %v4824
  %v4826 = vshrl.u32 683565275, %v4825
  %v4827 = vshll.u32 683565275, %v4824
  %v4828 = vshrl.u32 2475754826, %v4825
  %v4829 = vor.u32 %v4827, %v4828
  %v4830 = vshll.u32 2475754826, %v4824
  %v4831 = vshrl.u32 2131351028, %v4825
  %v4832 = vor.u32 %v4830, %v4831
  %v4833 = vshll.u32 2131351028, %v4824
  %v4834 = vshrl.u32 2102212464, %v4825
  %v4835 = vor.u32 %v4833, %v4834
  %v4836 = vshll.u32 2102212464, %v4824
  %v4837 = vshrl.u32 920167782, %v4825
  %v4838 = vor.u32 %v4836, %v4837
  %v4839 = vshll.u32 920167782, %v4824
  %v4840 = vshrl.u32 1326507024, %v4825
  %v4841 = vor.u32 %v4839, %v4840
  %vm4842 = vcmp.lt.s32.totalorder %v4823, 1
  %vm4843 = vcmp.lt.s32.totalorder %v4823, 2
  %vm4844 = vcmp.lt.s32.totalorder %v4823, 3
  %vm4845 = vcmp.lt.s32.totalorder %v4823, 4
  %v4846 = vsel %vm4842, %v4826, %v4829
  %v4847 = vsel %vm4845, %v4835, 2102212464
  %v4848 = vsel %vm4844, %v4832, %v4847
  %v4849 = vsel %vm4843, %v4846, %v4848
  %v4850 = vsel %vm4842, %v4829, %v4832
  %v4851 = vsel %vm4845, %v4838, 920167782
  %v4852 = vsel %vm4844, %v4835, %v4851
  %v4853 = vsel %vm4843, %v4850, %v4852
  %v4854 = vsel %vm4842, %v4832, %v4835
  %v4855 = vsel %vm4845, %v4841, 1326507024
  %v4856 = vsel %vm4844, %v4838, %v4855
  %v4857 = vsel %vm4843, %v4854, %v4856
  %v4858 = vshll.u32 %v4818, 8
  %v4859 = vmul.u32.u64.compose %v4858, %v4857
  %v4860 = vextract.low.u32 %v4859
  %v4861 = vextract.high.u32 %v4859
  %v4862 = vmul.u32.u64.compose %v4858, %v4853
  %v4863 = vextract.low.u32 %v4862
  %v4864 = vextract.high.u32 %v4862
  %v4865 = vmul.u32 %v4858, %v4849
  %v4866 = vadd.s32 %v4861, %v4863
  %vm4867 = vc.u32 %v4861, %v4863
  %v4868 = vadd.s32 %v4864, 1
  %v4869 = vsel %vm4867, %v4868, %v4864
  %v4870 = vadd.s32 %v4865, %v4869
  %v4871 = vadd.s32 %v4870, 536870912
  %v4872 = vshrl.u32 %v4871, 30
  %v4873 = vshll.u32 %v4872, 30
  %v4874 = vsub.s32 %v4870, %v4873
  %vm4875 = vcmp.lt.s32.totalorder %v4874, 0
  %v4876 = vsub.s32 0, %v4874
  %v4877 = vsel %vm4875, %v4876, %v4874
  %v4878 = vclz %v4877
  %v4879 = vsub.s32 %v4878, 2
  %vm4880 = vcmp.gt.s32.totalorder 0, %v4879
  %v4881 = vsel %vm4880, 0, %v4879
  %v4882 = vsub.s32 32, %v4881
  %v4883 = vshll.u32 %v4874, %v4881
  %v4884 = vshrl.u32 %v4866, %v4882
  %v4885 = vor.u32 %v4883, %v4884
  %v4886 = vsub.s32 4294967266, %v4881
  %v4887 = vadd.s32 %v4886, 127
  %v4888 = vshll.u32 %v4887, 23
  %v4889 = vor.u32 4788187, %v4888
  %v4890 = vand.u32 2147483647, %v4889
  %v4892 = vcvt.s32.f32 %v4885
  %v4893 = vmul.f32 %v4892, %v4890
  %v4894 = vxor.u32 %v4893, 2147483648
  %v4895 = vsel %vm4812, %v4894, %v4893
  %v4896 = vsub.s32 4, %v4872
  %v4897 = vsel %vm4812, %v4896, %v4872
  %v4898 = vsel %vm4811, %v124, %v4895
  %v4899 = vsel %vm4811, 0, %v4897
  %v4900 = vcosq.f32.pop %v4898
  %v4901 = vsinq.f32.pop %v4898
  %vm4902 = vweird.f32 %v124
  %v4903 = vand.u32 %v4899, 3
  %vm4904 = vcmp.lt.s32.totalorder %v4903, 2
  %vm4905 = vcmp.eq.s32.totalorder %v4903, 0
  %v4906 = vxor.u32 %v4901, 2147483648
  %v4907 = vsel %vm4905, %v4900, %v4906
  %vm4908 = vcmp.eq.s32.totalorder %v4903, 2
  %v4909 = vxor.u32 %v4900, 2147483648
  %v4910 = vsel %vm4908, %v4909, %v4901
  %v4911 = vsel %vm4904, %v4907, %v4910
  %v4912 = vsel %vm4902, nan, %v4911
  %v4913 = vand.u32 2147483647, %v125
  %vm4914 = vcmp.le.f32.partialorder %v4913, 0.7853982
  %vm4915 = vcmp.lt.s32.totalorder %v125, 0
  %v4916 = vand.u32 %v125, 2139095040
  %v4917 = vshrl.u32 %v4916, 23
  %v4918 = vsub.s32 %v4917, 127
  %v4919 = vand.u32 2147483647, %v125
  %v4920 = vand.u32 %v4919, 8388607
  %v4921 = vor.u32 %v4920, 8388608
  %v4922 = vsub.s32 0, %v4921
  %v4923 = vadd.s32 %v4918, 1
  %vm4924 = vcmp.gt.s32.totalorder %v4923, 0
  %v4925 = vsel %vm4924, %v4923, 0
  %v4926 = vshrl.u32 %v4925, 5
  %v4927 = vand.u32 %v4925, 31
  %v4928 = vsub.s32 32, %v4927
  %v4929 = vshrl.u32 683565275, %v4928
  %v4930 = vshll.u32 683565275, %v4927
  %v4931 = vshrl.u32 2475754826, %v4928
  %v4932 = vor.u32 %v4930, %v4931
  %v4933 = vshll.u32 2475754826, %v4927
  %v4934 = vshrl.u32 2131351028, %v4928
  %v4935 = vor.u32 %v4933, %v4934
  %v4936 = vshll.u32 2131351028, %v4927
  %v4937 = vshrl.u32 2102212464, %v4928
  %v4938 = vor.u32 %v4936, %v4937
  %v4939 = vshll.u32 2102212464, %v4927
  %v4940 = vshrl.u32 920167782, %v4928
  %v4941 = vor.u32 %v4939, %v4940
  %v4942 = vshll.u32 920167782, %v4927
  %v4943 = vshrl.u32 1326507024, %v4928
  %v4944 = vor.u32 %v4942, %v4943
  %vm4945 = vcmp.lt.s32.totalorder %v4926, 1
  %vm4946 = vcmp.lt.s32.totalorder %v4926, 2
  %vm4947 = vcmp.lt.s32.totalorder %v4926, 3
  %vm4948 = vcmp.lt.s32.totalorder %v4926, 4
  %v4949 = vsel %vm4945, %v4929, %v4932
  %v4950 = vsel %vm4948, %v4938, 2102212464
  %v4951 = vsel %vm4947, %v4935, %v4950
  %v4952 = vsel %vm4946, %v4949, %v4951
  %v4953 = vsel %vm4945, %v4932, %v4935
  %v4954 = vsel %vm4948, %v4941, 920167782
  %v4955 = vsel %vm4947, %v4938, %v4954
  %v4956 = vsel %vm4946, %v4953, %v4955
  %v4957 = vsel %vm4945, %v4935, %v4938
  %v4958 = vsel %vm4948, %v4944, 1326507024
  %v4959 = vsel %vm4947, %v4941, %v4958
  %v4960 = vsel %vm4946, %v4957, %v4959
  %v4961 = vshll.u32 %v4921, 8
  %v4962 = vmul.u32.u64.compose %v4961, %v4960
  %v4963 = vextract.low.u32 %v4962
  %v4964 = vextract.high.u32 %v4962
  %v4965 = vmul.u32.u64.compose %v4961, %v4956
  %v4966 = vextract.low.u32 %v4965
  %v4967 = vextract.high.u32 %v4965
  %v4968 = vmul.u32 %v4961, %v4952
  %v4969 = vadd.s32 %v4964, %v4966
  %vm4970 = vc.u32 %v4964, %v4966
  %v4971 = vadd.s32 %v4967, 1
  %v4972 = vsel %vm4970, %v4971, %v4967
  %v4973 = vadd.s32 %v4968, %v4972
  %v4974 = vadd.s32 %v4973, 536870912
  %v4975 = vshrl.u32 %v4974, 30
  %v4976 = vshll.u32 %v4975, 30
  %v4977 = vsub.s32 %v4973, %v4976
  %vm4978 = vcmp.lt.s32.totalorder %v4977, 0
  %v4979 = vsub.s32 0, %v4977
  %v4980 = vsel %vm4978, %v4979, %v4977
  %v4981 = vclz %v4980
  %v4982 = vsub.s32 %v4981, 2
  %vm4983 = vcmp.gt.s32.totalorder 0, %v4982
  %v4984 = vsel %vm4983, 0, %v4982
  %v4985 = vsub.s32 32, %v4984
  %v4986 = vshll.u32 %v4977, %v4984
  %v4987 = vshrl.u32 %v4969, %v4985
  %v4988 = vor.u32 %v4986, %v4987
  %v4989 = vsub.s32 4294967266, %v4984
  %v4990 = vadd.s32 %v4989, 127
  %v4991 = vshll.u32 %v4990, 23
  %v4992 = vor.u32 4788187, %v4991
  %v4993 = vand.u32 2147483647, %v4992
  %v4995 = vcvt.s32.f32 %v4988
  %v4996 = vmul.f32 %v4995, %v4993
  %v4997 = vxor.u32 %v4996, 2147483648
  %v4998 = vsel %vm4915, %v4997, %v4996
  %v4999 = vsub.s32 4, %v4975
  %v5000 = vsel %vm4915, %v4999, %v4975
  %v5001 = vsel %vm4914, %v125, %v4998
  %v5002 = vsel %vm4914, 0, %v5000
  %v5003 = vcosq.f32.pop %v5001
  %v5004 = vsinq.f32.pop %v5001
  %vm5005 = vweird.f32 %v125
  %v5006 = vand.u32 %v5002, 3
  %vm5007 = vcmp.lt.s32.totalorder %v5006, 2
  %vm5008 = vcmp.eq.s32.totalorder %v5006, 0
  %v5009 = vxor.u32 %v5004, 2147483648
  %v5010 = vsel %vm5008, %v5003, %v5009
  %vm5011 = vcmp.eq.s32.totalorder %v5006, 2
  %v5012 = vxor.u32 %v5003, 2147483648
  %v5013 = vsel %vm5011, %v5012, %v5004
  %v5014 = vsel %vm5007, %v5010, %v5013
  %v5015 = vsel %vm5005, nan, %v5014
  %v5016 = vand.u32 2147483647, %v126
  %vm5017 = vcmp.le.f32.partialorder %v5016, 0.7853982
  %vm5018 = vcmp.lt.s32.totalorder %v126, 0
  %v5019 = vand.u32 %v126, 2139095040
  %v5020 = vshrl.u32 %v5019, 23
  %v5021 = vsub.s32 %v5020, 127
  %v5022 = vand.u32 2147483647, %v126
  %v5023 = vand.u32 %v5022, 8388607
  %v5024 = vor.u32 %v5023, 8388608
  %v5025 = vsub.s32 0, %v5024
  %v5026 = vadd.s32 %v5021, 1
  %vm5027 = vcmp.gt.s32.totalorder %v5026, 0
  %v5028 = vsel %vm5027, %v5026, 0
  %v5029 = vshrl.u32 %v5028, 5
  %v5030 = vand.u32 %v5028, 31
  %v5031 = vsub.s32 32, %v5030
  %v5032 = vshrl.u32 683565275, %v5031
  %v5033 = vshll.u32 683565275, %v5030
  %v5034 = vshrl.u32 2475754826, %v5031
  %v5035 = vor.u32 %v5033, %v5034
  %v5036 = vshll.u32 2475754826, %v5030
  %v5037 = vshrl.u32 2131351028, %v5031
  %v5038 = vor.u32 %v5036, %v5037
  %v5039 = vshll.u32 2131351028, %v5030
  %v5040 = vshrl.u32 2102212464, %v5031
  %v5041 = vor.u32 %v5039, %v5040
  %v5042 = vshll.u32 2102212464, %v5030
  %v5043 = vshrl.u32 920167782, %v5031
  %v5044 = vor.u32 %v5042, %v5043
  %v5045 = vshll.u32 920167782, %v5030
  %v5046 = vshrl.u32 1326507024, %v5031
  %v5047 = vor.u32 %v5045, %v5046
  %vm5048 = vcmp.lt.s32.totalorder %v5029, 1
  %vm5049 = vcmp.lt.s32.totalorder %v5029, 2
  %vm5050 = vcmp.lt.s32.totalorder %v5029, 3
  %vm5051 = vcmp.lt.s32.totalorder %v5029, 4
  %v5052 = vsel %vm5048, %v5032, %v5035
  %v5053 = vsel %vm5051, %v5041, 2102212464
  %v5054 = vsel %vm5050, %v5038, %v5053
  %v5055 = vsel %vm5049, %v5052, %v5054
  %v5056 = vsel %vm5048, %v5035, %v5038
  %v5057 = vsel %vm5051, %v5044, 920167782
  %v5058 = vsel %vm5050, %v5041, %v5057
  %v5059 = vsel %vm5049, %v5056, %v5058
  %v5060 = vsel %vm5048, %v5038, %v5041
  %v5061 = vsel %vm5051, %v5047, 1326507024
  %v5062 = vsel %vm5050, %v5044, %v5061
  %v5063 = vsel %vm5049, %v5060, %v5062
  %v5064 = vshll.u32 %v5024, 8
  %v5065 = vmul.u32.u64.compose %v5064, %v5063
  %v5066 = vextract.low.u32 %v5065
  %v5067 = vextract.high.u32 %v5065
  %v5068 = vmul.u32.u64.compose %v5064, %v5059
  %v5069 = vextract.low.u32 %v5068
  %v5070 = vextract.high.u32 %v5068
  %v5071 = vmul.u32 %v5064, %v5055
  %v5072 = vadd.s32 %v5067, %v5069
  %vm5073 = vc.u32 %v5067, %v5069
  %v5074 = vadd.s32 %v5070, 1
  %v5075 = vsel %vm5073, %v5074, %v5070
  %v5076 = vadd.s32 %v5071, %v5075
  %v5077 = vadd.s32 %v5076, 536870912
  %v5078 = vshrl.u32 %v5077, 30
  %v5079 = vshll.u32 %v5078, 30
  %v5080 = vsub.s32 %v5076, %v5079
  %vm5081 = vcmp.lt.s32.totalorder %v5080, 0
  %v5082 = vsub.s32 0, %v5080
  %v5083 = vsel %vm5081, %v5082, %v5080
  %v5084 = vclz %v5083
  %v5085 = vsub.s32 %v5084, 2
  %vm5086 = vcmp.gt.s32.totalorder 0, %v5085
  %v5087 = vsel %vm5086, 0, %v5085
  %v5088 = vsub.s32 32, %v5087
  %v5089 = vshll.u32 %v5080, %v5087
  %v5090 = vshrl.u32 %v5072, %v5088
  %v5091 = vor.u32 %v5089, %v5090
  %v5092 = vsub.s32 4294967266, %v5087
  %v5093 = vadd.s32 %v5092, 127
  %v5094 = vshll.u32 %v5093, 23
  %v5095 = vor.u32 4788187, %v5094
  %v5096 = vand.u32 2147483647, %v5095
  %v5098 = vcvt.s32.f32 %v5091
  %v5099 = vmul.f32 %v5098, %v5096
  %v5100 = vxor.u32 %v5099, 2147483648
  %v5101 = vsel %vm5018, %v5100, %v5099
  %v5102 = vsub.s32 4, %v5078
  %v5103 = vsel %vm5018, %v5102, %v5078
  %v5104 = vsel %vm5017, %v126, %v5101
  %v5105 = vsel %vm5017, 0, %v5103
  %v5106 = vcosq.f32.pop %v5104
  %v5107 = vsinq.f32.pop %v5104
  %vm5108 = vweird.f32 %v126
  %v5109 = vand.u32 %v5105, 3
  %vm5110 = vcmp.lt.s32.totalorder %v5109, 2
  %vm5111 = vcmp.eq.s32.totalorder %v5109, 0
  %v5112 = vxor.u32 %v5107, 2147483648
  %v5113 = vsel %vm5111, %v5106, %v5112
  %vm5114 = vcmp.eq.s32.totalorder %v5109, 2
  %v5115 = vxor.u32 %v5106, 2147483648
  %v5116 = vsel %vm5114, %v5115, %v5107
  %v5117 = vsel %vm5110, %v5113, %v5116
  %v5118 = vsel %vm5108, nan, %v5117
  %v5119 = vand.u32 2147483647, %v127
  %vm5120 = vcmp.le.f32.partialorder %v5119, 0.7853982
  %vm5121 = vcmp.lt.s32.totalorder %v127, 0
  %v5122 = vand.u32 %v127, 2139095040
  %v5123 = vshrl.u32 %v5122, 23
  %v5124 = vsub.s32 %v5123, 127
  %v5125 = vand.u32 2147483647, %v127
  %v5126 = vand.u32 %v5125, 8388607
  %v5127 = vor.u32 %v5126, 8388608
  %v5128 = vsub.s32 0, %v5127
  %v5129 = vadd.s32 %v5124, 1
  %vm5130 = vcmp.gt.s32.totalorder %v5129, 0
  %v5131 = vsel %vm5130, %v5129, 0
  %v5132 = vshrl.u32 %v5131, 5
  %v5133 = vand.u32 %v5131, 31
  %v5134 = vsub.s32 32, %v5133
  %v5135 = vshrl.u32 683565275, %v5134
  %v5136 = vshll.u32 683565275, %v5133
  %v5137 = vshrl.u32 2475754826, %v5134
  %v5138 = vor.u32 %v5136, %v5137
  %v5139 = vshll.u32 2475754826, %v5133
  %v5140 = vshrl.u32 2131351028, %v5134
  %v5141 = vor.u32 %v5139, %v5140
  %v5142 = vshll.u32 2131351028, %v5133
  %v5143 = vshrl.u32 2102212464, %v5134
  %v5144 = vor.u32 %v5142, %v5143
  %v5145 = vshll.u32 2102212464, %v5133
  %v5146 = vshrl.u32 920167782, %v5134
  %v5147 = vor.u32 %v5145, %v5146
  %v5148 = vshll.u32 920167782, %v5133
  %v5149 = vshrl.u32 1326507024, %v5134
  %v5150 = vor.u32 %v5148, %v5149
  %vm5151 = vcmp.lt.s32.totalorder %v5132, 1
  %vm5152 = vcmp.lt.s32.totalorder %v5132, 2
  %vm5153 = vcmp.lt.s32.totalorder %v5132, 3
  %vm5154 = vcmp.lt.s32.totalorder %v5132, 4
  %v5155 = vsel %vm5151, %v5135, %v5138
  %v5156 = vsel %vm5154, %v5144, 2102212464
  %v5157 = vsel %vm5153, %v5141, %v5156
  %v5158 = vsel %vm5152, %v5155, %v5157
  %v5159 = vsel %vm5151, %v5138, %v5141
  %v5160 = vsel %vm5154, %v5147, 920167782
  %v5161 = vsel %vm5153, %v5144, %v5160
  %v5162 = vsel %vm5152, %v5159, %v5161
  %v5163 = vsel %vm5151, %v5141, %v5144
  %v5164 = vsel %vm5154, %v5150, 1326507024
  %v5165 = vsel %vm5153, %v5147, %v5164
  %v5166 = vsel %vm5152, %v5163, %v5165
  %v5167 = vshll.u32 %v5127, 8
  %v5168 = vmul.u32.u64.compose %v5167, %v5166
  %v5169 = vextract.low.u32 %v5168
  %v5170 = vextract.high.u32 %v5168
  %v5171 = vmul.u32.u64.compose %v5167, %v5162
  %v5172 = vextract.low.u32 %v5171
  %v5173 = vextract.high.u32 %v5171
  %v5174 = vmul.u32 %v5167, %v5158
  %v5175 = vadd.s32 %v5170, %v5172
  %vm5176 = vc.u32 %v5170, %v5172
  %v5177 = vadd.s32 %v5173, 1
  %v5178 = vsel %vm5176, %v5177, %v5173
  %v5179 = vadd.s32 %v5174, %v5178
  %v5180 = vadd.s32 %v5179, 536870912
  %v5181 = vshrl.u32 %v5180, 30
  %v5182 = vshll.u32 %v5181, 30
  %v5183 = vsub.s32 %v5179, %v5182
  %vm5184 = vcmp.lt.s32.totalorder %v5183, 0
  %v5185 = vsub.s32 0, %v5183
  %v5186 = vsel %vm5184, %v5185, %v5183
  %v5187 = vclz %v5186
  %v5188 = vsub.s32 %v5187, 2
  %vm5189 = vcmp.gt.s32.totalorder 0, %v5188
  %v5190 = vsel %vm5189, 0, %v5188
  %v5191 = vsub.s32 32, %v5190
  %v5192 = vshll.u32 %v5183, %v5190
  %v5193 = vshrl.u32 %v5175, %v5191
  %v5194 = vor.u32 %v5192, %v5193
  %v5195 = vsub.s32 4294967266, %v5190
  %v5196 = vadd.s32 %v5195, 127
  %v5197 = vshll.u32 %v5196, 23
  %v5198 = vor.u32 4788187, %v5197
  %v5199 = vand.u32 2147483647, %v5198
  %v5201 = vcvt.s32.f32 %v5194
  %v5202 = vmul.f32 %v5201, %v5199
  %v5203 = vxor.u32 %v5202, 2147483648
  %v5204 = vsel %vm5121, %v5203, %v5202
  %v5205 = vsub.s32 4, %v5181
  %v5206 = vsel %vm5121, %v5205, %v5181
  %v5207 = vsel %vm5120, %v127, %v5204
  %v5208 = vsel %vm5120, 0, %v5206
  %v5209 = vcosq.f32.pop %v5207
  %v5210 = vsinq.f32.pop %v5207
  %vm5211 = vweird.f32 %v127
  %v5212 = vand.u32 %v5208, 3
  %vm5213 = vcmp.lt.s32.totalorder %v5212, 2
  %vm5214 = vcmp.eq.s32.totalorder %v5212, 0
  %v5215 = vxor.u32 %v5210, 2147483648
  %v5216 = vsel %vm5214, %v5209, %v5215
  %vm5217 = vcmp.eq.s32.totalorder %v5212, 2
  %v5218 = vxor.u32 %v5209, 2147483648
  %v5219 = vsel %vm5217, %v5218, %v5210
  %v5220 = vsel %vm5213, %v5216, %v5219
  %v5221 = vsel %vm5211, nan, %v5220
  %v5222 = vand.u32 2147483647, %v128
  %vm5223 = vcmp.le.f32.partialorder %v5222, 0.7853982
  %vm5224 = vcmp.lt.s32.totalorder %v128, 0
  %v5225 = vand.u32 %v128, 2139095040
  %v5226 = vshrl.u32 %v5225, 23
  %v5227 = vsub.s32 %v5226, 127
  %v5228 = vand.u32 2147483647, %v128
  %v5229 = vand.u32 %v5228, 8388607
  %v5230 = vor.u32 %v5229, 8388608
  %v5231 = vsub.s32 0, %v5230
  %v5232 = vadd.s32 %v5227, 1
  %vm5233 = vcmp.gt.s32.totalorder %v5232, 0
  %v5234 = vsel %vm5233, %v5232, 0
  %v5235 = vshrl.u32 %v5234, 5
  %v5236 = vand.u32 %v5234, 31
  %v5237 = vsub.s32 32, %v5236
  %v5238 = vshrl.u32 683565275, %v5237
  %v5239 = vshll.u32 683565275, %v5236
  %v5240 = vshrl.u32 2475754826, %v5237
  %v5241 = vor.u32 %v5239, %v5240
  %v5242 = vshll.u32 2475754826, %v5236
  %v5243 = vshrl.u32 2131351028, %v5237
  %v5244 = vor.u32 %v5242, %v5243
  %v5245 = vshll.u32 2131351028, %v5236
  %v5246 = vshrl.u32 2102212464, %v5237
  %v5247 = vor.u32 %v5245, %v5246
  %v5248 = vshll.u32 2102212464, %v5236
  %v5249 = vshrl.u32 920167782, %v5237
  %v5250 = vor.u32 %v5248, %v5249
  %v5251 = vshll.u32 920167782, %v5236
  %v5252 = vshrl.u32 1326507024, %v5237
  %v5253 = vor.u32 %v5251, %v5252
  %vm5254 = vcmp.lt.s32.totalorder %v5235, 1
  %vm5255 = vcmp.lt.s32.totalorder %v5235, 2
  %vm5256 = vcmp.lt.s32.totalorder %v5235, 3
  %vm5257 = vcmp.lt.s32.totalorder %v5235, 4
  %v5258 = vsel %vm5254, %v5238, %v5241
  %v5259 = vsel %vm5257, %v5247, 2102212464
  %v5260 = vsel %vm5256, %v5244, %v5259
  %v5261 = vsel %vm5255, %v5258, %v5260
  %v5262 = vsel %vm5254, %v5241, %v5244
  %v5263 = vsel %vm5257, %v5250, 920167782
  %v5264 = vsel %vm5256, %v5247, %v5263
  %v5265 = vsel %vm5255, %v5262, %v5264
  %v5266 = vsel %vm5254, %v5244, %v5247
  %v5267 = vsel %vm5257, %v5253, 1326507024
  %v5268 = vsel %vm5256, %v5250, %v5267
  %v5269 = vsel %vm5255, %v5266, %v5268
  %v5270 = vshll.u32 %v5230, 8
  %v5271 = vmul.u32.u64.compose %v5270, %v5269
  %v5272 = vextract.low.u32 %v5271
  %v5273 = vextract.high.u32 %v5271
  %v5274 = vmul.u32.u64.compose %v5270, %v5265
  %v5275 = vextract.low.u32 %v5274
  %v5276 = vextract.high.u32 %v5274
  %v5277 = vmul.u32 %v5270, %v5261
  %v5278 = vadd.s32 %v5273, %v5275
  %vm5279 = vc.u32 %v5273, %v5275
  %v5280 = vadd.s32 %v5276, 1
  %v5281 = vsel %vm5279, %v5280, %v5276
  %v5282 = vadd.s32 %v5277, %v5281
  %v5283 = vadd.s32 %v5282, 536870912
  %v5284 = vshrl.u32 %v5283, 30
  %v5285 = vshll.u32 %v5284, 30
  %v5286 = vsub.s32 %v5282, %v5285
  %vm5287 = vcmp.lt.s32.totalorder %v5286, 0
  %v5288 = vsub.s32 0, %v5286
  %v5289 = vsel %vm5287, %v5288, %v5286
  %v5290 = vclz %v5289
  %v5291 = vsub.s32 %v5290, 2
  %vm5292 = vcmp.gt.s32.totalorder 0, %v5291
  %v5293 = vsel %vm5292, 0, %v5291
  %v5294 = vsub.s32 32, %v5293
  %v5295 = vshll.u32 %v5286, %v5293
  %v5296 = vshrl.u32 %v5278, %v5294
  %v5297 = vor.u32 %v5295, %v5296
  %v5298 = vsub.s32 4294967266, %v5293
  %v5299 = vadd.s32 %v5298, 127
  %v5300 = vshll.u32 %v5299, 23
  %v5301 = vor.u32 4788187, %v5300
  %v5302 = vand.u32 2147483647, %v5301
  %v5304 = vcvt.s32.f32 %v5297
  %v5305 = vmul.f32 %v5304, %v5302
  %v5306 = vxor.u32 %v5305, 2147483648
  %v5307 = vsel %vm5224, %v5306, %v5305
  %v5308 = vsub.s32 4, %v5284
  %v5309 = vsel %vm5224, %v5308, %v5284
  %v5310 = vsel %vm5223, %v128, %v5307
  %v5311 = vsel %vm5223, 0, %v5309
  %v5312 = vcosq.f32.pop %v5310
  %v5313 = vsinq.f32.pop %v5310
  %vm5314 = vweird.f32 %v128
  %v5315 = vand.u32 %v5311, 3
  %vm5316 = vcmp.lt.s32.totalorder %v5315, 2
  %vm5317 = vcmp.eq.s32.totalorder %v5315, 0
  %v5318 = vxor.u32 %v5313, 2147483648
  %v5319 = vsel %vm5317, %v5312, %v5318
  %vm5320 = vcmp.eq.s32.totalorder %v5315, 2
  %v5321 = vxor.u32 %v5312, 2147483648
  %v5322 = vsel %vm5320, %v5321, %v5313
  %v5323 = vsel %vm5316, %v5319, %v5322
  %v5324 = vsel %vm5314, nan, %v5323
  %v5325 = vand.u32 2147483647, %v129
  %vm5326 = vcmp.le.f32.partialorder %v5325, 0.7853982
  %vm5327 = vcmp.lt.s32.totalorder %v129, 0
  %v5328 = vand.u32 %v129, 2139095040
  %v5329 = vshrl.u32 %v5328, 23
  %v5330 = vsub.s32 %v5329, 127
  %v5331 = vand.u32 2147483647, %v129
  %v5332 = vand.u32 %v5331, 8388607
  %v5333 = vor.u32 %v5332, 8388608
  %v5334 = vsub.s32 0, %v5333
  %v5335 = vadd.s32 %v5330, 1
  %vm5336 = vcmp.gt.s32.totalorder %v5335, 0
  %v5337 = vsel %vm5336, %v5335, 0
  %v5338 = vshrl.u32 %v5337, 5
  %v5339 = vand.u32 %v5337, 31
  %v5340 = vsub.s32 32, %v5339
  %v5341 = vshrl.u32 683565275, %v5340
  %v5342 = vshll.u32 683565275, %v5339
  %v5343 = vshrl.u32 2475754826, %v5340
  %v5344 = vor.u32 %v5342, %v5343
  %v5345 = vshll.u32 2475754826, %v5339
  %v5346 = vshrl.u32 2131351028, %v5340
  %v5347 = vor.u32 %v5345, %v5346
  %v5348 = vshll.u32 2131351028, %v5339
  %v5349 = vshrl.u32 2102212464, %v5340
  %v5350 = vor.u32 %v5348, %v5349
  %v5351 = vshll.u32 2102212464, %v5339
  %v5352 = vshrl.u32 920167782, %v5340
  %v5353 = vor.u32 %v5351, %v5352
  %v5354 = vshll.u32 920167782, %v5339
  %v5355 = vshrl.u32 1326507024, %v5340
  %v5356 = vor.u32 %v5354, %v5355
  %vm5357 = vcmp.lt.s32.totalorder %v5338, 1
  %vm5358 = vcmp.lt.s32.totalorder %v5338, 2
  %vm5359 = vcmp.lt.s32.totalorder %v5338, 3
  %vm5360 = vcmp.lt.s32.totalorder %v5338, 4
  %v5361 = vsel %vm5357, %v5341, %v5344
  %v5362 = vsel %vm5360, %v5350, 2102212464
  %v5363 = vsel %vm5359, %v5347, %v5362
  %v5364 = vsel %vm5358, %v5361, %v5363
  %v5365 = vsel %vm5357, %v5344, %v5347
  %v5366 = vsel %vm5360, %v5353, 920167782
  %v5367 = vsel %vm5359, %v5350, %v5366
  %v5368 = vsel %vm5358, %v5365, %v5367
  %v5369 = vsel %vm5357, %v5347, %v5350
  %v5370 = vsel %vm5360, %v5356, 1326507024
  %v5371 = vsel %vm5359, %v5353, %v5370
  %v5372 = vsel %vm5358, %v5369, %v5371
  %v5373 = vshll.u32 %v5333, 8
  %v5374 = vmul.u32.u64.compose %v5373, %v5372
  %v5375 = vextract.low.u32 %v5374
  %v5376 = vextract.high.u32 %v5374
  %v5377 = vmul.u32.u64.compose %v5373, %v5368
  %v5378 = vextract.low.u32 %v5377
  %v5379 = vextract.high.u32 %v5377
  %v5380 = vmul.u32 %v5373, %v5364
  %v5381 = vadd.s32 %v5376, %v5378
  %vm5382 = vc.u32 %v5376, %v5378
  %v5383 = vadd.s32 %v5379, 1
  %v5384 = vsel %vm5382, %v5383, %v5379
  %v5385 = vadd.s32 %v5380, %v5384
  %v5386 = vadd.s32 %v5385, 536870912
  %v5387 = vshrl.u32 %v5386, 30
  %v5388 = vshll.u32 %v5387, 30
  %v5389 = vsub.s32 %v5385, %v5388
  %vm5390 = vcmp.lt.s32.totalorder %v5389, 0
  %v5391 = vsub.s32 0, %v5389
  %v5392 = vsel %vm5390, %v5391, %v5389
  %v5393 = vclz %v5392
  %v5394 = vsub.s32 %v5393, 2
  %vm5395 = vcmp.gt.s32.totalorder 0, %v5394
  %v5396 = vsel %vm5395, 0, %v5394
  %v5397 = vsub.s32 32, %v5396
  %v5398 = vshll.u32 %v5389, %v5396
  %v5399 = vshrl.u32 %v5381, %v5397
  %v5400 = vor.u32 %v5398, %v5399
  %v5401 = vsub.s32 4294967266, %v5396
  %v5402 = vadd.s32 %v5401, 127
  %v5403 = vshll.u32 %v5402, 23
  %v5404 = vor.u32 4788187, %v5403
  %v5405 = vand.u32 2147483647, %v5404
  %v5407 = vcvt.s32.f32 %v5400
  %v5408 = vmul.f32 %v5407, %v5405
  %v5409 = vxor.u32 %v5408, 2147483648
  %v5410 = vsel %vm5327, %v5409, %v5408
  %v5411 = vsub.s32 4, %v5387
  %v5412 = vsel %vm5327, %v5411, %v5387
  %v5413 = vsel %vm5326, %v129, %v5410
  %v5414 = vsel %vm5326, 0, %v5412
  %v5415 = vcosq.f32.pop %v5413
  %v5416 = vsinq.f32.pop %v5413
  %vm5417 = vweird.f32 %v129
  %v5418 = vand.u32 %v5414, 3
  %vm5419 = vcmp.lt.s32.totalorder %v5418, 2
  %vm5420 = vcmp.eq.s32.totalorder %v5418, 0
  %v5421 = vxor.u32 %v5416, 2147483648
  %v5422 = vsel %vm5420, %v5415, %v5421
  %vm5423 = vcmp.eq.s32.totalorder %v5418, 2
  %v5424 = vxor.u32 %v5415, 2147483648
  %v5425 = vsel %vm5423, %v5424, %v5416
  %v5426 = vsel %vm5419, %v5422, %v5425
  %v5427 = vsel %vm5417, nan, %v5426
  %v5428 = vand.u32 2147483647, %v130
  %vm5429 = vcmp.le.f32.partialorder %v5428, 0.7853982
  %vm5430 = vcmp.lt.s32.totalorder %v130, 0
  %v5431 = vand.u32 %v130, 2139095040
  %v5432 = vshrl.u32 %v5431, 23
  %v5433 = vsub.s32 %v5432, 127
  %v5434 = vand.u32 2147483647, %v130
  %v5435 = vand.u32 %v5434, 8388607
  %v5436 = vor.u32 %v5435, 8388608
  %v5437 = vsub.s32 0, %v5436
  %v5438 = vadd.s32 %v5433, 1
  %vm5439 = vcmp.gt.s32.totalorder %v5438, 0
  %v5440 = vsel %vm5439, %v5438, 0
  %v5441 = vshrl.u32 %v5440, 5
  %v5442 = vand.u32 %v5440, 31
  %v5443 = vsub.s32 32, %v5442
  %v5444 = vshrl.u32 683565275, %v5443
  %v5445 = vshll.u32 683565275, %v5442
  %v5446 = vshrl.u32 2475754826, %v5443
  %v5447 = vor.u32 %v5445, %v5446
  %v5448 = vshll.u32 2475754826, %v5442
  %v5449 = vshrl.u32 2131351028, %v5443
  %v5450 = vor.u32 %v5448, %v5449
  %v5451 = vshll.u32 2131351028, %v5442
  %v5452 = vshrl.u32 2102212464, %v5443
  %v5453 = vor.u32 %v5451, %v5452
  %v5454 = vshll.u32 2102212464, %v5442
  %v5455 = vshrl.u32 920167782, %v5443
  %v5456 = vor.u32 %v5454, %v5455
  %v5457 = vshll.u32 920167782, %v5442
  %v5458 = vshrl.u32 1326507024, %v5443
  %v5459 = vor.u32 %v5457, %v5458
  %vm5460 = vcmp.lt.s32.totalorder %v5441, 1
  %vm5461 = vcmp.lt.s32.totalorder %v5441, 2
  %vm5462 = vcmp.lt.s32.totalorder %v5441, 3
  %vm5463 = vcmp.lt.s32.totalorder %v5441, 4
  %v5464 = vsel %vm5460, %v5444, %v5447
  %v5465 = vsel %vm5463, %v5453, 2102212464
  %v5466 = vsel %vm5462, %v5450, %v5465
  %v5467 = vsel %vm5461, %v5464, %v5466
  %v5468 = vsel %vm5460, %v5447, %v5450
  %v5469 = vsel %vm5463, %v5456, 920167782
  %v5470 = vsel %vm5462, %v5453, %v5469
  %v5471 = vsel %vm5461, %v5468, %v5470
  %v5472 = vsel %vm5460, %v5450, %v5453
  %v5473 = vsel %vm5463, %v5459, 1326507024
  %v5474 = vsel %vm5462, %v5456, %v5473
  %v5475 = vsel %vm5461, %v5472, %v5474
  %v5476 = vshll.u32 %v5436, 8
  %v5477 = vmul.u32.u64.compose %v5476, %v5475
  %v5478 = vextract.low.u32 %v5477
  %v5479 = vextract.high.u32 %v5477
  %v5480 = vmul.u32.u64.compose %v5476, %v5471
  %v5481 = vextract.low.u32 %v5480
  %v5482 = vextract.high.u32 %v5480
  %v5483 = vmul.u32 %v5476, %v5467
  %v5484 = vadd.s32 %v5479, %v5481
  %vm5485 = vc.u32 %v5479, %v5481
  %v5486 = vadd.s32 %v5482, 1
  %v5487 = vsel %vm5485, %v5486, %v5482
  %v5488 = vadd.s32 %v5483, %v5487
  %v5489 = vadd.s32 %v5488, 536870912
  %v5490 = vshrl.u32 %v5489, 30
  %v5491 = vshll.u32 %v5490, 30
  %v5492 = vsub.s32 %v5488, %v5491
  %vm5493 = vcmp.lt.s32.totalorder %v5492, 0
  %v5494 = vsub.s32 0, %v5492
  %v5495 = vsel %vm5493, %v5494, %v5492
  %v5496 = vclz %v5495
  %v5497 = vsub.s32 %v5496, 2
  %vm5498 = vcmp.gt.s32.totalorder 0, %v5497
  %v5499 = vsel %vm5498, 0, %v5497
  %v5500 = vsub.s32 32, %v5499
  %v5501 = vshll.u32 %v5492, %v5499
  %v5502 = vshrl.u32 %v5484, %v5500
  %v5503 = vor.u32 %v5501, %v5502
  %v5504 = vsub.s32 4294967266, %v5499
  %v5505 = vadd.s32 %v5504, 127
  %v5506 = vshll.u32 %v5505, 23
  %v5507 = vor.u32 4788187, %v5506
  %v5508 = vand.u32 2147483647, %v5507
  %v5510 = vcvt.s32.f32 %v5503
  %v5511 = vmul.f32 %v5510, %v5508
  %v5512 = vxor.u32 %v5511, 2147483648
  %v5513 = vsel %vm5430, %v5512, %v5511
  %v5514 = vsub.s32 4, %v5490
  %v5515 = vsel %vm5430, %v5514, %v5490
  %v5516 = vsel %vm5429, %v130, %v5513
  %v5517 = vsel %vm5429, 0, %v5515
  %v5518 = vcosq.f32.pop %v5516
  %v5519 = vsinq.f32.pop %v5516
  %vm5520 = vweird.f32 %v130
  %v5521 = vand.u32 %v5517, 3
  %vm5522 = vcmp.lt.s32.totalorder %v5521, 2
  %vm5523 = vcmp.eq.s32.totalorder %v5521, 0
  %v5524 = vxor.u32 %v5519, 2147483648
  %v5525 = vsel %vm5523, %v5518, %v5524
  %vm5526 = vcmp.eq.s32.totalorder %v5521, 2
  %v5527 = vxor.u32 %v5518, 2147483648
  %v5528 = vsel %vm5526, %v5527, %v5519
  %v5529 = vsel %vm5522, %v5525, %v5528
  %v5530 = vsel %vm5520, nan, %v5529
  %v5531 = vand.u32 2147483647, %v131
  %vm5532 = vcmp.le.f32.partialorder %v5531, 0.7853982
  %vm5533 = vcmp.lt.s32.totalorder %v131, 0
  %v5534 = vand.u32 %v131, 2139095040
  %v5535 = vshrl.u32 %v5534, 23
  %v5536 = vsub.s32 %v5535, 127
  %v5537 = vand.u32 2147483647, %v131
  %v5538 = vand.u32 %v5537, 8388607
  %v5539 = vor.u32 %v5538, 8388608
  %v5540 = vsub.s32 0, %v5539
  %v5541 = vadd.s32 %v5536, 1
  %vm5542 = vcmp.gt.s32.totalorder %v5541, 0
  %v5543 = vsel %vm5542, %v5541, 0
  %v5544 = vshrl.u32 %v5543, 5
  %v5545 = vand.u32 %v5543, 31
  %v5546 = vsub.s32 32, %v5545
  %v5547 = vshrl.u32 683565275, %v5546
  %v5548 = vshll.u32 683565275, %v5545
  %v5549 = vshrl.u32 2475754826, %v5546
  %v5550 = vor.u32 %v5548, %v5549
  %v5551 = vshll.u32 2475754826, %v5545
  %v5552 = vshrl.u32 2131351028, %v5546
  %v5553 = vor.u32 %v5551, %v5552
  %v5554 = vshll.u32 2131351028, %v5545
  %v5555 = vshrl.u32 2102212464, %v5546
  %v5556 = vor.u32 %v5554, %v5555
  %v5557 = vshll.u32 2102212464, %v5545
  %v5558 = vshrl.u32 920167782, %v5546
  %v5559 = vor.u32 %v5557, %v5558
  %v5560 = vshll.u32 920167782, %v5545
  %v5561 = vshrl.u32 1326507024, %v5546
  %v5562 = vor.u32 %v5560, %v5561
  %vm5563 = vcmp.lt.s32.totalorder %v5544, 1
  %vm5564 = vcmp.lt.s32.totalorder %v5544, 2
  %vm5565 = vcmp.lt.s32.totalorder %v5544, 3
  %vm5566 = vcmp.lt.s32.totalorder %v5544, 4
  %v5567 = vsel %vm5563, %v5547, %v5550
  %v5568 = vsel %vm5566, %v5556, 2102212464
  %v5569 = vsel %vm5565, %v5553, %v5568
  %v5570 = vsel %vm5564, %v5567, %v5569
  %v5571 = vsel %vm5563, %v5550, %v5553
  %v5572 = vsel %vm5566, %v5559, 920167782
  %v5573 = vsel %vm5565, %v5556, %v5572
  %v5574 = vsel %vm5564, %v5571, %v5573
  %v5575 = vsel %vm5563, %v5553, %v5556
  %v5576 = vsel %vm5566, %v5562, 1326507024
  %v5577 = vsel %vm5565, %v5559, %v5576
  %v5578 = vsel %vm5564, %v5575, %v5577
  %v5579 = vshll.u32 %v5539, 8
  %v5580 = vmul.u32.u64.compose %v5579, %v5578
  %v5581 = vextract.low.u32 %v5580
  %v5582 = vextract.high.u32 %v5580
  %v5583 = vmul.u32.u64.compose %v5579, %v5574
  %v5584 = vextract.low.u32 %v5583
  %v5585 = vextract.high.u32 %v5583
  %v5586 = vmul.u32 %v5579, %v5570
  %v5587 = vadd.s32 %v5582, %v5584
  %vm5588 = vc.u32 %v5582, %v5584
  %v5589 = vadd.s32 %v5585, 1
  %v5590 = vsel %vm5588, %v5589, %v5585
  %v5591 = vadd.s32 %v5586, %v5590
  %v5592 = vadd.s32 %v5591, 536870912
  %v5593 = vshrl.u32 %v5592, 30
  %v5594 = vshll.u32 %v5593, 30
  %v5595 = vsub.s32 %v5591, %v5594
  %vm5596 = vcmp.lt.s32.totalorder %v5595, 0
  %v5597 = vsub.s32 0, %v5595
  %v5598 = vsel %vm5596, %v5597, %v5595
  %v5599 = vclz %v5598
  %v5600 = vsub.s32 %v5599, 2
  %vm5601 = vcmp.gt.s32.totalorder 0, %v5600
  %v5602 = vsel %vm5601, 0, %v5600
  %v5603 = vsub.s32 32, %v5602
  %v5604 = vshll.u32 %v5595, %v5602
  %v5605 = vshrl.u32 %v5587, %v5603
  %v5606 = vor.u32 %v5604, %v5605
  %v5607 = vsub.s32 4294967266, %v5602
  %v5608 = vadd.s32 %v5607, 127
  %v5609 = vshll.u32 %v5608, 23
  %v5610 = vor.u32 4788187, %v5609
  %v5611 = vand.u32 2147483647, %v5610
  %v5613 = vcvt.s32.f32 %v5606
  %v5614 = vmul.f32 %v5613, %v5611
  %v5615 = vxor.u32 %v5614, 2147483648
  %v5616 = vsel %vm5533, %v5615, %v5614
  %v5617 = vsub.s32 4, %v5593
  %v5618 = vsel %vm5533, %v5617, %v5593
  %v5619 = vsel %vm5532, %v131, %v5616
  %v5620 = vsel %vm5532, 0, %v5618
  %v5621 = vcosq.f32.pop %v5619
  %v5622 = vsinq.f32.pop %v5619
  %vm5623 = vweird.f32 %v131
  %v5624 = vand.u32 %v5620, 3
  %vm5625 = vcmp.lt.s32.totalorder %v5624, 2
  %vm5626 = vcmp.eq.s32.totalorder %v5624, 0
  %v5627 = vxor.u32 %v5622, 2147483648
  %v5628 = vsel %vm5626, %v5621, %v5627
  %vm5629 = vcmp.eq.s32.totalorder %v5624, 2
  %v5630 = vxor.u32 %v5621, 2147483648
  %v5631 = vsel %vm5629, %v5630, %v5622
  %v5632 = vsel %vm5625, %v5628, %v5631
  %v5633 = vsel %vm5623, nan, %v5632
  %v5634 = vand.u32 2147483647, %v132
  %vm5635 = vcmp.le.f32.partialorder %v5634, 0.7853982
  %vm5636 = vcmp.lt.s32.totalorder %v132, 0
  %v5637 = vand.u32 %v132, 2139095040
  %v5638 = vshrl.u32 %v5637, 23
  %v5639 = vsub.s32 %v5638, 127
  %v5640 = vand.u32 2147483647, %v132
  %v5641 = vand.u32 %v5640, 8388607
  %v5642 = vor.u32 %v5641, 8388608
  %v5643 = vsub.s32 0, %v5642
  %v5644 = vadd.s32 %v5639, 1
  %vm5645 = vcmp.gt.s32.totalorder %v5644, 0
  %v5646 = vsel %vm5645, %v5644, 0
  %v5647 = vshrl.u32 %v5646, 5
  %v5648 = vand.u32 %v5646, 31
  %v5649 = vsub.s32 32, %v5648
  %v5650 = vshrl.u32 683565275, %v5649
  %v5651 = vshll.u32 683565275, %v5648
  %v5652 = vshrl.u32 2475754826, %v5649
  %v5653 = vor.u32 %v5651, %v5652
  %v5654 = vshll.u32 2475754826, %v5648
  %v5655 = vshrl.u32 2131351028, %v5649
  %v5656 = vor.u32 %v5654, %v5655
  %v5657 = vshll.u32 2131351028, %v5648
  %v5658 = vshrl.u32 2102212464, %v5649
  %v5659 = vor.u32 %v5657, %v5658
  %v5660 = vshll.u32 2102212464, %v5648
  %v5661 = vshrl.u32 920167782, %v5649
  %v5662 = vor.u32 %v5660, %v5661
  %v5663 = vshll.u32 920167782, %v5648
  %v5664 = vshrl.u32 1326507024, %v5649
  %v5665 = vor.u32 %v5663, %v5664
  %vm5666 = vcmp.lt.s32.totalorder %v5647, 1
  %vm5667 = vcmp.lt.s32.totalorder %v5647, 2
  %vm5668 = vcmp.lt.s32.totalorder %v5647, 3
  %vm5669 = vcmp.lt.s32.totalorder %v5647, 4
  %v5670 = vsel %vm5666, %v5650, %v5653
  %v5671 = vsel %vm5669, %v5659, 2102212464
  %v5672 = vsel %vm5668, %v5656, %v5671
  %v5673 = vsel %vm5667, %v5670, %v5672
  %v5674 = vsel %vm5666, %v5653, %v5656
  %v5675 = vsel %vm5669, %v5662, 920167782
  %v5676 = vsel %vm5668, %v5659, %v5675
  %v5677 = vsel %vm5667, %v5674, %v5676
  %v5678 = vsel %vm5666, %v5656, %v5659
  %v5679 = vsel %vm5669, %v5665, 1326507024
  %v5680 = vsel %vm5668, %v5662, %v5679
  %v5681 = vsel %vm5667, %v5678, %v5680
  %v5682 = vshll.u32 %v5642, 8
  %v5683 = vmul.u32.u64.compose %v5682, %v5681
  %v5684 = vextract.low.u32 %v5683
  %v5685 = vextract.high.u32 %v5683
  %v5686 = vmul.u32.u64.compose %v5682, %v5677
  %v5687 = vextract.low.u32 %v5686
  %v5688 = vextract.high.u32 %v5686
  %v5689 = vmul.u32 %v5682, %v5673
  %v5690 = vadd.s32 %v5685, %v5687
  %vm5691 = vc.u32 %v5685, %v5687
  %v5692 = vadd.s32 %v5688, 1
  %v5693 = vsel %vm5691, %v5692, %v5688
  %v5694 = vadd.s32 %v5689, %v5693
  %v5695 = vadd.s32 %v5694, 536870912
  %v5696 = vshrl.u32 %v5695, 30
  %v5697 = vshll.u32 %v5696, 30
  %v5698 = vsub.s32 %v5694, %v5697
  %vm5699 = vcmp.lt.s32.totalorder %v5698, 0
  %v5700 = vsub.s32 0, %v5698
  %v5701 = vsel %vm5699, %v5700, %v5698
  %v5702 = vclz %v5701
  %v5703 = vsub.s32 %v5702, 2
  %vm5704 = vcmp.gt.s32.totalorder 0, %v5703
  %v5705 = vsel %vm5704, 0, %v5703
  %v5706 = vsub.s32 32, %v5705
  %v5707 = vshll.u32 %v5698, %v5705
  %v5708 = vshrl.u32 %v5690, %v5706
  %v5709 = vor.u32 %v5707, %v5708
  %v5710 = vsub.s32 4294967266, %v5705
  %v5711 = vadd.s32 %v5710, 127
  %v5712 = vshll.u32 %v5711, 23
  %v5713 = vor.u32 4788187, %v5712
  %v5714 = vand.u32 2147483647, %v5713
  %v5716 = vcvt.s32.f32 %v5709
  %v5717 = vmul.f32 %v5716, %v5714
  %v5718 = vxor.u32 %v5717, 2147483648
  %v5719 = vsel %vm5636, %v5718, %v5717
  %v5720 = vsub.s32 4, %v5696
  %v5721 = vsel %vm5636, %v5720, %v5696
  %v5722 = vsel %vm5635, %v132, %v5719
  %v5723 = vsel %vm5635, 0, %v5721
  %v5724 = vcosq.f32.pop %v5722
  %v5725 = vsinq.f32.pop %v5722
  %vm5726 = vweird.f32 %v132
  %v5727 = vand.u32 %v5723, 3
  %vm5728 = vcmp.lt.s32.totalorder %v5727, 2
  %vm5729 = vcmp.eq.s32.totalorder %v5727, 0
  %v5730 = vxor.u32 %v5725, 2147483648
  %v5731 = vsel %vm5729, %v5724, %v5730
  %vm5732 = vcmp.eq.s32.totalorder %v5727, 2
  %v5733 = vxor.u32 %v5724, 2147483648
  %v5734 = vsel %vm5732, %v5733, %v5725
  %v5735 = vsel %vm5728, %v5731, %v5734
  %v5736 = vsel %vm5726, nan, %v5735
  %v5737 = vand.u32 2147483647, %v133
  %vm5738 = vcmp.le.f32.partialorder %v5737, 0.7853982
  %vm5739 = vcmp.lt.s32.totalorder %v133, 0
  %v5740 = vand.u32 %v133, 2139095040
  %v5741 = vshrl.u32 %v5740, 23
  %v5742 = vsub.s32 %v5741, 127
  %v5743 = vand.u32 2147483647, %v133
  %v5744 = vand.u32 %v5743, 8388607
  %v5745 = vor.u32 %v5744, 8388608
  %v5746 = vsub.s32 0, %v5745
  %v5747 = vadd.s32 %v5742, 1
  %vm5748 = vcmp.gt.s32.totalorder %v5747, 0
  %v5749 = vsel %vm5748, %v5747, 0
  %v5750 = vshrl.u32 %v5749, 5
  %v5751 = vand.u32 %v5749, 31
  %v5752 = vsub.s32 32, %v5751
  %v5753 = vshrl.u32 683565275, %v5752
  %v5754 = vshll.u32 683565275, %v5751
  %v5755 = vshrl.u32 2475754826, %v5752
  %v5756 = vor.u32 %v5754, %v5755
  %v5757 = vshll.u32 2475754826, %v5751
  %v5758 = vshrl.u32 2131351028, %v5752
  %v5759 = vor.u32 %v5757, %v5758
  %v5760 = vshll.u32 2131351028, %v5751
  %v5761 = vshrl.u32 2102212464, %v5752
  %v5762 = vor.u32 %v5760, %v5761
  %v5763 = vshll.u32 2102212464, %v5751
  %v5764 = vshrl.u32 920167782, %v5752
  %v5765 = vor.u32 %v5763, %v5764
  %v5766 = vshll.u32 920167782, %v5751
  %v5767 = vshrl.u32 1326507024, %v5752
  %v5768 = vor.u32 %v5766, %v5767
  %vm5769 = vcmp.lt.s32.totalorder %v5750, 1
  %vm5770 = vcmp.lt.s32.totalorder %v5750, 2
  %vm5771 = vcmp.lt.s32.totalorder %v5750, 3
  %vm5772 = vcmp.lt.s32.totalorder %v5750, 4
  %v5773 = vsel %vm5769, %v5753, %v5756
  %v5774 = vsel %vm5772, %v5762, 2102212464
  %v5775 = vsel %vm5771, %v5759, %v5774
  %v5776 = vsel %vm5770, %v5773, %v5775
  %v5777 = vsel %vm5769, %v5756, %v5759
  %v5778 = vsel %vm5772, %v5765, 920167782
  %v5779 = vsel %vm5771, %v5762, %v5778
  %v5780 = vsel %vm5770, %v5777, %v5779
  %v5781 = vsel %vm5769, %v5759, %v5762
  %v5782 = vsel %vm5772, %v5768, 1326507024
  %v5783 = vsel %vm5771, %v5765, %v5782
  %v5784 = vsel %vm5770, %v5781, %v5783
  %v5785 = vshll.u32 %v5745, 8
  %v5786 = vmul.u32.u64.compose %v5785, %v5784
  %v5787 = vextract.low.u32 %v5786
  %v5788 = vextract.high.u32 %v5786
  %v5789 = vmul.u32.u64.compose %v5785, %v5780
  %v5790 = vextract.low.u32 %v5789
  %v5791 = vextract.high.u32 %v5789
  %v5792 = vmul.u32 %v5785, %v5776
  %v5793 = vadd.s32 %v5788, %v5790
  %vm5794 = vc.u32 %v5788, %v5790
  %v5795 = vadd.s32 %v5791, 1
  %v5796 = vsel %vm5794, %v5795, %v5791
  %v5797 = vadd.s32 %v5792, %v5796
  %v5798 = vadd.s32 %v5797, 536870912
  %v5799 = vshrl.u32 %v5798, 30
  %v5800 = vshll.u32 %v5799, 30
  %v5801 = vsub.s32 %v5797, %v5800
  %vm5802 = vcmp.lt.s32.totalorder %v5801, 0
  %v5803 = vsub.s32 0, %v5801
  %v5804 = vsel %vm5802, %v5803, %v5801
  %v5805 = vclz %v5804
  %v5806 = vsub.s32 %v5805, 2
  %vm5807 = vcmp.gt.s32.totalorder 0, %v5806
  %v5808 = vsel %vm5807, 0, %v5806
  %v5809 = vsub.s32 32, %v5808
  %v5810 = vshll.u32 %v5801, %v5808
  %v5811 = vshrl.u32 %v5793, %v5809
  %v5812 = vor.u32 %v5810, %v5811
  %v5813 = vsub.s32 4294967266, %v5808
  %v5814 = vadd.s32 %v5813, 127
  %v5815 = vshll.u32 %v5814, 23
  %v5816 = vor.u32 4788187, %v5815
  %v5817 = vand.u32 2147483647, %v5816
  %v5819 = vcvt.s32.f32 %v5812
  %v5820 = vmul.f32 %v5819, %v5817
  %v5821 = vxor.u32 %v5820, 2147483648
  %v5822 = vsel %vm5739, %v5821, %v5820
  %v5823 = vsub.s32 4, %v5799
  %v5824 = vsel %vm5739, %v5823, %v5799
  %v5825 = vsel %vm5738, %v133, %v5822
  %v5826 = vsel %vm5738, 0, %v5824
  %v5827 = vcosq.f32.pop %v5825
  %v5828 = vsinq.f32.pop %v5825
  %vm5829 = vweird.f32 %v133
  %v5830 = vand.u32 %v5826, 3
  %vm5831 = vcmp.lt.s32.totalorder %v5830, 2
  %vm5832 = vcmp.eq.s32.totalorder %v5830, 0
  %v5833 = vxor.u32 %v5828, 2147483648
  %v5834 = vsel %vm5832, %v5827, %v5833
  %vm5835 = vcmp.eq.s32.totalorder %v5830, 2
  %v5836 = vxor.u32 %v5827, 2147483648
  %v5837 = vsel %vm5835, %v5836, %v5828
  %v5838 = vsel %vm5831, %v5834, %v5837
  %v5839 = vsel %vm5829, nan, %v5838
  %v5840 = vand.u32 2147483647, %v134
  %vm5841 = vcmp.le.f32.partialorder %v5840, 0.7853982
  %vm5842 = vcmp.lt.s32.totalorder %v134, 0
  %v5843 = vand.u32 %v134, 2139095040
  %v5844 = vshrl.u32 %v5843, 23
  %v5845 = vsub.s32 %v5844, 127
  %v5846 = vand.u32 2147483647, %v134
  %v5847 = vand.u32 %v5846, 8388607
  %v5848 = vor.u32 %v5847, 8388608
  %v5849 = vsub.s32 0, %v5848
  %v5850 = vadd.s32 %v5845, 1
  %vm5851 = vcmp.gt.s32.totalorder %v5850, 0
  %v5852 = vsel %vm5851, %v5850, 0
  %v5853 = vshrl.u32 %v5852, 5
  %v5854 = vand.u32 %v5852, 31
  %v5855 = vsub.s32 32, %v5854
  %v5856 = vshrl.u32 683565275, %v5855
  %v5857 = vshll.u32 683565275, %v5854
  %v5858 = vshrl.u32 2475754826, %v5855
  %v5859 = vor.u32 %v5857, %v5858
  %v5860 = vshll.u32 2475754826, %v5854
  %v5861 = vshrl.u32 2131351028, %v5855
  %v5862 = vor.u32 %v5860, %v5861
  %v5863 = vshll.u32 2131351028, %v5854
  %v5864 = vshrl.u32 2102212464, %v5855
  %v5865 = vor.u32 %v5863, %v5864
  %v5866 = vshll.u32 2102212464, %v5854
  %v5867 = vshrl.u32 920167782, %v5855
  %v5868 = vor.u32 %v5866, %v5867
  %v5869 = vshll.u32 920167782, %v5854
  %v5870 = vshrl.u32 1326507024, %v5855
  %v5871 = vor.u32 %v5869, %v5870
  %vm5872 = vcmp.lt.s32.totalorder %v5853, 1
  %vm5873 = vcmp.lt.s32.totalorder %v5853, 2
  %vm5874 = vcmp.lt.s32.totalorder %v5853, 3
  %vm5875 = vcmp.lt.s32.totalorder %v5853, 4
  %v5876 = vsel %vm5872, %v5856, %v5859
  %v5877 = vsel %vm5875, %v5865, 2102212464
  %v5878 = vsel %vm5874, %v5862, %v5877
  %v5879 = vsel %vm5873, %v5876, %v5878
  %v5880 = vsel %vm5872, %v5859, %v5862
  %v5881 = vsel %vm5875, %v5868, 920167782
  %v5882 = vsel %vm5874, %v5865, %v5881
  %v5883 = vsel %vm5873, %v5880, %v5882
  %v5884 = vsel %vm5872, %v5862, %v5865
  %v5885 = vsel %vm5875, %v5871, 1326507024
  %v5886 = vsel %vm5874, %v5868, %v5885
  %v5887 = vsel %vm5873, %v5884, %v5886
  %v5888 = vshll.u32 %v5848, 8
  %v5889 = vmul.u32.u64.compose %v5888, %v5887
  %v5890 = vextract.low.u32 %v5889
  %v5891 = vextract.high.u32 %v5889
  %v5892 = vmul.u32.u64.compose %v5888, %v5883
  %v5893 = vextract.low.u32 %v5892
  %v5894 = vextract.high.u32 %v5892
  %v5895 = vmul.u32 %v5888, %v5879
  %v5896 = vadd.s32 %v5891, %v5893
  %vm5897 = vc.u32 %v5891, %v5893
  %v5898 = vadd.s32 %v5894, 1
  %v5899 = vsel %vm5897, %v5898, %v5894
  %v5900 = vadd.s32 %v5895, %v5899
  %v5901 = vadd.s32 %v5900, 536870912
  %v5902 = vshrl.u32 %v5901, 30
  %v5903 = vshll.u32 %v5902, 30
  %v5904 = vsub.s32 %v5900, %v5903
  %vm5905 = vcmp.lt.s32.totalorder %v5904, 0
  %v5906 = vsub.s32 0, %v5904
  %v5907 = vsel %vm5905, %v5906, %v5904
  %v5908 = vclz %v5907
  %v5909 = vsub.s32 %v5908, 2
  %vm5910 = vcmp.gt.s32.totalorder 0, %v5909
  %v5911 = vsel %vm5910, 0, %v5909
  %v5912 = vsub.s32 32, %v5911
  %v5913 = vshll.u32 %v5904, %v5911
  %v5914 = vshrl.u32 %v5896, %v5912
  %v5915 = vor.u32 %v5913, %v5914
  %v5916 = vsub.s32 4294967266, %v5911
  %v5917 = vadd.s32 %v5916, 127
  %v5918 = vshll.u32 %v5917, 23
  %v5919 = vor.u32 4788187, %v5918
  %v5920 = vand.u32 2147483647, %v5919
  %v5922 = vcvt.s32.f32 %v5915
  %v5923 = vmul.f32 %v5922, %v5920
  %v5924 = vxor.u32 %v5923, 2147483648
  %v5925 = vsel %vm5842, %v5924, %v5923
  %v5926 = vsub.s32 4, %v5902
  %v5927 = vsel %vm5842, %v5926, %v5902
  %v5928 = vsel %vm5841, %v134, %v5925
  %v5929 = vsel %vm5841, 0, %v5927
  %v5930 = vcosq.f32.pop %v5928
  %v5931 = vsinq.f32.pop %v5928
  %vm5932 = vweird.f32 %v134
  %v5933 = vand.u32 %v5929, 3
  %vm5934 = vcmp.lt.s32.totalorder %v5933, 2
  %vm5935 = vcmp.eq.s32.totalorder %v5933, 0
  %v5936 = vxor.u32 %v5931, 2147483648
  %v5937 = vsel %vm5935, %v5930, %v5936
  %vm5938 = vcmp.eq.s32.totalorder %v5933, 2
  %v5939 = vxor.u32 %v5930, 2147483648
  %v5940 = vsel %vm5938, %v5939, %v5931
  %v5941 = vsel %vm5934, %v5937, %v5940
  %v5942 = vsel %vm5932, nan, %v5941
  %v5943 = vand.u32 2147483647, %v135
  %vm5944 = vcmp.le.f32.partialorder %v5943, 0.7853982
  %vm5945 = vcmp.lt.s32.totalorder %v135, 0
  %v5946 = vand.u32 %v135, 2139095040
  %v5947 = vshrl.u32 %v5946, 23
  %v5948 = vsub.s32 %v5947, 127
  %v5949 = vand.u32 2147483647, %v135
  %v5950 = vand.u32 %v5949, 8388607
  %v5951 = vor.u32 %v5950, 8388608
  %v5952 = vsub.s32 0, %v5951
  %v5953 = vadd.s32 %v5948, 1
  %vm5954 = vcmp.gt.s32.totalorder %v5953, 0
  %v5955 = vsel %vm5954, %v5953, 0
  %v5956 = vshrl.u32 %v5955, 5
  %v5957 = vand.u32 %v5955, 31
  %v5958 = vsub.s32 32, %v5957
  %v5959 = vshrl.u32 683565275, %v5958
  %v5960 = vshll.u32 683565275, %v5957
  %v5961 = vshrl.u32 2475754826, %v5958
  %v5962 = vor.u32 %v5960, %v5961
  %v5963 = vshll.u32 2475754826, %v5957
  %v5964 = vshrl.u32 2131351028, %v5958
  %v5965 = vor.u32 %v5963, %v5964
  %v5966 = vshll.u32 2131351028, %v5957
  %v5967 = vshrl.u32 2102212464, %v5958
  %v5968 = vor.u32 %v5966, %v5967
  %v5969 = vshll.u32 2102212464, %v5957
  %v5970 = vshrl.u32 920167782, %v5958
  %v5971 = vor.u32 %v5969, %v5970
  %v5972 = vshll.u32 920167782, %v5957
  %v5973 = vshrl.u32 1326507024, %v5958
  %v5974 = vor.u32 %v5972, %v5973
  %vm5975 = vcmp.lt.s32.totalorder %v5956, 1
  %vm5976 = vcmp.lt.s32.totalorder %v5956, 2
  %vm5977 = vcmp.lt.s32.totalorder %v5956, 3
  %vm5978 = vcmp.lt.s32.totalorder %v5956, 4
  %v5979 = vsel %vm5975, %v5959, %v5962
  %v5980 = vsel %vm5978, %v5968, 2102212464
  %v5981 = vsel %vm5977, %v5965, %v5980
  %v5982 = vsel %vm5976, %v5979, %v5981
  %v5983 = vsel %vm5975, %v5962, %v5965
  %v5984 = vsel %vm5978, %v5971, 920167782
  %v5985 = vsel %vm5977, %v5968, %v5984
  %v5986 = vsel %vm5976, %v5983, %v5985
  %v5987 = vsel %vm5975, %v5965, %v5968
  %v5988 = vsel %vm5978, %v5974, 1326507024
  %v5989 = vsel %vm5977, %v5971, %v5988
  %v5990 = vsel %vm5976, %v5987, %v5989
  %v5991 = vshll.u32 %v5951, 8
  %v5992 = vmul.u32.u64.compose %v5991, %v5990
  %v5993 = vextract.low.u32 %v5992
  %v5994 = vextract.high.u32 %v5992
  %v5995 = vmul.u32.u64.compose %v5991, %v5986
  %v5996 = vextract.low.u32 %v5995
  %v5997 = vextract.high.u32 %v5995
  %v5998 = vmul.u32 %v5991, %v5982
  %v5999 = vadd.s32 %v5994, %v5996
  %vm6000 = vc.u32 %v5994, %v5996
  %v6001 = vadd.s32 %v5997, 1
  %v6002 = vsel %vm6000, %v6001, %v5997
  %v6003 = vadd.s32 %v5998, %v6002
  %v6004 = vadd.s32 %v6003, 536870912
  %v6005 = vshrl.u32 %v6004, 30
  %v6006 = vshll.u32 %v6005, 30
  %v6007 = vsub.s32 %v6003, %v6006
  %vm6008 = vcmp.lt.s32.totalorder %v6007, 0
  %v6009 = vsub.s32 0, %v6007
  %v6010 = vsel %vm6008, %v6009, %v6007
  %v6011 = vclz %v6010
  %v6012 = vsub.s32 %v6011, 2
  %vm6013 = vcmp.gt.s32.totalorder 0, %v6012
  %v6014 = vsel %vm6013, 0, %v6012
  %v6015 = vsub.s32 32, %v6014
  %v6016 = vshll.u32 %v6007, %v6014
  %v6017 = vshrl.u32 %v5999, %v6015
  %v6018 = vor.u32 %v6016, %v6017
  %v6019 = vsub.s32 4294967266, %v6014
  %v6020 = vadd.s32 %v6019, 127
  %v6021 = vshll.u32 %v6020, 23
  %v6022 = vor.u32 4788187, %v6021
  %v6023 = vand.u32 2147483647, %v6022
  %v6025 = vcvt.s32.f32 %v6018
  %v6026 = vmul.f32 %v6025, %v6023
  %v6027 = vxor.u32 %v6026, 2147483648
  %v6028 = vsel %vm5945, %v6027, %v6026
  %v6029 = vsub.s32 4, %v6005
  %v6030 = vsel %vm5945, %v6029, %v6005
  %v6031 = vsel %vm5944, %v135, %v6028
  %v6032 = vsel %vm5944, 0, %v6030
  %v6033 = vcosq.f32.pop %v6031
  %v6034 = vsinq.f32.pop %v6031
  %vm6035 = vweird.f32 %v135
  %v6036 = vand.u32 %v6032, 3
  %vm6037 = vcmp.lt.s32.totalorder %v6036, 2
  %vm6038 = vcmp.eq.s32.totalorder %v6036, 0
  %v6039 = vxor.u32 %v6034, 2147483648
  %v6040 = vsel %vm6038, %v6033, %v6039
  %vm6041 = vcmp.eq.s32.totalorder %v6036, 2
  %v6042 = vxor.u32 %v6033, 2147483648
  %v6043 = vsel %vm6041, %v6042, %v6034
  %v6044 = vsel %vm6037, %v6040, %v6043
  %v6045 = vsel %vm6035, nan, %v6044
  %v6046 = vand.u32 2147483647, %v136
  %vm6047 = vcmp.le.f32.partialorder %v6046, 0.7853982
  %vm6048 = vcmp.lt.s32.totalorder %v136, 0
  %v6049 = vand.u32 %v136, 2139095040
  %v6050 = vshrl.u32 %v6049, 23
  %v6051 = vsub.s32 %v6050, 127
  %v6052 = vand.u32 2147483647, %v136
  %v6053 = vand.u32 %v6052, 8388607
  %v6054 = vor.u32 %v6053, 8388608
  %v6055 = vsub.s32 0, %v6054
  %v6056 = vadd.s32 %v6051, 1
  %vm6057 = vcmp.gt.s32.totalorder %v6056, 0
  %v6058 = vsel %vm6057, %v6056, 0
  %v6059 = vshrl.u32 %v6058, 5
  %v6060 = vand.u32 %v6058, 31
  %v6061 = vsub.s32 32, %v6060
  %v6062 = vshrl.u32 683565275, %v6061
  %v6063 = vshll.u32 683565275, %v6060
  %v6064 = vshrl.u32 2475754826, %v6061
  %v6065 = vor.u32 %v6063, %v6064
  %v6066 = vshll.u32 2475754826, %v6060
  %v6067 = vshrl.u32 2131351028, %v6061
  %v6068 = vor.u32 %v6066, %v6067
  %v6069 = vshll.u32 2131351028, %v6060
  %v6070 = vshrl.u32 2102212464, %v6061
  %v6071 = vor.u32 %v6069, %v6070
  %v6072 = vshll.u32 2102212464, %v6060
  %v6073 = vshrl.u32 920167782, %v6061
  %v6074 = vor.u32 %v6072, %v6073
  %v6075 = vshll.u32 920167782, %v6060
  %v6076 = vshrl.u32 1326507024, %v6061
  %v6077 = vor.u32 %v6075, %v6076
  %vm6078 = vcmp.lt.s32.totalorder %v6059, 1
  %vm6079 = vcmp.lt.s32.totalorder %v6059, 2
  %vm6080 = vcmp.lt.s32.totalorder %v6059, 3
  %vm6081 = vcmp.lt.s32.totalorder %v6059, 4
  %v6082 = vsel %vm6078, %v6062, %v6065
  %v6083 = vsel %vm6081, %v6071, 2102212464
  %v6084 = vsel %vm6080, %v6068, %v6083
  %v6085 = vsel %vm6079, %v6082, %v6084
  %v6086 = vsel %vm6078, %v6065, %v6068
  %v6087 = vsel %vm6081, %v6074, 920167782
  %v6088 = vsel %vm6080, %v6071, %v6087
  %v6089 = vsel %vm6079, %v6086, %v6088
  %v6090 = vsel %vm6078, %v6068, %v6071
  %v6091 = vsel %vm6081, %v6077, 1326507024
  %v6092 = vsel %vm6080, %v6074, %v6091
  %v6093 = vsel %vm6079, %v6090, %v6092
  %v6094 = vshll.u32 %v6054, 8
  %v6095 = vmul.u32.u64.compose %v6094, %v6093
  %v6096 = vextract.low.u32 %v6095
  %v6097 = vextract.high.u32 %v6095
  %v6098 = vmul.u32.u64.compose %v6094, %v6089
  %v6099 = vextract.low.u32 %v6098
  %v6100 = vextract.high.u32 %v6098
  %v6101 = vmul.u32 %v6094, %v6085
  %v6102 = vadd.s32 %v6097, %v6099
  %vm6103 = vc.u32 %v6097, %v6099
  %v6104 = vadd.s32 %v6100, 1
  %v6105 = vsel %vm6103, %v6104, %v6100
  %v6106 = vadd.s32 %v6101, %v6105
  %v6107 = vadd.s32 %v6106, 536870912
  %v6108 = vshrl.u32 %v6107, 30
  %v6109 = vshll.u32 %v6108, 30
  %v6110 = vsub.s32 %v6106, %v6109
  %vm6111 = vcmp.lt.s32.totalorder %v6110, 0
  %v6112 = vsub.s32 0, %v6110
  %v6113 = vsel %vm6111, %v6112, %v6110
  %v6114 = vclz %v6113
  %v6115 = vsub.s32 %v6114, 2
  %vm6116 = vcmp.gt.s32.totalorder 0, %v6115
  %v6117 = vsel %vm6116, 0, %v6115
  %v6118 = vsub.s32 32, %v6117
  %v6119 = vshll.u32 %v6110, %v6117
  %v6120 = vshrl.u32 %v6102, %v6118
  %v6121 = vor.u32 %v6119, %v6120
  %v6122 = vsub.s32 4294967266, %v6117
  %v6123 = vadd.s32 %v6122, 127
  %v6124 = vshll.u32 %v6123, 23
  %v6125 = vor.u32 4788187, %v6124
  %v6126 = vand.u32 2147483647, %v6125
  %v6128 = vcvt.s32.f32 %v6121
  %v6129 = vmul.f32 %v6128, %v6126
  %v6130 = vxor.u32 %v6129, 2147483648
  %v6131 = vsel %vm6048, %v6130, %v6129
  %v6132 = vsub.s32 4, %v6108
  %v6133 = vsel %vm6048, %v6132, %v6108
  %v6134 = vsel %vm6047, %v136, %v6131
  %v6135 = vsel %vm6047, 0, %v6133
  %v6136 = vcosq.f32.pop %v6134
  %v6137 = vsinq.f32.pop %v6134
  %vm6138 = vweird.f32 %v136
  %v6139 = vand.u32 %v6135, 3
  %vm6140 = vcmp.lt.s32.totalorder %v6139, 2
  %vm6141 = vcmp.eq.s32.totalorder %v6139, 0
  %v6142 = vxor.u32 %v6137, 2147483648
  %v6143 = vsel %vm6141, %v6136, %v6142
  %vm6144 = vcmp.eq.s32.totalorder %v6139, 2
  %v6145 = vxor.u32 %v6136, 2147483648
  %v6146 = vsel %vm6144, %v6145, %v6137
  %v6147 = vsel %vm6140, %v6143, %v6146
  %v6148 = vsel %vm6138, nan, %v6147
  %v6149 = vand.u32 2147483647, %v137
  %vm6150 = vcmp.le.f32.partialorder %v6149, 0.7853982
  %vm6151 = vcmp.lt.s32.totalorder %v137, 0
  %v6152 = vand.u32 %v137, 2139095040
  %v6153 = vshrl.u32 %v6152, 23
  %v6154 = vsub.s32 %v6153, 127
  %v6155 = vand.u32 2147483647, %v137
  %v6156 = vand.u32 %v6155, 8388607
  %v6157 = vor.u32 %v6156, 8388608
  %v6158 = vsub.s32 0, %v6157
  %v6159 = vadd.s32 %v6154, 1
  %vm6160 = vcmp.gt.s32.totalorder %v6159, 0
  %v6161 = vsel %vm6160, %v6159, 0
  %v6162 = vshrl.u32 %v6161, 5
  %v6163 = vand.u32 %v6161, 31
  %v6164 = vsub.s32 32, %v6163
  %v6165 = vshrl.u32 683565275, %v6164
  %v6166 = vshll.u32 683565275, %v6163
  %v6167 = vshrl.u32 2475754826, %v6164
  %v6168 = vor.u32 %v6166, %v6167
  %v6169 = vshll.u32 2475754826, %v6163
  %v6170 = vshrl.u32 2131351028, %v6164
  %v6171 = vor.u32 %v6169, %v6170
  %v6172 = vshll.u32 2131351028, %v6163
  %v6173 = vshrl.u32 2102212464, %v6164
  %v6174 = vor.u32 %v6172, %v6173
  %v6175 = vshll.u32 2102212464, %v6163
  %v6176 = vshrl.u32 920167782, %v6164
  %v6177 = vor.u32 %v6175, %v6176
  %v6178 = vshll.u32 920167782, %v6163
  %v6179 = vshrl.u32 1326507024, %v6164
  %v6180 = vor.u32 %v6178, %v6179
  %vm6181 = vcmp.lt.s32.totalorder %v6162, 1
  %vm6182 = vcmp.lt.s32.totalorder %v6162, 2
  %vm6183 = vcmp.lt.s32.totalorder %v6162, 3
  %vm6184 = vcmp.lt.s32.totalorder %v6162, 4
  %v6185 = vsel %vm6181, %v6165, %v6168
  %v6186 = vsel %vm6184, %v6174, 2102212464
  %v6187 = vsel %vm6183, %v6171, %v6186
  %v6188 = vsel %vm6182, %v6185, %v6187
  %v6189 = vsel %vm6181, %v6168, %v6171
  %v6190 = vsel %vm6184, %v6177, 920167782
  %v6191 = vsel %vm6183, %v6174, %v6190
  %v6192 = vsel %vm6182, %v6189, %v6191
  %v6193 = vsel %vm6181, %v6171, %v6174
  %v6194 = vsel %vm6184, %v6180, 1326507024
  %v6195 = vsel %vm6183, %v6177, %v6194
  %v6196 = vsel %vm6182, %v6193, %v6195
  %v6197 = vshll.u32 %v6157, 8
  %v6198 = vmul.u32.u64.compose %v6197, %v6196
  %v6199 = vextract.low.u32 %v6198
  %v6200 = vextract.high.u32 %v6198
  %v6201 = vmul.u32.u64.compose %v6197, %v6192
  %v6202 = vextract.low.u32 %v6201
  %v6203 = vextract.high.u32 %v6201
  %v6204 = vmul.u32 %v6197, %v6188
  %v6205 = vadd.s32 %v6200, %v6202
  %vm6206 = vc.u32 %v6200, %v6202
  %v6207 = vadd.s32 %v6203, 1
  %v6208 = vsel %vm6206, %v6207, %v6203
  %v6209 = vadd.s32 %v6204, %v6208
  %v6210 = vadd.s32 %v6209, 536870912
  %v6211 = vshrl.u32 %v6210, 30
  %v6212 = vshll.u32 %v6211, 30
  %v6213 = vsub.s32 %v6209, %v6212
  %vm6214 = vcmp.lt.s32.totalorder %v6213, 0
  %v6215 = vsub.s32 0, %v6213
  %v6216 = vsel %vm6214, %v6215, %v6213
  %v6217 = vclz %v6216
  %v6218 = vsub.s32 %v6217, 2
  %vm6219 = vcmp.gt.s32.totalorder 0, %v6218
  %v6220 = vsel %vm6219, 0, %v6218
  %v6221 = vsub.s32 32, %v6220
  %v6222 = vshll.u32 %v6213, %v6220
  %v6223 = vshrl.u32 %v6205, %v6221
  %v6224 = vor.u32 %v6222, %v6223
  %v6225 = vsub.s32 4294967266, %v6220
  %v6226 = vadd.s32 %v6225, 127
  %v6227 = vshll.u32 %v6226, 23
  %v6228 = vor.u32 4788187, %v6227
  %v6229 = vand.u32 2147483647, %v6228
  %v6231 = vcvt.s32.f32 %v6224
  %v6232 = vmul.f32 %v6231, %v6229
  %v6233 = vxor.u32 %v6232, 2147483648
  %v6234 = vsel %vm6151, %v6233, %v6232
  %v6235 = vsub.s32 4, %v6211
  %v6236 = vsel %vm6151, %v6235, %v6211
  %v6237 = vsel %vm6150, %v137, %v6234
  %v6238 = vsel %vm6150, 0, %v6236
  %v6239 = vcosq.f32.pop %v6237
  %v6240 = vsinq.f32.pop %v6237
  %vm6241 = vweird.f32 %v137
  %v6242 = vand.u32 %v6238, 3
  %vm6243 = vcmp.lt.s32.totalorder %v6242, 2
  %vm6244 = vcmp.eq.s32.totalorder %v6242, 0
  %v6245 = vxor.u32 %v6240, 2147483648
  %v6246 = vsel %vm6244, %v6239, %v6245
  %vm6247 = vcmp.eq.s32.totalorder %v6242, 2
  %v6248 = vxor.u32 %v6239, 2147483648
  %v6249 = vsel %vm6247, %v6248, %v6240
  %v6250 = vsel %vm6243, %v6246, %v6249
  %v6251 = vsel %vm6241, nan, %v6250
  %v6252 = vand.u32 2147483647, %v138
  %vm6253 = vcmp.le.f32.partialorder %v6252, 0.7853982
  %vm6254 = vcmp.lt.s32.totalorder %v138, 0
  %v6255 = vand.u32 %v138, 2139095040
  %v6256 = vshrl.u32 %v6255, 23
  %v6257 = vsub.s32 %v6256, 127
  %v6258 = vand.u32 2147483647, %v138
  %v6259 = vand.u32 %v6258, 8388607
  %v6260 = vor.u32 %v6259, 8388608
  %v6261 = vsub.s32 0, %v6260
  %v6262 = vadd.s32 %v6257, 1
  %vm6263 = vcmp.gt.s32.totalorder %v6262, 0
  %v6264 = vsel %vm6263, %v6262, 0
  %v6265 = vshrl.u32 %v6264, 5
  %v6266 = vand.u32 %v6264, 31
  %v6267 = vsub.s32 32, %v6266
  %v6268 = vshrl.u32 683565275, %v6267
  %v6269 = vshll.u32 683565275, %v6266
  %v6270 = vshrl.u32 2475754826, %v6267
  %v6271 = vor.u32 %v6269, %v6270
  %v6272 = vshll.u32 2475754826, %v6266
  %v6273 = vshrl.u32 2131351028, %v6267
  %v6274 = vor.u32 %v6272, %v6273
  %v6275 = vshll.u32 2131351028, %v6266
  %v6276 = vshrl.u32 2102212464, %v6267
  %v6277 = vor.u32 %v6275, %v6276
  %v6278 = vshll.u32 2102212464, %v6266
  %v6279 = vshrl.u32 920167782, %v6267
  %v6280 = vor.u32 %v6278, %v6279
  %v6281 = vshll.u32 920167782, %v6266
  %v6282 = vshrl.u32 1326507024, %v6267
  %v6283 = vor.u32 %v6281, %v6282
  %vm6284 = vcmp.lt.s32.totalorder %v6265, 1
  %vm6285 = vcmp.lt.s32.totalorder %v6265, 2
  %vm6286 = vcmp.lt.s32.totalorder %v6265, 3
  %vm6287 = vcmp.lt.s32.totalorder %v6265, 4
  %v6288 = vsel %vm6284, %v6268, %v6271
  %v6289 = vsel %vm6287, %v6277, 2102212464
  %v6290 = vsel %vm6286, %v6274, %v6289
  %v6291 = vsel %vm6285, %v6288, %v6290
  %v6292 = vsel %vm6284, %v6271, %v6274
  %v6293 = vsel %vm6287, %v6280, 920167782
  %v6294 = vsel %vm6286, %v6277, %v6293
  %v6295 = vsel %vm6285, %v6292, %v6294
  %v6296 = vsel %vm6284, %v6274, %v6277
  %v6297 = vsel %vm6287, %v6283, 1326507024
  %v6298 = vsel %vm6286, %v6280, %v6297
  %v6299 = vsel %vm6285, %v6296, %v6298
  %v6300 = vshll.u32 %v6260, 8
  %v6301 = vmul.u32.u64.compose %v6300, %v6299
  %v6302 = vextract.low.u32 %v6301
  %v6303 = vextract.high.u32 %v6301
  %v6304 = vmul.u32.u64.compose %v6300, %v6295
  %v6305 = vextract.low.u32 %v6304
  %v6306 = vextract.high.u32 %v6304
  %v6307 = vmul.u32 %v6300, %v6291
  %v6308 = vadd.s32 %v6303, %v6305
  %vm6309 = vc.u32 %v6303, %v6305
  %v6310 = vadd.s32 %v6306, 1
  %v6311 = vsel %vm6309, %v6310, %v6306
  %v6312 = vadd.s32 %v6307, %v6311
  %v6313 = vadd.s32 %v6312, 536870912
  %v6314 = vshrl.u32 %v6313, 30
  %v6315 = vshll.u32 %v6314, 30
  %v6316 = vsub.s32 %v6312, %v6315
  %vm6317 = vcmp.lt.s32.totalorder %v6316, 0
  %v6318 = vsub.s32 0, %v6316
  %v6319 = vsel %vm6317, %v6318, %v6316
  %v6320 = vclz %v6319
  %v6321 = vsub.s32 %v6320, 2
  %vm6322 = vcmp.gt.s32.totalorder 0, %v6321
  %v6323 = vsel %vm6322, 0, %v6321
  %v6324 = vsub.s32 32, %v6323
  %v6325 = vshll.u32 %v6316, %v6323
  %v6326 = vshrl.u32 %v6308, %v6324
  %v6327 = vor.u32 %v6325, %v6326
  %v6328 = vsub.s32 4294967266, %v6323
  %v6329 = vadd.s32 %v6328, 127
  %v6330 = vshll.u32 %v6329, 23
  %v6331 = vor.u32 4788187, %v6330
  %v6332 = vand.u32 2147483647, %v6331
  %v6334 = vcvt.s32.f32 %v6327
  %v6335 = vmul.f32 %v6334, %v6332
  %v6336 = vxor.u32 %v6335, 2147483648
  %v6337 = vsel %vm6254, %v6336, %v6335
  %v6338 = vsub.s32 4, %v6314
  %v6339 = vsel %vm6254, %v6338, %v6314
  %v6340 = vsel %vm6253, %v138, %v6337
  %v6341 = vsel %vm6253, 0, %v6339
  %v6342 = vcosq.f32.pop %v6340
  %v6343 = vsinq.f32.pop %v6340
  %vm6344 = vweird.f32 %v138
  %v6345 = vand.u32 %v6341, 3
  %vm6346 = vcmp.lt.s32.totalorder %v6345, 2
  %vm6347 = vcmp.eq.s32.totalorder %v6345, 0
  %v6348 = vxor.u32 %v6343, 2147483648
  %v6349 = vsel %vm6347, %v6342, %v6348
  %vm6350 = vcmp.eq.s32.totalorder %v6345, 2
  %v6351 = vxor.u32 %v6342, 2147483648
  %v6352 = vsel %vm6350, %v6351, %v6343
  %v6353 = vsel %vm6346, %v6349, %v6352
  %v6354 = vsel %vm6344, nan, %v6353
  %v6355 = vand.u32 2147483647, %v139
  %vm6356 = vcmp.le.f32.partialorder %v6355, 0.7853982
  %vm6357 = vcmp.lt.s32.totalorder %v139, 0
  %v6358 = vand.u32 %v139, 2139095040
  %v6359 = vshrl.u32 %v6358, 23
  %v6360 = vsub.s32 %v6359, 127
  %v6361 = vand.u32 2147483647, %v139
  %v6362 = vand.u32 %v6361, 8388607
  %v6363 = vor.u32 %v6362, 8388608
  %v6364 = vsub.s32 0, %v6363
  %v6365 = vadd.s32 %v6360, 1
  %vm6366 = vcmp.gt.s32.totalorder %v6365, 0
  %v6367 = vsel %vm6366, %v6365, 0
  %v6368 = vshrl.u32 %v6367, 5
  %v6369 = vand.u32 %v6367, 31
  %v6370 = vsub.s32 32, %v6369
  %v6371 = vshrl.u32 683565275, %v6370
  %v6372 = vshll.u32 683565275, %v6369
  %v6373 = vshrl.u32 2475754826, %v6370
  %v6374 = vor.u32 %v6372, %v6373
  %v6375 = vshll.u32 2475754826, %v6369
  %v6376 = vshrl.u32 2131351028, %v6370
  %v6377 = vor.u32 %v6375, %v6376
  %v6378 = vshll.u32 2131351028, %v6369
  %v6379 = vshrl.u32 2102212464, %v6370
  %v6380 = vor.u32 %v6378, %v6379
  %v6381 = vshll.u32 2102212464, %v6369
  %v6382 = vshrl.u32 920167782, %v6370
  %v6383 = vor.u32 %v6381, %v6382
  %v6384 = vshll.u32 920167782, %v6369
  %v6385 = vshrl.u32 1326507024, %v6370
  %v6386 = vor.u32 %v6384, %v6385
  %vm6387 = vcmp.lt.s32.totalorder %v6368, 1
  %vm6388 = vcmp.lt.s32.totalorder %v6368, 2
  %vm6389 = vcmp.lt.s32.totalorder %v6368, 3
  %vm6390 = vcmp.lt.s32.totalorder %v6368, 4
  %v6391 = vsel %vm6387, %v6371, %v6374
  %v6392 = vsel %vm6390, %v6380, 2102212464
  %v6393 = vsel %vm6389, %v6377, %v6392
  %v6394 = vsel %vm6388, %v6391, %v6393
  %v6395 = vsel %vm6387, %v6374, %v6377
  %v6396 = vsel %vm6390, %v6383, 920167782
  %v6397 = vsel %vm6389, %v6380, %v6396
  %v6398 = vsel %vm6388, %v6395, %v6397
  %v6399 = vsel %vm6387, %v6377, %v6380
  %v6400 = vsel %vm6390, %v6386, 1326507024
  %v6401 = vsel %vm6389, %v6383, %v6400
  %v6402 = vsel %vm6388, %v6399, %v6401
  %v6403 = vshll.u32 %v6363, 8
  %v6404 = vmul.u32.u64.compose %v6403, %v6402
  %v6405 = vextract.low.u32 %v6404
  %v6406 = vextract.high.u32 %v6404
  %v6407 = vmul.u32.u64.compose %v6403, %v6398
  %v6408 = vextract.low.u32 %v6407
  %v6409 = vextract.high.u32 %v6407
  %v6410 = vmul.u32 %v6403, %v6394
  %v6411 = vadd.s32 %v6406, %v6408
  %vm6412 = vc.u32 %v6406, %v6408
  %v6413 = vadd.s32 %v6409, 1
  %v6414 = vsel %vm6412, %v6413, %v6409
  %v6415 = vadd.s32 %v6410, %v6414
  %v6416 = vadd.s32 %v6415, 536870912
  %v6417 = vshrl.u32 %v6416, 30
  %v6418 = vshll.u32 %v6417, 30
  %v6419 = vsub.s32 %v6415, %v6418
  %vm6420 = vcmp.lt.s32.totalorder %v6419, 0
  %v6421 = vsub.s32 0, %v6419
  %v6422 = vsel %vm6420, %v6421, %v6419
  %v6423 = vclz %v6422
  %v6424 = vsub.s32 %v6423, 2
  %vm6425 = vcmp.gt.s32.totalorder 0, %v6424
  %v6426 = vsel %vm6425, 0, %v6424
  %v6427 = vsub.s32 32, %v6426
  %v6428 = vshll.u32 %v6419, %v6426
  %v6429 = vshrl.u32 %v6411, %v6427
  %v6430 = vor.u32 %v6428, %v6429
  %v6431 = vsub.s32 4294967266, %v6426
  %v6432 = vadd.s32 %v6431, 127
  %v6433 = vshll.u32 %v6432, 23
  %v6434 = vor.u32 4788187, %v6433
  %v6435 = vand.u32 2147483647, %v6434
  %v6437 = vcvt.s32.f32 %v6430
  %v6438 = vmul.f32 %v6437, %v6435
  %v6439 = vxor.u32 %v6438, 2147483648
  %v6440 = vsel %vm6357, %v6439, %v6438
  %v6441 = vsub.s32 4, %v6417
  %v6442 = vsel %vm6357, %v6441, %v6417
  %v6443 = vsel %vm6356, %v139, %v6440
  %v6444 = vsel %vm6356, 0, %v6442
  %v6445 = vcosq.f32.pop %v6443
  %v6446 = vsinq.f32.pop %v6443
  %vm6447 = vweird.f32 %v139
  %v6448 = vand.u32 %v6444, 3
  %vm6449 = vcmp.lt.s32.totalorder %v6448, 2
  %vm6450 = vcmp.eq.s32.totalorder %v6448, 0
  %v6451 = vxor.u32 %v6446, 2147483648
  %v6452 = vsel %vm6450, %v6445, %v6451
  %vm6453 = vcmp.eq.s32.totalorder %v6448, 2
  %v6454 = vxor.u32 %v6445, 2147483648
  %v6455 = vsel %vm6453, %v6454, %v6446
  %v6456 = vsel %vm6449, %v6452, %v6455
  %v6457 = vsel %vm6447, nan, %v6456
  %v6458 = vand.u32 2147483647, %v140
  %vm6459 = vcmp.le.f32.partialorder %v6458, 0.7853982
  %vm6460 = vcmp.lt.s32.totalorder %v140, 0
  %v6461 = vand.u32 %v140, 2139095040
  %v6462 = vshrl.u32 %v6461, 23
  %v6463 = vsub.s32 %v6462, 127
  %v6464 = vand.u32 2147483647, %v140
  %v6465 = vand.u32 %v6464, 8388607
  %v6466 = vor.u32 %v6465, 8388608
  %v6467 = vsub.s32 0, %v6466
  %v6468 = vadd.s32 %v6463, 1
  %vm6469 = vcmp.gt.s32.totalorder %v6468, 0
  %v6470 = vsel %vm6469, %v6468, 0
  %v6471 = vshrl.u32 %v6470, 5
  %v6472 = vand.u32 %v6470, 31
  %v6473 = vsub.s32 32, %v6472
  %v6474 = vshrl.u32 683565275, %v6473
  %v6475 = vshll.u32 683565275, %v6472
  %v6476 = vshrl.u32 2475754826, %v6473
  %v6477 = vor.u32 %v6475, %v6476
  %v6478 = vshll.u32 2475754826, %v6472
  %v6479 = vshrl.u32 2131351028, %v6473
  %v6480 = vor.u32 %v6478, %v6479
  %v6481 = vshll.u32 2131351028, %v6472
  %v6482 = vshrl.u32 2102212464, %v6473
  %v6483 = vor.u32 %v6481, %v6482
  %v6484 = vshll.u32 2102212464, %v6472
  %v6485 = vshrl.u32 920167782, %v6473
  %v6486 = vor.u32 %v6484, %v6485
  %v6487 = vshll.u32 920167782, %v6472
  %v6488 = vshrl.u32 1326507024, %v6473
  %v6489 = vor.u32 %v6487, %v6488
  %vm6490 = vcmp.lt.s32.totalorder %v6471, 1
  %vm6491 = vcmp.lt.s32.totalorder %v6471, 2
  %vm6492 = vcmp.lt.s32.totalorder %v6471, 3
  %vm6493 = vcmp.lt.s32.totalorder %v6471, 4
  %v6494 = vsel %vm6490, %v6474, %v6477
  %v6495 = vsel %vm6493, %v6483, 2102212464
  %v6496 = vsel %vm6492, %v6480, %v6495
  %v6497 = vsel %vm6491, %v6494, %v6496
  %v6498 = vsel %vm6490, %v6477, %v6480
  %v6499 = vsel %vm6493, %v6486, 920167782
  %v6500 = vsel %vm6492, %v6483, %v6499
  %v6501 = vsel %vm6491, %v6498, %v6500
  %v6502 = vsel %vm6490, %v6480, %v6483
  %v6503 = vsel %vm6493, %v6489, 1326507024
  %v6504 = vsel %vm6492, %v6486, %v6503
  %v6505 = vsel %vm6491, %v6502, %v6504
  %v6506 = vshll.u32 %v6466, 8
  %v6507 = vmul.u32.u64.compose %v6506, %v6505
  %v6508 = vextract.low.u32 %v6507
  %v6509 = vextract.high.u32 %v6507
  %v6510 = vmul.u32.u64.compose %v6506, %v6501
  %v6511 = vextract.low.u32 %v6510
  %v6512 = vextract.high.u32 %v6510
  %v6513 = vmul.u32 %v6506, %v6497
  %v6514 = vadd.s32 %v6509, %v6511
  %vm6515 = vc.u32 %v6509, %v6511
  %v6516 = vadd.s32 %v6512, 1
  %v6517 = vsel %vm6515, %v6516, %v6512
  %v6518 = vadd.s32 %v6513, %v6517
  %v6519 = vadd.s32 %v6518, 536870912
  %v6520 = vshrl.u32 %v6519, 30
  %v6521 = vshll.u32 %v6520, 30
  %v6522 = vsub.s32 %v6518, %v6521
  %vm6523 = vcmp.lt.s32.totalorder %v6522, 0
  %v6524 = vsub.s32 0, %v6522
  %v6525 = vsel %vm6523, %v6524, %v6522
  %v6526 = vclz %v6525
  %v6527 = vsub.s32 %v6526, 2
  %vm6528 = vcmp.gt.s32.totalorder 0, %v6527
  %v6529 = vsel %vm6528, 0, %v6527
  %v6530 = vsub.s32 32, %v6529
  %v6531 = vshll.u32 %v6522, %v6529
  %v6532 = vshrl.u32 %v6514, %v6530
  %v6533 = vor.u32 %v6531, %v6532
  %v6534 = vsub.s32 4294967266, %v6529
  %v6535 = vadd.s32 %v6534, 127
  %v6536 = vshll.u32 %v6535, 23
  %v6537 = vor.u32 4788187, %v6536
  %v6538 = vand.u32 2147483647, %v6537
  %v6540 = vcvt.s32.f32 %v6533
  %v6541 = vmul.f32 %v6540, %v6538
  %v6542 = vxor.u32 %v6541, 2147483648
  %v6543 = vsel %vm6460, %v6542, %v6541
  %v6544 = vsub.s32 4, %v6520
  %v6545 = vsel %vm6460, %v6544, %v6520
  %v6546 = vsel %vm6459, %v140, %v6543
  %v6547 = vsel %vm6459, 0, %v6545
  %v6548 = vcosq.f32.pop %v6546
  %v6549 = vsinq.f32.pop %v6546
  %vm6550 = vweird.f32 %v140
  %v6551 = vand.u32 %v6547, 3
  %vm6552 = vcmp.lt.s32.totalorder %v6551, 2
  %vm6553 = vcmp.eq.s32.totalorder %v6551, 0
  %v6554 = vxor.u32 %v6549, 2147483648
  %v6555 = vsel %vm6553, %v6548, %v6554
  %vm6556 = vcmp.eq.s32.totalorder %v6551, 2
  %v6557 = vxor.u32 %v6548, 2147483648
  %v6558 = vsel %vm6556, %v6557, %v6549
  %v6559 = vsel %vm6552, %v6555, %v6558
  %v6560 = vsel %vm6550, nan, %v6559
  %v6561 = vand.u32 2147483647, %v141
  %vm6562 = vcmp.le.f32.partialorder %v6561, 0.7853982
  %vm6563 = vcmp.lt.s32.totalorder %v141, 0
  %v6564 = vand.u32 %v141, 2139095040
  %v6565 = vshrl.u32 %v6564, 23
  %v6566 = vsub.s32 %v6565, 127
  %v6567 = vand.u32 2147483647, %v141
  %v6568 = vand.u32 %v6567, 8388607
  %v6569 = vor.u32 %v6568, 8388608
  %v6570 = vsub.s32 0, %v6569
  %v6571 = vadd.s32 %v6566, 1
  %vm6572 = vcmp.gt.s32.totalorder %v6571, 0
  %v6573 = vsel %vm6572, %v6571, 0
  %v6574 = vshrl.u32 %v6573, 5
  %v6575 = vand.u32 %v6573, 31
  %v6576 = vsub.s32 32, %v6575
  %v6577 = vshrl.u32 683565275, %v6576
  %v6578 = vshll.u32 683565275, %v6575
  %v6579 = vshrl.u32 2475754826, %v6576
  %v6580 = vor.u32 %v6578, %v6579
  %v6581 = vshll.u32 2475754826, %v6575
  %v6582 = vshrl.u32 2131351028, %v6576
  %v6583 = vor.u32 %v6581, %v6582
  %v6584 = vshll.u32 2131351028, %v6575
  %v6585 = vshrl.u32 2102212464, %v6576
  %v6586 = vor.u32 %v6584, %v6585
  %v6587 = vshll.u32 2102212464, %v6575
  %v6588 = vshrl.u32 920167782, %v6576
  %v6589 = vor.u32 %v6587, %v6588
  %v6590 = vshll.u32 920167782, %v6575
  %v6591 = vshrl.u32 1326507024, %v6576
  %v6592 = vor.u32 %v6590, %v6591
  %vm6593 = vcmp.lt.s32.totalorder %v6574, 1
  %vm6594 = vcmp.lt.s32.totalorder %v6574, 2
  %vm6595 = vcmp.lt.s32.totalorder %v6574, 3
  %vm6596 = vcmp.lt.s32.totalorder %v6574, 4
  %v6597 = vsel %vm6593, %v6577, %v6580
  %v6598 = vsel %vm6596, %v6586, 2102212464
  %v6599 = vsel %vm6595, %v6583, %v6598
  %v6600 = vsel %vm6594, %v6597, %v6599
  %v6601 = vsel %vm6593, %v6580, %v6583
  %v6602 = vsel %vm6596, %v6589, 920167782
  %v6603 = vsel %vm6595, %v6586, %v6602
  %v6604 = vsel %vm6594, %v6601, %v6603
  %v6605 = vsel %vm6593, %v6583, %v6586
  %v6606 = vsel %vm6596, %v6592, 1326507024
  %v6607 = vsel %vm6595, %v6589, %v6606
  %v6608 = vsel %vm6594, %v6605, %v6607
  %v6609 = vshll.u32 %v6569, 8
  %v6610 = vmul.u32.u64.compose %v6609, %v6608
  %v6611 = vextract.low.u32 %v6610
  %v6612 = vextract.high.u32 %v6610
  %v6613 = vmul.u32.u64.compose %v6609, %v6604
  %v6614 = vextract.low.u32 %v6613
  %v6615 = vextract.high.u32 %v6613
  %v6616 = vmul.u32 %v6609, %v6600
  %v6617 = vadd.s32 %v6612, %v6614
  %vm6618 = vc.u32 %v6612, %v6614
  %v6619 = vadd.s32 %v6615, 1
  %v6620 = vsel %vm6618, %v6619, %v6615
  %v6621 = vadd.s32 %v6616, %v6620
  %v6622 = vadd.s32 %v6621, 536870912
  %v6623 = vshrl.u32 %v6622, 30
  %v6624 = vshll.u32 %v6623, 30
  %v6625 = vsub.s32 %v6621, %v6624
  %vm6626 = vcmp.lt.s32.totalorder %v6625, 0
  %v6627 = vsub.s32 0, %v6625
  %v6628 = vsel %vm6626, %v6627, %v6625
  %v6629 = vclz %v6628
  %v6630 = vsub.s32 %v6629, 2
  %vm6631 = vcmp.gt.s32.totalorder 0, %v6630
  %v6632 = vsel %vm6631, 0, %v6630
  %v6633 = vsub.s32 32, %v6632
  %v6634 = vshll.u32 %v6625, %v6632
  %v6635 = vshrl.u32 %v6617, %v6633
  %v6636 = vor.u32 %v6634, %v6635
  %v6637 = vsub.s32 4294967266, %v6632
  %v6638 = vadd.s32 %v6637, 127
  %v6639 = vshll.u32 %v6638, 23
  %v6640 = vor.u32 4788187, %v6639
  %v6641 = vand.u32 2147483647, %v6640
  %v6643 = vcvt.s32.f32 %v6636
  %v6644 = vmul.f32 %v6643, %v6641
  %v6645 = vxor.u32 %v6644, 2147483648
  %v6646 = vsel %vm6563, %v6645, %v6644
  %v6647 = vsub.s32 4, %v6623
  %v6648 = vsel %vm6563, %v6647, %v6623
  %v6649 = vsel %vm6562, %v141, %v6646
  %v6650 = vsel %vm6562, 0, %v6648
  %v6651 = vcosq.f32.pop %v6649
  %v6652 = vsinq.f32.pop %v6649
  %vm6653 = vweird.f32 %v141
  %v6654 = vand.u32 %v6650, 3
  %vm6655 = vcmp.lt.s32.totalorder %v6654, 2
  %vm6656 = vcmp.eq.s32.totalorder %v6654, 0
  %v6657 = vxor.u32 %v6652, 2147483648
  %v6658 = vsel %vm6656, %v6651, %v6657
  %vm6659 = vcmp.eq.s32.totalorder %v6654, 2
  %v6660 = vxor.u32 %v6651, 2147483648
  %v6661 = vsel %vm6659, %v6660, %v6652
  %v6662 = vsel %vm6655, %v6658, %v6661
  %v6663 = vsel %vm6653, nan, %v6662
  %v6664 = vand.u32 2147483647, %v142
  %vm6665 = vcmp.le.f32.partialorder %v6664, 0.7853982
  %vm6666 = vcmp.lt.s32.totalorder %v142, 0
  %v6667 = vand.u32 %v142, 2139095040
  %v6668 = vshrl.u32 %v6667, 23
  %v6669 = vsub.s32 %v6668, 127
  %v6670 = vand.u32 2147483647, %v142
  %v6671 = vand.u32 %v6670, 8388607
  %v6672 = vor.u32 %v6671, 8388608
  %v6673 = vsub.s32 0, %v6672
  %v6674 = vadd.s32 %v6669, 1
  %vm6675 = vcmp.gt.s32.totalorder %v6674, 0
  %v6676 = vsel %vm6675, %v6674, 0
  %v6677 = vshrl.u32 %v6676, 5
  %v6678 = vand.u32 %v6676, 31
  %v6679 = vsub.s32 32, %v6678
  %v6680 = vshrl.u32 683565275, %v6679
  %v6681 = vshll.u32 683565275, %v6678
  %v6682 = vshrl.u32 2475754826, %v6679
  %v6683 = vor.u32 %v6681, %v6682
  %v6684 = vshll.u32 2475754826, %v6678
  %v6685 = vshrl.u32 2131351028, %v6679
  %v6686 = vor.u32 %v6684, %v6685
  %v6687 = vshll.u32 2131351028, %v6678
  %v6688 = vshrl.u32 2102212464, %v6679
  %v6689 = vor.u32 %v6687, %v6688
  %v6690 = vshll.u32 2102212464, %v6678
  %v6691 = vshrl.u32 920167782, %v6679
  %v6692 = vor.u32 %v6690, %v6691
  %v6693 = vshll.u32 920167782, %v6678
  %v6694 = vshrl.u32 1326507024, %v6679
  %v6695 = vor.u32 %v6693, %v6694
  %vm6696 = vcmp.lt.s32.totalorder %v6677, 1
  %vm6697 = vcmp.lt.s32.totalorder %v6677, 2
  %vm6698 = vcmp.lt.s32.totalorder %v6677, 3
  %vm6699 = vcmp.lt.s32.totalorder %v6677, 4
  %v6700 = vsel %vm6696, %v6680, %v6683
  %v6701 = vsel %vm6699, %v6689, 2102212464
  %v6702 = vsel %vm6698, %v6686, %v6701
  %v6703 = vsel %vm6697, %v6700, %v6702
  %v6704 = vsel %vm6696, %v6683, %v6686
  %v6705 = vsel %vm6699, %v6692, 920167782
  %v6706 = vsel %vm6698, %v6689, %v6705
  %v6707 = vsel %vm6697, %v6704, %v6706
  %v6708 = vsel %vm6696, %v6686, %v6689
  %v6709 = vsel %vm6699, %v6695, 1326507024
  %v6710 = vsel %vm6698, %v6692, %v6709
  %v6711 = vsel %vm6697, %v6708, %v6710
  %v6712 = vshll.u32 %v6672, 8
  %v6713 = vmul.u32.u64.compose %v6712, %v6711
  %v6714 = vextract.low.u32 %v6713
  %v6715 = vextract.high.u32 %v6713
  %v6716 = vmul.u32.u64.compose %v6712, %v6707
  %v6717 = vextract.low.u32 %v6716
  %v6718 = vextract.high.u32 %v6716
  %v6719 = vmul.u32 %v6712, %v6703
  %v6720 = vadd.s32 %v6715, %v6717
  %vm6721 = vc.u32 %v6715, %v6717
  %v6722 = vadd.s32 %v6718, 1
  %v6723 = vsel %vm6721, %v6722, %v6718
  %v6724 = vadd.s32 %v6719, %v6723
  %v6725 = vadd.s32 %v6724, 536870912
  %v6726 = vshrl.u32 %v6725, 30
  %v6727 = vshll.u32 %v6726, 30
  %v6728 = vsub.s32 %v6724, %v6727
  %vm6729 = vcmp.lt.s32.totalorder %v6728, 0
  %v6730 = vsub.s32 0, %v6728
  %v6731 = vsel %vm6729, %v6730, %v6728
  %v6732 = vclz %v6731
  %v6733 = vsub.s32 %v6732, 2
  %vm6734 = vcmp.gt.s32.totalorder 0, %v6733
  %v6735 = vsel %vm6734, 0, %v6733
  %v6736 = vsub.s32 32, %v6735
  %v6737 = vshll.u32 %v6728, %v6735
  %v6738 = vshrl.u32 %v6720, %v6736
  %v6739 = vor.u32 %v6737, %v6738
  %v6740 = vsub.s32 4294967266, %v6735
  %v6741 = vadd.s32 %v6740, 127
  %v6742 = vshll.u32 %v6741, 23
  %v6743 = vor.u32 4788187, %v6742
  %v6744 = vand.u32 2147483647, %v6743
  %v6746 = vcvt.s32.f32 %v6739
  %v6747 = vmul.f32 %v6746, %v6744
  %v6748 = vxor.u32 %v6747, 2147483648
  %v6749 = vsel %vm6666, %v6748, %v6747
  %v6750 = vsub.s32 4, %v6726
  %v6751 = vsel %vm6666, %v6750, %v6726
  %v6752 = vsel %vm6665, %v142, %v6749
  %v6753 = vsel %vm6665, 0, %v6751
  %v6754 = vcosq.f32.pop %v6752
  %v6755 = vsinq.f32.pop %v6752
  %vm6756 = vweird.f32 %v142
  %v6757 = vand.u32 %v6753, 3
  %vm6758 = vcmp.lt.s32.totalorder %v6757, 2
  %vm6759 = vcmp.eq.s32.totalorder %v6757, 0
  %v6760 = vxor.u32 %v6755, 2147483648
  %v6761 = vsel %vm6759, %v6754, %v6760
  %vm6762 = vcmp.eq.s32.totalorder %v6757, 2
  %v6763 = vxor.u32 %v6754, 2147483648
  %v6764 = vsel %vm6762, %v6763, %v6755
  %v6765 = vsel %vm6758, %v6761, %v6764
  %v6766 = vsel %vm6756, nan, %v6765
  %v6767 = vmul.f32 %v246, 2.0
  %v6768 = vmul.f32 %v350, 2.0
  %v6769 = vmul.f32 %v454, 2.0
  %v6770 = vmul.f32 %v558, 2.0
  %v6771 = vmul.f32 %v662, 2.0
  %v6772 = vmul.f32 %v766, 2.0
  %v6773 = vmul.f32 %v870, 2.0
  %v6774 = vmul.f32 %v974, 2.0
  %v6775 = vmul.f32 %v1078, 2.0
  %v6776 = vmul.f32 %v1182, 2.0
  %v6777 = vmul.f32 %v1286, 2.0
  %v6778 = vmul.f32 %v1390, 2.0
  %v6779 = vmul.f32 %v1494, 2.0
  %v6780 = vmul.f32 %v1598, 2.0
  %v6781 = vmul.f32 %v1702, 2.0
  %v6782 = vmul.f32 %v1806, 2.0
  %v6783 = vmul.f32 %v1910, 2.0
  %v6784 = vmul.f32 %v2014, 2.0
  %v6785 = vmul.f32 %v2118, 2.0
  %v6786 = vmul.f32 %v2222, 2.0
  %v6787 = vmul.f32 %v2326, 2.0
  %v6788 = vmul.f32 %v2430, 2.0
  %v6789 = vmul.f32 %v2534, 2.0
  %v6790 = vmul.f32 %v2638, 2.0
  %v6791 = vmul.f32 %v2742, 2.0
  %v6792 = vmul.f32 %v2846, 2.0
  %v6793 = vmul.f32 %v2950, 2.0
  %v6794 = vmul.f32 %v3054, 2.0
  %v6795 = vmul.f32 %v3158, 2.0
  %v6796 = vmul.f32 %v3262, 2.0
  %v6797 = vmul.f32 %v3366, 2.0
  %v6798 = vmul.f32 %v3470, 2.0
  %v6799 = vmul.f32 %v6767, %v3573
  %v6800 = vmul.f32 %v6768, %v3676
  %v6801 = vmul.f32 %v6769, %v3779
  %v6802 = vmul.f32 %v6770, %v3882
  %v6803 = vmul.f32 %v6771, %v3985
  %v6804 = vmul.f32 %v6772, %v4088
  %v6805 = vmul.f32 %v6773, %v4191
  %v6806 = vmul.f32 %v6774, %v4294
  %v6807 = vmul.f32 %v6775, %v4397
  %v6808 = vmul.f32 %v6776, %v4500
  %v6809 = vmul.f32 %v6777, %v4603
  %v6810 = vmul.f32 %v6778, %v4706
  %v6811 = vmul.f32 %v6779, %v4809
  %v6812 = vmul.f32 %v6780, %v4912
  %v6813 = vmul.f32 %v6781, %v5015
  %v6814 = vmul.f32 %v6782, %v5118
  %v6815 = vmul.f32 %v6783, %v5221
  %v6816 = vmul.f32 %v6784, %v5324
  %v6817 = vmul.f32 %v6785, %v5427
  %v6818 = vmul.f32 %v6786, %v5530
  %v6819 = vmul.f32 %v6787, %v5633
  %v6820 = vmul.f32 %v6788, %v5736
  %v6821 = vmul.f32 %v6789, %v5839
  %v6822 = vmul.f32 %v6790, %v5942
  %v6823 = vmul.f32 %v6791, %v6045
  %v6824 = vmul.f32 %v6792, %v6148
  %v6825 = vmul.f32 %v6793, %v6251
  %v6826 = vmul.f32 %v6794, %v6354
  %v6827 = vmul.f32 %v6795, %v6457
  %v6828 = vmul.f32 %v6796, %v6560
  %v6829 = vmul.f32 %v6797, %v6663
  %v6830 = vmul.f32 %v6798, %v6766
  %v6831 = vmul.f32 %v3573, 2.0
  %v6832 = vmul.f32 %v3676, 2.0
  %v6833 = vmul.f32 %v3779, 2.0
  %v6834 = vmul.f32 %v3882, 2.0
  %v6835 = vmul.f32 %v3985, 2.0
  %v6836 = vmul.f32 %v4088, 2.0
  %v6837 = vmul.f32 %v4191, 2.0
  %v6838 = vmul.f32 %v4294, 2.0
  %v6839 = vmul.f32 %v4397, 2.0
  %v6840 = vmul.f32 %v4500, 2.0
  %v6841 = vmul.f32 %v4603, 2.0
  %v6842 = vmul.f32 %v4706, 2.0
  %v6843 = vmul.f32 %v4809, 2.0
  %v6844 = vmul.f32 %v4912, 2.0
  %v6845 = vmul.f32 %v5015, 2.0
  %v6846 = vmul.f32 %v5118, 2.0
  %v6847 = vmul.f32 %v5221, 2.0
  %v6848 = vmul.f32 %v5324, 2.0
  %v6849 = vmul.f32 %v5427, 2.0
  %v6850 = vmul.f32 %v5530, 2.0
  %v6851 = vmul.f32 %v5633, 2.0
  %v6852 = vmul.f32 %v5736, 2.0
  %v6853 = vmul.f32 %v5839, 2.0
  %v6854 = vmul.f32 %v5942, 2.0
  %v6855 = vmul.f32 %v6045, 2.0
  %v6856 = vmul.f32 %v6148, 2.0
  %v6857 = vmul.f32 %v6251, 2.0
  %v6858 = vmul.f32 %v6354, 2.0
  %v6859 = vmul.f32 %v6457, 2.0
  %v6860 = vmul.f32 %v6560, 2.0
  %v6861 = vmul.f32 %v6663, 2.0
  %v6862 = vmul.f32 %v6766, 2.0
  %v6863 = vmul.f32 %v6831, %v3573
  %v6864 = vmul.f32 %v6832, %v3676
  %v6865 = vmul.f32 %v6833, %v3779
  %v6866 = vmul.f32 %v6834, %v3882
  %v6867 = vmul.f32 %v6835, %v3985
  %v6868 = vmul.f32 %v6836, %v4088
  %v6869 = vmul.f32 %v6837, %v4191
  %v6870 = vmul.f32 %v6838, %v4294
  %v6871 = vmul.f32 %v6839, %v4397
  %v6872 = vmul.f32 %v6840, %v4500
  %v6873 = vmul.f32 %v6841, %v4603
  %v6874 = vmul.f32 %v6842, %v4706
  %v6875 = vmul.f32 %v6843, %v4809
  %v6876 = vmul.f32 %v6844, %v4912
  %v6877 = vmul.f32 %v6845, %v5015
  %v6878 = vmul.f32 %v6846, %v5118
  %v6879 = vmul.f32 %v6847, %v5221
  %v6880 = vmul.f32 %v6848, %v5324
  %v6881 = vmul.f32 %v6849, %v5427
  %v6882 = vmul.f32 %v6850, %v5530
  %v6883 = vmul.f32 %v6851, %v5633
  %v6884 = vmul.f32 %v6852, %v5736
  %v6885 = vmul.f32 %v6853, %v5839
  %v6886 = vmul.f32 %v6854, %v5942
  %v6887 = vmul.f32 %v6855, %v6045
  %v6888 = vmul.f32 %v6856, %v6148
  %v6889 = vmul.f32 %v6857, %v6251
  %v6890 = vmul.f32 %v6858, %v6354
  %v6891 = vmul.f32 %v6859, %v6457
  %v6892 = vmul.f32 %v6860, %v6560
  %v6893 = vmul.f32 %v6861, %v6663
  %v6894 = vmul.f32 %v6862, %v6766
  %v6895 = vsub.f32 %v6863, 1.0
  %v6896 = vsub.f32 %v6864, 1.0
  %v6897 = vsub.f32 %v6865, 1.0
  %v6898 = vsub.f32 %v6866, 1.0
  %v6899 = vsub.f32 %v6867, 1.0
  %v6900 = vsub.f32 %v6868, 1.0
  %v6901 = vsub.f32 %v6869, 1.0
  %v6902 = vsub.f32 %v6870, 1.0
  %v6903 = vsub.f32 %v6871, 1.0
  %v6904 = vsub.f32 %v6872, 1.0
  %v6905 = vsub.f32 %v6873, 1.0
  %v6906 = vsub.f32 %v6874, 1.0
  %v6907 = vsub.f32 %v6875, 1.0
  %v6908 = vsub.f32 %v6876, 1.0
  %v6909 = vsub.f32 %v6877, 1.0
  %v6910 = vsub.f32 %v6878, 1.0
  %v6911 = vsub.f32 %v6879, 1.0
  %v6912 = vsub.f32 %v6880, 1.0
  %v6913 = vsub.f32 %v6881, 1.0
  %v6914 = vsub.f32 %v6882, 1.0
  %v6915 = vsub.f32 %v6883, 1.0
  %v6916 = vsub.f32 %v6884, 1.0
  %v6917 = vsub.f32 %v6885, 1.0
  %v6918 = vsub.f32 %v6886, 1.0
  %v6919 = vsub.f32 %v6887, 1.0
  %v6920 = vsub.f32 %v6888, 1.0
  %v6921 = vsub.f32 %v6889, 1.0
  %v6922 = vsub.f32 %v6890, 1.0
  %v6923 = vsub.f32 %v6891, 1.0
  %v6924 = vsub.f32 %v6892, 1.0
  %v6925 = vsub.f32 %v6893, 1.0
  %v6926 = vsub.f32 %v6894, 1.0
  %v6927 = vmul.f32 %v6799, 2.0
  %v6928 = vmul.f32 %v6800, 2.0
  %v6929 = vmul.f32 %v6801, 2.0
  %v6930 = vmul.f32 %v6802, 2.0
  %v6931 = vmul.f32 %v6803, 2.0
  %v6932 = vmul.f32 %v6804, 2.0
  %v6933 = vmul.f32 %v6805, 2.0
  %v6934 = vmul.f32 %v6806, 2.0
  %v6935 = vmul.f32 %v6807, 2.0
  %v6936 = vmul.f32 %v6808, 2.0
  %v6937 = vmul.f32 %v6809, 2.0
  %v6938 = vmul.f32 %v6810, 2.0
  %v6939 = vmul.f32 %v6811, 2.0
  %v6940 = vmul.f32 %v6812, 2.0
  %v6941 = vmul.f32 %v6813, 2.0
  %v6942 = vmul.f32 %v6814, 2.0
  %v6943 = vmul.f32 %v6815, 2.0
  %v6944 = vmul.f32 %v6816, 2.0
  %v6945 = vmul.f32 %v6817, 2.0
  %v6946 = vmul.f32 %v6818, 2.0
  %v6947 = vmul.f32 %v6819, 2.0
  %v6948 = vmul.f32 %v6820, 2.0
  %v6949 = vmul.f32 %v6821, 2.0
  %v6950 = vmul.f32 %v6822, 2.0
  %v6951 = vmul.f32 %v6823, 2.0
  %v6952 = vmul.f32 %v6824, 2.0
  %v6953 = vmul.f32 %v6825, 2.0
  %v6954 = vmul.f32 %v6826, 2.0
  %v6955 = vmul.f32 %v6827, 2.0
  %v6956 = vmul.f32 %v6828, 2.0
  %v6957 = vmul.f32 %v6829, 2.0
  %v6958 = vmul.f32 %v6830, 2.0
  %v6959 = vmul.f32 %v6927, %v6895
  %v6960 = vmul.f32 %v6928, %v6896
  %v6961 = vmul.f32 %v6929, %v6897
  %v6962 = vmul.f32 %v6930, %v6898
  %v6963 = vmul.f32 %v6931, %v6899
  %v6964 = vmul.f32 %v6932, %v6900
  %v6965 = vmul.f32 %v6933, %v6901
  %v6966 = vmul.f32 %v6934, %v6902
  %v6967 = vmul.f32 %v6935, %v6903
  %v6968 = vmul.f32 %v6936, %v6904
  %v6969 = vmul.f32 %v6937, %v6905
  %v6970 = vmul.f32 %v6938, %v6906
  %v6971 = vmul.f32 %v6939, %v6907
  %v6972 = vmul.f32 %v6940, %v6908
  %v6973 = vmul.f32 %v6941, %v6909
  %v6974 = vmul.f32 %v6942, %v6910
  %v6975 = vmul.f32 %v6943, %v6911
  %v6976 = vmul.f32 %v6944, %v6912
  %v6977 = vmul.f32 %v6945, %v6913
  %v6978 = vmul.f32 %v6946, %v6914
  %v6979 = vmul.f32 %v6947, %v6915
  %v6980 = vmul.f32 %v6948, %v6916
  %v6981 = vmul.f32 %v6949, %v6917
  %v6982 = vmul.f32 %v6950, %v6918
  %v6983 = vmul.f32 %v6951, %v6919
  %v6984 = vmul.f32 %v6952, %v6920
  %v6985 = vmul.f32 %v6953, %v6921
  %v6986 = vmul.f32 %v6954, %v6922
  %v6987 = vmul.f32 %v6955, %v6923
  %v6988 = vmul.f32 %v6956, %v6924
  %v6989 = vmul.f32 %v6957, %v6925
  %v6990 = vmul.f32 %v6958, %v6926
  %v6991 = vmul.f32 %v6895, 2.0
  %v6992 = vmul.f32 %v6896, 2.0
  %v6993 = vmul.f32 %v6897, 2.0
  %v6994 = vmul.f32 %v6898, 2.0
  %v6995 = vmul.f32 %v6899, 2.0
  %v6996 = vmul.f32 %v6900, 2.0
  %v6997 = vmul.f32 %v6901, 2.0
  %v6998 = vmul.f32 %v6902, 2.0
  %v6999 = vmul.f32 %v6903, 2.0
  %v7000 = vmul.f32 %v6904, 2.0
  %v7001 = vmul.f32 %v6905, 2.0
  %v7002 = vmul.f32 %v6906, 2.0
  %v7003 = vmul.f32 %v6907, 2.0
  %v7004 = vmul.f32 %v6908, 2.0
  %v7005 = vmul.f32 %v6909, 2.0
  %v7006 = vmul.f32 %v6910, 2.0
  %v7007 = vmul.f32 %v6911, 2.0
  %v7008 = vmul.f32 %v6912, 2.0
  %v7009 = vmul.f32 %v6913, 2.0
  %v7010 = vmul.f32 %v6914, 2.0
  %v7011 = vmul.f32 %v6915, 2.0
  %v7012 = vmul.f32 %v6916, 2.0
  %v7013 = vmul.f32 %v6917, 2.0
  %v7014 = vmul.f32 %v6918, 2.0
  %v7015 = vmul.f32 %v6919, 2.0
  %v7016 = vmul.f32 %v6920, 2.0
  %v7017 = vmul.f32 %v6921, 2.0
  %v7018 = vmul.f32 %v6922, 2.0
  %v7019 = vmul.f32 %v6923, 2.0
  %v7020 = vmul.f32 %v6924, 2.0
  %v7021 = vmul.f32 %v6925, 2.0
  %v7022 = vmul.f32 %v6926, 2.0
  %v7023 = vmul.f32 %v6991, %v6895
  %v7024 = vmul.f32 %v6992, %v6896
  %v7025 = vmul.f32 %v6993, %v6897
  %v7026 = vmul.f32 %v6994, %v6898
  %v7027 = vmul.f32 %v6995, %v6899
  %v7028 = vmul.f32 %v6996, %v6900
  %v7029 = vmul.f32 %v6997, %v6901
  %v7030 = vmul.f32 %v6998, %v6902
  %v7031 = vmul.f32 %v6999, %v6903
  %v7032 = vmul.f32 %v7000, %v6904
  %v7033 = vmul.f32 %v7001, %v6905
  %v7034 = vmul.f32 %v7002, %v6906
  %v7035 = vmul.f32 %v7003, %v6907
  %v7036 = vmul.f32 %v7004, %v6908
  %v7037 = vmul.f32 %v7005, %v6909
  %v7038 = vmul.f32 %v7006, %v6910
  %v7039 = vmul.f32 %v7007, %v6911
  %v7040 = vmul.f32 %v7008, %v6912
  %v7041 = vmul.f32 %v7009, %v6913
  %v7042 = vmul.f32 %v7010, %v6914
  %v7043 = vmul.f32 %v7011, %v6915
  %v7044 = vmul.f32 %v7012, %v6916
  %v7045 = vmul.f32 %v7013, %v6917
  %v7046 = vmul.f32 %v7014, %v6918
  %v7047 = vmul.f32 %v7015, %v6919
  %v7048 = vmul.f32 %v7016, %v6920
  %v7049 = vmul.f32 %v7017, %v6921
  %v7050 = vmul.f32 %v7018, %v6922
  %v7051 = vmul.f32 %v7019, %v6923
  %v7052 = vmul.f32 %v7020, %v6924
  %v7053 = vmul.f32 %v7021, %v6925
  %v7054 = vmul.f32 %v7022, %v6926
  %v7055 = vsub.f32 %v7023, 1.0
  %v7056 = vsub.f32 %v7024, 1.0
  %v7057 = vsub.f32 %v7025, 1.0
  %v7058 = vsub.f32 %v7026, 1.0
  %v7059 = vsub.f32 %v7027, 1.0
  %v7060 = vsub.f32 %v7028, 1.0
  %v7061 = vsub.f32 %v7029, 1.0
  %v7062 = vsub.f32 %v7030, 1.0
  %v7063 = vsub.f32 %v7031, 1.0
  %v7064 = vsub.f32 %v7032, 1.0
  %v7065 = vsub.f32 %v7033, 1.0
  %v7066 = vsub.f32 %v7034, 1.0
  %v7067 = vsub.f32 %v7035, 1.0
  %v7068 = vsub.f32 %v7036, 1.0
  %v7069 = vsub.f32 %v7037, 1.0
  %v7070 = vsub.f32 %v7038, 1.0
  %v7071 = vsub.f32 %v7039, 1.0
  %v7072 = vsub.f32 %v7040, 1.0
  %v7073 = vsub.f32 %v7041, 1.0
  %v7074 = vsub.f32 %v7042, 1.0
  %v7075 = vsub.f32 %v7043, 1.0
  %v7076 = vsub.f32 %v7044, 1.0
  %v7077 = vsub.f32 %v7045, 1.0
  %v7078 = vsub.f32 %v7046, 1.0
  %v7079 = vsub.f32 %v7047, 1.0
  %v7080 = vsub.f32 %v7048, 1.0
  %v7081 = vsub.f32 %v7049, 1.0
  %v7082 = vsub.f32 %v7050, 1.0
  %v7083 = vsub.f32 %v7051, 1.0
  %v7084 = vsub.f32 %v7052, 1.0
  %v7085 = vsub.f32 %v7053, 1.0
  %v7086 = vsub.f32 %v7054, 1.0
  %v7087 = vmul.f32 %v6959, 2.0
  %v7088 = vmul.f32 %v6960, 2.0
  %v7089 = vmul.f32 %v6961, 2.0
  %v7090 = vmul.f32 %v6962, 2.0
  %v7091 = vmul.f32 %v6963, 2.0
  %v7092 = vmul.f32 %v6964, 2.0
  %v7093 = vmul.f32 %v6965, 2.0
  %v7094 = vmul.f32 %v6966, 2.0
  %v7095 = vmul.f32 %v6967, 2.0
  %v7096 = vmul.f32 %v6968, 2.0
  %v7097 = vmul.f32 %v6969, 2.0
  %v7098 = vmul.f32 %v6970, 2.0
  %v7099 = vmul.f32 %v6971, 2.0
  %v7100 = vmul.f32 %v6972, 2.0
  %v7101 = vmul.f32 %v6973, 2.0
  %v7102 = vmul.f32 %v6974, 2.0
  %v7103 = vmul.f32 %v6975, 2.0
  %v7104 = vmul.f32 %v6976, 2.0
  %v7105 = vmul.f32 %v6977, 2.0
  %v7106 = vmul.f32 %v6978, 2.0
  %v7107 = vmul.f32 %v6979, 2.0
  %v7108 = vmul.f32 %v6980, 2.0
  %v7109 = vmul.f32 %v6981, 2.0
  %v7110 = vmul.f32 %v6982, 2.0
  %v7111 = vmul.f32 %v6983, 2.0
  %v7112 = vmul.f32 %v6984, 2.0
  %v7113 = vmul.f32 %v6985, 2.0
  %v7114 = vmul.f32 %v6986, 2.0
  %v7115 = vmul.f32 %v6987, 2.0
  %v7116 = vmul.f32 %v6988, 2.0
  %v7117 = vmul.f32 %v6989, 2.0
  %v7118 = vmul.f32 %v6990, 2.0
  %v7119 = vmul.f32 %v7087, %v7055
  %v7120 = vmul.f32 %v7088, %v7056
  %v7121 = vmul.f32 %v7089, %v7057
  %v7122 = vmul.f32 %v7090, %v7058
  %v7123 = vmul.f32 %v7091, %v7059
  %v7124 = vmul.f32 %v7092, %v7060
  %v7125 = vmul.f32 %v7093, %v7061
  %v7126 = vmul.f32 %v7094, %v7062
  %v7127 = vmul.f32 %v7095, %v7063
  %v7128 = vmul.f32 %v7096, %v7064
  %v7129 = vmul.f32 %v7097, %v7065
  %v7130 = vmul.f32 %v7098, %v7066
  %v7131 = vmul.f32 %v7099, %v7067
  %v7132 = vmul.f32 %v7100, %v7068
  %v7133 = vmul.f32 %v7101, %v7069
  %v7134 = vmul.f32 %v7102, %v7070
  %v7135 = vmul.f32 %v7103, %v7071
  %v7136 = vmul.f32 %v7104, %v7072
  %v7137 = vmul.f32 %v7105, %v7073
  %v7138 = vmul.f32 %v7106, %v7074
  %v7139 = vmul.f32 %v7107, %v7075
  %v7140 = vmul.f32 %v7108, %v7076
  %v7141 = vmul.f32 %v7109, %v7077
  %v7142 = vmul.f32 %v7110, %v7078
  %v7143 = vmul.f32 %v7111, %v7079
  %v7144 = vmul.f32 %v7112, %v7080
  %v7145 = vmul.f32 %v7113, %v7081
  %v7146 = vmul.f32 %v7114, %v7082
  %v7147 = vmul.f32 %v7115, %v7083
  %v7148 = vmul.f32 %v7116, %v7084
  %v7149 = vmul.f32 %v7117, %v7085
  %v7150 = vmul.f32 %v7118, %v7086
  %v7151 = vmul.f32 %v7055, 2.0
  %v7152 = vmul.f32 %v7056, 2.0
  %v7153 = vmul.f32 %v7057, 2.0
  %v7154 = vmul.f32 %v7058, 2.0
  %v7155 = vmul.f32 %v7059, 2.0
  %v7156 = vmul.f32 %v7060, 2.0
  %v7157 = vmul.f32 %v7061, 2.0
  %v7158 = vmul.f32 %v7062, 2.0
  %v7159 = vmul.f32 %v7063, 2.0
  %v7160 = vmul.f32 %v7064, 2.0
  %v7161 = vmul.f32 %v7065, 2.0
  %v7162 = vmul.f32 %v7066, 2.0
  %v7163 = vmul.f32 %v7067, 2.0
  %v7164 = vmul.f32 %v7068, 2.0
  %v7165 = vmul.f32 %v7069, 2.0
  %v7166 = vmul.f32 %v7070, 2.0
  %v7167 = vmul.f32 %v7071, 2.0
  %v7168 = vmul.f32 %v7072, 2.0
  %v7169 = vmul.f32 %v7073, 2.0
  %v7170 = vmul.f32 %v7074, 2.0
  %v7171 = vmul.f32 %v7075, 2.0
  %v7172 = vmul.f32 %v7076, 2.0
  %v7173 = vmul.f32 %v7077, 2.0
  %v7174 = vmul.f32 %v7078, 2.0
  %v7175 = vmul.f32 %v7079, 2.0
  %v7176 = vmul.f32 %v7080, 2.0
  %v7177 = vmul.f32 %v7081, 2.0
  %v7178 = vmul.f32 %v7082, 2.0
  %v7179 = vmul.f32 %v7083, 2.0
  %v7180 = vmul.f32 %v7084, 2.0
  %v7181 = vmul.f32 %v7085, 2.0
  %v7182 = vmul.f32 %v7086, 2.0
  %v7183 = vmul.f32 %v7151, %v7055
  %v7184 = vmul.f32 %v7152, %v7056
  %v7185 = vmul.f32 %v7153, %v7057
  %v7186 = vmul.f32 %v7154, %v7058
  %v7187 = vmul.f32 %v7155, %v7059
  %v7188 = vmul.f32 %v7156, %v7060
  %v7189 = vmul.f32 %v7157, %v7061
  %v7190 = vmul.f32 %v7158, %v7062
  %v7191 = vmul.f32 %v7159, %v7063
  %v7192 = vmul.f32 %v7160, %v7064
  %v7193 = vmul.f32 %v7161, %v7065
  %v7194 = vmul.f32 %v7162, %v7066
  %v7195 = vmul.f32 %v7163, %v7067
  %v7196 = vmul.f32 %v7164, %v7068
  %v7197 = vmul.f32 %v7165, %v7069
  %v7198 = vmul.f32 %v7166, %v7070
  %v7199 = vmul.f32 %v7167, %v7071
  %v7200 = vmul.f32 %v7168, %v7072
  %v7201 = vmul.f32 %v7169, %v7073
  %v7202 = vmul.f32 %v7170, %v7074
  %v7203 = vmul.f32 %v7171, %v7075
  %v7204 = vmul.f32 %v7172, %v7076
  %v7205 = vmul.f32 %v7173, %v7077
  %v7206 = vmul.f32 %v7174, %v7078
  %v7207 = vmul.f32 %v7175, %v7079
  %v7208 = vmul.f32 %v7176, %v7080
  %v7209 = vmul.f32 %v7177, %v7081
  %v7210 = vmul.f32 %v7178, %v7082
  %v7211 = vmul.f32 %v7179, %v7083
  %v7212 = vmul.f32 %v7180, %v7084
  %v7213 = vmul.f32 %v7181, %v7085
  %v7214 = vmul.f32 %v7182, %v7086
  %v7215 = vsub.f32 %v7183, 1.0
  %v7216 = vsub.f32 %v7184, 1.0
  %v7217 = vsub.f32 %v7185, 1.0
  %v7218 = vsub.f32 %v7186, 1.0
  %v7219 = vsub.f32 %v7187, 1.0
  %v7220 = vsub.f32 %v7188, 1.0
  %v7221 = vsub.f32 %v7189, 1.0
  %v7222 = vsub.f32 %v7190, 1.0
  %v7223 = vsub.f32 %v7191, 1.0
  %v7224 = vsub.f32 %v7192, 1.0
  %v7225 = vsub.f32 %v7193, 1.0
  %v7226 = vsub.f32 %v7194, 1.0
  %v7227 = vsub.f32 %v7195, 1.0
  %v7228 = vsub.f32 %v7196, 1.0
  %v7229 = vsub.f32 %v7197, 1.0
  %v7230 = vsub.f32 %v7198, 1.0
  %v7231 = vsub.f32 %v7199, 1.0
  %v7232 = vsub.f32 %v7200, 1.0
  %v7233 = vsub.f32 %v7201, 1.0
  %v7234 = vsub.f32 %v7202, 1.0
  %v7235 = vsub.f32 %v7203, 1.0
  %v7236 = vsub.f32 %v7204, 1.0
  %v7237 = vsub.f32 %v7205, 1.0
  %v7238 = vsub.f32 %v7206, 1.0
  %v7239 = vsub.f32 %v7207, 1.0
  %v7240 = vsub.f32 %v7208, 1.0
  %v7241 = vsub.f32 %v7209, 1.0
  %v7242 = vsub.f32 %v7210, 1.0
  %v7243 = vsub.f32 %v7211, 1.0
  %v7244 = vsub.f32 %v7212, 1.0
  %v7245 = vsub.f32 %v7213, 1.0
  %v7246 = vsub.f32 %v7214, 1.0
  %7279 = vrot.lane.b32.xlu0 %v6799, 24
  %v7280 = vpop.permute.xlu0 %7279
  %7281 = vrot.lane.b32.xlu0 %v6800, 24
  %v7282 = vpop.permute.xlu0 %7281
  %7283 = vrot.lane.b32.xlu0 %v6801, 24
  %v7284 = vpop.permute.xlu0 %7283
  %7285 = vrot.lane.b32.xlu0 %v6802, 24
  %v7286 = vpop.permute.xlu0 %7285
  %7287 = vrot.lane.b32.xlu0 %v6803, 24
  %v7288 = vpop.permute.xlu0 %7287
  %7289 = vrot.lane.b32.xlu0 %v6804, 24
  %v7290 = vpop.permute.xlu0 %7289
  %7291 = vrot.lane.b32.xlu0 %v6805, 24
  %v7292 = vpop.permute.xlu0 %7291
  %7293 = vrot.lane.b32.xlu0 %v6806, 24
  %v7294 = vpop.permute.xlu0 %7293
  %7295 = vrot.lane.b32.xlu0 %v6807, 24
  %v7296 = vpop.permute.xlu0 %7295
  %7297 = vrot.lane.b32.xlu0 %v6808, 24
  %v7298 = vpop.permute.xlu0 %7297
  %7299 = vrot.lane.b32.xlu0 %v6809, 24
  %v7300 = vpop.permute.xlu0 %7299
  %7301 = vrot.lane.b32.xlu0 %v6810, 24
  %v7302 = vpop.permute.xlu0 %7301
  %7303 = vrot.lane.b32.xlu0 %v6811, 24
  %v7304 = vpop.permute.xlu0 %7303
  %7305 = vrot.lane.b32.xlu0 %v6812, 24
  %v7306 = vpop.permute.xlu0 %7305
  %7307 = vrot.lane.b32.xlu0 %v6813, 24
  %v7308 = vpop.permute.xlu0 %7307
  %7309 = vrot.lane.b32.xlu0 %v6814, 24
  %v7310 = vpop.permute.xlu0 %7309
  %7311 = vrot.lane.b32.xlu0 %v6815, 24
  %v7312 = vpop.permute.xlu0 %7311
  %7313 = vrot.lane.b32.xlu0 %v6816, 24
  %v7314 = vpop.permute.xlu0 %7313
  %7315 = vrot.lane.b32.xlu0 %v6817, 24
  %v7316 = vpop.permute.xlu0 %7315
  %7317 = vrot.lane.b32.xlu0 %v6818, 24
  %v7318 = vpop.permute.xlu0 %7317
  %7319 = vrot.lane.b32.xlu0 %v6819, 24
  %v7320 = vpop.permute.xlu0 %7319
  %7321 = vrot.lane.b32.xlu0 %v6820, 24
  %v7322 = vpop.permute.xlu0 %7321
  %7323 = vrot.lane.b32.xlu0 %v6821, 24
  %v7324 = vpop.permute.xlu0 %7323
  %7325 = vrot.lane.b32.xlu0 %v6822, 24
  %v7326 = vpop.permute.xlu0 %7325
  %7327 = vrot.lane.b32.xlu0 %v6823, 24
  %v7328 = vpop.permute.xlu0 %7327
  %7329 = vrot.lane.b32.xlu0 %v6824, 24
  %v7330 = vpop.permute.xlu0 %7329
  %7331 = vrot.lane.b32.xlu0 %v6825, 24
  %v7332 = vpop.permute.xlu0 %7331
  %7333 = vrot.lane.b32.xlu0 %v6826, 24
  %v7334 = vpop.permute.xlu0 %7333
  %7335 = vrot.lane.b32.xlu0 %v6827, 24
  %v7336 = vpop.permute.xlu0 %7335
  %7337 = vrot.lane.b32.xlu0 %v6828, 24
  %v7338 = vpop.permute.xlu0 %7337
  %7339 = vrot.lane.b32.xlu0 %v6829, 24
  %v7340 = vpop.permute.xlu0 %7339
  %7341 = vrot.lane.b32.xlu0 %v6830, 24
  %v7342 = vpop.permute.xlu0 %7341
  %7407 = vrot.lane.b32.xlu0 %v6959, 48
  %v7408 = vpop.permute.xlu0 %7407
  %7409 = vrot.lane.b32.xlu0 %v6960, 48
  %v7410 = vpop.permute.xlu0 %7409
  %7411 = vrot.lane.b32.xlu0 %v6961, 48
  %v7412 = vpop.permute.xlu0 %7411
  %7413 = vrot.lane.b32.xlu0 %v6962, 48
  %v7414 = vpop.permute.xlu0 %7413
  %7415 = vrot.lane.b32.xlu0 %v6963, 48
  %v7416 = vpop.permute.xlu0 %7415
  %7417 = vrot.lane.b32.xlu0 %v6964, 48
  %v7418 = vpop.permute.xlu0 %7417
  %7419 = vrot.lane.b32.xlu0 %v6965, 48
  %v7420 = vpop.permute.xlu0 %7419
  %7421 = vrot.lane.b32.xlu0 %v6966, 48
  %v7422 = vpop.permute.xlu0 %7421
  %7423 = vrot.lane.b32.xlu0 %v6967, 48
  %v7424 = vpop.permute.xlu0 %7423
  %7425 = vrot.lane.b32.xlu0 %v6968, 48
  %v7426 = vpop.permute.xlu0 %7425
  %7427 = vrot.lane.b32.xlu0 %v6969, 48
  %v7428 = vpop.permute.xlu0 %7427
  %7429 = vrot.lane.b32.xlu0 %v6970, 48
  %v7430 = vpop.permute.xlu0 %7429
  %7431 = vrot.lane.b32.xlu0 %v6971, 48
  %v7432 = vpop.permute.xlu0 %7431
  %7433 = vrot.lane.b32.xlu0 %v6972, 48
  %v7434 = vpop.permute.xlu0 %7433
  %7435 = vrot.lane.b32.xlu0 %v6973, 48
  %v7436 = vpop.permute.xlu0 %7435
  %7437 = vrot.lane.b32.xlu0 %v6974, 48
  %v7438 = vpop.permute.xlu0 %7437
  %7439 = vrot.lane.b32.xlu0 %v6975, 48
  %v7440 = vpop.permute.xlu0 %7439
  %7441 = vrot.lane.b32.xlu0 %v6976, 48
  %v7442 = vpop.permute.xlu0 %7441
  %7443 = vrot.lane.b32.xlu0 %v6977, 48
  %v7444 = vpop.permute.xlu0 %7443
  %7445 = vrot.lane.b32.xlu0 %v6978, 48
  %v7446 = vpop.permute.xlu0 %7445
  %7447 = vrot.lane.b32.xlu0 %v6979, 48
  %v7448 = vpop.permute.xlu0 %7447
  %7449 = vrot.lane.b32.xlu0 %v6980, 48
  %v7450 = vpop.permute.xlu0 %7449
  %7451 = vrot.lane.b32.xlu0 %v6981, 48
  %v7452 = vpop.permute.xlu0 %7451
  %7453 = vrot.lane.b32.xlu0 %v6982, 48
  %v7454 = vpop.permute.xlu0 %7453
  %7455 = vrot.lane.b32.xlu0 %v6983, 48
  %v7456 = vpop.permute.xlu0 %7455
  %7457 = vrot.lane.b32.xlu0 %v6984, 48
  %v7458 = vpop.permute.xlu0 %7457
  %7459 = vrot.lane.b32.xlu0 %v6985, 48
  %v7460 = vpop.permute.xlu0 %7459
  %7461 = vrot.lane.b32.xlu0 %v6986, 48
  %v7462 = vpop.permute.xlu0 %7461
  %7463 = vrot.lane.b32.xlu0 %v6987, 48
  %v7464 = vpop.permute.xlu0 %7463
  %7465 = vrot.lane.b32.xlu0 %v6988, 48
  %v7466 = vpop.permute.xlu0 %7465
  %7467 = vrot.lane.b32.xlu0 %v6989, 48
  %v7468 = vpop.permute.xlu0 %7467
  %7469 = vrot.lane.b32.xlu0 %v6990, 48
  %v7470 = vpop.permute.xlu0 %7469
  %7535 = vrot.lane.b32.xlu0 %v7119, 72
  %v7536 = vpop.permute.xlu0 %7535
  %7537 = vrot.lane.b32.xlu0 %v7120, 72
  %v7538 = vpop.permute.xlu0 %7537
  %7539 = vrot.lane.b32.xlu0 %v7121, 72
  %v7540 = vpop.permute.xlu0 %7539
  %7541 = vrot.lane.b32.xlu0 %v7122, 72
  %v7542 = vpop.permute.xlu0 %7541
  %7543 = vrot.lane.b32.xlu0 %v7123, 72
  %v7544 = vpop.permute.xlu0 %7543
  %7545 = vrot.lane.b32.xlu0 %v7124, 72
  %v7546 = vpop.permute.xlu0 %7545
  %7547 = vrot.lane.b32.xlu0 %v7125, 72
  %v7548 = vpop.permute.xlu0 %7547
  %7549 = vrot.lane.b32.xlu0 %v7126, 72
  %v7550 = vpop.permute.xlu0 %7549
  %7551 = vrot.lane.b32.xlu0 %v7127, 72
  %v7552 = vpop.permute.xlu0 %7551
  %7553 = vrot.lane.b32.xlu0 %v7128, 72
  %v7554 = vpop.permute.xlu0 %7553
  %7555 = vrot.lane.b32.xlu0 %v7129, 72
  %v7556 = vpop.permute.xlu0 %7555
  %7557 = vrot.lane.b32.xlu0 %v7130, 72
  %v7558 = vpop.permute.xlu0 %7557
  %7559 = vrot.lane.b32.xlu0 %v7131, 72
  %v7560 = vpop.permute.xlu0 %7559
  %7561 = vrot.lane.b32.xlu0 %v7132, 72
  %v7562 = vpop.permute.xlu0 %7561
  %7563 = vrot.lane.b32.xlu0 %v7133, 72
  %v7564 = vpop.permute.xlu0 %7563
  %7565 = vrot.lane.b32.xlu0 %v7134, 72
  %v7566 = vpop.permute.xlu0 %7565
  %7567 = vrot.lane.b32.xlu0 %v7135, 72
  %v7568 = vpop.permute.xlu0 %7567
  %7569 = vrot.lane.b32.xlu0 %v7136, 72
  %v7570 = vpop.permute.xlu0 %7569
  %7571 = vrot.lane.b32.xlu0 %v7137, 72
  %v7572 = vpop.permute.xlu0 %7571
  %7573 = vrot.lane.b32.xlu0 %v7138, 72
  %v7574 = vpop.permute.xlu0 %7573
  %7575 = vrot.lane.b32.xlu0 %v7139, 72
  %v7576 = vpop.permute.xlu0 %7575
  %7577 = vrot.lane.b32.xlu0 %v7140, 72
  %v7578 = vpop.permute.xlu0 %7577
  %7579 = vrot.lane.b32.xlu0 %v7141, 72
  %v7580 = vpop.permute.xlu0 %7579
  %7581 = vrot.lane.b32.xlu0 %v7142, 72
  %v7582 = vpop.permute.xlu0 %7581
  %7583 = vrot.lane.b32.xlu0 %v7143, 72
  %v7584 = vpop.permute.xlu0 %7583
  %7585 = vrot.lane.b32.xlu0 %v7144, 72
  %v7586 = vpop.permute.xlu0 %7585
  %7587 = vrot.lane.b32.xlu0 %v7145, 72
  %v7588 = vpop.permute.xlu0 %7587
  %7589 = vrot.lane.b32.xlu0 %v7146, 72
  %v7590 = vpop.permute.xlu0 %7589
  %7591 = vrot.lane.b32.xlu0 %v7147, 72
  %v7592 = vpop.permute.xlu0 %7591
  %7593 = vrot.lane.b32.xlu0 %v7148, 72
  %v7594 = vpop.permute.xlu0 %7593
  %7595 = vrot.lane.b32.xlu0 %v7149, 72
  %v7596 = vpop.permute.xlu0 %7595
  %7597 = vrot.lane.b32.xlu0 %v7150, 72
  %v7598 = vpop.permute.xlu0 %7597
  %7663 = vrot.lane.b32.xlu0 %v3573, 96
  %v7664 = vpop.permute.xlu0 %7663
  %7665 = vrot.lane.b32.xlu0 %v3676, 96
  %v7666 = vpop.permute.xlu0 %7665
  %7667 = vrot.lane.b32.xlu0 %v3779, 96
  %v7668 = vpop.permute.xlu0 %7667
  %7669 = vrot.lane.b32.xlu0 %v3882, 96
  %v7670 = vpop.permute.xlu0 %7669
  %7671 = vrot.lane.b32.xlu0 %v3985, 96
  %v7672 = vpop.permute.xlu0 %7671
  %7673 = vrot.lane.b32.xlu0 %v4088, 96
  %v7674 = vpop.permute.xlu0 %7673
  %7675 = vrot.lane.b32.xlu0 %v4191, 96
  %v7676 = vpop.permute.xlu0 %7675
  %7677 = vrot.lane.b32.xlu0 %v4294, 96
  %v7678 = vpop.permute.xlu0 %7677
  %7679 = vrot.lane.b32.xlu0 %v4397, 96
  %v7680 = vpop.permute.xlu0 %7679
  %7681 = vrot.lane.b32.xlu0 %v4500, 96
  %v7682 = vpop.permute.xlu0 %7681
  %7683 = vrot.lane.b32.xlu0 %v4603, 96
  %v7684 = vpop.permute.xlu0 %7683
  %7685 = vrot.lane.b32.xlu0 %v4706, 96
  %v7686 = vpop.permute.xlu0 %7685
  %7687 = vrot.lane.b32.xlu0 %v4809, 96
  %v7688 = vpop.permute.xlu0 %7687
  %7689 = vrot.lane.b32.xlu0 %v4912, 96
  %v7690 = vpop.permute.xlu0 %7689
  %7691 = vrot.lane.b32.xlu0 %v5015, 96
  %v7692 = vpop.permute.xlu0 %7691
  %7693 = vrot.lane.b32.xlu0 %v5118, 96
  %v7694 = vpop.permute.xlu0 %7693
  %7695 = vrot.lane.b32.xlu0 %v5221, 96
  %v7696 = vpop.permute.xlu0 %7695
  %7697 = vrot.lane.b32.xlu0 %v5324, 96
  %v7698 = vpop.permute.xlu0 %7697
  %7699 = vrot.lane.b32.xlu0 %v5427, 96
  %v7700 = vpop.permute.xlu0 %7699
  %7701 = vrot.lane.b32.xlu0 %v5530, 96
  %v7702 = vpop.permute.xlu0 %7701
  %7703 = vrot.lane.b32.xlu0 %v5633, 96
  %v7704 = vpop.permute.xlu0 %7703
  %7705 = vrot.lane.b32.xlu0 %v5736, 96
  %v7706 = vpop.permute.xlu0 %7705
  %7707 = vrot.lane.b32.xlu0 %v5839, 96
  %v7708 = vpop.permute.xlu0 %7707
  %7709 = vrot.lane.b32.xlu0 %v5942, 96
  %v7710 = vpop.permute.xlu0 %7709
  %7711 = vrot.lane.b32.xlu0 %v6045, 96
  %v7712 = vpop.permute.xlu0 %7711
  %7713 = vrot.lane.b32.xlu0 %v6148, 96
  %v7714 = vpop.permute.xlu0 %7713
  %7715 = vrot.lane.b32.xlu0 %v6251, 96
  %v7716 = vpop.permute.xlu0 %7715
  %7717 = vrot.lane.b32.xlu0 %v6354, 96
  %v7718 = vpop.permute.xlu0 %7717
  %7719 = vrot.lane.b32.xlu0 %v6457, 96
  %v7720 = vpop.permute.xlu0 %7719
  %7721 = vrot.lane.b32.xlu0 %v6560, 96
  %v7722 = vpop.permute.xlu0 %7721
  %7723 = vrot.lane.b32.xlu0 %v6663, 96
  %v7724 = vpop.permute.xlu0 %7723
  %7725 = vrot.lane.b32.xlu0 %v6766, 96
  %v7726 = vpop.permute.xlu0 %7725
  %7791 = vrot.lane.b32.xlu0 %v6895, 120
  %v7792 = vpop.permute.xlu0 %7791
  %7793 = vrot.lane.b32.xlu0 %v6896, 120
  %v7794 = vpop.permute.xlu0 %7793
  %7795 = vrot.lane.b32.xlu0 %v6897, 120
  %v7796 = vpop.permute.xlu0 %7795
  %7797 = vrot.lane.b32.xlu0 %v6898, 120
  %v7798 = vpop.permute.xlu0 %7797
  %7799 = vrot.lane.b32.xlu0 %v6899, 120
  %v7800 = vpop.permute.xlu0 %7799
  %7801 = vrot.lane.b32.xlu0 %v6900, 120
  %v7802 = vpop.permute.xlu0 %7801
  %7803 = vrot.lane.b32.xlu0 %v6901, 120
  %v7804 = vpop.permute.xlu0 %7803
  %7805 = vrot.lane.b32.xlu0 %v6902, 120
  %v7806 = vpop.permute.xlu0 %7805
  %7807 = vrot.lane.b32.xlu0 %v6903, 120
  %v7808 = vpop.permute.xlu0 %7807
  %7809 = vrot.lane.b32.xlu0 %v6904, 120
  %v7810 = vpop.permute.xlu0 %7809
  %7811 = vrot.lane.b32.xlu0 %v6905, 120
  %v7812 = vpop.permute.xlu0 %7811
  %7813 = vrot.lane.b32.xlu0 %v6906, 120
  %v7814 = vpop.permute.xlu0 %7813
  %7815 = vrot.lane.b32.xlu0 %v6907, 120
  %v7816 = vpop.permute.xlu0 %7815
  %7817 = vrot.lane.b32.xlu0 %v6908, 120
  %v7818 = vpop.permute.xlu0 %7817
  %7819 = vrot.lane.b32.xlu0 %v6909, 120
  %v7820 = vpop.permute.xlu0 %7819
  %7821 = vrot.lane.b32.xlu0 %v6910, 120
  %v7822 = vpop.permute.xlu0 %7821
  %7823 = vrot.lane.b32.xlu0 %v6911, 120
  %v7824 = vpop.permute.xlu0 %7823
  %7825 = vrot.lane.b32.xlu0 %v6912, 120
  %v7826 = vpop.permute.xlu0 %7825
  %7827 = vrot.lane.b32.xlu0 %v6913, 120
  %v7828 = vpop.permute.xlu0 %7827
  %7829 = vrot.lane.b32.xlu0 %v6914, 120
  %v7830 = vpop.permute.xlu0 %7829
  %7831 = vrot.lane.b32.xlu0 %v6915, 120
  %v7832 = vpop.permute.xlu0 %7831
  %7833 = vrot.lane.b32.xlu0 %v6916, 120
  %v7834 = vpop.permute.xlu0 %7833
  %7835 = vrot.lane.b32.xlu0 %v6917, 120
  %v7836 = vpop.permute.xlu0 %7835
  %7837 = vrot.lane.b32.xlu0 %v6918, 120
  %v7838 = vpop.permute.xlu0 %7837
  %7839 = vrot.lane.b32.xlu0 %v6919, 120
  %v7840 = vpop.permute.xlu0 %7839
  %7841 = vrot.lane.b32.xlu0 %v6920, 120
  %v7842 = vpop.permute.xlu0 %7841
  %7843 = vrot.lane.b32.xlu0 %v6921, 120
  %v7844 = vpop.permute.xlu0 %7843
  %7845 = vrot.lane.b32.xlu0 %v6922, 120
  %v7846 = vpop.permute.xlu0 %7845
  %7847 = vrot.lane.b32.xlu0 %v6923, 120
  %v7848 = vpop.permute.xlu0 %7847
  %7849 = vrot.lane.b32.xlu0 %v6924, 120
  %v7850 = vpop.permute.xlu0 %7849
  %7851 = vrot.lane.b32.xlu0 %v6925, 120
  %v7852 = vpop.permute.xlu0 %7851
  %7853 = vrot.lane.b32.xlu0 %v6926, 120
  %v7854 = vpop.permute.xlu0 %7853
  %7919 = vrot.lane.b32.xlu0 %v7055, 16
  %v7920 = vpop.permute.xlu0 %7919
  %7921 = vrot.lane.b32.xlu0 %v7056, 16
  %v7922 = vpop.permute.xlu0 %7921
  %7923 = vrot.lane.b32.xlu0 %v7057, 16
  %v7924 = vpop.permute.xlu0 %7923
  %7925 = vrot.lane.b32.xlu0 %v7058, 16
  %v7926 = vpop.permute.xlu0 %7925
  %7927 = vrot.lane.b32.xlu0 %v7059, 16
  %v7928 = vpop.permute.xlu0 %7927
  %7929 = vrot.lane.b32.xlu0 %v7060, 16
  %v7930 = vpop.permute.xlu0 %7929
  %7931 = vrot.lane.b32.xlu0 %v7061, 16
  %v7932 = vpop.permute.xlu0 %7931
  %7933 = vrot.lane.b32.xlu0 %v7062, 16
  %v7934 = vpop.permute.xlu0 %7933
  %7935 = vrot.lane.b32.xlu0 %v7063, 16
  %v7936 = vpop.permute.xlu0 %7935
  %7937 = vrot.lane.b32.xlu0 %v7064, 16
  %v7938 = vpop.permute.xlu0 %7937
  %7939 = vrot.lane.b32.xlu0 %v7065, 16
  %v7940 = vpop.permute.xlu0 %7939
  %7941 = vrot.lane.b32.xlu0 %v7066, 16
  %v7942 = vpop.permute.xlu0 %7941
  %7943 = vrot.lane.b32.xlu0 %v7067, 16
  %v7944 = vpop.permute.xlu0 %7943
  %7945 = vrot.lane.b32.xlu0 %v7068, 16
  %v7946 = vpop.permute.xlu0 %7945
  %7947 = vrot.lane.b32.xlu0 %v7069, 16
  %v7948 = vpop.permute.xlu0 %7947
  %7949 = vrot.lane.b32.xlu0 %v7070, 16
  %v7950 = vpop.permute.xlu0 %7949
  %7951 = vrot.lane.b32.xlu0 %v7071, 16
  %v7952 = vpop.permute.xlu0 %7951
  %7953 = vrot.lane.b32.xlu0 %v7072, 16
  %v7954 = vpop.permute.xlu0 %7953
  %7955 = vrot.lane.b32.xlu0 %v7073, 16
  %v7956 = vpop.permute.xlu0 %7955
  %7957 = vrot.lane.b32.xlu0 %v7074, 16
  %v7958 = vpop.permute.xlu0 %7957
  %7959 = vrot.lane.b32.xlu0 %v7075, 16
  %v7960 = vpop.permute.xlu0 %7959
  %7961 = vrot.lane.b32.xlu0 %v7076, 16
  %v7962 = vpop.permute.xlu0 %7961
  %7963 = vrot.lane.b32.xlu0 %v7077, 16
  %v7964 = vpop.permute.xlu0 %7963
  %7965 = vrot.lane.b32.xlu0 %v7078, 16
  %v7966 = vpop.permute.xlu0 %7965
  %7967 = vrot.lane.b32.xlu0 %v7079, 16
  %v7968 = vpop.permute.xlu0 %7967
  %7969 = vrot.lane.b32.xlu0 %v7080, 16
  %v7970 = vpop.permute.xlu0 %7969
  %7971 = vrot.lane.b32.xlu0 %v7081, 16
  %v7972 = vpop.permute.xlu0 %7971
  %7973 = vrot.lane.b32.xlu0 %v7082, 16
  %v7974 = vpop.permute.xlu0 %7973
  %7975 = vrot.lane.b32.xlu0 %v7083, 16
  %v7976 = vpop.permute.xlu0 %7975
  %7977 = vrot.lane.b32.xlu0 %v7084, 16
  %v7978 = vpop.permute.xlu0 %7977
  %7979 = vrot.lane.b32.xlu0 %v7085, 16
  %v7980 = vpop.permute.xlu0 %7979
  %7981 = vrot.lane.b32.xlu0 %v7086, 16
  %v7982 = vpop.permute.xlu0 %7981
  %8047 = vrot.lane.b32.xlu0 %v7215, 40
  %v8048 = vpop.permute.xlu0 %8047
  %8049 = vrot.lane.b32.xlu0 %v7216, 40
  %v8050 = vpop.permute.xlu0 %8049
  %8051 = vrot.lane.b32.xlu0 %v7217, 40
  %v8052 = vpop.permute.xlu0 %8051
  %8053 = vrot.lane.b32.xlu0 %v7218, 40
  %v8054 = vpop.permute.xlu0 %8053
  %8055 = vrot.lane.b32.xlu0 %v7219, 40
  %v8056 = vpop.permute.xlu0 %8055
  %8057 = vrot.lane.b32.xlu0 %v7220, 40
  %v8058 = vpop.permute.xlu0 %8057
  %8059 = vrot.lane.b32.xlu0 %v7221, 40
  %v8060 = vpop.permute.xlu0 %8059
  %8061 = vrot.lane.b32.xlu0 %v7222, 40
  %v8062 = vpop.permute.xlu0 %8061
  %8063 = vrot.lane.b32.xlu0 %v7223, 40
  %v8064 = vpop.permute.xlu0 %8063
  %8065 = vrot.lane.b32.xlu0 %v7224, 40
  %v8066 = vpop.permute.xlu0 %8065
  %8067 = vrot.lane.b32.xlu0 %v7225, 40
  %v8068 = vpop.permute.xlu0 %8067
  %8069 = vrot.lane.b32.xlu0 %v7226, 40
  %v8070 = vpop.permute.xlu0 %8069
  %8071 = vrot.lane.b32.xlu0 %v7227, 40
  %v8072 = vpop.permute.xlu0 %8071
  %8073 = vrot.lane.b32.xlu0 %v7228, 40
  %v8074 = vpop.permute.xlu0 %8073
  %8075 = vrot.lane.b32.xlu0 %v7229, 40
  %v8076 = vpop.permute.xlu0 %8075
  %8077 = vrot.lane.b32.xlu0 %v7230, 40
  %v8078 = vpop.permute.xlu0 %8077
  %8079 = vrot.lane.b32.xlu0 %v7231, 40
  %v8080 = vpop.permute.xlu0 %8079
  %8081 = vrot.lane.b32.xlu0 %v7232, 40
  %v8082 = vpop.permute.xlu0 %8081
  %8083 = vrot.lane.b32.xlu0 %v7233, 40
  %v8084 = vpop.permute.xlu0 %8083
  %8085 = vrot.lane.b32.xlu0 %v7234, 40
  %v8086 = vpop.permute.xlu0 %8085
  %8087 = vrot.lane.b32.xlu0 %v7235, 40
  %v8088 = vpop.permute.xlu0 %8087
  %8089 = vrot.lane.b32.xlu0 %v7236, 40
  %v8090 = vpop.permute.xlu0 %8089
  %8091 = vrot.lane.b32.xlu0 %v7237, 40
  %v8092 = vpop.permute.xlu0 %8091
  %8093 = vrot.lane.b32.xlu0 %v7238, 40
  %v8094 = vpop.permute.xlu0 %8093
  %8095 = vrot.lane.b32.xlu0 %v7239, 40
  %v8096 = vpop.permute.xlu0 %8095
  %8097 = vrot.lane.b32.xlu0 %v7240, 40
  %v8098 = vpop.permute.xlu0 %8097
  %8099 = vrot.lane.b32.xlu0 %v7241, 40
  %v8100 = vpop.permute.xlu0 %8099
  %8101 = vrot.lane.b32.xlu0 %v7242, 40
  %v8102 = vpop.permute.xlu0 %8101
  %8103 = vrot.lane.b32.xlu0 %v7243, 40
  %v8104 = vpop.permute.xlu0 %8103
  %8105 = vrot.lane.b32.xlu0 %v7244, 40
  %v8106 = vpop.permute.xlu0 %8105
  %8107 = vrot.lane.b32.xlu0 %v7245, 40
  %v8108 = vpop.permute.xlu0 %8107
  %8109 = vrot.lane.b32.xlu0 %v7246, 40
  %v8110 = vpop.permute.xlu0 %8109
  %vm8143 = vcmask 195584
  %v8144 = vsel %vm8143, %v246, %v7280
  %v8145 = vsel %vm8143, %v350, %v7282
  %v8146 = vsel %vm8143, %v454, %v7284
  %v8147 = vsel %vm8143, %v558, %v7286
  %v8148 = vsel %vm8143, %v662, %v7288
  %v8149 = vsel %vm8143, %v766, %v7290
  %v8150 = vsel %vm8143, %v870, %v7292
  %v8151 = vsel %vm8143, %v974, %v7294
  %v8152 = vsel %vm8143, %v1078, %v7296
  %v8153 = vsel %vm8143, %v1182, %v7298
  %v8154 = vsel %vm8143, %v1286, %v7300
  %v8155 = vsel %vm8143, %v1390, %v7302
  %v8156 = vsel %vm8143, %v1494, %v7304
  %v8157 = vsel %vm8143, %v1598, %v7306
  %v8158 = vsel %vm8143, %v1702, %v7308
  %v8159 = vsel %vm8143, %v1806, %v7310
  %v8160 = vsel %vm8143, %v1910, %v7312
  %v8161 = vsel %vm8143, %v2014, %v7314
  %v8162 = vsel %vm8143, %v2118, %v7316
  %v8163 = vsel %vm8143, %v2222, %v7318
  %v8164 = vsel %vm8143, %v2326, %v7320
  %v8165 = vsel %vm8143, %v2430, %v7322
  %v8166 = vsel %vm8143, %v2534, %v7324
  %v8167 = vsel %vm8143, %v2638, %v7326
  %v8168 = vsel %vm8143, %v2742, %v7328
  %v8169 = vsel %vm8143, %v2846, %v7330
  %v8170 = vsel %vm8143, %v2950, %v7332
  %v8171 = vsel %vm8143, %v3054, %v7334
  %v8172 = vsel %vm8143, %v3158, %v7336
  %v8173 = vsel %vm8143, %v3262, %v7338
  %v8174 = vsel %vm8143, %v3366, %v7340
  %v8175 = vsel %vm8143, %v3470, %v7342
  %vm8176 = vcmask 392192
  %v8177 = vsel %vm8176, %v8144, %v7408
  %v8178 = vsel %vm8176, %v8145, %v7410
  %v8179 = vsel %vm8176, %v8146, %v7412
  %v8180 = vsel %vm8176, %v8147, %v7414
  %v8181 = vsel %vm8176, %v8148, %v7416
  %v8182 = vsel %vm8176, %v8149, %v7418
  %v8183 = vsel %vm8176, %v8150, %v7420
  %v8184 = vsel %vm8176, %v8151, %v7422
  %v8185 = vsel %vm8176, %v8152, %v7424
  %v8186 = vsel %vm8176, %v8153, %v7426
  %v8187 = vsel %vm8176, %v8154, %v7428
  %v8188 = vsel %vm8176, %v8155, %v7430
  %v8189 = vsel %vm8176, %v8156, %v7432
  %v8190 = vsel %vm8176, %v8157, %v7434
  %v8191 = vsel %vm8176, %v8158, %v7436
  %v8192 = vsel %vm8176, %v8159, %v7438
  %v8193 = vsel %vm8176, %v8160, %v7440
  %v8194 = vsel %vm8176, %v8161, %v7442
  %v8195 = vsel %vm8176, %v8162, %v7444
  %v8196 = vsel %vm8176, %v8163, %v7446
  %v8197 = vsel %vm8176, %v8164, %v7448
  %v8198 = vsel %vm8176, %v8165, %v7450
  %v8199 = vsel %vm8176, %v8166, %v7452
  %v8200 = vsel %vm8176, %v8167, %v7454
  %v8201 = vsel %vm8176, %v8168, %v7456
  %v8202 = vsel %vm8176, %v8169, %v7458
  %v8203 = vsel %vm8176, %v8170, %v7460
  %v8204 = vsel %vm8176, %v8171, %v7462
  %v8205 = vsel %vm8176, %v8172, %v7464
  %v8206 = vsel %vm8176, %v8173, %v7466
  %v8207 = vsel %vm8176, %v8174, %v7468
  %v8208 = vsel %vm8176, %v8175, %v7470
  %vm8209 = vcmask 588800
  %v8210 = vsel %vm8209, %v8177, %v7536
  %v8211 = vsel %vm8209, %v8178, %v7538
  %v8212 = vsel %vm8209, %v8179, %v7540
  %v8213 = vsel %vm8209, %v8180, %v7542
  %v8214 = vsel %vm8209, %v8181, %v7544
  %v8215 = vsel %vm8209, %v8182, %v7546
  %v8216 = vsel %vm8209, %v8183, %v7548
  %v8217 = vsel %vm8209, %v8184, %v7550
  %v8218 = vsel %vm8209, %v8185, %v7552
  %v8219 = vsel %vm8209, %v8186, %v7554
  %v8220 = vsel %vm8209, %v8187, %v7556
  %v8221 = vsel %vm8209, %v8188, %v7558
  %v8222 = vsel %vm8209, %v8189, %v7560
  %v8223 = vsel %vm8209, %v8190, %v7562
  %v8224 = vsel %vm8209, %v8191, %v7564
  %v8225 = vsel %vm8209, %v8192, %v7566
  %v8226 = vsel %vm8209, %v8193, %v7568
  %v8227 = vsel %vm8209, %v8194, %v7570
  %v8228 = vsel %vm8209, %v8195, %v7572
  %v8229 = vsel %vm8209, %v8196, %v7574
  %v8230 = vsel %vm8209, %v8197, %v7576
  %v8231 = vsel %vm8209, %v8198, %v7578
  %v8232 = vsel %vm8209, %v8199, %v7580
  %v8233 = vsel %vm8209, %v8200, %v7582
  %v8234 = vsel %vm8209, %v8201, %v7584
  %v8235 = vsel %vm8209, %v8202, %v7586
  %v8236 = vsel %vm8209, %v8203, %v7588
  %v8237 = vsel %vm8209, %v8204, %v7590
  %v8238 = vsel %vm8209, %v8205, %v7592
  %v8239 = vsel %vm8209, %v8206, %v7594
  %v8240 = vsel %vm8209, %v8207, %v7596
  %v8241 = vsel %vm8209, %v8208, %v7598
  %vm8242 = vcmask 785408
  %v8243 = vsel %vm8242, %v8210, %v7664
  %v8244 = vsel %vm8242, %v8211, %v7666
  %v8245 = vsel %vm8242, %v8212, %v7668
  %v8246 = vsel %vm8242, %v8213, %v7670
  %v8247 = vsel %vm8242, %v8214, %v7672
  %v8248 = vsel %vm8242, %v8215, %v7674
  %v8249 = vsel %vm8242, %v8216, %v7676
  %v8250 = vsel %vm8242, %v8217, %v7678
  %v8251 = vsel %vm8242, %v8218, %v7680
  %v8252 = vsel %vm8242, %v8219, %v7682
  %v8253 = vsel %vm8242, %v8220, %v7684
  %v8254 = vsel %vm8242, %v8221, %v7686
  %v8255 = vsel %vm8242, %v8222, %v7688
  %v8256 = vsel %vm8242, %v8223, %v7690
  %v8257 = vsel %vm8242, %v8224, %v7692
  %v8258 = vsel %vm8242, %v8225, %v7694
  %v8259 = vsel %vm8242, %v8226, %v7696
  %v8260 = vsel %vm8242, %v8227, %v7698
  %v8261 = vsel %vm8242, %v8228, %v7700
  %v8262 = vsel %vm8242, %v8229, %v7702
  %v8263 = vsel %vm8242, %v8230, %v7704
  %v8264 = vsel %vm8242, %v8231, %v7706
  %v8265 = vsel %vm8242, %v8232, %v7708
  %v8266 = vsel %vm8242, %v8233, %v7710
  %v8267 = vsel %vm8242, %v8234, %v7712
  %v8268 = vsel %vm8242, %v8235, %v7714
  %v8269 = vsel %vm8242, %v8236, %v7716
  %v8270 = vsel %vm8242, %v8237, %v7718
  %v8271 = vsel %vm8242, %v8238, %v7720
  %v8272 = vsel %vm8242, %v8239, %v7722
  %v8273 = vsel %vm8242, %v8240, %v7724
  %v8274 = vsel %vm8242, %v8241, %v7726
  %vm8275 = vcmask 982016
  %v8276 = vsel %vm8275, %v8243, %v7792
  %v8277 = vsel %vm8275, %v8244, %v7794
  %v8278 = vsel %vm8275, %v8245, %v7796
  %v8279 = vsel %vm8275, %v8246, %v7798
  %v8280 = vsel %vm8275, %v8247, %v7800
  %v8281 = vsel %vm8275, %v8248, %v7802
  %v8282 = vsel %vm8275, %v8249, %v7804
  %v8283 = vsel %vm8275, %v8250, %v7806
  %v8284 = vsel %vm8275, %v8251, %v7808
  %v8285 = vsel %vm8275, %v8252, %v7810
  %v8286 = vsel %vm8275, %v8253, %v7812
  %v8287 = vsel %vm8275, %v8254, %v7814
  %v8288 = vsel %vm8275, %v8255, %v7816
  %v8289 = vsel %vm8275, %v8256, %v7818
  %v8290 = vsel %vm8275, %v8257, %v7820
  %v8291 = vsel %vm8275, %v8258, %v7822
  %v8292 = vsel %vm8275, %v8259, %v7824
  %v8293 = vsel %vm8275, %v8260, %v7826
  %v8294 = vsel %vm8275, %v8261, %v7828
  %v8295 = vsel %vm8275, %v8262, %v7830
  %v8296 = vsel %vm8275, %v8263, %v7832
  %v8297 = vsel %vm8275, %v8264, %v7834
  %v8298 = vsel %vm8275, %v8265, %v7836
  %v8299 = vsel %vm8275, %v8266, %v7838
  %v8300 = vsel %vm8275, %v8267, %v7840
  %v8301 = vsel %vm8275, %v8268, %v7842
  %v8302 = vsel %vm8275, %v8269, %v7844
  %v8303 = vsel %vm8275, %v8270, %v7846
  %v8304 = vsel %vm8275, %v8271, %v7848
  %v8305 = vsel %vm8275, %v8272, %v7850
  %v8306 = vsel %vm8275, %v8273, %v7852
  %v8307 = vsel %vm8275, %v8274, %v7854
  %vm8308 = vcmask 130048
  %v8309 = vsel %vm8308, %v7792, %v7920
  %v8310 = vsel %vm8308, %v7794, %v7922
  %v8311 = vsel %vm8308, %v7796, %v7924
  %v8312 = vsel %vm8308, %v7798, %v7926
  %v8313 = vsel %vm8308, %v7800, %v7928
  %v8314 = vsel %vm8308, %v7802, %v7930
  %v8315 = vsel %vm8308, %v7804, %v7932
  %v8316 = vsel %vm8308, %v7806, %v7934
  %v8317 = vsel %vm8308, %v7808, %v7936
  %v8318 = vsel %vm8308, %v7810, %v7938
  %v8319 = vsel %vm8308, %v7812, %v7940
  %v8320 = vsel %vm8308, %v7814, %v7942
  %v8321 = vsel %vm8308, %v7816, %v7944
  %v8322 = vsel %vm8308, %v7818, %v7946
  %v8323 = vsel %vm8308, %v7820, %v7948
  %v8324 = vsel %vm8308, %v7822, %v7950
  %v8325 = vsel %vm8308, %v7824, %v7952
  %v8326 = vsel %vm8308, %v7826, %v7954
  %v8327 = vsel %vm8308, %v7828, %v7956
  %v8328 = vsel %vm8308, %v7830, %v7958
  %v8329 = vsel %vm8308, %v7832, %v7960
  %v8330 = vsel %vm8308, %v7834, %v7962
  %v8331 = vsel %vm8308, %v7836, %v7964
  %v8332 = vsel %vm8308, %v7838, %v7966
  %v8333 = vsel %vm8308, %v7840, %v7968
  %v8334 = vsel %vm8308, %v7842, %v7970
  %v8335 = vsel %vm8308, %v7844, %v7972
  %v8336 = vsel %vm8308, %v7846, %v7974
  %v8337 = vsel %vm8308, %v7848, %v7976
  %v8338 = vsel %vm8308, %v7850, %v7978
  %v8339 = vsel %vm8308, %v7852, %v7980
  %v8340 = vsel %vm8308, %v7854, %v7982
  %vm8341 = vcmask 326656
  %v8342 = vsel %vm8341, %v8309, %v8048
  %v8343 = vsel %vm8341, %v8310, %v8050
  %v8344 = vsel %vm8341, %v8311, %v8052
  %v8345 = vsel %vm8341, %v8312, %v8054
  %v8346 = vsel %vm8341, %v8313, %v8056
  %v8347 = vsel %vm8341, %v8314, %v8058
  %v8348 = vsel %vm8341, %v8315, %v8060
  %v8349 = vsel %vm8341, %v8316, %v8062
  %v8350 = vsel %vm8341, %v8317, %v8064
  %v8351 = vsel %vm8341, %v8318, %v8066
  %v8352 = vsel %vm8341, %v8319, %v8068
  %v8353 = vsel %vm8341, %v8320, %v8070
  %v8354 = vsel %vm8341, %v8321, %v8072
  %v8355 = vsel %vm8341, %v8322, %v8074
  %v8356 = vsel %vm8341, %v8323, %v8076
  %v8357 = vsel %vm8341, %v8324, %v8078
  %v8358 = vsel %vm8341, %v8325, %v8080
  %v8359 = vsel %vm8341, %v8326, %v8082
  %v8360 = vsel %vm8341, %v8327, %v8084
  %v8361 = vsel %vm8341, %v8328, %v8086
  %v8362 = vsel %vm8341, %v8329, %v8088
  %v8363 = vsel %vm8341, %v8330, %v8090
  %v8364 = vsel %vm8341, %v8331, %v8092
  %v8365 = vsel %vm8341, %v8332, %v8094
  %v8366 = vsel %vm8341, %v8333, %v8096
  %v8367 = vsel %vm8341, %v8334, %v8098
  %v8368 = vsel %vm8341, %v8335, %v8100
  %v8369 = vsel %vm8341, %v8336, %v8102
  %v8370 = vsel %vm8341, %v8337, %v8104
  %v8371 = vsel %vm8341, %v8338, %v8106
  %v8372 = vsel %vm8341, %v8339, %v8108
  %v8373 = vsel %vm8341, %v8340, %v8110
  %v8374 = vpack.c.bf16 %v8277, %v8276
  %v8375 = vpack.c.bf16 %v8343, %v8342
  %v8376 = vpack.c.bf16 %v8279, %v8278
  %v8377 = vpack.c.bf16 %v8345, %v8344
  %v8378 = vpack.c.bf16 %v8281, %v8280
  %v8379 = vpack.c.bf16 %v8347, %v8346
  %v8380 = vpack.c.bf16 %v8283, %v8282
  %v8381 = vpack.c.bf16 %v8349, %v8348
  %v8382 = vpack.c.bf16 %v8285, %v8284
  %v8383 = vpack.c.bf16 %v8351, %v8350
  %v8384 = vpack.c.bf16 %v8287, %v8286
  %v8385 = vpack.c.bf16 %v8353, %v8352
  %v8386 = vpack.c.bf16 %v8289, %v8288
  %v8387 = vpack.c.bf16 %v8355, %v8354
  %v8388 = vpack.c.bf16 %v8291, %v8290
  %v8389 = vpack.c.bf16 %v8357, %v8356
  %v8390 = vpack.c.bf16 %v8293, %v8292
  %v8391 = vpack.c.bf16 %v8359, %v8358
  %v8392 = vpack.c.bf16 %v8295, %v8294
  %v8393 = vpack.c.bf16 %v8361, %v8360
  %v8394 = vpack.c.bf16 %v8297, %v8296
  %v8395 = vpack.c.bf16 %v8363, %v8362
  %v8396 = vpack.c.bf16 %v8299, %v8298
  %v8397 = vpack.c.bf16 %v8365, %v8364
  %v8398 = vpack.c.bf16 %v8301, %v8300
  %v8399 = vpack.c.bf16 %v8367, %v8366
  %v8400 = vpack.c.bf16 %v8303, %v8302
  %v8401 = vpack.c.bf16 %v8369, %v8368
  %v8402 = vpack.c.bf16 %v8305, %v8304
  %v8403 = vpack.c.bf16 %v8371, %v8370
  %v8404 = vpack.c.bf16 %v8307, %v8306
  %v8405 = vpack.c.bf16 %v8373, %v8372
  %v8406 = vld [vmem:[%s3] sm:$0xff]
  %v8407 = vld [vmem:[%s3 + $0x8] sm:$0xff]
  %v8408 = vld [vmem:[%s3 + $0x10] sm:$0xff]
  %v8409 = vld [vmem:[%s3 + $0x18] sm:$0xff]
  %v8410 = vld [vmem:[%s3 + $0x20] sm:$0xff]
  %v8411 = vld [vmem:[%s3 + $0x28] sm:$0xff]
  %v8412 = vld [vmem:[%s3 + $0x30] sm:$0xff]
  %v8413 = vld [vmem:[%s3 + $0x38] sm:$0xff]
  %v8414 = vld [vmem:[%s3 + $0x40] sm:$0xff]
  %v8415 = vld [vmem:[%s3 + $0x48] sm:$0xff]
  %v8416 = vld [vmem:[%s3 + $0x50] sm:$0xff]
  %v8417 = vld [vmem:[%s3 + $0x58] sm:$0xff]
  %v8418 = vld [vmem:[%s3 + $0x60] sm:$0xff]
  %v8419 = vld [vmem:[%s3 + $0x68] sm:$0xff]
  %v8420 = vld [vmem:[%s3 + $0x70] sm:$0xff]
  %v8421 = vld [vmem:[%s3 + $0x78] sm:$0xff]
  %v8422 = vld [vmem:[%s3 + $0x80] sm:$0xff]
  %v8423 = vld [vmem:[%s3 + $0x88] sm:$0xff]
  %v8424 = vld [vmem:[%s3 + $0x90] sm:$0xff]
  %v8425 = vld [vmem:[%s3 + $0x98] sm:$0xff]
  %v8426 = vld [vmem:[%s3 + $0xa0] sm:$0xff]
  %v8427 = vld [vmem:[%s3 + $0xa8] sm:$0xff]
  %v8428 = vld [vmem:[%s3 + $0xb0] sm:$0xff]
  %v8429 = vld [vmem:[%s3 + $0xb8] sm:$0xff]
  %v8454 = vunpack.c.l.b16 %v8406
  %v8455 = vunpack.c.h.b16 %v8406
  %v8456 = vunpack.c.l.b16 %v8407
  %v8457 = vunpack.c.h.b16 %v8407
  %v8458 = vunpack.c.l.b16 %v8408
  %v8459 = vunpack.c.h.b16 %v8408
  %v8460 = vunpack.c.l.b16 %v8409
  %v8461 = vunpack.c.h.b16 %v8409
  %v8462 = vunpack.c.l.b16 %v8410
  %v8463 = vunpack.c.h.b16 %v8410
  %v8464 = vunpack.c.l.b16 %v8411
  %v8465 = vunpack.c.h.b16 %v8411
  %v8466 = vunpack.c.l.b16 %v8412
  %v8467 = vunpack.c.h.b16 %v8412
  %v8468 = vunpack.c.l.b16 %v8413
  %v8469 = vunpack.c.h.b16 %v8413
  %v8470 = vunpack.c.l.b16 %v8414
  %v8471 = vunpack.c.h.b16 %v8414
  %v8472 = vunpack.c.l.b16 %v8415
  %v8473 = vunpack.c.h.b16 %v8415
  %v8474 = vunpack.c.l.b16 %v8416
  %v8475 = vunpack.c.h.b16 %v8416
  %v8476 = vunpack.c.l.b16 %v8417
  %v8477 = vunpack.c.h.b16 %v8417
  %v8478 = vunpack.c.l.b16 %v8418
  %v8479 = vunpack.c.h.b16 %v8418
  %v8480 = vunpack.c.l.b16 %v8419
  %v8481 = vunpack.c.h.b16 %v8419
  %v8482 = vunpack.c.l.b16 %v8420
  %v8483 = vunpack.c.h.b16 %v8420
  %v8484 = vunpack.c.l.b16 %v8421
  %v8485 = vunpack.c.h.b16 %v8421
  %v8486 = vunpack.c.l.b16 %v8422
  %v8487 = vunpack.c.h.b16 %v8422
  %v8488 = vunpack.c.l.b16 %v8423
  %v8489 = vunpack.c.h.b16 %v8423
  %v8490 = vunpack.c.l.b16 %v8424
  %v8491 = vunpack.c.h.b16 %v8424
  %v8492 = vunpack.c.l.b16 %v8425
  %v8493 = vunpack.c.h.b16 %v8425
  %v8494 = vunpack.c.l.b16 %v8426
  %v8495 = vunpack.c.h.b16 %v8426
  %v8496 = vunpack.c.l.b16 %v8427
  %v8497 = vunpack.c.h.b16 %v8427
  %v8498 = vunpack.c.l.b16 %v8428
  %v8499 = vunpack.c.h.b16 %v8428
  %v8500 = vunpack.c.l.b16 %v8429
  %v8501 = vunpack.c.h.b16 %v8429
  %v8502 = vpack.c.b16 %v8456, %v8454
  %v8503 = vpack.c.b16 %v8457, %v8455
  %v8504 = vpack.c.b16 %v8460, %v8458
  %v8505 = vpack.c.b16 %v8461, %v8459
  %v8506 = vpack.c.b16 %v8464, %v8462
  %v8507 = vpack.c.b16 %v8465, %v8463
  %v8508 = vpack.c.b16 %v8468, %v8466
  %v8509 = vpack.c.b16 %v8469, %v8467
  %v8510 = vpack.c.b16 %v8472, %v8470
  %v8511 = vpack.c.b16 %v8473, %v8471
  %v8512 = vpack.c.b16 %v8476, %v8474
  %v8513 = vpack.c.b16 %v8477, %v8475
  %v8514 = vpack.c.b16 %v8480, %v8478
  %v8515 = vpack.c.b16 %v8481, %v8479
  %v8516 = vpack.c.b16 %v8484, %v8482
  %v8517 = vpack.c.b16 %v8485, %v8483
  %v8518 = vpack.c.b16 %v8488, %v8486
  %v8519 = vpack.c.b16 %v8489, %v8487
  %v8520 = vpack.c.b16 %v8492, %v8490
  %v8521 = vpack.c.b16 %v8493, %v8491
  %v8522 = vpack.c.b16 %v8496, %v8494
  %v8523 = vpack.c.b16 %v8497, %v8495
  %v8524 = vpack.c.b16 %v8500, %v8498
  %v8525 = vpack.c.b16 %v8501, %v8499
  %vm8550 = vcmask 523264
  %v8552 = vsel %vm8550, %v8375, 0
  %v8555 = vsel %vm8550, %v8377, 0
  %v8558 = vsel %vm8550, %v8379, 0
  %v8561 = vsel %vm8550, %v8381, 0
  %v8564 = vsel %vm8550, %v8383, 0
  %v8567 = vsel %vm8550, %v8385, 0
  %v8570 = vsel %vm8550, %v8387, 0
  %v8573 = vsel %vm8550, %v8389, 0
  %v8576 = vsel %vm8550, %v8391, 0
  %v8579 = vsel %vm8550, %v8393, 0
  %v8582 = vsel %vm8550, %v8395, 0
  %v8585 = vsel %vm8550, %v8397, 0
  %v8588 = vsel %vm8550, %v8399, 0
  %v8591 = vsel %vm8550, %v8401, 0
  %v8594 = vsel %vm8550, %v8403, 0
  %v8597 = vsel %vm8550, %v8405, 0
  %8599 = vmatprep.subr.bf16.mxu0 %v8503
  %8600 = vmatpush1.bf16.msra.mxu0 %v8502
  %8601 = vmatprep.subr.bf16.mxu0 %v8505
  %8602 = vmatpush1.bf16.msra.mxu0 %v8504
  %8603 = vmatprep.subr.bf16.mxu0 %v8507
  %8604 = vmatpush1.bf16.msra.mxu0 %v8506
  %8605 = vmatprep.subr.bf16.mxu0 %v8509
  %8606 = vmatpush1.bf16.msra.mxu0 %v8508
  %8607 = vmatprep.subr.bf16.mxu0 %v8511
  %8608 = vmatpush1.bf16.msra.mxu0 %v8510
  %8609 = vmatprep.subr.bf16.mxu0 %v8513
  %8610 = vmatpush1.bf16.msra.mxu0 %v8512
  %8611 = vmatprep.subr.bf16.mxu0 %v8515
  %8612 = vmatpush1.bf16.msra.mxu0 %v8514
  %8613 = vmatprep.subr.bf16.mxu0 %v8517
  %8614 = vmatpush1.bf16.msra.mxu0 %v8516
  %8615 = vmatprep.subr.bf16.mxu0 %v8519
  %8616 = vmatpush1.bf16.msra.mxu0 %v8518
  %8617 = vmatprep.subr.bf16.mxu0 %v8521
  %8618 = vmatpush1.bf16.msra.mxu0 %v8520
  %8619 = vmatprep.subr.bf16.mxu0 %v8523
  %8620 = vmatpush1.bf16.msra.mxu0 %v8522
  %8621 = vmatprep.subr.bf16.mxu0 %v8525
  %8622 = vmatpush1.bf16.msra.mxu0 %v8524
  %8623 = vmatprep.subr.bf16.mxu0 0
  %8624 = vmatpush1.bf16.msra.mxu0 0
  %8625 = vmatprep.subr.bf16.mxu0 0
  %8626 = vmatpush1.bf16.msra.mxu0 0
  %8627 = vmatprep.subr.bf16.mxu0 0
  %8628 = vmatpush1.bf16.msra.mxu0 0
  %8629 = vmatprep.subr.bf16.mxu0 0
  %8630 = vmatpush1.bf16.msra.mxu0 0
  %8631 = vmatprep.mubr.bf16.mxu0 %v8552
  %8632 = vmatmul.mubr.bf16.gmra.mrb[0].mxu0 %v8374
  %v8633 = vpop.f32.mrb[0].mxu0
  %v8634 = vadd.f32 0.0, %v8633
  %v8635 = vpop.f32.mrb[0].mxu0
  %v8636 = vadd.f32 0.0, %v8635
  %v8637 = vpop.f32.mrb[0].mxu0
  %v8638 = vadd.f32 0.0, %v8637
  %v8639 = vpop.f32.mrb[0].mxu0
  %v8640 = vadd.f32 0.0, %v8639
  %8641 = vmatprep.mubr.bf16.mxu0 %v8555
  %8642 = vmatmul.mubr.bf16.gmra.mrb[0].mxu0 %v8376
  %v8643 = vpop.f32.mrb[0].mxu0
  %v8644 = vadd.f32 0.0, %v8643
  %v8645 = vpop.f32.mrb[0].mxu0
  %v8646 = vadd.f32 0.0, %v8645
  %v8647 = vpop.f32.mrb[0].mxu0
  %v8648 = vadd.f32 0.0, %v8647
  %v8649 = vpop.f32.mrb[0].mxu0
  %v8650 = vadd.f32 0.0, %v8649
  %8651 = vmatprep.mubr.bf16.mxu0 %v8558
  %8652 = vmatmul.mubr.bf16.gmra.mrb[0].mxu0 %v8378
  %v8653 = vpop.f32.mrb[0].mxu0
  %v8654 = vadd.f32 0.0, %v8653
  %v8655 = vpop.f32.mrb[0].mxu0
  %v8656 = vadd.f32 0.0, %v8655
  %v8657 = vpop.f32.mrb[0].mxu0
  %v8658 = vadd.f32 0.0, %v8657
  %v8659 = vpop.f32.mrb[0].mxu0
  %v8660 = vadd.f32 0.0, %v8659
  %8661 = vmatprep.mubr.bf16.mxu0 %v8561
  %8662 = vmatmul.mubr.bf16.gmra.mrb[0].mxu0 %v8380
  %v8663 = vpop.f32.mrb[0].mxu0
  %v8664 = vadd.f32 0.0, %v8663
  %v8665 = vpop.f32.mrb[0].mxu0
  %v8666 = vadd.f32 0.0, %v8665
  %v8667 = vpop.f32.mrb[0].mxu0
  %v8668 = vadd.f32 0.0, %v8667
  %v8669 = vpop.f32.mrb[0].mxu0
  %v8670 = vadd.f32 0.0, %v8669
  %8671 = vmatprep.mubr.bf16.mxu0 %v8564
  %8672 = vmatmul.mubr.bf16.gmra.mrb[0].mxu0 %v8382
  %v8673 = vpop.f32.mrb[0].mxu0
  %v8674 = vadd.f32 0.0, %v8673
  %v8675 = vpop.f32.mrb[0].mxu0
  %v8676 = vadd.f32 0.0, %v8675
  %v8677 = vpop.f32.mrb[0].mxu0
  %v8678 = vadd.f32 0.0, %v8677
  %v8679 = vpop.f32.mrb[0].mxu0
  %v8680 = vadd.f32 0.0, %v8679
  %8681 = vmatprep.mubr.bf16.mxu0 %v8567
  %8682 = vmatmul.mubr.bf16.gmra.mrb[0].mxu0 %v8384
  %v8683 = vpop.f32.mrb[0].mxu0
  %v8684 = vadd.f32 0.0, %v8683
  %v8685 = vpop.f32.mrb[0].mxu0
  %v8686 = vadd.f32 0.0, %v8685
  %v8687 = vpop.f32.mrb[0].mxu0
  %v8688 = vadd.f32 0.0, %v8687
  %v8689 = vpop.f32.mrb[0].mxu0
  %v8690 = vadd.f32 0.0, %v8689
  %8691 = vmatprep.mubr.bf16.mxu0 %v8570
  %8692 = vmatmul.mubr.bf16.gmra.mrb[0].mxu0 %v8386
  %v8693 = vpop.f32.mrb[0].mxu0
  %v8694 = vadd.f32 0.0, %v8693
  %v8695 = vpop.f32.mrb[0].mxu0
  %v8696 = vadd.f32 0.0, %v8695
  %v8697 = vpop.f32.mrb[0].mxu0
  %v8698 = vadd.f32 0.0, %v8697
  %v8699 = vpop.f32.mrb[0].mxu0
  %v8700 = vadd.f32 0.0, %v8699
  %8701 = vmatprep.mubr.bf16.mxu0 %v8573
  %8702 = vmatmul.mubr.bf16.gmra.mrb[0].mxu0 %v8388
  %v8703 = vpop.f32.mrb[0].mxu0
  %v8704 = vadd.f32 0.0, %v8703
  %v8705 = vpop.f32.mrb[0].mxu0
  %v8706 = vadd.f32 0.0, %v8705
  %v8707 = vpop.f32.mrb[0].mxu0
  %v8708 = vadd.f32 0.0, %v8707
  %v8709 = vpop.f32.mrb[0].mxu0
  %v8710 = vadd.f32 0.0, %v8709
  %8711 = vmatprep.mubr.bf16.mxu0 %v8576
  %8712 = vmatmul.mubr.bf16.gmra.mrb[0].mxu0 %v8390
  %v8713 = vpop.f32.mrb[0].mxu0
  %v8714 = vadd.f32 0.0, %v8713
  %v8715 = vpop.f32.mrb[0].mxu0
  %v8716 = vadd.f32 0.0, %v8715
  %v8717 = vpop.f32.mrb[0].mxu0
  %v8718 = vadd.f32 0.0, %v8717
  %v8719 = vpop.f32.mrb[0].mxu0
  %v8720 = vadd.f32 0.0, %v8719
  %8721 = vmatprep.mubr.bf16.mxu0 %v8579
  %8722 = vmatmul.mubr.bf16.gmra.mrb[0].mxu0 %v8392
  %v8723 = vpop.f32.mrb[0].mxu0
  %v8724 = vadd.f32 0.0, %v8723
  %v8725 = vpop.f32.mrb[0].mxu0
  %v8726 = vadd.f32 0.0, %v8725
  %v8727 = vpop.f32.mrb[0].mxu0
  %v8728 = vadd.f32 0.0, %v8727
  %v8729 = vpop.f32.mrb[0].mxu0
  %v8730 = vadd.f32 0.0, %v8729
  %8731 = vmatprep.mubr.bf16.mxu0 %v8582
  %8732 = vmatmul.mubr.bf16.gmra.mrb[0].mxu0 %v8394
  %v8733 = vpop.f32.mrb[0].mxu0
  %v8734 = vadd.f32 0.0, %v8733
  %v8735 = vpop.f32.mrb[0].mxu0
  %v8736 = vadd.f32 0.0, %v8735
  %v8737 = vpop.f32.mrb[0].mxu0
  %v8738 = vadd.f32 0.0, %v8737
  %v8739 = vpop.f32.mrb[0].mxu0
  %v8740 = vadd.f32 0.0, %v8739
  %8741 = vmatprep.mubr.bf16.mxu0 %v8585
  %8742 = vmatmul.mubr.bf16.gmra.mrb[0].mxu0 %v8396
  %v8743 = vpop.f32.mrb[0].mxu0
  %v8744 = vadd.f32 0.0, %v8743
  %v8745 = vpop.f32.mrb[0].mxu0
  %v8746 = vadd.f32 0.0, %v8745
  %v8747 = vpop.f32.mrb[0].mxu0
  %v8748 = vadd.f32 0.0, %v8747
  %v8749 = vpop.f32.mrb[0].mxu0
  %v8750 = vadd.f32 0.0, %v8749
  %8751 = vmatprep.mubr.bf16.mxu0 %v8588
  %8752 = vmatmul.mubr.bf16.gmra.mrb[0].mxu0 %v8398
  %v8753 = vpop.f32.mrb[0].mxu0
  %v8754 = vadd.f32 0.0, %v8753
  %v8755 = vpop.f32.mrb[0].mxu0
  %v8756 = vadd.f32 0.0, %v8755
  %v8757 = vpop.f32.mrb[0].mxu0
  %v8758 = vadd.f32 0.0, %v8757
  %v8759 = vpop.f32.mrb[0].mxu0
  %v8760 = vadd.f32 0.0, %v8759
  %8761 = vmatprep.mubr.bf16.mxu0 %v8591
  %8762 = vmatmul.mubr.bf16.gmra.mrb[0].mxu0 %v8400
  %v8763 = vpop.f32.mrb[0].mxu0
  %v8764 = vadd.f32 0.0, %v8763
  %v8765 = vpop.f32.mrb[0].mxu0
  %v8766 = vadd.f32 0.0, %v8765
  %v8767 = vpop.f32.mrb[0].mxu0
  %v8768 = vadd.f32 0.0, %v8767
  %v8769 = vpop.f32.mrb[0].mxu0
  %v8770 = vadd.f32 0.0, %v8769
  %8771 = vmatprep.mubr.bf16.mxu0 %v8594
  %8772 = vmatmul.mubr.bf16.gmra.mrb[0].mxu0 %v8402
  %v8773 = vpop.f32.mrb[0].mxu0
  %v8774 = vadd.f32 0.0, %v8773
  %v8775 = vpop.f32.mrb[0].mxu0
  %v8776 = vadd.f32 0.0, %v8775
  %v8777 = vpop.f32.mrb[0].mxu0
  %v8778 = vadd.f32 0.0, %v8777
  %v8779 = vpop.f32.mrb[0].mxu0
  %v8780 = vadd.f32 0.0, %v8779
  %8781 = vmatprep.mubr.bf16.mxu0 %v8597
  %8782 = vmatmul.mubr.bf16.gmra.mrb[0].mxu0 %v8404
  %v8783 = vpop.f32.mrb[0].mxu0
  %v8784 = vadd.f32 0.0, %v8783
  %v8785 = vpop.f32.mrb[0].mxu0
  %v8786 = vadd.f32 0.0, %v8785
  %v8787 = vpop.f32.mrb[0].mxu0
  %v8788 = vadd.f32 0.0, %v8787
  %v8789 = vpop.f32.mrb[0].mxu0
  %v8790 = vadd.f32 0.0, %v8789
  %8791 = vdwg.mxu0
  %v8824 = vunpack.c.l.b16 %v51
  %v8825 = vunpack.c.h.b16 %v51
  %v8826 = vunpack.c.l.b16 %v52
  %v8827 = vunpack.c.h.b16 %v52
  %v8828 = vunpack.c.l.b16 %v53
  %v8829 = vunpack.c.h.b16 %v53
  %v8830 = vunpack.c.l.b16 %v54
  %v8831 = vunpack.c.h.b16 %v54
  %v8832 = vunpack.c.l.b16 %v55
  %v8833 = vunpack.c.h.b16 %v55
  %v8834 = vunpack.c.l.b16 %v56
  %v8835 = vunpack.c.h.b16 %v56
  %v8836 = vunpack.c.l.b16 %v57
  %v8837 = vunpack.c.h.b16 %v57
  %v8838 = vunpack.c.l.b16 %v58
  %v8839 = vunpack.c.h.b16 %v58
  %v8840 = vunpack.c.l.b16 %v59
  %v8841 = vunpack.c.h.b16 %v59
  %v8842 = vunpack.c.l.b16 %v60
  %v8843 = vunpack.c.h.b16 %v60
  %v8844 = vunpack.c.l.b16 %v61
  %v8845 = vunpack.c.h.b16 %v61
  %v8846 = vunpack.c.l.b16 %v62
  %v8847 = vunpack.c.h.b16 %v62
  %v8848 = vunpack.c.l.b16 %v63
  %v8849 = vunpack.c.h.b16 %v63
  %v8850 = vunpack.c.l.b16 %v64
  %v8851 = vunpack.c.h.b16 %v64
  %v8852 = vunpack.c.l.b16 %v65
  %v8853 = vunpack.c.h.b16 %v65
  %v8854 = vunpack.c.l.b16 %v66
  %v8855 = vunpack.c.h.b16 %v66
  %v8856 = vunpack.c.l.b16 %v67
  %v8857 = vunpack.c.h.b16 %v67
  %v8858 = vunpack.c.l.b16 %v68
  %v8859 = vunpack.c.h.b16 %v68
  %v8860 = vunpack.c.l.b16 %v69
  %v8861 = vunpack.c.h.b16 %v69
  %v8862 = vunpack.c.l.b16 %v70
  %v8863 = vunpack.c.h.b16 %v70
  %v8864 = vunpack.c.l.b16 %v71
  %v8865 = vunpack.c.h.b16 %v71
  %v8866 = vunpack.c.l.b16 %v72
  %v8867 = vunpack.c.h.b16 %v72
  %v8868 = vunpack.c.l.b16 %v73
  %v8869 = vunpack.c.h.b16 %v73
  %v8870 = vunpack.c.l.b16 %v74
  %v8871 = vunpack.c.h.b16 %v74
  %v8872 = vunpack.c.l.b16 %v75
  %v8873 = vunpack.c.h.b16 %v75
  %v8874 = vunpack.c.l.b16 %v76
  %v8875 = vunpack.c.h.b16 %v76
  %v8876 = vunpack.c.l.b16 %v77
  %v8877 = vunpack.c.h.b16 %v77
  %v8878 = vunpack.c.l.b16 %v78
  %v8879 = vunpack.c.h.b16 %v78
  %v8880 = vunpack.c.l.b16 %v79
  %v8881 = vunpack.c.h.b16 %v79
  %v8882 = vunpack.c.l.b16 %v80
  %v8883 = vunpack.c.h.b16 %v80
  %v8884 = vunpack.c.l.b16 %v81
  %v8885 = vunpack.c.h.b16 %v81
  %v8886 = vunpack.c.l.b16 %v82
  %v8887 = vunpack.c.h.b16 %v82
  %v8888 = vpack.c.b16 %v8826, %v8824
  %v8889 = vpack.c.b16 %v8827, %v8825
  %v8890 = vpack.c.b16 %v8830, %v8828
  %v8891 = vpack.c.b16 %v8831, %v8829
  %v8892 = vpack.c.b16 %v8834, %v8832
  %v8893 = vpack.c.b16 %v8835, %v8833
  %v8894 = vpack.c.b16 %v8838, %v8836
  %v8895 = vpack.c.b16 %v8839, %v8837
  %v8896 = vpack.c.b16 %v8842, %v8840
  %v8897 = vpack.c.b16 %v8843, %v8841
  %v8898 = vpack.c.b16 %v8846, %v8844
  %v8899 = vpack.c.b16 %v8847, %v8845
  %v8900 = vpack.c.b16 %v8850, %v8848
  %v8901 = vpack.c.b16 %v8851, %v8849
  %v8902 = vpack.c.b16 %v8854, %v8852
  %v8903 = vpack.c.b16 %v8855, %v8853
  %v8904 = vpack.c.b16 %v8858, %v8856
  %v8905 = vpack.c.b16 %v8859, %v8857
  %v8906 = vpack.c.b16 %v8862, %v8860
  %v8907 = vpack.c.b16 %v8863, %v8861
  %v8908 = vpack.c.b16 %v8866, %v8864
  %v8909 = vpack.c.b16 %v8867, %v8865
  %v8910 = vpack.c.b16 %v8870, %v8868
  %v8911 = vpack.c.b16 %v8871, %v8869
  %v8912 = vpack.c.b16 %v8874, %v8872
  %v8913 = vpack.c.b16 %v8875, %v8873
  %v8914 = vpack.c.b16 %v8878, %v8876
  %v8915 = vpack.c.b16 %v8879, %v8877
  %v8916 = vpack.c.b16 %v8882, %v8880
  %v8917 = vpack.c.b16 %v8883, %v8881
  %v8918 = vpack.c.b16 %v8886, %v8884
  %v8919 = vpack.c.b16 %v8887, %v8885
  %v8964 = vunpack.c.l.b16 %v83
  %v8965 = vunpack.c.h.b16 %v83
  %v8966 = vunpack.c.l.b16 %v84
  %v8967 = vunpack.c.h.b16 %v84
  %v8968 = vunpack.c.l.b16 %v85
  %v8969 = vunpack.c.h.b16 %v85
  %v8970 = vunpack.c.l.b16 %v86
  %v8971 = vunpack.c.h.b16 %v86
  %v8972 = vunpack.c.l.b16 %v87
  %v8973 = vunpack.c.h.b16 %v87
  %v8974 = vunpack.c.l.b16 %v88
  %v8975 = vunpack.c.h.b16 %v88
  %v8976 = vunpack.c.l.b16 %v89
  %v8977 = vunpack.c.h.b16 %v89
  %v8978 = vunpack.c.l.b16 %v90
  %v8979 = vunpack.c.h.b16 %v90
  %v8980 = vunpack.c.l.b16 %v91
  %v8981 = vunpack.c.h.b16 %v91
  %v8982 = vunpack.c.l.b16 %v92
  %v8983 = vunpack.c.h.b16 %v92
  %v8984 = vunpack.c.l.b16 %v93
  %v8985 = vunpack.c.h.b16 %v93
  %v8986 = vunpack.c.l.b16 %v94
  %v8987 = vunpack.c.h.b16 %v94
  %v8988 = vunpack.c.l.b16 %v95
  %v8989 = vunpack.c.h.b16 %v95
  %v8990 = vunpack.c.l.b16 %v96
  %v8991 = vunpack.c.h.b16 %v96
  %v8992 = vunpack.c.l.b16 %v97
  %v8993 = vunpack.c.h.b16 %v97
  %v8994 = vunpack.c.l.b16 %v98
  %v8995 = vunpack.c.h.b16 %v98
  %v8996 = vunpack.c.l.b16 %v99
  %v8997 = vunpack.c.h.b16 %v99
  %v8998 = vunpack.c.l.b16 %v100
  %v8999 = vunpack.c.h.b16 %v100
  %v9000 = vunpack.c.l.b16 %v101
  %v9001 = vunpack.c.h.b16 %v101
  %v9002 = vunpack.c.l.b16 %v102
  %v9003 = vunpack.c.h.b16 %v102
  %v9004 = vunpack.c.l.b16 %v103
  %v9005 = vunpack.c.h.b16 %v103
  %v9006 = vunpack.c.l.b16 %v104
  %v9007 = vunpack.c.h.b16 %v104
  %v9008 = vunpack.c.l.b16 %v105
  %v9009 = vunpack.c.h.b16 %v105
  %v9010 = vunpack.c.l.b16 %v106
  %v9011 = vunpack.c.h.b16 %v106
  %v9012 = vunpack.c.l.b16 %v107
  %v9013 = vunpack.c.h.b16 %v107
  %v9014 = vunpack.c.l.b16 %v108
  %v9015 = vunpack.c.h.b16 %v108
  %v9016 = vunpack.c.l.b16 %v109
  %v9017 = vunpack.c.h.b16 %v109
  %v9018 = vunpack.c.l.b16 %v110
  %v9019 = vunpack.c.h.b16 %v110
  %v9020 = vpack.c.b16 %v8966, %v8964
  %v9021 = vpack.c.b16 %v8967, %v8965
  %v9022 = vpack.c.b16 %v8970, %v8968
  %v9023 = vpack.c.b16 %v8971, %v8969
  %v9024 = vpack.c.b16 %v8974, %v8972
  %v9025 = vpack.c.b16 %v8975, %v8973
  %v9026 = vpack.c.b16 %v8978, %v8976
  %v9027 = vpack.c.b16 %v8979, %v8977
  %v9028 = vpack.c.b16 %v8982, %v8980
  %v9029 = vpack.c.b16 %v8983, %v8981
  %v9030 = vpack.c.b16 %v8986, %v8984
  %v9031 = vpack.c.b16 %v8987, %v8985
  %v9032 = vpack.c.b16 %v8990, %v8988
  %v9033 = vpack.c.b16 %v8991, %v8989
  %v9034 = vpack.c.b16 %v8994, %v8992
  %v9035 = vpack.c.b16 %v8995, %v8993
  %v9036 = vpack.c.b16 %v8998, %v8996
  %v9037 = vpack.c.b16 %v8999, %v8997
  %v9038 = vpack.c.b16 %v9002, %v9000
  %v9039 = vpack.c.b16 %v9003, %v9001
  %v9040 = vpack.c.b16 %v9006, %v9004
  %v9041 = vpack.c.b16 %v9007, %v9005
  %v9042 = vpack.c.b16 %v9010, %v9008
  %v9043 = vpack.c.b16 %v9011, %v9009
  %v9044 = vpack.c.b16 %v9014, %v9012
  %v9045 = vpack.c.b16 %v9015, %v9013
  %v9046 = vpack.c.b16 %v9018, %v9016
  %v9047 = vpack.c.b16 %v9019, %v9017
  %v9077 = vsel %vm8242, %v8889, 0
  %v9080 = vsel %vm8242, %v8891, 0
  %v9083 = vsel %vm8242, %v8893, 0
  %v9086 = vsel %vm8242, %v8895, 0
  %v9089 = vsel %vm8242, %v8897, 0
  %v9092 = vsel %vm8242, %v8899, 0
  %v9095 = vsel %vm8242, %v8901, 0
  %v9098 = vsel %vm8242, %v8903, 0
  %v9101 = vsel %vm8242, %v8905, 0
  %v9104 = vsel %vm8242, %v8907, 0
  %v9107 = vsel %vm8242, %v8909, 0
  %v9110 = vsel %vm8242, %v8911, 0
  %v9113 = vsel %vm8242, %v8913, 0
  %v9116 = vsel %vm8242, %v8915, 0
  %v9119 = vsel %vm8242, %v8917, 0
  %v9122 = vsel %vm8242, %v8919, 0
  %9124 = vmatprep.subr.bf16.mxu0 %v9021
  %9125 = vmatpush1.bf16.msra.mxu0 %v9020
  %9126 = vmatprep.subr.bf16.mxu0 %v9023
  %9127 = vmatpush1.bf16.msra.mxu0 %v9022
  %9128 = vmatprep.subr.bf16.mxu0 %v9025
  %9129 = vmatpush1.bf16.msra.mxu0 %v9024
  %9130 = vmatprep.subr.bf16.mxu0 %v9027
  %9131 = vmatpush1.bf16.msra.mxu0 %v9026
  %9132 = vmatprep.subr.bf16.mxu0 %v9029
  %9133 = vmatpush1.bf16.msra.mxu0 %v9028
  %9134 = vmatprep.subr.bf16.mxu0 %v9031
  %9135 = vmatpush1.bf16.msra.mxu0 %v9030
  %9136 = vmatprep.subr.bf16.mxu0 %v9033
  %9137 = vmatpush1.bf16.msra.mxu0 %v9032
  %9138 = vmatprep.subr.bf16.mxu0 %v9035
  %9139 = vmatpush1.bf16.msra.mxu0 %v9034
  %9140 = vmatprep.subr.bf16.mxu0 %v9037
  %9141 = vmatpush1.bf16.msra.mxu0 %v9036
  %9142 = vmatprep.subr.bf16.mxu0 %v9039
  %9143 = vmatpush1.bf16.msra.mxu0 %v9038
  %9144 = vmatprep.subr.bf16.mxu0 %v9041
  %9145 = vmatpush1.bf16.msra.mxu0 %v9040
  %9146 = vmatprep.subr.bf16.mxu0 %v9043
  %9147 = vmatpush1.bf16.msra.mxu0 %v9042
  %9148 = vmatprep.subr.bf16.mxu0 %v9045
  %9149 = vmatpush1.bf16.msra.mxu0 %v9044
  %9150 = vmatprep.subr.bf16.mxu0 %v9047
  %9151 = vmatpush1.bf16.msra.mxu0 %v9046
  %9152 = vmatprep.subr.bf16.mxu0 0
  %9153 = vmatpush1.bf16.msra.mxu0 0
  %9154 = vmatprep.subr.bf16.mxu0 0
  %9155 = vmatpush1.bf16.msra.mxu0 0
  %9156 = vmatprep.mubr.bf16.mxu0 %v9077
  %9157 = vmatmul.mubr.bf16.gmra.mrb[0].mxu0 %v8888
  %v9158 = vpop.f32.mrb[0].mxu0
  %v9159 = vadd.f32 %v8634, %v9158
  %v9160 = vpop.f32.mrb[0].mxu0
  %v9161 = vadd.f32 %v8636, %v9160
  %v9162 = vpop.f32.mrb[0].mxu0
  %v9163 = vadd.f32 %v8638, %v9162
  %v9164 = vpop.f32.mrb[0].mxu0
  %v9165 = vadd.f32 %v8640, %v9164
  %9166 = vmatprep.mubr.bf16.mxu0 %v9080
  %9167 = vmatmul.mubr.bf16.gmra.mrb[0].mxu0 %v8890
  %v9168 = vpop.f32.mrb[0].mxu0
  %v9169 = vadd.f32 %v8644, %v9168
  %v9170 = vpop.f32.mrb[0].mxu0
  %v9171 = vadd.f32 %v8646, %v9170
  %v9172 = vpop.f32.mrb[0].mxu0
  %v9173 = vadd.f32 %v8648, %v9172
  %v9174 = vpop.f32.mrb[0].mxu0
  %v9175 = vadd.f32 %v8650, %v9174
  %9176 = vmatprep.mubr.bf16.mxu0 %v9083
  %9177 = vmatmul.mubr.bf16.gmra.mrb[0].mxu0 %v8892
  %v9178 = vpop.f32.mrb[0].mxu0
  %v9179 = vadd.f32 %v8654, %v9178
  %v9180 = vpop.f32.mrb[0].mxu0
  %v9181 = vadd.f32 %v8656, %v9180
  %v9182 = vpop.f32.mrb[0].mxu0
  %v9183 = vadd.f32 %v8658, %v9182
  %v9184 = vpop.f32.mrb[0].mxu0
  %v9185 = vadd.f32 %v8660, %v9184
  %9186 = vmatprep.mubr.bf16.mxu0 %v9086
  %9187 = vmatmul.mubr.bf16.gmra.mrb[0].mxu0 %v8894
  %v9188 = vpop.f32.mrb[0].mxu0
  %v9189 = vadd.f32 %v8664, %v9188
  %v9190 = vpop.f32.mrb[0].mxu0
  %v9191 = vadd.f32 %v8666, %v9190
  %v9192 = vpop.f32.mrb[0].mxu0
  %v9193 = vadd.f32 %v8668, %v9192
  %v9194 = vpop.f32.mrb[0].mxu0
  %v9195 = vadd.f32 %v8670, %v9194
  %9196 = vmatprep.mubr.bf16.mxu0 %v9089
  %9197 = vmatmul.mubr.bf16.gmra.mrb[0].mxu0 %v8896
  %v9198 = vpop.f32.mrb[0].mxu0
  %v9199 = vadd.f32 %v8674, %v9198
  %v9200 = vpop.f32.mrb[0].mxu0
  %v9201 = vadd.f32 %v8676, %v9200
  %v9202 = vpop.f32.mrb[0].mxu0
  %v9203 = vadd.f32 %v8678, %v9202
  %v9204 = vpop.f32.mrb[0].mxu0
  %v9205 = vadd.f32 %v8680, %v9204
  %9206 = vmatprep.mubr.bf16.mxu0 %v9092
  %9207 = vmatmul.mubr.bf16.gmra.mrb[0].mxu0 %v8898
  %v9208 = vpop.f32.mrb[0].mxu0
  %v9209 = vadd.f32 %v8684, %v9208
  %v9210 = vpop.f32.mrb[0].mxu0
  %v9211 = vadd.f32 %v8686, %v9210
  %v9212 = vpop.f32.mrb[0].mxu0
  %v9213 = vadd.f32 %v8688, %v9212
  %v9214 = vpop.f32.mrb[0].mxu0
  %v9215 = vadd.f32 %v8690, %v9214
  %9216 = vmatprep.mubr.bf16.mxu0 %v9095
  %9217 = vmatmul.mubr.bf16.gmra.mrb[0].mxu0 %v8900
  %v9218 = vpop.f32.mrb[0].mxu0
  %v9219 = vadd.f32 %v8694, %v9218
  %v9220 = vpop.f32.mrb[0].mxu0
  %v9221 = vadd.f32 %v8696, %v9220
  %v9222 = vpop.f32.mrb[0].mxu0
  %v9223 = vadd.f32 %v8698, %v9222
  %v9224 = vpop.f32.mrb[0].mxu0
  %v9225 = vadd.f32 %v8700, %v9224
  %9226 = vmatprep.mubr.bf16.mxu0 %v9098
  %9227 = vmatmul.mubr.bf16.gmra.mrb[0].mxu0 %v8902
  %v9228 = vpop.f32.mrb[0].mxu0
  %v9229 = vadd.f32 %v8704, %v9228
  %v9230 = vpop.f32.mrb[0].mxu0
  %v9231 = vadd.f32 %v8706, %v9230
  %v9232 = vpop.f32.mrb[0].mxu0
  %v9233 = vadd.f32 %v8708, %v9232
  %v9234 = vpop.f32.mrb[0].mxu0
  %v9235 = vadd.f32 %v8710, %v9234
  %9236 = vmatprep.mubr.bf16.mxu0 %v9101
  %9237 = vmatmul.mubr.bf16.gmra.mrb[0].mxu0 %v8904
  %v9238 = vpop.f32.mrb[0].mxu0
  %v9239 = vadd.f32 %v8714, %v9238
  %v9240 = vpop.f32.mrb[0].mxu0
  %v9241 = vadd.f32 %v8716, %v9240
  %v9242 = vpop.f32.mrb[0].mxu0
  %v9243 = vadd.f32 %v8718, %v9242
  %v9244 = vpop.f32.mrb[0].mxu0
  %v9245 = vadd.f32 %v8720, %v9244
  %9246 = vmatprep.mubr.bf16.mxu0 %v9104
  %9247 = vmatmul.mubr.bf16.gmra.mrb[0].mxu0 %v8906
  %v9248 = vpop.f32.mrb[0].mxu0
  %v9249 = vadd.f32 %v8724, %v9248
  %v9250 = vpop.f32.mrb[0].mxu0
  %v9251 = vadd.f32 %v8726, %v9250
  %v9252 = vpop.f32.mrb[0].mxu0
  %v9253 = vadd.f32 %v8728, %v9252
  %v9254 = vpop.f32.mrb[0].mxu0
  %v9255 = vadd.f32 %v8730, %v9254
  %9256 = vmatprep.mubr.bf16.mxu0 %v9107
  %9257 = vmatmul.mubr.bf16.gmra.mrb[0].mxu0 %v8908
  %v9258 = vpop.f32.mrb[0].mxu0
  %v9259 = vadd.f32 %v8734, %v9258
  %v9260 = vpop.f32.mrb[0].mxu0
  %v9261 = vadd.f32 %v8736, %v9260
  %v9262 = vpop.f32.mrb[0].mxu0
  %v9263 = vadd.f32 %v8738, %v9262
  %v9264 = vpop.f32.mrb[0].mxu0
  %v9265 = vadd.f32 %v8740, %v9264
  %9266 = vmatprep.mubr.bf16.mxu0 %v9110
  %9267 = vmatmul.mubr.bf16.gmra.mrb[0].mxu0 %v8910
  %v9268 = vpop.f32.mrb[0].mxu0
  %v9269 = vadd.f32 %v8744, %v9268
  %v9270 = vpop.f32.mrb[0].mxu0
  %v9271 = vadd.f32 %v8746, %v9270
  %v9272 = vpop.f32.mrb[0].mxu0
  %v9273 = vadd.f32 %v8748, %v9272
  %v9274 = vpop.f32.mrb[0].mxu0
  %v9275 = vadd.f32 %v8750, %v9274
  %9276 = vmatprep.mubr.bf16.mxu0 %v9113
  %9277 = vmatmul.mubr.bf16.gmra.mrb[0].mxu0 %v8912
  %v9278 = vpop.f32.mrb[0].mxu0
  %v9279 = vadd.f32 %v8754, %v9278
  %v9280 = vpop.f32.mrb[0].mxu0
  %v9281 = vadd.f32 %v8756, %v9280
  %v9282 = vpop.f32.mrb[0].mxu0
  %v9283 = vadd.f32 %v8758, %v9282
  %v9284 = vpop.f32.mrb[0].mxu0
  %v9285 = vadd.f32 %v8760, %v9284
  %9286 = vmatprep.mubr.bf16.mxu0 %v9116
  %9287 = vmatmul.mubr.bf16.gmra.mrb[0].mxu0 %v8914
  %v9288 = vpop.f32.mrb[0].mxu0
  %v9289 = vadd.f32 %v8764, %v9288
  %v9290 = vpop.f32.mrb[0].mxu0
  %v9291 = vadd.f32 %v8766, %v9290
  %v9292 = vpop.f32.mrb[0].mxu0
  %v9293 = vadd.f32 %v8768, %v9292
  %v9294 = vpop.f32.mrb[0].mxu0
  %v9295 = vadd.f32 %v8770, %v9294
  %9296 = vmatprep.mubr.bf16.mxu0 %v9119
  %9297 = vmatmul.mubr.bf16.gmra.mrb[0].mxu0 %v8916
  %v9298 = vpop.f32.mrb[0].mxu0
  %v9299 = vadd.f32 %v8774, %v9298
  %v9300 = vpop.f32.mrb[0].mxu0
  %v9301 = vadd.f32 %v8776, %v9300
  %v9302 = vpop.f32.mrb[0].mxu0
  %v9303 = vadd.f32 %v8778, %v9302
  %v9304 = vpop.f32.mrb[0].mxu0
  %v9305 = vadd.f32 %v8780, %v9304
  %9306 = vmatprep.mubr.bf16.mxu0 %v9122
  %9307 = vmatmul.mubr.bf16.gmra.mrb[0].mxu0 %v8918
  %v9308 = vpop.f32.mrb[0].mxu0
  %v9309 = vadd.f32 %v8784, %v9308
  %v9310 = vpop.f32.mrb[0].mxu0
  %v9311 = vadd.f32 %v8786, %v9310
  %v9312 = vpop.f32.mrb[0].mxu0
  %v9313 = vadd.f32 %v8788, %v9312
  %v9314 = vpop.f32.mrb[0].mxu0
  %v9315 = vadd.f32 %v8790, %v9314
  %9316 = vdwg.mxu0
  %v9317 = vld [vmem:[%s4] sm:$0x3]
  %v9319 = vlaneseq
  %v9320 = vshrl.u32 %v9319, 7
  %v9321 = vsub.s32 0, %v9320
  %v9322 = vrot.slane %v9317, %v9321
  %v9323 = vlaneseq
  %v9324 = vshrl.u32 %v9323, 7
  %v9325 = vsub.s32 1, %v9324
  %v9326 = vrot.slane %v9317, %v9325
  %v9329 = vadd.f32 %v9159, %v9322
  %v9330 = vadd.f32 %v9161, %v9326
  %v9331 = vadd.f32 %v9163, %v9322
  %v9332 = vadd.f32 %v9165, %v9326
  %v9333 = vadd.f32 %v9169, %v9322
  %v9334 = vadd.f32 %v9171, %v9326
  %v9335 = vadd.f32 %v9173, %v9322
  %v9336 = vadd.f32 %v9175, %v9326
  %v9337 = vadd.f32 %v9179, %v9322
  %v9338 = vadd.f32 %v9181, %v9326
  %v9339 = vadd.f32 %v9183, %v9322
  %v9340 = vadd.f32 %v9185, %v9326
  %v9341 = vadd.f32 %v9189, %v9322
  %v9342 = vadd.f32 %v9191, %v9326
  %v9343 = vadd.f32 %v9193, %v9322
  %v9344 = vadd.f32 %v9195, %v9326
  %v9345 = vadd.f32 %v9199, %v9322
  %v9346 = vadd.f32 %v9201, %v9326
  %v9347 = vadd.f32 %v9203, %v9322
  %v9348 = vadd.f32 %v9205, %v9326
  %v9349 = vadd.f32 %v9209, %v9322
  %v9350 = vadd.f32 %v9211, %v9326
  %v9351 = vadd.f32 %v9213, %v9322
  %v9352 = vadd.f32 %v9215, %v9326
  %v9353 = vadd.f32 %v9219, %v9322
  %v9354 = vadd.f32 %v9221, %v9326
  %v9355 = vadd.f32 %v9223, %v9322
  %v9356 = vadd.f32 %v9225, %v9326
  %v9357 = vadd.f32 %v9229, %v9322
  %v9358 = vadd.f32 %v9231, %v9326
  %v9359 = vadd.f32 %v9233, %v9322
  %v9360 = vadd.f32 %v9235, %v9326
  %v9361 = vadd.f32 %v9239, %v9322
  %v9362 = vadd.f32 %v9241, %v9326
  %v9363 = vadd.f32 %v9243, %v9322
  %v9364 = vadd.f32 %v9245, %v9326
  %v9365 = vadd.f32 %v9249, %v9322
  %v9366 = vadd.f32 %v9251, %v9326
  %v9367 = vadd.f32 %v9253, %v9322
  %v9368 = vadd.f32 %v9255, %v9326
  %v9369 = vadd.f32 %v9259, %v9322
  %v9370 = vadd.f32 %v9261, %v9326
  %v9371 = vadd.f32 %v9263, %v9322
  %v9372 = vadd.f32 %v9265, %v9326
  %v9373 = vadd.f32 %v9269, %v9322
  %v9374 = vadd.f32 %v9271, %v9326
  %v9375 = vadd.f32 %v9273, %v9322
  %v9376 = vadd.f32 %v9275, %v9326
  %v9377 = vadd.f32 %v9279, %v9322
  %v9378 = vadd.f32 %v9281, %v9326
  %v9379 = vadd.f32 %v9283, %v9322
  %v9380 = vadd.f32 %v9285, %v9326
  %v9381 = vadd.f32 %v9289, %v9322
  %v9382 = vadd.f32 %v9291, %v9326
  %v9383 = vadd.f32 %v9293, %v9322
  %v9384 = vadd.f32 %v9295, %v9326
  %v9385 = vadd.f32 %v9299, %v9322
  %v9386 = vadd.f32 %v9301, %v9326
  %v9387 = vadd.f32 %v9303, %v9322
  %v9388 = vadd.f32 %v9305, %v9326
  %v9389 = vadd.f32 %v9309, %v9322
  %v9390 = vadd.f32 %v9311, %v9326
  %v9391 = vadd.f32 %v9313, %v9322
  %v9392 = vadd.f32 %v9315, %v9326
  %v9393 = vmax.f32 %v9329, 0.0
  %v9394 = vmax.f32 %v9330, 0.0
  %v9395 = vmax.f32 %v9331, 0.0
  %v9396 = vmax.f32 %v9332, 0.0
  %v9397 = vmax.f32 %v9333, 0.0
  %v9398 = vmax.f32 %v9334, 0.0
  %v9399 = vmax.f32 %v9335, 0.0
  %v9400 = vmax.f32 %v9336, 0.0
  %v9401 = vmax.f32 %v9337, 0.0
  %v9402 = vmax.f32 %v9338, 0.0
  %v9403 = vmax.f32 %v9339, 0.0
  %v9404 = vmax.f32 %v9340, 0.0
  %v9405 = vmax.f32 %v9341, 0.0
  %v9406 = vmax.f32 %v9342, 0.0
  %v9407 = vmax.f32 %v9343, 0.0
  %v9408 = vmax.f32 %v9344, 0.0
  %v9409 = vmax.f32 %v9345, 0.0
  %v9410 = vmax.f32 %v9346, 0.0
  %v9411 = vmax.f32 %v9347, 0.0
  %v9412 = vmax.f32 %v9348, 0.0
  %v9413 = vmax.f32 %v9349, 0.0
  %v9414 = vmax.f32 %v9350, 0.0
  %v9415 = vmax.f32 %v9351, 0.0
  %v9416 = vmax.f32 %v9352, 0.0
  %v9417 = vmax.f32 %v9353, 0.0
  %v9418 = vmax.f32 %v9354, 0.0
  %v9419 = vmax.f32 %v9355, 0.0
  %v9420 = vmax.f32 %v9356, 0.0
  %v9421 = vmax.f32 %v9357, 0.0
  %v9422 = vmax.f32 %v9358, 0.0
  %v9423 = vmax.f32 %v9359, 0.0
  %v9424 = vmax.f32 %v9360, 0.0
  %v9425 = vmax.f32 %v9361, 0.0
  %v9426 = vmax.f32 %v9362, 0.0
  %v9427 = vmax.f32 %v9363, 0.0
  %v9428 = vmax.f32 %v9364, 0.0
  %v9429 = vmax.f32 %v9365, 0.0
  %v9430 = vmax.f32 %v9366, 0.0
  %v9431 = vmax.f32 %v9367, 0.0
  %v9432 = vmax.f32 %v9368, 0.0
  %v9433 = vmax.f32 %v9369, 0.0
  %v9434 = vmax.f32 %v9370, 0.0
  %v9435 = vmax.f32 %v9371, 0.0
  %v9436 = vmax.f32 %v9372, 0.0
  %v9437 = vmax.f32 %v9373, 0.0
  %v9438 = vmax.f32 %v9374, 0.0
  %v9439 = vmax.f32 %v9375, 0.0
  %v9440 = vmax.f32 %v9376, 0.0
  %v9441 = vmax.f32 %v9377, 0.0
  %v9442 = vmax.f32 %v9378, 0.0
  %v9443 = vmax.f32 %v9379, 0.0
  %v9444 = vmax.f32 %v9380, 0.0
  %v9445 = vmax.f32 %v9381, 0.0
  %v9446 = vmax.f32 %v9382, 0.0
  %v9447 = vmax.f32 %v9383, 0.0
  %v9448 = vmax.f32 %v9384, 0.0
  %v9449 = vmax.f32 %v9385, 0.0
  %v9450 = vmax.f32 %v9386, 0.0
  %v9451 = vmax.f32 %v9387, 0.0
  %v9452 = vmax.f32 %v9388, 0.0
  %v9453 = vmax.f32 %v9389, 0.0
  %v9454 = vmax.f32 %v9390, 0.0
  %v9455 = vmax.f32 %v9391, 0.0
  %v9456 = vmax.f32 %v9392, 0.0
  %v9457 = vpack.c.bf16 %v9395, %v9393
  %v9458 = vpack.c.bf16 %v9396, %v9394
  %v9459 = vpack.c.bf16 %v9399, %v9397
  %v9460 = vpack.c.bf16 %v9400, %v9398
  %v9461 = vpack.c.bf16 %v9403, %v9401
  %v9462 = vpack.c.bf16 %v9404, %v9402
  %v9463 = vpack.c.bf16 %v9407, %v9405
  %v9464 = vpack.c.bf16 %v9408, %v9406
  %v9465 = vpack.c.bf16 %v9411, %v9409
  %v9466 = vpack.c.bf16 %v9412, %v9410
  %v9467 = vpack.c.bf16 %v9415, %v9413
  %v9468 = vpack.c.bf16 %v9416, %v9414
  %v9469 = vpack.c.bf16 %v9419, %v9417
  %v9470 = vpack.c.bf16 %v9420, %v9418
  %v9471 = vpack.c.bf16 %v9423, %v9421
  %v9472 = vpack.c.bf16 %v9424, %v9422
  %v9473 = vpack.c.bf16 %v9427, %v9425
  %v9474 = vpack.c.bf16 %v9428, %v9426
  %v9475 = vpack.c.bf16 %v9431, %v9429
  %v9476 = vpack.c.bf16 %v9432, %v9430
  %v9477 = vpack.c.bf16 %v9435, %v9433
  %v9478 = vpack.c.bf16 %v9436, %v9434
  %v9479 = vpack.c.bf16 %v9439, %v9437
  %v9480 = vpack.c.bf16 %v9440, %v9438
  %v9481 = vpack.c.bf16 %v9443, %v9441
  %v9482 = vpack.c.bf16 %v9444, %v9442
  %v9483 = vpack.c.bf16 %v9447, %v9445
  %v9484 = vpack.c.bf16 %v9448, %v9446
  %v9485 = vpack.c.bf16 %v9451, %v9449
  %v9486 = vpack.c.bf16 %v9452, %v9450
  %v9487 = vpack.c.bf16 %v9455, %v9453
  %v9488 = vpack.c.bf16 %v9456, %v9454
  %v9489 = vld [vmem:[%s5] sm:$0xff]
  %v9490 = vld [vmem:[%s5 + $0x8] sm:$0xff]
  %v9491 = vld [vmem:[%s5 + $0x10] sm:$0xff]
  %v9492 = vld [vmem:[%s5 + $0x18] sm:$0xff]
  %v9493 = vld [vmem:[%s5 + $0x20] sm:$0xff]
  %v9494 = vld [vmem:[%s5 + $0x28] sm:$0xff]
  %v9495 = vld [vmem:[%s5 + $0x30] sm:$0xff]
  %v9496 = vld [vmem:[%s5 + $0x38] sm:$0xff]
  %v9497 = vld [vmem:[%s5 + $0x40] sm:$0xff]
  %v9498 = vld [vmem:[%s5 + $0x48] sm:$0xff]
  %v9499 = vld [vmem:[%s5 + $0x50] sm:$0xff]
  %v9500 = vld [vmem:[%s5 + $0x58] sm:$0xff]
  %v9501 = vld [vmem:[%s5 + $0x60] sm:$0xff]
  %v9502 = vld [vmem:[%s5 + $0x68] sm:$0xff]
  %v9503 = vld [vmem:[%s5 + $0x70] sm:$0xff]
  %v9504 = vld [vmem:[%s5 + $0x78] sm:$0xff]
  %v9505 = vld [vmem:[%s5 + $0x80] sm:$0xff]
  %v9506 = vld [vmem:[%s5 + $0x88] sm:$0xff]
  %v9507 = vld [vmem:[%s5 + $0x90] sm:$0xff]
  %v9508 = vld [vmem:[%s5 + $0x98] sm:$0xff]
  %v9509 = vld [vmem:[%s5 + $0xa0] sm:$0xff]
  %v9510 = vld [vmem:[%s5 + $0xa8] sm:$0xff]
  %v9511 = vld [vmem:[%s5 + $0xb0] sm:$0xff]
  %v9512 = vld [vmem:[%s5 + $0xb8] sm:$0xff]
  %v9513 = vld [vmem:[%s5 + $0xc0] sm:$0xff]
  %v9514 = vld [vmem:[%s5 + $0xc8] sm:$0xff]
  %v9515 = vld [vmem:[%s5 + $0xd0] sm:$0xff]
  %v9516 = vld [vmem:[%s5 + $0xd8] sm:$0xff]
  %v9517 = vld [vmem:[%s5 + $0xe0] sm:$0xff]
  %v9518 = vld [vmem:[%s5 + $0xe8] sm:$0xff]
  %v9519 = vld [vmem:[%s5 + $0xf0] sm:$0xff]
  %v9520 = vld [vmem:[%s5 + $0xf8] sm:$0xff]
  %v9521 = vld [vmem:[%s6] sm:$0x3]
  %v9523 = vlaneseq
  %v9524 = vshrl.u32 %v9523, 7
  %v9525 = vsub.s32 0, %v9524
  %v9526 = vrot.slane %v9521, %v9525
  %v9527 = vlaneseq
  %v9528 = vshrl.u32 %v9527, 7
  %v9529 = vsub.s32 1, %v9528
  %v9530 = vrot.slane %v9521, %v9529
  %v9565 = vunpack.c.l.b16 %v9489
  %v9566 = vunpack.c.h.b16 %v9489
  %v9567 = vunpack.c.l.b16 %v9490
  %v9568 = vunpack.c.h.b16 %v9490
  %v9569 = vunpack.c.l.b16 %v9491
  %v9570 = vunpack.c.h.b16 %v9491
  %v9571 = vunpack.c.l.b16 %v9492
  %v9572 = vunpack.c.h.b16 %v9492
  %v9573 = vunpack.c.l.b16 %v9493
  %v9574 = vunpack.c.h.b16 %v9493
  %v9575 = vunpack.c.l.b16 %v9494
  %v9576 = vunpack.c.h.b16 %v9494
  %v9577 = vunpack.c.l.b16 %v9495
  %v9578 = vunpack.c.h.b16 %v9495
  %v9579 = vunpack.c.l.b16 %v9496
  %v9580 = vunpack.c.h.b16 %v9496
  %v9581 = vunpack.c.l.b16 %v9497
  %v9582 = vunpack.c.h.b16 %v9497
  %v9583 = vunpack.c.l.b16 %v9498
  %v9584 = vunpack.c.h.b16 %v9498
  %v9585 = vunpack.c.l.b16 %v9499
  %v9586 = vunpack.c.h.b16 %v9499
  %v9587 = vunpack.c.l.b16 %v9500
  %v9588 = vunpack.c.h.b16 %v9500
  %v9589 = vunpack.c.l.b16 %v9501
  %v9590 = vunpack.c.h.b16 %v9501
  %v9591 = vunpack.c.l.b16 %v9502
  %v9592 = vunpack.c.h.b16 %v9502
  %v9593 = vunpack.c.l.b16 %v9503
  %v9594 = vunpack.c.h.b16 %v9503
  %v9595 = vunpack.c.l.b16 %v9504
  %v9596 = vunpack.c.h.b16 %v9504
  %v9597 = vunpack.c.l.b16 %v9505
  %v9598 = vunpack.c.h.b16 %v9505
  %v9599 = vunpack.c.l.b16 %v9506
  %v9600 = vunpack.c.h.b16 %v9506
  %v9601 = vunpack.c.l.b16 %v9507
  %v9602 = vunpack.c.h.b16 %v9507
  %v9603 = vunpack.c.l.b16 %v9508
  %v9604 = vunpack.c.h.b16 %v9508
  %v9605 = vunpack.c.l.b16 %v9509
  %v9606 = vunpack.c.h.b16 %v9509
  %v9607 = vunpack.c.l.b16 %v9510
  %v9608 = vunpack.c.h.b16 %v9510
  %v9609 = vunpack.c.l.b16 %v9511
  %v9610 = vunpack.c.h.b16 %v9511
  %v9611 = vunpack.c.l.b16 %v9512
  %v9612 = vunpack.c.h.b16 %v9512
  %v9613 = vunpack.c.l.b16 %v9513
  %v9614 = vunpack.c.h.b16 %v9513
  %v9615 = vunpack.c.l.b16 %v9514
  %v9616 = vunpack.c.h.b16 %v9514
  %v9617 = vunpack.c.l.b16 %v9515
  %v9618 = vunpack.c.h.b16 %v9515
  %v9619 = vunpack.c.l.b16 %v9516
  %v9620 = vunpack.c.h.b16 %v9516
  %v9621 = vunpack.c.l.b16 %v9517
  %v9622 = vunpack.c.h.b16 %v9517
  %v9623 = vunpack.c.l.b16 %v9518
  %v9624 = vunpack.c.h.b16 %v9518
  %v9625 = vunpack.c.l.b16 %v9519
  %v9626 = vunpack.c.h.b16 %v9519
  %v9627 = vunpack.c.l.b16 %v9520
  %v9628 = vunpack.c.h.b16 %v9520
  %v9629 = vpack.c.b16 %v9567, %v9565
  %v9630 = vpack.c.b16 %v9568, %v9566
  %v9631 = vpack.c.b16 %v9571, %v9569
  %v9632 = vpack.c.b16 %v9572, %v9570
  %v9633 = vpack.c.b16 %v9575, %v9573
  %v9634 = vpack.c.b16 %v9576, %v9574
  %v9635 = vpack.c.b16 %v9579, %v9577
  %v9636 = vpack.c.b16 %v9580, %v9578
  %v9637 = vpack.c.b16 %v9583, %v9581
  %v9638 = vpack.c.b16 %v9584, %v9582
  %v9639 = vpack.c.b16 %v9587, %v9585
  %v9640 = vpack.c.b16 %v9588, %v9586
  %v9641 = vpack.c.b16 %v9591, %v9589
  %v9642 = vpack.c.b16 %v9592, %v9590
  %v9643 = vpack.c.b16 %v9595, %v9593
  %v9644 = vpack.c.b16 %v9596, %v9594
  %v9645 = vpack.c.b16 %v9599, %v9597
  %v9646 = vpack.c.b16 %v9600, %v9598
  %v9647 = vpack.c.b16 %v9603, %v9601
  %v9648 = vpack.c.b16 %v9604, %v9602
  %v9649 = vpack.c.b16 %v9607, %v9605
  %v9650 = vpack.c.b16 %v9608, %v9606
  %v9651 = vpack.c.b16 %v9611, %v9609
  %v9652 = vpack.c.b16 %v9612, %v9610
  %v9653 = vpack.c.b16 %v9615, %v9613
  %v9654 = vpack.c.b16 %v9616, %v9614
  %v9655 = vpack.c.b16 %v9619, %v9617
  %v9656 = vpack.c.b16 %v9620, %v9618
  %v9657 = vpack.c.b16 %v9623, %v9621
  %v9658 = vpack.c.b16 %v9624, %v9622
  %v9659 = vpack.c.b16 %v9627, %v9625
  %v9660 = vpack.c.b16 %v9628, %v9626
  %9693 = vmatprep.subr.bf16.mxu0 %v9630
  %9694 = vmatpush1.bf16.msra.mxu0 %v9629
  %9695 = vmatprep.subr.bf16.mxu0 %v9632
  %9696 = vmatpush1.bf16.msra.mxu0 %v9631
  %9697 = vmatprep.subr.bf16.mxu0 %v9634
  %9698 = vmatpush1.bf16.msra.mxu0 %v9633
  %9699 = vmatprep.subr.bf16.mxu0 %v9636
  %9700 = vmatpush1.bf16.msra.mxu0 %v9635
  %9701 = vmatprep.subr.bf16.mxu0 %v9638
  %9702 = vmatpush1.bf16.msra.mxu0 %v9637
  %9703 = vmatprep.subr.bf16.mxu0 %v9640
  %9704 = vmatpush1.bf16.msra.mxu0 %v9639
  %9705 = vmatprep.subr.bf16.mxu0 %v9642
  %9706 = vmatpush1.bf16.msra.mxu0 %v9641
  %9707 = vmatprep.subr.bf16.mxu0 %v9644
  %9708 = vmatpush1.bf16.msra.mxu0 %v9643
  %9709 = vmatprep.subr.bf16.mxu0 %v9646
  %9710 = vmatpush1.bf16.msra.mxu0 %v9645
  %9711 = vmatprep.subr.bf16.mxu0 %v9648
  %9712 = vmatpush1.bf16.msra.mxu0 %v9647
  %9713 = vmatprep.subr.bf16.mxu0 %v9650
  %9714 = vmatpush1.bf16.msra.mxu0 %v9649
  %9715 = vmatprep.subr.bf16.mxu0 %v9652
  %9716 = vmatpush1.bf16.msra.mxu0 %v9651
  %9717 = vmatprep.subr.bf16.mxu0 %v9654
  %9718 = vmatpush1.bf16.msra.mxu0 %v9653
  %9719 = vmatprep.subr.bf16.mxu0 %v9656
  %9720 = vmatpush1.bf16.msra.mxu0 %v9655
  %9721 = vmatprep.subr.bf16.mxu0 %v9658
  %9722 = vmatpush1.bf16.msra.mxu0 %v9657
  %9723 = vmatprep.subr.bf16.mxu0 %v9660
  %9724 = vmatpush1.bf16.msra.mxu0 %v9659
  %9725 = vmatprep.mubr.bf16.mxu0 %v9458
  %9726 = vmatmul.mubr.bf16.gmra.mrb[0].mxu0 %v9457
  %v9727 = vpop.f32.mrb[0].mxu0
  %v9728 = vadd.f32 %v9526, %v9727
  %v9729 = vpop.f32.mrb[0].mxu0
  %v9730 = vadd.f32 %v9530, %v9729
  %v9731 = vpop.f32.mrb[0].mxu0
  %v9732 = vadd.f32 %v9526, %v9731
  %v9733 = vpop.f32.mrb[0].mxu0
  %v9734 = vadd.f32 %v9530, %v9733
  %9735 = vmatprep.mubr.bf16.mxu0 %v9460
  %9736 = vmatmul.mubr.bf16.gmra.mrb[0].mxu0 %v9459
  %v9737 = vpop.f32.mrb[0].mxu0
  %v9738 = vadd.f32 %v9526, %v9737
  %v9739 = vpop.f32.mrb[0].mxu0
  %v9740 = vadd.f32 %v9530, %v9739
  %v9741 = vpop.f32.mrb[0].mxu0
  %v9742 = vadd.f32 %v9526, %v9741
  %v9743 = vpop.f32.mrb[0].mxu0
  %v9744 = vadd.f32 %v9530, %v9743
  %9745 = vmatprep.mubr.bf16.mxu0 %v9462
  %9746 = vmatmul.mubr.bf16.gmra.mrb[0].mxu0 %v9461
  %v9747 = vpop.f32.mrb[0].mxu0
  %v9748 = vadd.f32 %v9526, %v9747
  %v9749 = vpop.f32.mrb[0].mxu0
  %v9750 = vadd.f32 %v9530, %v9749
  %v9751 = vpop.f32.mrb[0].mxu0
  %v9752 = vadd.f32 %v9526, %v9751
  %v9753 = vpop.f32.mrb[0].mxu0
  %v9754 = vadd.f32 %v9530, %v9753
  %9755 = vmatprep.mubr.bf16.mxu0 %v9464
  %9756 = vmatmul.mubr.bf16.gmra.mrb[0].mxu0 %v9463
  %v9757 = vpop.f32.mrb[0].mxu0
  %v9758 = vadd.f32 %v9526, %v9757
  %v9759 = vpop.f32.mrb[0].mxu0
  %v9760 = vadd.f32 %v9530, %v9759
  %v9761 = vpop.f32.mrb[0].mxu0
  %v9762 = vadd.f32 %v9526, %v9761
  %v9763 = vpop.f32.mrb[0].mxu0
  %v9764 = vadd.f32 %v9530, %v9763
  %9765 = vmatprep.mubr.bf16.mxu0 %v9466
  %9766 = vmatmul.mubr.bf16.gmra.mrb[0].mxu0 %v9465
  %v9767 = vpop.f32.mrb[0].mxu0
  %v9768 = vadd.f32 %v9526, %v9767
  %v9769 = vpop.f32.mrb[0].mxu0
  %v9770 = vadd.f32 %v9530, %v9769
  %v9771 = vpop.f32.mrb[0].mxu0
  %v9772 = vadd.f32 %v9526, %v9771
  %v9773 = vpop.f32.mrb[0].mxu0
  %v9774 = vadd.f32 %v9530, %v9773
  %9775 = vmatprep.mubr.bf16.mxu0 %v9468
  %9776 = vmatmul.mubr.bf16.gmra.mrb[0].mxu0 %v9467
  %v9777 = vpop.f32.mrb[0].mxu0
  %v9778 = vadd.f32 %v9526, %v9777
  %v9779 = vpop.f32.mrb[0].mxu0
  %v9780 = vadd.f32 %v9530, %v9779
  %v9781 = vpop.f32.mrb[0].mxu0
  %v9782 = vadd.f32 %v9526, %v9781
  %v9783 = vpop.f32.mrb[0].mxu0
  %v9784 = vadd.f32 %v9530, %v9783
  %9785 = vmatprep.mubr.bf16.mxu0 %v9470
  %9786 = vmatmul.mubr.bf16.gmra.mrb[0].mxu0 %v9469
  %v9787 = vpop.f32.mrb[0].mxu0
  %v9788 = vadd.f32 %v9526, %v9787
  %v9789 = vpop.f32.mrb[0].mxu0
  %v9790 = vadd.f32 %v9530, %v9789
  %v9791 = vpop.f32.mrb[0].mxu0
  %v9792 = vadd.f32 %v9526, %v9791
  %v9793 = vpop.f32.mrb[0].mxu0
  %v9794 = vadd.f32 %v9530, %v9793
  %9795 = vmatprep.mubr.bf16.mxu0 %v9472
  %9796 = vmatmul.mubr.bf16.gmra.mrb[0].mxu0 %v9471
  %v9797 = vpop.f32.mrb[0].mxu0
  %v9798 = vadd.f32 %v9526, %v9797
  %v9799 = vpop.f32.mrb[0].mxu0
  %v9800 = vadd.f32 %v9530, %v9799
  %v9801 = vpop.f32.mrb[0].mxu0
  %v9802 = vadd.f32 %v9526, %v9801
  %v9803 = vpop.f32.mrb[0].mxu0
  %v9804 = vadd.f32 %v9530, %v9803
  %9805 = vmatprep.mubr.bf16.mxu0 %v9474
  %9806 = vmatmul.mubr.bf16.gmra.mrb[0].mxu0 %v9473
  %v9807 = vpop.f32.mrb[0].mxu0
  %v9808 = vadd.f32 %v9526, %v9807
  %v9809 = vpop.f32.mrb[0].mxu0
  %v9810 = vadd.f32 %v9530, %v9809
  %v9811 = vpop.f32.mrb[0].mxu0
  %v9812 = vadd.f32 %v9526, %v9811
  %v9813 = vpop.f32.mrb[0].mxu0
  %v9814 = vadd.f32 %v9530, %v9813
  %9815 = vmatprep.mubr.bf16.mxu0 %v9476
  %9816 = vmatmul.mubr.bf16.gmra.mrb[0].mxu0 %v9475
  %v9817 = vpop.f32.mrb[0].mxu0
  %v9818 = vadd.f32 %v9526, %v9817
  %v9819 = vpop.f32.mrb[0].mxu0
  %v9820 = vadd.f32 %v9530, %v9819
  %v9821 = vpop.f32.mrb[0].mxu0
  %v9822 = vadd.f32 %v9526, %v9821
  %v9823 = vpop.f32.mrb[0].mxu0
  %v9824 = vadd.f32 %v9530, %v9823
  %9825 = vmatprep.mubr.bf16.mxu0 %v9478
  %9826 = vmatmul.mubr.bf16.gmra.mrb[0].mxu0 %v9477
  %v9827 = vpop.f32.mrb[0].mxu0
  %v9828 = vadd.f32 %v9526, %v9827
  %v9829 = vpop.f32.mrb[0].mxu0
  %v9830 = vadd.f32 %v9530, %v9829
  %v9831 = vpop.f32.mrb[0].mxu0
  %v9832 = vadd.f32 %v9526, %v9831
  %v9833 = vpop.f32.mrb[0].mxu0
  %v9834 = vadd.f32 %v9530, %v9833
  %9835 = vmatprep.mubr.bf16.mxu0 %v9480
  %9836 = vmatmul.mubr.bf16.gmra.mrb[0].mxu0 %v9479
  %v9837 = vpop.f32.mrb[0].mxu0
  %v9838 = vadd.f32 %v9526, %v9837
  %v9839 = vpop.f32.mrb[0].mxu0
  %v9840 = vadd.f32 %v9530, %v9839
  %v9841 = vpop.f32.mrb[0].mxu0
  %v9842 = vadd.f32 %v9526, %v9841
  %v9843 = vpop.f32.mrb[0].mxu0
  %v9844 = vadd.f32 %v9530, %v9843
  %9845 = vmatprep.mubr.bf16.mxu0 %v9482
  %9846 = vmatmul.mubr.bf16.gmra.mrb[0].mxu0 %v9481
  %v9847 = vpop.f32.mrb[0].mxu0
  %v9848 = vadd.f32 %v9526, %v9847
  %v9849 = vpop.f32.mrb[0].mxu0
  %v9850 = vadd.f32 %v9530, %v9849
  %v9851 = vpop.f32.mrb[0].mxu0
  %v9852 = vadd.f32 %v9526, %v9851
  %v9853 = vpop.f32.mrb[0].mxu0
  %v9854 = vadd.f32 %v9530, %v9853
  %9855 = vmatprep.mubr.bf16.mxu0 %v9484
  %9856 = vmatmul.mubr.bf16.gmra.mrb[0].mxu0 %v9483
  %v9857 = vpop.f32.mrb[0].mxu0
  %v9858 = vadd.f32 %v9526, %v9857
  %v9859 = vpop.f32.mrb[0].mxu0
  %v9860 = vadd.f32 %v9530, %v9859
  %v9861 = vpop.f32.mrb[0].mxu0
  %v9862 = vadd.f32 %v9526, %v9861
  %v9863 = vpop.f32.mrb[0].mxu0
  %v9864 = vadd.f32 %v9530, %v9863
  %9865 = vmatprep.mubr.bf16.mxu0 %v9486
  %9866 = vmatmul.mubr.bf16.gmra.mrb[0].mxu0 %v9485
  %v9867 = vpop.f32.mrb[0].mxu0
  %v9868 = vadd.f32 %v9526, %v9867
  %v9869 = vpop.f32.mrb[0].mxu0
  %v9870 = vadd.f32 %v9530, %v9869
  %v9871 = vpop.f32.mrb[0].mxu0
  %v9872 = vadd.f32 %v9526, %v9871
  %v9873 = vpop.f32.mrb[0].mxu0
  %v9874 = vadd.f32 %v9530, %v9873
  %9875 = vmatprep.mubr.bf16.mxu0 %v9488
  %9876 = vmatmul.mubr.bf16.gmra.mrb[0].mxu0 %v9487
  %v9877 = vpop.f32.mrb[0].mxu0
  %v9878 = vadd.f32 %v9526, %v9877
  %v9879 = vpop.f32.mrb[0].mxu0
  %v9880 = vadd.f32 %v9530, %v9879
  %v9881 = vpop.f32.mrb[0].mxu0
  %v9882 = vadd.f32 %v9526, %v9881
  %v9883 = vpop.f32.mrb[0].mxu0
  %v9884 = vadd.f32 %v9530, %v9883
  %9885 = vdwg.mxu0
  %v9886 = vmax.f32 %v9728, 0.0
  %v9887 = vmax.f32 %v9730, 0.0
  %v9888 = vmax.f32 %v9732, 0.0
  %v9889 = vmax.f32 %v9734, 0.0
  %v9890 = vmax.f32 %v9738, 0.0
  %v9891 = vmax.f32 %v9740, 0.0
  %v9892 = vmax.f32 %v9742, 0.0
  %v9893 = vmax.f32 %v9744, 0.0
  %v9894 = vmax.f32 %v9748, 0.0
  %v9895 = vmax.f32 %v9750, 0.0
  %v9896 = vmax.f32 %v9752, 0.0
  %v9897 = vmax.f32 %v9754, 0.0
  %v9898 = vmax.f32 %v9758, 0.0
  %v9899 = vmax.f32 %v9760, 0.0
  %v9900 = vmax.f32 %v9762, 0.0
  %v9901 = vmax.f32 %v9764, 0.0
  %v9902 = vmax.f32 %v9768, 0.0
  %v9903 = vmax.f32 %v9770, 0.0
  %v9904 = vmax.f32 %v9772, 0.0
  %v9905 = vmax.f32 %v9774, 0.0
  %v9906 = vmax.f32 %v9778, 0.0
  %v9907 = vmax.f32 %v9780, 0.0
  %v9908 = vmax.f32 %v9782, 0.0
  %v9909 = vmax.f32 %v9784, 0.0
  %v9910 = vmax.f32 %v9788, 0.0
  %v9911 = vmax.f32 %v9790, 0.0
  %v9912 = vmax.f32 %v9792, 0.0
  %v9913 = vmax.f32 %v9794, 0.0
  %v9914 = vmax.f32 %v9798, 0.0
  %v9915 = vmax.f32 %v9800, 0.0
  %v9916 = vmax.f32 %v9802, 0.0
  %v9917 = vmax.f32 %v9804, 0.0
  %v9918 = vmax.f32 %v9808, 0.0
  %v9919 = vmax.f32 %v9810, 0.0
  %v9920 = vmax.f32 %v9812, 0.0
  %v9921 = vmax.f32 %v9814, 0.0
  %v9922 = vmax.f32 %v9818, 0.0
  %v9923 = vmax.f32 %v9820, 0.0
  %v9924 = vmax.f32 %v9822, 0.0
  %v9925 = vmax.f32 %v9824, 0.0
  %v9926 = vmax.f32 %v9828, 0.0
  %v9927 = vmax.f32 %v9830, 0.0
  %v9928 = vmax.f32 %v9832, 0.0
  %v9929 = vmax.f32 %v9834, 0.0
  %v9930 = vmax.f32 %v9838, 0.0
  %v9931 = vmax.f32 %v9840, 0.0
  %v9932 = vmax.f32 %v9842, 0.0
  %v9933 = vmax.f32 %v9844, 0.0
  %v9934 = vmax.f32 %v9848, 0.0
  %v9935 = vmax.f32 %v9850, 0.0
  %v9936 = vmax.f32 %v9852, 0.0
  %v9937 = vmax.f32 %v9854, 0.0
  %v9938 = vmax.f32 %v9858, 0.0
  %v9939 = vmax.f32 %v9860, 0.0
  %v9940 = vmax.f32 %v9862, 0.0
  %v9941 = vmax.f32 %v9864, 0.0
  %v9942 = vmax.f32 %v9868, 0.0
  %v9943 = vmax.f32 %v9870, 0.0
  %v9944 = vmax.f32 %v9872, 0.0
  %v9945 = vmax.f32 %v9874, 0.0
  %v9946 = vmax.f32 %v9878, 0.0
  %v9947 = vmax.f32 %v9880, 0.0
  %v9948 = vmax.f32 %v9882, 0.0
  %v9949 = vmax.f32 %v9884, 0.0
  %v9950 = vpack.c.bf16 %v9888, %v9886
  %v9951 = vpack.c.bf16 %v9889, %v9887
  %v9952 = vpack.c.bf16 %v9892, %v9890
  %v9953 = vpack.c.bf16 %v9893, %v9891
  %v9954 = vpack.c.bf16 %v9896, %v9894
  %v9955 = vpack.c.bf16 %v9897, %v9895
  %v9956 = vpack.c.bf16 %v9900, %v9898
  %v9957 = vpack.c.bf16 %v9901, %v9899
  %v9958 = vpack.c.bf16 %v9904, %v9902
  %v9959 = vpack.c.bf16 %v9905, %v9903
  %v9960 = vpack.c.bf16 %v9908, %v9906
  %v9961 = vpack.c.bf16 %v9909, %v9907
  %v9962 = vpack.c.bf16 %v9912, %v9910
  %v9963 = vpack.c.bf16 %v9913, %v9911
  %v9964 = vpack.c.bf16 %v9916, %v9914
  %v9965 = vpack.c.bf16 %v9917, %v9915
  %v9966 = vpack.c.bf16 %v9920, %v9918
  %v9967 = vpack.c.bf16 %v9921, %v9919
  %v9968 = vpack.c.bf16 %v9924, %v9922
  %v9969 = vpack.c.bf16 %v9925, %v9923
  %v9970 = vpack.c.bf16 %v9928, %v9926
  %v9971 = vpack.c.bf16 %v9929, %v9927
  %v9972 = vpack.c.bf16 %v9932, %v9930
  %v9973 = vpack.c.bf16 %v9933, %v9931
  %v9974 = vpack.c.bf16 %v9936, %v9934
  %v9975 = vpack.c.bf16 %v9937, %v9935
  %v9976 = vpack.c.bf16 %v9940, %v9938
  %v9977 = vpack.c.bf16 %v9941, %v9939
  %v9978 = vpack.c.bf16 %v9944, %v9942
  %v9979 = vpack.c.bf16 %v9945, %v9943
  %v9980 = vpack.c.bf16 %v9948, %v9946
  %v9981 = vpack.c.bf16 %v9949, %v9947
  %v9982 = vld [vmem:[%s7] sm:$0xff]
  %v9983 = vld [vmem:[%s7 + $0x8] sm:$0xff]
  %v9984 = vld [vmem:[%s7 + $0x10] sm:$0xff]
  %v9985 = vld [vmem:[%s7 + $0x18] sm:$0xff]
  %v9986 = vld [vmem:[%s7 + $0x20] sm:$0xff]
  %v9987 = vld [vmem:[%s7 + $0x28] sm:$0xff]
  %v9988 = vld [vmem:[%s7 + $0x30] sm:$0xff]
  %v9989 = vld [vmem:[%s7 + $0x38] sm:$0xff]
  %v9990 = vld [vmem:[%s7 + $0x40] sm:$0xff]
  %v9991 = vld [vmem:[%s7 + $0x48] sm:$0xff]
  %v9992 = vld [vmem:[%s7 + $0x50] sm:$0xff]
  %v9993 = vld [vmem:[%s7 + $0x58] sm:$0xff]
  %v9994 = vld [vmem:[%s7 + $0x60] sm:$0xff]
  %v9995 = vld [vmem:[%s7 + $0x68] sm:$0xff]
  %v9996 = vld [vmem:[%s7 + $0x70] sm:$0xff]
  %v9997 = vld [vmem:[%s7 + $0x78] sm:$0xff]
  %v9998 = vld [vmem:[%s7 + $0x80] sm:$0xff]
  %v9999 = vld [vmem:[%s7 + $0x88] sm:$0xff]
  %v10000 = vld [vmem:[%s7 + $0x90] sm:$0xff]
  %v10001 = vld [vmem:[%s7 + $0x98] sm:$0xff]
  %v10002 = vld [vmem:[%s7 + $0xa0] sm:$0xff]
  %v10003 = vld [vmem:[%s7 + $0xa8] sm:$0xff]
  %v10004 = vld [vmem:[%s7 + $0xb0] sm:$0xff]
  %v10005 = vld [vmem:[%s7 + $0xb8] sm:$0xff]
  %v10006 = vld [vmem:[%s7 + $0xc0] sm:$0xff]
  %v10007 = vld [vmem:[%s7 + $0xc8] sm:$0xff]
  %v10008 = vld [vmem:[%s7 + $0xd0] sm:$0xff]
  %v10009 = vld [vmem:[%s7 + $0xd8] sm:$0xff]
  %v10010 = vld [vmem:[%s7 + $0xe0] sm:$0xff]
  %v10011 = vld [vmem:[%s7 + $0xe8] sm:$0xff]
  %v10012 = vld [vmem:[%s7 + $0xf0] sm:$0xff]
  %v10013 = vld [vmem:[%s7 + $0xf8] sm:$0xff]
  %v10014 = vld [vmem:[%s8] sm:$0x3]
  %v10016 = vlaneseq
  %v10017 = vshrl.u32 %v10016, 7
  %v10018 = vsub.s32 0, %v10017
  %v10019 = vrot.slane %v10014, %v10018
  %v10020 = vlaneseq
  %v10021 = vshrl.u32 %v10020, 7
  %v10022 = vsub.s32 1, %v10021
  %v10023 = vrot.slane %v10014, %v10022
  %v10058 = vunpack.c.l.b16 %v9982
  %v10059 = vunpack.c.h.b16 %v9982
  %v10060 = vunpack.c.l.b16 %v9983
  %v10061 = vunpack.c.h.b16 %v9983
  %v10062 = vunpack.c.l.b16 %v9984
  %v10063 = vunpack.c.h.b16 %v9984
  %v10064 = vunpack.c.l.b16 %v9985
  %v10065 = vunpack.c.h.b16 %v9985
  %v10066 = vunpack.c.l.b16 %v9986
  %v10067 = vunpack.c.h.b16 %v9986
  %v10068 = vunpack.c.l.b16 %v9987
  %v10069 = vunpack.c.h.b16 %v9987
  %v10070 = vunpack.c.l.b16 %v9988
  %v10071 = vunpack.c.h.b16 %v9988
  %v10072 = vunpack.c.l.b16 %v9989
  %v10073 = vunpack.c.h.b16 %v9989
  %v10074 = vunpack.c.l.b16 %v9990
  %v10075 = vunpack.c.h.b16 %v9990
  %v10076 = vunpack.c.l.b16 %v9991
  %v10077 = vunpack.c.h.b16 %v9991
  %v10078 = vunpack.c.l.b16 %v9992
  %v10079 = vunpack.c.h.b16 %v9992
  %v10080 = vunpack.c.l.b16 %v9993
  %v10081 = vunpack.c.h.b16 %v9993
  %v10082 = vunpack.c.l.b16 %v9994
  %v10083 = vunpack.c.h.b16 %v9994
  %v10084 = vunpack.c.l.b16 %v9995
  %v10085 = vunpack.c.h.b16 %v9995
  %v10086 = vunpack.c.l.b16 %v9996
  %v10087 = vunpack.c.h.b16 %v9996
  %v10088 = vunpack.c.l.b16 %v9997
  %v10089 = vunpack.c.h.b16 %v9997
  %v10090 = vunpack.c.l.b16 %v9998
  %v10091 = vunpack.c.h.b16 %v9998
  %v10092 = vunpack.c.l.b16 %v9999
  %v10093 = vunpack.c.h.b16 %v9999
  %v10094 = vunpack.c.l.b16 %v10000
  %v10095 = vunpack.c.h.b16 %v10000
  %v10096 = vunpack.c.l.b16 %v10001
  %v10097 = vunpack.c.h.b16 %v10001
  %v10098 = vunpack.c.l.b16 %v10002
  %v10099 = vunpack.c.h.b16 %v10002
  %v10100 = vunpack.c.l.b16 %v10003
  %v10101 = vunpack.c.h.b16 %v10003
  %v10102 = vunpack.c.l.b16 %v10004
  %v10103 = vunpack.c.h.b16 %v10004
  %v10104 = vunpack.c.l.b16 %v10005
  %v10105 = vunpack.c.h.b16 %v10005
  %v10106 = vunpack.c.l.b16 %v10006
  %v10107 = vunpack.c.h.b16 %v10006
  %v10108 = vunpack.c.l.b16 %v10007
  %v10109 = vunpack.c.h.b16 %v10007
  %v10110 = vunpack.c.l.b16 %v10008
  %v10111 = vunpack.c.h.b16 %v10008
  %v10112 = vunpack.c.l.b16 %v10009
  %v10113 = vunpack.c.h.b16 %v10009
  %v10114 = vunpack.c.l.b16 %v10010
  %v10115 = vunpack.c.h.b16 %v10010
  %v10116 = vunpack.c.l.b16 %v10011
  %v10117 = vunpack.c.h.b16 %v10011
  %v10118 = vunpack.c.l.b16 %v10012
  %v10119 = vunpack.c.h.b16 %v10012
  %v10120 = vunpack.c.l.b16 %v10013
  %v10121 = vunpack.c.h.b16 %v10013
  %v10122 = vpack.c.b16 %v10060, %v10058
  %v10123 = vpack.c.b16 %v10061, %v10059
  %v10124 = vpack.c.b16 %v10064, %v10062
  %v10125 = vpack.c.b16 %v10065, %v10063
  %v10126 = vpack.c.b16 %v10068, %v10066
  %v10127 = vpack.c.b16 %v10069, %v10067
  %v10128 = vpack.c.b16 %v10072, %v10070
  %v10129 = vpack.c.b16 %v10073, %v10071
  %v10130 = vpack.c.b16 %v10076, %v10074
  %v10131 = vpack.c.b16 %v10077, %v10075
  %v10132 = vpack.c.b16 %v10080, %v10078
  %v10133 = vpack.c.b16 %v10081, %v10079
  %v10134 = vpack.c.b16 %v10084, %v10082
  %v10135 = vpack.c.b16 %v10085, %v10083
  %v10136 = vpack.c.b16 %v10088, %v10086
  %v10137 = vpack.c.b16 %v10089, %v10087
  %v10138 = vpack.c.b16 %v10092, %v10090
  %v10139 = vpack.c.b16 %v10093, %v10091
  %v10140 = vpack.c.b16 %v10096, %v10094
  %v10141 = vpack.c.b16 %v10097, %v10095
  %v10142 = vpack.c.b16 %v10100, %v10098
  %v10143 = vpack.c.b16 %v10101, %v10099
  %v10144 = vpack.c.b16 %v10104, %v10102
  %v10145 = vpack.c.b16 %v10105, %v10103
  %v10146 = vpack.c.b16 %v10108, %v10106
  %v10147 = vpack.c.b16 %v10109, %v10107
  %v10148 = vpack.c.b16 %v10112, %v10110
  %v10149 = vpack.c.b16 %v10113, %v10111
  %v10150 = vpack.c.b16 %v10116, %v10114
  %v10151 = vpack.c.b16 %v10117, %v10115
  %v10152 = vpack.c.b16 %v10120, %v10118
  %v10153 = vpack.c.b16 %v10121, %v10119
  %10186 = vmatprep.subr.bf16.mxu0 %v10123
  %10187 = vmatpush1.bf16.msra.mxu0 %v10122
  %10188 = vmatprep.subr.bf16.mxu0 %v10125
  %10189 = vmatpush1.bf16.msra.mxu0 %v10124
  %10190 = vmatprep.subr.bf16.mxu0 %v10127
  %10191 = vmatpush1.bf16.msra.mxu0 %v10126
  %10192 = vmatprep.subr.bf16.mxu0 %v10129
  %10193 = vmatpush1.bf16.msra.mxu0 %v10128
  %10194 = vmatprep.subr.bf16.mxu0 %v10131
  %10195 = vmatpush1.bf16.msra.mxu0 %v10130
  %10196 = vmatprep.subr.bf16.mxu0 %v10133
  %10197 = vmatpush1.bf16.msra.mxu0 %v10132
  %10198 = vmatprep.subr.bf16.mxu0 %v10135
  %10199 = vmatpush1.bf16.msra.mxu0 %v10134
  %10200 = vmatprep.subr.bf16.mxu0 %v10137
  %10201 = vmatpush1.bf16.msra.mxu0 %v10136
  %10202 = vmatprep.subr.bf16.mxu0 %v10139
  %10203 = vmatpush1.bf16.msra.mxu0 %v10138
  %10204 = vmatprep.subr.bf16.mxu0 %v10141
  %10205 = vmatpush1.bf16.msra.mxu0 %v10140
  %10206 = vmatprep.subr.bf16.mxu0 %v10143
  %10207 = vmatpush1.bf16.msra.mxu0 %v10142
  %10208 = vmatprep.subr.bf16.mxu0 %v10145
  %10209 = vmatpush1.bf16.msra.mxu0 %v10144
  %10210 = vmatprep.subr.bf16.mxu0 %v10147
  %10211 = vmatpush1.bf16.msra.mxu0 %v10146
  %10212 = vmatprep.subr.bf16.mxu0 %v10149
  %10213 = vmatpush1.bf16.msra.mxu0 %v10148
  %10214 = vmatprep.subr.bf16.mxu0 %v10151
  %10215 = vmatpush1.bf16.msra.mxu0 %v10150
  %10216 = vmatprep.subr.bf16.mxu0 %v10153
  %10217 = vmatpush1.bf16.msra.mxu0 %v10152
  %10218 = vmatprep.mubr.bf16.mxu0 %v9951
  %10219 = vmatmul.mubr.bf16.gmra.mrb[0].mxu0 %v9950
  %v10220 = vpop.f32.mrb[0].mxu0
  %v10221 = vadd.f32 %v10019, %v10220
  %v10222 = vpop.f32.mrb[0].mxu0
  %v10223 = vadd.f32 %v10023, %v10222
  %v10224 = vpop.f32.mrb[0].mxu0
  %v10225 = vadd.f32 %v10019, %v10224
  %v10226 = vpop.f32.mrb[0].mxu0
  %v10227 = vadd.f32 %v10023, %v10226
  %10228 = vmatprep.mubr.bf16.mxu0 %v9953
  %10229 = vmatmul.mubr.bf16.gmra.mrb[0].mxu0 %v9952
  %v10230 = vpop.f32.mrb[0].mxu0
  %v10231 = vadd.f32 %v10019, %v10230
  %v10232 = vpop.f32.mrb[0].mxu0
  %v10233 = vadd.f32 %v10023, %v10232
  %v10234 = vpop.f32.mrb[0].mxu0
  %v10235 = vadd.f32 %v10019, %v10234
  %v10236 = vpop.f32.mrb[0].mxu0
  %v10237 = vadd.f32 %v10023, %v10236
  %10238 = vmatprep.mubr.bf16.mxu0 %v9955
  %10239 = vmatmul.mubr.bf16.gmra.mrb[0].mxu0 %v9954
  %v10240 = vpop.f32.mrb[0].mxu0
  %v10241 = vadd.f32 %v10019, %v10240
  %v10242 = vpop.f32.mrb[0].mxu0
  %v10243 = vadd.f32 %v10023, %v10242
  %v10244 = vpop.f32.mrb[0].mxu0
  %v10245 = vadd.f32 %v10019, %v10244
  %v10246 = vpop.f32.mrb[0].mxu0
  %v10247 = vadd.f32 %v10023, %v10246
  %10248 = vmatprep.mubr.bf16.mxu0 %v9957
  %10249 = vmatmul.mubr.bf16.gmra.mrb[0].mxu0 %v9956
  %v10250 = vpop.f32.mrb[0].mxu0
  %v10251 = vadd.f32 %v10019, %v10250
  %v10252 = vpop.f32.mrb[0].mxu0
  %v10253 = vadd.f32 %v10023, %v10252
  %v10254 = vpop.f32.mrb[0].mxu0
  %v10255 = vadd.f32 %v10019, %v10254
  %v10256 = vpop.f32.mrb[0].mxu0
  %v10257 = vadd.f32 %v10023, %v10256
  %10258 = vmatprep.mubr.bf16.mxu0 %v9959
  %10259 = vmatmul.mubr.bf16.gmra.mrb[0].mxu0 %v9958
  %v10260 = vpop.f32.mrb[0].mxu0
  %v10261 = vadd.f32 %v10019, %v10260
  %v10262 = vpop.f32.mrb[0].mxu0
  %v10263 = vadd.f32 %v10023, %v10262
  %v10264 = vpop.f32.mrb[0].mxu0
  %v10265 = vadd.f32 %v10019, %v10264
  %v10266 = vpop.f32.mrb[0].mxu0
  %v10267 = vadd.f32 %v10023, %v10266
  %10268 = vmatprep.mubr.bf16.mxu0 %v9961
  %10269 = vmatmul.mubr.bf16.gmra.mrb[0].mxu0 %v9960
  %v10270 = vpop.f32.mrb[0].mxu0
  %v10271 = vadd.f32 %v10019, %v10270
  %v10272 = vpop.f32.mrb[0].mxu0
  %v10273 = vadd.f32 %v10023, %v10272
  %v10274 = vpop.f32.mrb[0].mxu0
  %v10275 = vadd.f32 %v10019, %v10274
  %v10276 = vpop.f32.mrb[0].mxu0
  %v10277 = vadd.f32 %v10023, %v10276
  %10278 = vmatprep.mubr.bf16.mxu0 %v9963
  %10279 = vmatmul.mubr.bf16.gmra.mrb[0].mxu0 %v9962
  %v10280 = vpop.f32.mrb[0].mxu0
  %v10281 = vadd.f32 %v10019, %v10280
  %v10282 = vpop.f32.mrb[0].mxu0
  %v10283 = vadd.f32 %v10023, %v10282
  %v10284 = vpop.f32.mrb[0].mxu0
  %v10285 = vadd.f32 %v10019, %v10284
  %v10286 = vpop.f32.mrb[0].mxu0
  %v10287 = vadd.f32 %v10023, %v10286
  %10288 = vmatprep.mubr.bf16.mxu0 %v9965
  %10289 = vmatmul.mubr.bf16.gmra.mrb[0].mxu0 %v9964
  %v10290 = vpop.f32.mrb[0].mxu0
  %v10291 = vadd.f32 %v10019, %v10290
  %v10292 = vpop.f32.mrb[0].mxu0
  %v10293 = vadd.f32 %v10023, %v10292
  %v10294 = vpop.f32.mrb[0].mxu0
  %v10295 = vadd.f32 %v10019, %v10294
  %v10296 = vpop.f32.mrb[0].mxu0
  %v10297 = vadd.f32 %v10023, %v10296
  %10298 = vmatprep.mubr.bf16.mxu0 %v9967
  %10299 = vmatmul.mubr.bf16.gmra.mrb[0].mxu0 %v9966
  %v10300 = vpop.f32.mrb[0].mxu0
  %v10301 = vadd.f32 %v10019, %v10300
  %v10302 = vpop.f32.mrb[0].mxu0
  %v10303 = vadd.f32 %v10023, %v10302
  %v10304 = vpop.f32.mrb[0].mxu0
  %v10305 = vadd.f32 %v10019, %v10304
  %v10306 = vpop.f32.mrb[0].mxu0
  %v10307 = vadd.f32 %v10023, %v10306
  %10308 = vmatprep.mubr.bf16.mxu0 %v9969
  %10309 = vmatmul.mubr.bf16.gmra.mrb[0].mxu0 %v9968
  %v10310 = vpop.f32.mrb[0].mxu0
  %v10311 = vadd.f32 %v10019, %v10310
  %v10312 = vpop.f32.mrb[0].mxu0
  %v10313 = vadd.f32 %v10023, %v10312
  %v10314 = vpop.f32.mrb[0].mxu0
  %v10315 = vadd.f32 %v10019, %v10314
  %v10316 = vpop.f32.mrb[0].mxu0
  %v10317 = vadd.f32 %v10023, %v10316
  %10318 = vmatprep.mubr.bf16.mxu0 %v9971
  %10319 = vmatmul.mubr.bf16.gmra.mrb[0].mxu0 %v9970
  %v10320 = vpop.f32.mrb[0].mxu0
  %v10321 = vadd.f32 %v10019, %v10320
  %v10322 = vpop.f32.mrb[0].mxu0
  %v10323 = vadd.f32 %v10023, %v10322
  %v10324 = vpop.f32.mrb[0].mxu0
  %v10325 = vadd.f32 %v10019, %v10324
  %v10326 = vpop.f32.mrb[0].mxu0
  %v10327 = vadd.f32 %v10023, %v10326
  %10328 = vmatprep.mubr.bf16.mxu0 %v9973
  %10329 = vmatmul.mubr.bf16.gmra.mrb[0].mxu0 %v9972
  %v10330 = vpop.f32.mrb[0].mxu0
  %v10331 = vadd.f32 %v10019, %v10330
  %v10332 = vpop.f32.mrb[0].mxu0
  %v10333 = vadd.f32 %v10023, %v10332
  %v10334 = vpop.f32.mrb[0].mxu0
  %v10335 = vadd.f32 %v10019, %v10334
  %v10336 = vpop.f32.mrb[0].mxu0
  %v10337 = vadd.f32 %v10023, %v10336
  %10338 = vmatprep.mubr.bf16.mxu0 %v9975
  %10339 = vmatmul.mubr.bf16.gmra.mrb[0].mxu0 %v9974
  %v10340 = vpop.f32.mrb[0].mxu0
  %v10341 = vadd.f32 %v10019, %v10340
  %v10342 = vpop.f32.mrb[0].mxu0
  %v10343 = vadd.f32 %v10023, %v10342
  %v10344 = vpop.f32.mrb[0].mxu0
  %v10345 = vadd.f32 %v10019, %v10344
  %v10346 = vpop.f32.mrb[0].mxu0
  %v10347 = vadd.f32 %v10023, %v10346
  %10348 = vmatprep.mubr.bf16.mxu0 %v9977
  %10349 = vmatmul.mubr.bf16.gmra.mrb[0].mxu0 %v9976
  %v10350 = vpop.f32.mrb[0].mxu0
  %v10351 = vadd.f32 %v10019, %v10350
  %v10352 = vpop.f32.mrb[0].mxu0
  %v10353 = vadd.f32 %v10023, %v10352
  %v10354 = vpop.f32.mrb[0].mxu0
  %v10355 = vadd.f32 %v10019, %v10354
  %v10356 = vpop.f32.mrb[0].mxu0
  %v10357 = vadd.f32 %v10023, %v10356
  %10358 = vmatprep.mubr.bf16.mxu0 %v9979
  %10359 = vmatmul.mubr.bf16.gmra.mrb[0].mxu0 %v9978
  %v10360 = vpop.f32.mrb[0].mxu0
  %v10361 = vadd.f32 %v10019, %v10360
  %v10362 = vpop.f32.mrb[0].mxu0
  %v10363 = vadd.f32 %v10023, %v10362
  %v10364 = vpop.f32.mrb[0].mxu0
  %v10365 = vadd.f32 %v10019, %v10364
  %v10366 = vpop.f32.mrb[0].mxu0
  %v10367 = vadd.f32 %v10023, %v10366
  %10368 = vmatprep.mubr.bf16.mxu0 %v9981
  %10369 = vmatmul.mubr.bf16.gmra.mrb[0].mxu0 %v9980
  %v10370 = vpop.f32.mrb[0].mxu0
  %v10371 = vadd.f32 %v10019, %v10370
  %v10372 = vpop.f32.mrb[0].mxu0
  %v10373 = vadd.f32 %v10023, %v10372
  %v10374 = vpop.f32.mrb[0].mxu0
  %v10375 = vadd.f32 %v10019, %v10374
  %v10376 = vpop.f32.mrb[0].mxu0
  %v10377 = vadd.f32 %v10023, %v10376
  %10378 = vdwg.mxu0
  %v10379 = vmax.f32 %v10221, 0.0
  %v10380 = vmax.f32 %v10223, 0.0
  %v10381 = vmax.f32 %v10225, 0.0
  %v10382 = vmax.f32 %v10227, 0.0
  %v10383 = vmax.f32 %v10231, 0.0
  %v10384 = vmax.f32 %v10233, 0.0
  %v10385 = vmax.f32 %v10235, 0.0
  %v10386 = vmax.f32 %v10237, 0.0
  %v10387 = vmax.f32 %v10241, 0.0
  %v10388 = vmax.f32 %v10243, 0.0
  %v10389 = vmax.f32 %v10245, 0.0
  %v10390 = vmax.f32 %v10247, 0.0
  %v10391 = vmax.f32 %v10251, 0.0
  %v10392 = vmax.f32 %v10253, 0.0
  %v10393 = vmax.f32 %v10255, 0.0
  %v10394 = vmax.f32 %v10257, 0.0
  %v10395 = vmax.f32 %v10261, 0.0
  %v10396 = vmax.f32 %v10263, 0.0
  %v10397 = vmax.f32 %v10265, 0.0
  %v10398 = vmax.f32 %v10267, 0.0
  %v10399 = vmax.f32 %v10271, 0.0
  %v10400 = vmax.f32 %v10273, 0.0
  %v10401 = vmax.f32 %v10275, 0.0
  %v10402 = vmax.f32 %v10277, 0.0
  %v10403 = vmax.f32 %v10281, 0.0
  %v10404 = vmax.f32 %v10283, 0.0
  %v10405 = vmax.f32 %v10285, 0.0
  %v10406 = vmax.f32 %v10287, 0.0
  %v10407 = vmax.f32 %v10291, 0.0
  %v10408 = vmax.f32 %v10293, 0.0
  %v10409 = vmax.f32 %v10295, 0.0
  %v10410 = vmax.f32 %v10297, 0.0
  %v10411 = vmax.f32 %v10301, 0.0
  %v10412 = vmax.f32 %v10303, 0.0
  %v10413 = vmax.f32 %v10305, 0.0
  %v10414 = vmax.f32 %v10307, 0.0
  %v10415 = vmax.f32 %v10311, 0.0
  %v10416 = vmax.f32 %v10313, 0.0
  %v10417 = vmax.f32 %v10315, 0.0
  %v10418 = vmax.f32 %v10317, 0.0
  %v10419 = vmax.f32 %v10321, 0.0
  %v10420 = vmax.f32 %v10323, 0.0
  %v10421 = vmax.f32 %v10325, 0.0
  %v10422 = vmax.f32 %v10327, 0.0
  %v10423 = vmax.f32 %v10331, 0.0
  %v10424 = vmax.f32 %v10333, 0.0
  %v10425 = vmax.f32 %v10335, 0.0
  %v10426 = vmax.f32 %v10337, 0.0
  %v10427 = vmax.f32 %v10341, 0.0
  %v10428 = vmax.f32 %v10343, 0.0
  %v10429 = vmax.f32 %v10345, 0.0
  %v10430 = vmax.f32 %v10347, 0.0
  %v10431 = vmax.f32 %v10351, 0.0
  %v10432 = vmax.f32 %v10353, 0.0
  %v10433 = vmax.f32 %v10355, 0.0
  %v10434 = vmax.f32 %v10357, 0.0
  %v10435 = vmax.f32 %v10361, 0.0
  %v10436 = vmax.f32 %v10363, 0.0
  %v10437 = vmax.f32 %v10365, 0.0
  %v10438 = vmax.f32 %v10367, 0.0
  %v10439 = vmax.f32 %v10371, 0.0
  %v10440 = vmax.f32 %v10373, 0.0
  %v10441 = vmax.f32 %v10375, 0.0
  %v10442 = vmax.f32 %v10377, 0.0
  %v10443 = vpack.c.bf16 %v10381, %v10379
  %v10444 = vpack.c.bf16 %v10382, %v10380
  %v10445 = vpack.c.bf16 %v10385, %v10383
  %v10446 = vpack.c.bf16 %v10386, %v10384
  %v10447 = vpack.c.bf16 %v10389, %v10387
  %v10448 = vpack.c.bf16 %v10390, %v10388
  %v10449 = vpack.c.bf16 %v10393, %v10391
  %v10450 = vpack.c.bf16 %v10394, %v10392
  %v10451 = vpack.c.bf16 %v10397, %v10395
  %v10452 = vpack.c.bf16 %v10398, %v10396
  %v10453 = vpack.c.bf16 %v10401, %v10399
  %v10454 = vpack.c.bf16 %v10402, %v10400
  %v10455 = vpack.c.bf16 %v10405, %v10403
  %v10456 = vpack.c.bf16 %v10406, %v10404
  %v10457 = vpack.c.bf16 %v10409, %v10407
  %v10458 = vpack.c.bf16 %v10410, %v10408
  %v10459 = vpack.c.bf16 %v10413, %v10411
  %v10460 = vpack.c.bf16 %v10414, %v10412
  %v10461 = vpack.c.bf16 %v10417, %v10415
  %v10462 = vpack.c.bf16 %v10418, %v10416
  %v10463 = vpack.c.bf16 %v10421, %v10419
  %v10464 = vpack.c.bf16 %v10422, %v10420
  %v10465 = vpack.c.bf16 %v10425, %v10423
  %v10466 = vpack.c.bf16 %v10426, %v10424
  %v10467 = vpack.c.bf16 %v10429, %v10427
  %v10468 = vpack.c.bf16 %v10430, %v10428
  %v10469 = vpack.c.bf16 %v10433, %v10431
  %v10470 = vpack.c.bf16 %v10434, %v10432
  %v10471 = vpack.c.bf16 %v10437, %v10435
  %v10472 = vpack.c.bf16 %v10438, %v10436
  %v10473 = vpack.c.bf16 %v10441, %v10439
  %v10474 = vpack.c.bf16 %v10442, %v10440
  %v10475 = vld [vmem:[%s9] sm:$0xff]
  %v10476 = vld [vmem:[%s9 + $0x8] sm:$0xff]
  %v10477 = vld [vmem:[%s9 + $0x10] sm:$0xff]
  %v10478 = vld [vmem:[%s9 + $0x18] sm:$0xff]
  %v10479 = vld [vmem:[%s9 + $0x20] sm:$0xff]
  %v10480 = vld [vmem:[%s9 + $0x28] sm:$0xff]
  %v10481 = vld [vmem:[%s9 + $0x30] sm:$0xff]
  %v10482 = vld [vmem:[%s9 + $0x38] sm:$0xff]
  %v10483 = vld [vmem:[%s9 + $0x40] sm:$0xff]
  %v10484 = vld [vmem:[%s9 + $0x48] sm:$0xff]
  %v10485 = vld [vmem:[%s9 + $0x50] sm:$0xff]
  %v10486 = vld [vmem:[%s9 + $0x58] sm:$0xff]
  %v10487 = vld [vmem:[%s9 + $0x60] sm:$0xff]
  %v10488 = vld [vmem:[%s9 + $0x68] sm:$0xff]
  %v10489 = vld [vmem:[%s9 + $0x70] sm:$0xff]
  %v10490 = vld [vmem:[%s9 + $0x78] sm:$0xff]
  %v10491 = vld [vmem:[%s9 + $0x80] sm:$0xff]
  %v10492 = vld [vmem:[%s9 + $0x88] sm:$0xff]
  %v10493 = vld [vmem:[%s9 + $0x90] sm:$0xff]
  %v10494 = vld [vmem:[%s9 + $0x98] sm:$0xff]
  %v10495 = vld [vmem:[%s9 + $0xa0] sm:$0xff]
  %v10496 = vld [vmem:[%s9 + $0xa8] sm:$0xff]
  %v10497 = vld [vmem:[%s9 + $0xb0] sm:$0xff]
  %v10498 = vld [vmem:[%s9 + $0xb8] sm:$0xff]
  %v10499 = vld [vmem:[%s9 + $0xc0] sm:$0xff]
  %v10500 = vld [vmem:[%s9 + $0xc8] sm:$0xff]
  %v10501 = vld [vmem:[%s9 + $0xd0] sm:$0xff]
  %v10502 = vld [vmem:[%s9 + $0xd8] sm:$0xff]
  %v10503 = vld [vmem:[%s9 + $0xe0] sm:$0xff]
  %v10504 = vld [vmem:[%s9 + $0xe8] sm:$0xff]
  %v10505 = vld [vmem:[%s9 + $0xf0] sm:$0xff]
  %v10506 = vld [vmem:[%s9 + $0xf8] sm:$0xff]
  %v10507 = vld [vmem:[%s10] sm:$0x3]
  %v10509 = vlaneseq
  %v10510 = vshrl.u32 %v10509, 7
  %v10511 = vsub.s32 0, %v10510
  %v10512 = vrot.slane %v10507, %v10511
  %v10513 = vlaneseq
  %v10514 = vshrl.u32 %v10513, 7
  %v10515 = vsub.s32 1, %v10514
  %v10516 = vrot.slane %v10507, %v10515
  %v10551 = vunpack.c.l.b16 %v10475
  %v10552 = vunpack.c.h.b16 %v10475
  %v10553 = vunpack.c.l.b16 %v10476
  %v10554 = vunpack.c.h.b16 %v10476
  %v10555 = vunpack.c.l.b16 %v10477
  %v10556 = vunpack.c.h.b16 %v10477
  %v10557 = vunpack.c.l.b16 %v10478
  %v10558 = vunpack.c.h.b16 %v10478
  %v10559 = vunpack.c.l.b16 %v10479
  %v10560 = vunpack.c.h.b16 %v10479
  %v10561 = vunpack.c.l.b16 %v10480
  %v10562 = vunpack.c.h.b16 %v10480
  %v10563 = vunpack.c.l.b16 %v10481
  %v10564 = vunpack.c.h.b16 %v10481
  %v10565 = vunpack.c.l.b16 %v10482
  %v10566 = vunpack.c.h.b16 %v10482
  %v10567 = vunpack.c.l.b16 %v10483
  %v10568 = vunpack.c.h.b16 %v10483
  %v10569 = vunpack.c.l.b16 %v10484
  %v10570 = vunpack.c.h.b16 %v10484
  %v10571 = vunpack.c.l.b16 %v10485
  %v10572 = vunpack.c.h.b16 %v10485
  %v10573 = vunpack.c.l.b16 %v10486
  %v10574 = vunpack.c.h.b16 %v10486
  %v10575 = vunpack.c.l.b16 %v10487
  %v10576 = vunpack.c.h.b16 %v10487
  %v10577 = vunpack.c.l.b16 %v10488
  %v10578 = vunpack.c.h.b16 %v10488
  %v10579 = vunpack.c.l.b16 %v10489
  %v10580 = vunpack.c.h.b16 %v10489
  %v10581 = vunpack.c.l.b16 %v10490
  %v10582 = vunpack.c.h.b16 %v10490
  %v10583 = vunpack.c.l.b16 %v10491
  %v10584 = vunpack.c.h.b16 %v10491
  %v10585 = vunpack.c.l.b16 %v10492
  %v10586 = vunpack.c.h.b16 %v10492
  %v10587 = vunpack.c.l.b16 %v10493
  %v10588 = vunpack.c.h.b16 %v10493
  %v10589 = vunpack.c.l.b16 %v10494
  %v10590 = vunpack.c.h.b16 %v10494
  %v10591 = vunpack.c.l.b16 %v10495
  %v10592 = vunpack.c.h.b16 %v10495
  %v10593 = vunpack.c.l.b16 %v10496
  %v10594 = vunpack.c.h.b16 %v10496
  %v10595 = vunpack.c.l.b16 %v10497
  %v10596 = vunpack.c.h.b16 %v10497
  %v10597 = vunpack.c.l.b16 %v10498
  %v10598 = vunpack.c.h.b16 %v10498
  %v10599 = vunpack.c.l.b16 %v10499
  %v10600 = vunpack.c.h.b16 %v10499
  %v10601 = vunpack.c.l.b16 %v10500
  %v10602 = vunpack.c.h.b16 %v10500
  %v10603 = vunpack.c.l.b16 %v10501
  %v10604 = vunpack.c.h.b16 %v10501
  %v10605 = vunpack.c.l.b16 %v10502
  %v10606 = vunpack.c.h.b16 %v10502
  %v10607 = vunpack.c.l.b16 %v10503
  %v10608 = vunpack.c.h.b16 %v10503
  %v10609 = vunpack.c.l.b16 %v10504
  %v10610 = vunpack.c.h.b16 %v10504
  %v10611 = vunpack.c.l.b16 %v10505
  %v10612 = vunpack.c.h.b16 %v10505
  %v10613 = vunpack.c.l.b16 %v10506
  %v10614 = vunpack.c.h.b16 %v10506
  %v10615 = vpack.c.b16 %v10553, %v10551
  %v10616 = vpack.c.b16 %v10554, %v10552
  %v10617 = vpack.c.b16 %v10557, %v10555
  %v10618 = vpack.c.b16 %v10558, %v10556
  %v10619 = vpack.c.b16 %v10561, %v10559
  %v10620 = vpack.c.b16 %v10562, %v10560
  %v10621 = vpack.c.b16 %v10565, %v10563
  %v10622 = vpack.c.b16 %v10566, %v10564
  %v10623 = vpack.c.b16 %v10569, %v10567
  %v10624 = vpack.c.b16 %v10570, %v10568
  %v10625 = vpack.c.b16 %v10573, %v10571
  %v10626 = vpack.c.b16 %v10574, %v10572
  %v10627 = vpack.c.b16 %v10577, %v10575
  %v10628 = vpack.c.b16 %v10578, %v10576
  %v10629 = vpack.c.b16 %v10581, %v10579
  %v10630 = vpack.c.b16 %v10582, %v10580
  %v10631 = vpack.c.b16 %v10585, %v10583
  %v10632 = vpack.c.b16 %v10586, %v10584
  %v10633 = vpack.c.b16 %v10589, %v10587
  %v10634 = vpack.c.b16 %v10590, %v10588
  %v10635 = vpack.c.b16 %v10593, %v10591
  %v10636 = vpack.c.b16 %v10594, %v10592
  %v10637 = vpack.c.b16 %v10597, %v10595
  %v10638 = vpack.c.b16 %v10598, %v10596
  %v10639 = vpack.c.b16 %v10601, %v10599
  %v10640 = vpack.c.b16 %v10602, %v10600
  %v10641 = vpack.c.b16 %v10605, %v10603
  %v10642 = vpack.c.b16 %v10606, %v10604
  %v10643 = vpack.c.b16 %v10609, %v10607
  %v10644 = vpack.c.b16 %v10610, %v10608
  %v10645 = vpack.c.b16 %v10613, %v10611
  %v10646 = vpack.c.b16 %v10614, %v10612
  %10679 = vmatprep.subr.bf16.mxu0 %v10616
  %10680 = vmatpush1.bf16.msra.mxu0 %v10615
  %10681 = vmatprep.subr.bf16.mxu0 %v10618
  %10682 = vmatpush1.bf16.msra.mxu0 %v10617
  %10683 = vmatprep.subr.bf16.mxu0 %v10620
  %10684 = vmatpush1.bf16.msra.mxu0 %v10619
  %10685 = vmatprep.subr.bf16.mxu0 %v10622
  %10686 = vmatpush1.bf16.msra.mxu0 %v10621
  %10687 = vmatprep.subr.bf16.mxu0 %v10624
  %10688 = vmatpush1.bf16.msra.mxu0 %v10623
  %10689 = vmatprep.subr.bf16.mxu0 %v10626
  %10690 = vmatpush1.bf16.msra.mxu0 %v10625
  %10691 = vmatprep.subr.bf16.mxu0 %v10628
  %10692 = vmatpush1.bf16.msra.mxu0 %v10627
  %10693 = vmatprep.subr.bf16.mxu0 %v10630
  %10694 = vmatpush1.bf16.msra.mxu0 %v10629
  %10695 = vmatprep.subr.bf16.mxu0 %v10632
  %10696 = vmatpush1.bf16.msra.mxu0 %v10631
  %10697 = vmatprep.subr.bf16.mxu0 %v10634
  %10698 = vmatpush1.bf16.msra.mxu0 %v10633
  %10699 = vmatprep.subr.bf16.mxu0 %v10636
  %10700 = vmatpush1.bf16.msra.mxu0 %v10635
  %10701 = vmatprep.subr.bf16.mxu0 %v10638
  %10702 = vmatpush1.bf16.msra.mxu0 %v10637
  %10703 = vmatprep.subr.bf16.mxu0 %v10640
  %10704 = vmatpush1.bf16.msra.mxu0 %v10639
  %10705 = vmatprep.subr.bf16.mxu0 %v10642
  %10706 = vmatpush1.bf16.msra.mxu0 %v10641
  %10707 = vmatprep.subr.bf16.mxu0 %v10644
  %10708 = vmatpush1.bf16.msra.mxu0 %v10643
  %10709 = vmatprep.subr.bf16.mxu0 %v10646
  %10710 = vmatpush1.bf16.msra.mxu0 %v10645
  %10711 = vmatprep.mubr.bf16.mxu0 %v10444
  %10712 = vmatmul.mubr.bf16.gmra.mrb[0].mxu0 %v10443
  %v10713 = vpop.f32.mrb[0].mxu0
  %v10714 = vadd.f32 %v10512, %v10713
  %v10715 = vpop.f32.mrb[0].mxu0
  %v10716 = vadd.f32 %v10516, %v10715
  %v10717 = vpop.f32.mrb[0].mxu0
  %v10718 = vadd.f32 %v10512, %v10717
  %v10719 = vpop.f32.mrb[0].mxu0
  %v10720 = vadd.f32 %v10516, %v10719
  %10721 = vmatprep.mubr.bf16.mxu0 %v10446
  %10722 = vmatmul.mubr.bf16.gmra.mrb[0].mxu0 %v10445
  %v10723 = vpop.f32.mrb[0].mxu0
  %v10724 = vadd.f32 %v10512, %v10723
  %v10725 = vpop.f32.mrb[0].mxu0
  %v10726 = vadd.f32 %v10516, %v10725
  %v10727 = vpop.f32.mrb[0].mxu0
  %v10728 = vadd.f32 %v10512, %v10727
  %v10729 = vpop.f32.mrb[0].mxu0
  %v10730 = vadd.f32 %v10516, %v10729
  %10731 = vmatprep.mubr.bf16.mxu0 %v10448
  %10732 = vmatmul.mubr.bf16.gmra.mrb[0].mxu0 %v10447
  %v10733 = vpop.f32.mrb[0].mxu0
  %v10734 = vadd.f32 %v10512, %v10733
  %v10735 = vpop.f32.mrb[0].mxu0
  %v10736 = vadd.f32 %v10516, %v10735
  %v10737 = vpop.f32.mrb[0].mxu0
  %v10738 = vadd.f32 %v10512, %v10737
  %v10739 = vpop.f32.mrb[0].mxu0
  %v10740 = vadd.f32 %v10516, %v10739
  %10741 = vmatprep.mubr.bf16.mxu0 %v10450
  %10742 = vmatmul.mubr.bf16.gmra.mrb[0].mxu0 %v10449
  %v10743 = vpop.f32.mrb[0].mxu0
  %v10744 = vadd.f32 %v10512, %v10743
  %v10745 = vpop.f32.mrb[0].mxu0
  %v10746 = vadd.f32 %v10516, %v10745
  %v10747 = vpop.f32.mrb[0].mxu0
  %v10748 = vadd.f32 %v10512, %v10747
  %v10749 = vpop.f32.mrb[0].mxu0
  %v10750 = vadd.f32 %v10516, %v10749
  %10751 = vmatprep.mubr.bf16.mxu0 %v10452
  %10752 = vmatmul.mubr.bf16.gmra.mrb[0].mxu0 %v10451
  %v10753 = vpop.f32.mrb[0].mxu0
  %v10754 = vadd.f32 %v10512, %v10753
  %v10755 = vpop.f32.mrb[0].mxu0
  %v10756 = vadd.f32 %v10516, %v10755
  %v10757 = vpop.f32.mrb[0].mxu0
  %v10758 = vadd.f32 %v10512, %v10757
  %v10759 = vpop.f32.mrb[0].mxu0
  %v10760 = vadd.f32 %v10516, %v10759
  %10761 = vmatprep.mubr.bf16.mxu0 %v10454
  %10762 = vmatmul.mubr.bf16.gmra.mrb[0].mxu0 %v10453
  %v10763 = vpop.f32.mrb[0].mxu0
  %v10764 = vadd.f32 %v10512, %v10763
  %v10765 = vpop.f32.mrb[0].mxu0
  %v10766 = vadd.f32 %v10516, %v10765
  %v10767 = vpop.f32.mrb[0].mxu0
  %v10768 = vadd.f32 %v10512, %v10767
  %v10769 = vpop.f32.mrb[0].mxu0
  %v10770 = vadd.f32 %v10516, %v10769
  %10771 = vmatprep.mubr.bf16.mxu0 %v10456
  %10772 = vmatmul.mubr.bf16.gmra.mrb[0].mxu0 %v10455
  %v10773 = vpop.f32.mrb[0].mxu0
  %v10774 = vadd.f32 %v10512, %v10773
  %v10775 = vpop.f32.mrb[0].mxu0
  %v10776 = vadd.f32 %v10516, %v10775
  %v10777 = vpop.f32.mrb[0].mxu0
  %v10778 = vadd.f32 %v10512, %v10777
  %v10779 = vpop.f32.mrb[0].mxu0
  %v10780 = vadd.f32 %v10516, %v10779
  %10781 = vmatprep.mubr.bf16.mxu0 %v10458
  %10782 = vmatmul.mubr.bf16.gmra.mrb[0].mxu0 %v10457
  %v10783 = vpop.f32.mrb[0].mxu0
  %v10784 = vadd.f32 %v10512, %v10783
  %v10785 = vpop.f32.mrb[0].mxu0
  %v10786 = vadd.f32 %v10516, %v10785
  %v10787 = vpop.f32.mrb[0].mxu0
  %v10788 = vadd.f32 %v10512, %v10787
  %v10789 = vpop.f32.mrb[0].mxu0
  %v10790 = vadd.f32 %v10516, %v10789
  %10791 = vmatprep.mubr.bf16.mxu0 %v10460
  %10792 = vmatmul.mubr.bf16.gmra.mrb[0].mxu0 %v10459
  %v10793 = vpop.f32.mrb[0].mxu0
  %v10794 = vadd.f32 %v10512, %v10793
  %v10795 = vpop.f32.mrb[0].mxu0
  %v10796 = vadd.f32 %v10516, %v10795
  %v10797 = vpop.f32.mrb[0].mxu0
  %v10798 = vadd.f32 %v10512, %v10797
  %v10799 = vpop.f32.mrb[0].mxu0
  %v10800 = vadd.f32 %v10516, %v10799
  %10801 = vmatprep.mubr.bf16.mxu0 %v10462
  %10802 = vmatmul.mubr.bf16.gmra.mrb[0].mxu0 %v10461
  %v10803 = vpop.f32.mrb[0].mxu0
  %v10804 = vadd.f32 %v10512, %v10803
  %v10805 = vpop.f32.mrb[0].mxu0
  %v10806 = vadd.f32 %v10516, %v10805
  %v10807 = vpop.f32.mrb[0].mxu0
  %v10808 = vadd.f32 %v10512, %v10807
  %v10809 = vpop.f32.mrb[0].mxu0
  %v10810 = vadd.f32 %v10516, %v10809
  %10811 = vmatprep.mubr.bf16.mxu0 %v10464
  %10812 = vmatmul.mubr.bf16.gmra.mrb[0].mxu0 %v10463
  %v10813 = vpop.f32.mrb[0].mxu0
  %v10814 = vadd.f32 %v10512, %v10813
  %v10815 = vpop.f32.mrb[0].mxu0
  %v10816 = vadd.f32 %v10516, %v10815
  %v10817 = vpop.f32.mrb[0].mxu0
  %v10818 = vadd.f32 %v10512, %v10817
  %v10819 = vpop.f32.mrb[0].mxu0
  %v10820 = vadd.f32 %v10516, %v10819
  %10821 = vmatprep.mubr.bf16.mxu0 %v10466
  %10822 = vmatmul.mubr.bf16.gmra.mrb[0].mxu0 %v10465
  %v10823 = vpop.f32.mrb[0].mxu0
  %v10824 = vadd.f32 %v10512, %v10823
  %v10825 = vpop.f32.mrb[0].mxu0
  %v10826 = vadd.f32 %v10516, %v10825
  %v10827 = vpop.f32.mrb[0].mxu0
  %v10828 = vadd.f32 %v10512, %v10827
  %v10829 = vpop.f32.mrb[0].mxu0
  %v10830 = vadd.f32 %v10516, %v10829
  %10831 = vmatprep.mubr.bf16.mxu0 %v10468
  %10832 = vmatmul.mubr.bf16.gmra.mrb[0].mxu0 %v10467
  %v10833 = vpop.f32.mrb[0].mxu0
  %v10834 = vadd.f32 %v10512, %v10833
  %v10835 = vpop.f32.mrb[0].mxu0
  %v10836 = vadd.f32 %v10516, %v10835
  %v10837 = vpop.f32.mrb[0].mxu0
  %v10838 = vadd.f32 %v10512, %v10837
  %v10839 = vpop.f32.mrb[0].mxu0
  %v10840 = vadd.f32 %v10516, %v10839
  %10841 = vmatprep.mubr.bf16.mxu0 %v10470
  %10842 = vmatmul.mubr.bf16.gmra.mrb[0].mxu0 %v10469
  %v10843 = vpop.f32.mrb[0].mxu0
  %v10844 = vadd.f32 %v10512, %v10843
  %v10845 = vpop.f32.mrb[0].mxu0
  %v10846 = vadd.f32 %v10516, %v10845
  %v10847 = vpop.f32.mrb[0].mxu0
  %v10848 = vadd.f32 %v10512, %v10847
  %v10849 = vpop.f32.mrb[0].mxu0
  %v10850 = vadd.f32 %v10516, %v10849
  %10851 = vmatprep.mubr.bf16.mxu0 %v10472
  %10852 = vmatmul.mubr.bf16.gmra.mrb[0].mxu0 %v10471
  %v10853 = vpop.f32.mrb[0].mxu0
  %v10854 = vadd.f32 %v10512, %v10853
  %v10855 = vpop.f32.mrb[0].mxu0
  %v10856 = vadd.f32 %v10516, %v10855
  %v10857 = vpop.f32.mrb[0].mxu0
  %v10858 = vadd.f32 %v10512, %v10857
  %v10859 = vpop.f32.mrb[0].mxu0
  %v10860 = vadd.f32 %v10516, %v10859
  %10861 = vmatprep.mubr.bf16.mxu0 %v10474
  %10862 = vmatmul.mubr.bf16.gmra.mrb[0].mxu0 %v10473
  %v10863 = vpop.f32.mrb[0].mxu0
  %v10864 = vadd.f32 %v10512, %v10863
  %v10865 = vpop.f32.mrb[0].mxu0
  %v10866 = vadd.f32 %v10516, %v10865
  %v10867 = vpop.f32.mrb[0].mxu0
  %v10868 = vadd.f32 %v10512, %v10867
  %v10869 = vpop.f32.mrb[0].mxu0
  %v10870 = vadd.f32 %v10516, %v10869
  %10871 = vdwg.mxu0
  %v10872 = vmax.f32 %v10714, 0.0
  %v10873 = vmax.f32 %v10716, 0.0
  %v10874 = vmax.f32 %v10718, 0.0
  %v10875 = vmax.f32 %v10720, 0.0
  %v10876 = vmax.f32 %v10724, 0.0
  %v10877 = vmax.f32 %v10726, 0.0
  %v10878 = vmax.f32 %v10728, 0.0
  %v10879 = vmax.f32 %v10730, 0.0
  %v10880 = vmax.f32 %v10734, 0.0
  %v10881 = vmax.f32 %v10736, 0.0
  %v10882 = vmax.f32 %v10738, 0.0
  %v10883 = vmax.f32 %v10740, 0.0
  %v10884 = vmax.f32 %v10744, 0.0
  %v10885 = vmax.f32 %v10746, 0.0
  %v10886 = vmax.f32 %v10748, 0.0
  %v10887 = vmax.f32 %v10750, 0.0
  %v10888 = vmax.f32 %v10754, 0.0
  %v10889 = vmax.f32 %v10756, 0.0
  %v10890 = vmax.f32 %v10758, 0.0
  %v10891 = vmax.f32 %v10760, 0.0
  %v10892 = vmax.f32 %v10764, 0.0
  %v10893 = vmax.f32 %v10766, 0.0
  %v10894 = vmax.f32 %v10768, 0.0
  %v10895 = vmax.f32 %v10770, 0.0
  %v10896 = vmax.f32 %v10774, 0.0
  %v10897 = vmax.f32 %v10776, 0.0
  %v10898 = vmax.f32 %v10778, 0.0
  %v10899 = vmax.f32 %v10780, 0.0
  %v10900 = vmax.f32 %v10784, 0.0
  %v10901 = vmax.f32 %v10786, 0.0
  %v10902 = vmax.f32 %v10788, 0.0
  %v10903 = vmax.f32 %v10790, 0.0
  %v10904 = vmax.f32 %v10794, 0.0
  %v10905 = vmax.f32 %v10796, 0.0
  %v10906 = vmax.f32 %v10798, 0.0
  %v10907 = vmax.f32 %v10800, 0.0
  %v10908 = vmax.f32 %v10804, 0.0
  %v10909 = vmax.f32 %v10806, 0.0
  %v10910 = vmax.f32 %v10808, 0.0
  %v10911 = vmax.f32 %v10810, 0.0
  %v10912 = vmax.f32 %v10814, 0.0
  %v10913 = vmax.f32 %v10816, 0.0
  %v10914 = vmax.f32 %v10818, 0.0
  %v10915 = vmax.f32 %v10820, 0.0
  %v10916 = vmax.f32 %v10824, 0.0
  %v10917 = vmax.f32 %v10826, 0.0
  %v10918 = vmax.f32 %v10828, 0.0
  %v10919 = vmax.f32 %v10830, 0.0
  %v10920 = vmax.f32 %v10834, 0.0
  %v10921 = vmax.f32 %v10836, 0.0
  %v10922 = vmax.f32 %v10838, 0.0
  %v10923 = vmax.f32 %v10840, 0.0
  %v10924 = vmax.f32 %v10844, 0.0
  %v10925 = vmax.f32 %v10846, 0.0
  %v10926 = vmax.f32 %v10848, 0.0
  %v10927 = vmax.f32 %v10850, 0.0
  %v10928 = vmax.f32 %v10854, 0.0
  %v10929 = vmax.f32 %v10856, 0.0
  %v10930 = vmax.f32 %v10858, 0.0
  %v10931 = vmax.f32 %v10860, 0.0
  %v10932 = vmax.f32 %v10864, 0.0
  %v10933 = vmax.f32 %v10866, 0.0
  %v10934 = vmax.f32 %v10868, 0.0
  %v10935 = vmax.f32 %v10870, 0.0
  %v10936 = vpack.c.bf16 %v10874, %v10872
  %v10937 = vpack.c.bf16 %v10875, %v10873
  %v10938 = vpack.c.bf16 %v10878, %v10876
  %v10939 = vpack.c.bf16 %v10879, %v10877
  %v10940 = vpack.c.bf16 %v10882, %v10880
  %v10941 = vpack.c.bf16 %v10883, %v10881
  %v10942 = vpack.c.bf16 %v10886, %v10884
  %v10943 = vpack.c.bf16 %v10887, %v10885
  %v10944 = vpack.c.bf16 %v10890, %v10888
  %v10945 = vpack.c.bf16 %v10891, %v10889
  %v10946 = vpack.c.bf16 %v10894, %v10892
  %v10947 = vpack.c.bf16 %v10895, %v10893
  %v10948 = vpack.c.bf16 %v10898, %v10896
  %v10949 = vpack.c.bf16 %v10899, %v10897
  %v10950 = vpack.c.bf16 %v10902, %v10900
  %v10951 = vpack.c.bf16 %v10903, %v10901
  %v10952 = vpack.c.bf16 %v10906, %v10904
  %v10953 = vpack.c.bf16 %v10907, %v10905
  %v10954 = vpack.c.bf16 %v10910, %v10908
  %v10955 = vpack.c.bf16 %v10911, %v10909
  %v10956 = vpack.c.bf16 %v10914, %v10912
  %v10957 = vpack.c.bf16 %v10915, %v10913
  %v10958 = vpack.c.bf16 %v10918, %v10916
  %v10959 = vpack.c.bf16 %v10919, %v10917
  %v10960 = vpack.c.bf16 %v10922, %v10920
  %v10961 = vpack.c.bf16 %v10923, %v10921
  %v10962 = vpack.c.bf16 %v10926, %v10924
  %v10963 = vpack.c.bf16 %v10927, %v10925
  %v10964 = vpack.c.bf16 %v10930, %v10928
  %v10965 = vpack.c.bf16 %v10931, %v10929
  %v10966 = vpack.c.bf16 %v10934, %v10932
  %v10967 = vpack.c.bf16 %v10935, %v10933
  %v10968 = vld [vmem:[%s11] sm:$0xf]
  %v10969 = vld [vmem:[%s11 + $0x4] sm:$0xf]
  %v10970 = vld [vmem:[%s11 + $0x8] sm:$0xf]
  %v10971 = vld [vmem:[%s11 + $0xc] sm:$0xf]
  %v10972 = vld [vmem:[%s11 + $0x10] sm:$0xf]
  %v10973 = vld [vmem:[%s11 + $0x14] sm:$0xf]
  %v10974 = vld [vmem:[%s11 + $0x18] sm:$0xf]
  %v10975 = vld [vmem:[%s11 + $0x1c] sm:$0xf]
  %v10976 = vld [vmem:[%s11 + $0x20] sm:$0xf]
  %v10977 = vld [vmem:[%s11 + $0x24] sm:$0xf]
  %v10978 = vld [vmem:[%s11 + $0x28] sm:$0xf]
  %v10979 = vld [vmem:[%s11 + $0x2c] sm:$0xf]
  %v10980 = vld [vmem:[%s11 + $0x30] sm:$0xf]
  %v10981 = vld [vmem:[%s11 + $0x34] sm:$0xf]
  %v10982 = vld [vmem:[%s11 + $0x38] sm:$0xf]
  %v10983 = vld [vmem:[%s11 + $0x3c] sm:$0xf]
  %v10984 = vld [vmem:[%s11 + $0x40] sm:$0xf]
  %v10985 = vld [vmem:[%s11 + $0x44] sm:$0xf]
  %v10986 = vld [vmem:[%s11 + $0x48] sm:$0xf]
  %v10987 = vld [vmem:[%s11 + $0x4c] sm:$0xf]
  %v10988 = vld [vmem:[%s11 + $0x50] sm:$0xf]
  %v10989 = vld [vmem:[%s11 + $0x54] sm:$0xf]
  %v10990 = vld [vmem:[%s11 + $0x58] sm:$0xf]
  %v10991 = vld [vmem:[%s11 + $0x5c] sm:$0xf]
  %v10992 = vld [vmem:[%s11 + $0x60] sm:$0xf]
  %v10993 = vld [vmem:[%s11 + $0x64] sm:$0xf]
  %v10994 = vld [vmem:[%s11 + $0x68] sm:$0xf]
  %v10995 = vld [vmem:[%s11 + $0x6c] sm:$0xf]
  %v10996 = vld [vmem:[%s11 + $0x70] sm:$0xf]
  %v10997 = vld [vmem:[%s11 + $0x74] sm:$0xf]
  %v10998 = vld [vmem:[%s11 + $0x78] sm:$0xf]
  %v10999 = vld [vmem:[%s11 + $0x7c] sm:$0xf]
  %v11000 = vld [vmem:[%s12] sm:$0x1]
  %v11002 = vlaneseq
  %v11003 = vshrl.u32 %v11002, 7
  %v11004 = vsub.s32 0, %v11003
  %v11005 = vrot.slane %v11000, %v11004
  %v11039 = vunpack.c.l.b16 %v10968
  %v11040 = vunpack.c.l.b16 %v10969
  %v11041 = vunpack.c.l.b16 %v10970
  %v11042 = vunpack.c.l.b16 %v10971
  %v11043 = vunpack.c.l.b16 %v10972
  %v11044 = vunpack.c.l.b16 %v10973
  %v11045 = vunpack.c.l.b16 %v10974
  %v11046 = vunpack.c.l.b16 %v10975
  %v11047 = vunpack.c.l.b16 %v10976
  %v11048 = vunpack.c.l.b16 %v10977
  %v11049 = vunpack.c.l.b16 %v10978
  %v11050 = vunpack.c.l.b16 %v10979
  %v11051 = vunpack.c.l.b16 %v10980
  %v11052 = vunpack.c.l.b16 %v10981
  %v11053 = vunpack.c.l.b16 %v10982
  %v11054 = vunpack.c.l.b16 %v10983
  %v11055 = vunpack.c.l.b16 %v10984
  %v11056 = vunpack.c.l.b16 %v10985
  %v11057 = vunpack.c.l.b16 %v10986
  %v11058 = vunpack.c.l.b16 %v10987
  %v11059 = vunpack.c.l.b16 %v10988
  %v11060 = vunpack.c.l.b16 %v10989
  %v11061 = vunpack.c.l.b16 %v10990
  %v11062 = vunpack.c.l.b16 %v10991
  %v11063 = vunpack.c.l.b16 %v10992
  %v11064 = vunpack.c.l.b16 %v10993
  %v11065 = vunpack.c.l.b16 %v10994
  %v11066 = vunpack.c.l.b16 %v10995
  %v11067 = vunpack.c.l.b16 %v10996
  %v11068 = vunpack.c.l.b16 %v10997
  %v11069 = vunpack.c.l.b16 %v10998
  %v11070 = vunpack.c.l.b16 %v10999
  %v11071 = vpack.c.b16 %v11040, %v11039
  %v11072 = vpack.c.b16 %v11042, %v11041
  %v11073 = vpack.c.b16 %v11044, %v11043
  %v11074 = vpack.c.b16 %v11046, %v11045
  %v11075 = vpack.c.b16 %v11048, %v11047
  %v11076 = vpack.c.b16 %v11050, %v11049
  %v11077 = vpack.c.b16 %v11052, %v11051
  %v11078 = vpack.c.b16 %v11054, %v11053
  %v11079 = vpack.c.b16 %v11056, %v11055
  %v11080 = vpack.c.b16 %v11058, %v11057
  %v11081 = vpack.c.b16 %v11060, %v11059
  %v11082 = vpack.c.b16 %v11062, %v11061
  %v11083 = vpack.c.b16 %v11064, %v11063
  %v11084 = vpack.c.b16 %v11066, %v11065
  %v11085 = vpack.c.b16 %v11068, %v11067
  %v11086 = vpack.c.b16 %v11070, %v11069
  %11103 = vmatprep.subr.bf16.mxu0 0
  %11104 = vmatpush1.bf16.msra.mxu0 %v11071
  %11105 = vmatprep.subr.bf16.mxu0 0
  %11106 = vmatpush1.bf16.msra.mxu0 %v11072
  %11107 = vmatprep.subr.bf16.mxu0 0
  %11108 = vmatpush1.bf16.msra.mxu0 %v11073
  %11109 = vmatprep.subr.bf16.mxu0 0
  %11110 = vmatpush1.bf16.msra.mxu0 %v11074
  %11111 = vmatprep.subr.bf16.mxu0 0
  %11112 = vmatpush1.bf16.msra.mxu0 %v11075
  %11113 = vmatprep.subr.bf16.mxu0 0
  %11114 = vmatpush1.bf16.msra.mxu0 %v11076
  %11115 = vmatprep.subr.bf16.mxu0 0
  %11116 = vmatpush1.bf16.msra.mxu0 %v11077
  %11117 = vmatprep.subr.bf16.mxu0 0
  %11118 = vmatpush1.bf16.msra.mxu0 %v11078
  %11119 = vmatprep.subr.bf16.mxu0 0
  %11120 = vmatpush1.bf16.msra.mxu0 %v11079
  %11121 = vmatprep.subr.bf16.mxu0 0
  %11122 = vmatpush1.bf16.msra.mxu0 %v11080
  %11123 = vmatprep.subr.bf16.mxu0 0
  %11124 = vmatpush1.bf16.msra.mxu0 %v11081
  %11125 = vmatprep.subr.bf16.mxu0 0
  %11126 = vmatpush1.bf16.msra.mxu0 %v11082
  %11127 = vmatprep.subr.bf16.mxu0 0
  %11128 = vmatpush1.bf16.msra.mxu0 %v11083
  %11129 = vmatprep.subr.bf16.mxu0 0
  %11130 = vmatpush1.bf16.msra.mxu0 %v11084
  %11131 = vmatprep.subr.bf16.mxu0 0
  %11132 = vmatpush1.bf16.msra.mxu0 %v11085
  %11133 = vmatprep.subr.bf16.mxu0 0
  %11134 = vmatpush1.bf16.msra.mxu0 %v11086
  %11135 = vmatprep.mubr.bf16.mxu0 %v10937
  %11136 = vmatmul.mubr.bf16.gmra.mrb[0].mxu0 %v10936
  %v11137 = vpop.f32.mrb[0].mxu0
  %v11138 = vadd.f32 %v11005, %v11137
  %v11139 = vpop.f32.mrb[0].mxu0
  %v11140 = vpop.f32.mrb[0].mxu0
  %v11141 = vadd.f32 %v11005, %v11140
  %v11142 = vpop.f32.mrb[0].mxu0
  %11143 = vmatprep.mubr.bf16.mxu0 %v10939
  %11144 = vmatmul.mubr.bf16.gmra.mrb[0].mxu0 %v10938
  %v11145 = vpop.f32.mrb[0].mxu0
  %v11146 = vadd.f32 %v11005, %v11145
  %v11147 = vpop.f32.mrb[0].mxu0
  %v11148 = vpop.f32.mrb[0].mxu0
  %v11149 = vadd.f32 %v11005, %v11148
  %v11150 = vpop.f32.mrb[0].mxu0
  %11151 = vmatprep.mubr.bf16.mxu0 %v10941
  %11152 = vmatmul.mubr.bf16.gmra.mrb[0].mxu0 %v10940
  %v11153 = vpop.f32.mrb[0].mxu0
  %v11154 = vadd.f32 %v11005, %v11153
  %v11155 = vpop.f32.mrb[0].mxu0
  %v11156 = vpop.f32.mrb[0].mxu0
  %v11157 = vadd.f32 %v11005, %v11156
  %v11158 = vpop.f32.mrb[0].mxu0
  %11159 = vmatprep.mubr.bf16.mxu0 %v10943
  %11160 = vmatmul.mubr.bf16.gmra.mrb[0].mxu0 %v10942
  %v11161 = vpop.f32.mrb[0].mxu0
  %v11162 = vadd.f32 %v11005, %v11161
  %v11163 = vpop.f32.mrb[0].mxu0
  %v11164 = vpop.f32.mrb[0].mxu0
  %v11165 = vadd.f32 %v11005, %v11164
  %v11166 = vpop.f32.mrb[0].mxu0
  %11167 = vmatprep.mubr.bf16.mxu0 %v10945
  %11168 = vmatmul.mubr.bf16.gmra.mrb[0].mxu0 %v10944
  %v11169 = vpop.f32.mrb[0].mxu0
  %v11170 = vadd.f32 %v11005, %v11169
  %v11171 = vpop.f32.mrb[0].mxu0
  %v11172 = vpop.f32.mrb[0].mxu0
  %v11173 = vadd.f32 %v11005, %v11172
  %v11174 = vpop.f32.mrb[0].mxu0
  %11175 = vmatprep.mubr.bf16.mxu0 %v10947
  %11176 = vmatmul.mubr.bf16.gmra.mrb[0].mxu0 %v10946
  %v11177 = vpop.f32.mrb[0].mxu0
  %v11178 = vadd.f32 %v11005, %v11177
  %v11179 = vpop.f32.mrb[0].mxu0
  %v11180 = vpop.f32.mrb[0].mxu0
  %v11181 = vadd.f32 %v11005, %v11180
  %v11182 = vpop.f32.mrb[0].mxu0
  %11183 = vmatprep.mubr.bf16.mxu0 %v10949
  %11184 = vmatmul.mubr.bf16.gmra.mrb[0].mxu0 %v10948
  %v11185 = vpop.f32.mrb[0].mxu0
  %v11186 = vadd.f32 %v11005, %v11185
  %v11187 = vpop.f32.mrb[0].mxu0
  %v11188 = vpop.f32.mrb[0].mxu0
  %v11189 = vadd.f32 %v11005, %v11188
  %v11190 = vpop.f32.mrb[0].mxu0
  %11191 = vmatprep.mubr.bf16.mxu0 %v10951
  %11192 = vmatmul.mubr.bf16.gmra.mrb[0].mxu0 %v10950
  %v11193 = vpop.f32.mrb[0].mxu0
  %v11194 = vadd.f32 %v11005, %v11193
  %v11195 = vpop.f32.mrb[0].mxu0
  %v11196 = vpop.f32.mrb[0].mxu0
  %v11197 = vadd.f32 %v11005, %v11196
  %v11198 = vpop.f32.mrb[0].mxu0
  %11199 = vmatprep.mubr.bf16.mxu0 %v10953
  %11200 = vmatmul.mubr.bf16.gmra.mrb[0].mxu0 %v10952
  %v11201 = vpop.f32.mrb[0].mxu0
  %v11202 = vadd.f32 %v11005, %v11201
  %v11203 = vpop.f32.mrb[0].mxu0
  %v11204 = vpop.f32.mrb[0].mxu0
  %v11205 = vadd.f32 %v11005, %v11204
  %v11206 = vpop.f32.mrb[0].mxu0
  %11207 = vmatprep.mubr.bf16.mxu0 %v10955
  %11208 = vmatmul.mubr.bf16.gmra.mrb[0].mxu0 %v10954
  %v11209 = vpop.f32.mrb[0].mxu0
  %v11210 = vadd.f32 %v11005, %v11209
  %v11211 = vpop.f32.mrb[0].mxu0
  %v11212 = vpop.f32.mrb[0].mxu0
  %v11213 = vadd.f32 %v11005, %v11212
  %v11214 = vpop.f32.mrb[0].mxu0
  %11215 = vmatprep.mubr.bf16.mxu0 %v10957
  %11216 = vmatmul.mubr.bf16.gmra.mrb[0].mxu0 %v10956
  %v11217 = vpop.f32.mrb[0].mxu0
  %v11218 = vadd.f32 %v11005, %v11217
  %v11219 = vpop.f32.mrb[0].mxu0
  %v11220 = vpop.f32.mrb[0].mxu0
  %v11221 = vadd.f32 %v11005, %v11220
  %v11222 = vpop.f32.mrb[0].mxu0
  %11223 = vmatprep.mubr.bf16.mxu0 %v10959
  %11224 = vmatmul.mubr.bf16.gmra.mrb[0].mxu0 %v10958
  %v11225 = vpop.f32.mrb[0].mxu0
  %v11226 = vadd.f32 %v11005, %v11225
  %v11227 = vpop.f32.mrb[0].mxu0
  %v11228 = vpop.f32.mrb[0].mxu0
  %v11229 = vadd.f32 %v11005, %v11228
  %v11230 = vpop.f32.mrb[0].mxu0
  %11231 = vmatprep.mubr.bf16.mxu0 %v10961
  %11232 = vmatmul.mubr.bf16.gmra.mrb[0].mxu0 %v10960
  %v11233 = vpop.f32.mrb[0].mxu0
  %v11234 = vadd.f32 %v11005, %v11233
  %v11235 = vpop.f32.mrb[0].mxu0
  %v11236 = vpop.f32.mrb[0].mxu0
  %v11237 = vadd.f32 %v11005, %v11236
  %v11238 = vpop.f32.mrb[0].mxu0
  %11239 = vmatprep.mubr.bf16.mxu0 %v10963
  %11240 = vmatmul.mubr.bf16.gmra.mrb[0].mxu0 %v10962
  %v11241 = vpop.f32.mrb[0].mxu0
  %v11242 = vadd.f32 %v11005, %v11241
  %v11243 = vpop.f32.mrb[0].mxu0
  %v11244 = vpop.f32.mrb[0].mxu0
  %v11245 = vadd.f32 %v11005, %v11244
  %v11246 = vpop.f32.mrb[0].mxu0
  %11247 = vmatprep.mubr.bf16.mxu0 %v10965
  %11248 = vmatmul.mubr.bf16.gmra.mrb[0].mxu0 %v10964
  %v11249 = vpop.f32.mrb[0].mxu0
  %v11250 = vadd.f32 %v11005, %v11249
  %v11251 = vpop.f32.mrb[0].mxu0
  %v11252 = vpop.f32.mrb[0].mxu0
  %v11253 = vadd.f32 %v11005, %v11252
  %v11254 = vpop.f32.mrb[0].mxu0
  %11255 = vmatprep.mubr.bf16.mxu0 %v10967
  %11256 = vmatmul.mubr.bf16.gmra.mrb[0].mxu0 %v10966
  %v11257 = vpop.f32.mrb[0].mxu0
  %v11258 = vadd.f32 %v11005, %v11257
  %v11259 = vpop.f32.mrb[0].mxu0
  %v11260 = vpop.f32.mrb[0].mxu0
  %v11261 = vadd.f32 %v11005, %v11260
  %v11262 = vpop.f32.mrb[0].mxu0
  %11263 = vdwg.mxu0
  %v11264 = vmax.f32 %v11138, 0.0
  %v11265 = vmax.f32 %v11141, 0.0
  %v11266 = vmax.f32 %v11146, 0.0
  %v11267 = vmax.f32 %v11149, 0.0
  %v11268 = vmax.f32 %v11154, 0.0
  %v11269 = vmax.f32 %v11157, 0.0
  %v11270 = vmax.f32 %v11162, 0.0
  %v11271 = vmax.f32 %v11165, 0.0
  %v11272 = vmax.f32 %v11170, 0.0
  %v11273 = vmax.f32 %v11173, 0.0
  %v11274 = vmax.f32 %v11178, 0.0
  %v11275 = vmax.f32 %v11181, 0.0
  %v11276 = vmax.f32 %v11186, 0.0
  %v11277 = vmax.f32 %v11189, 0.0
  %v11278 = vmax.f32 %v11194, 0.0
  %v11279 = vmax.f32 %v11197, 0.0
  %v11280 = vmax.f32 %v11202, 0.0
  %v11281 = vmax.f32 %v11205, 0.0
  %v11282 = vmax.f32 %v11210, 0.0
  %v11283 = vmax.f32 %v11213, 0.0
  %v11284 = vmax.f32 %v11218, 0.0
  %v11285 = vmax.f32 %v11221, 0.0
  %v11286 = vmax.f32 %v11226, 0.0
  %v11287 = vmax.f32 %v11229, 0.0
  %v11288 = vmax.f32 %v11234, 0.0
  %v11289 = vmax.f32 %v11237, 0.0
  %v11290 = vmax.f32 %v11242, 0.0
  %v11291 = vmax.f32 %v11245, 0.0
  %v11292 = vmax.f32 %v11250, 0.0
  %v11293 = vmax.f32 %v11253, 0.0
  %v11294 = vmax.f32 %v11258, 0.0
  %v11295 = vmax.f32 %v11261, 0.0
  %v11296 = vpack.c.bf16 %v11265, %v11264
  %v11297 = vpack.c.bf16 %v11267, %v11266
  %v11298 = vpack.c.bf16 %v11269, %v11268
  %v11299 = vpack.c.bf16 %v11271, %v11270
  %v11300 = vpack.c.bf16 %v11273, %v11272
  %v11301 = vpack.c.bf16 %v11275, %v11274
  %v11302 = vpack.c.bf16 %v11277, %v11276
  %v11303 = vpack.c.bf16 %v11279, %v11278
  %v11304 = vpack.c.bf16 %v11281, %v11280
  %v11305 = vpack.c.bf16 %v11283, %v11282
  %v11306 = vpack.c.bf16 %v11285, %v11284
  %v11307 = vpack.c.bf16 %v11287, %v11286
  %v11308 = vpack.c.bf16 %v11289, %v11288
  %v11309 = vpack.c.bf16 %v11291, %v11290
  %v11310 = vpack.c.bf16 %v11293, %v11292
  %v11311 = vpack.c.bf16 %v11295, %v11294
  %v11312 = vld [vmem:[%s13] sm:$0xf]
  %v11313 = vld [vmem:[%s13 + $0x4] sm:$0xf]
  %v11314 = vld [vmem:[%s13 + $0x8] sm:$0xf]
  %v11315 = vld [vmem:[%s13 + $0xc] sm:$0xf]
  %v11316 = vld [vmem:[%s13 + $0x10] sm:$0xf]
  %v11317 = vld [vmem:[%s13 + $0x14] sm:$0xf]
  %v11318 = vld [vmem:[%s13 + $0x18] sm:$0xf]
  %v11319 = vld [vmem:[%s13 + $0x1c] sm:$0xf]
  %v11320 = vld [vmem:[%s13 + $0x20] sm:$0xf]
  %v11321 = vld [vmem:[%s13 + $0x24] sm:$0xf]
  %v11322 = vld [vmem:[%s13 + $0x28] sm:$0xf]
  %v11323 = vld [vmem:[%s13 + $0x2c] sm:$0xf]
  %v11324 = vld [vmem:[%s13 + $0x30] sm:$0xf]
  %v11325 = vld [vmem:[%s13 + $0x34] sm:$0xf]
  %v11326 = vld [vmem:[%s13 + $0x38] sm:$0xf]
  %v11327 = vld [vmem:[%s13 + $0x3c] sm:$0xf]
  %v11328 = vld [vmem:[%s14] sm:$0x1]
  %v11330 = vlaneseq
  %v11331 = vshrl.u32 %v11330, 7
  %v11332 = vsub.s32 0, %v11331
  %v11333 = vrot.slane %v11328, %v11332
  %v11351 = vunpack.c.l.b16 %v11312
  %v11352 = vunpack.c.l.b16 %v11313
  %v11353 = vunpack.c.l.b16 %v11314
  %v11354 = vunpack.c.l.b16 %v11315
  %v11355 = vunpack.c.l.b16 %v11316
  %v11356 = vunpack.c.l.b16 %v11317
  %v11357 = vunpack.c.l.b16 %v11318
  %v11358 = vunpack.c.l.b16 %v11319
  %v11359 = vunpack.c.l.b16 %v11320
  %v11360 = vunpack.c.l.b16 %v11321
  %v11361 = vunpack.c.l.b16 %v11322
  %v11362 = vunpack.c.l.b16 %v11323
  %v11363 = vunpack.c.l.b16 %v11324
  %v11364 = vunpack.c.l.b16 %v11325
  %v11365 = vunpack.c.l.b16 %v11326
  %v11366 = vunpack.c.l.b16 %v11327
  %v11367 = vpack.c.b16 %v11352, %v11351
  %v11368 = vpack.c.b16 %v11354, %v11353
  %v11369 = vpack.c.b16 %v11356, %v11355
  %v11370 = vpack.c.b16 %v11358, %v11357
  %v11371 = vpack.c.b16 %v11360, %v11359
  %v11372 = vpack.c.b16 %v11362, %v11361
  %v11373 = vpack.c.b16 %v11364, %v11363
  %v11374 = vpack.c.b16 %v11366, %v11365
  %11383 = vmatprep.subr.bf16.mxu0 0
  %11384 = vmatpush1.bf16.msra.mxu0 %v11367
  %11385 = vmatprep.subr.bf16.mxu0 0
  %11386 = vmatpush1.bf16.msra.mxu0 %v11368
  %11387 = vmatprep.subr.bf16.mxu0 0
  %11388 = vmatpush1.bf16.msra.mxu0 %v11369
  %11389 = vmatprep.subr.bf16.mxu0 0
  %11390 = vmatpush1.bf16.msra.mxu0 %v11370
  %11391 = vmatprep.subr.bf16.mxu0 0
  %11392 = vmatpush1.bf16.msra.mxu0 %v11371
  %11393 = vmatprep.subr.bf16.mxu0 0
  %11394 = vmatpush1.bf16.msra.mxu0 %v11372
  %11395 = vmatprep.subr.bf16.mxu0 0
  %11396 = vmatpush1.bf16.msra.mxu0 %v11373
  %11397 = vmatprep.subr.bf16.mxu0 0
  %11398 = vmatpush1.bf16.msra.mxu0 %v11374
  %11399 = vmatprep.subr.bf16.mxu0 0
  %11400 = vmatpush1.bf16.msra.mxu0 0
  %11401 = vmatprep.subr.bf16.mxu0 0
  %11402 = vmatpush1.bf16.msra.mxu0 0
  %11403 = vmatprep.subr.bf16.mxu0 0
  %11404 = vmatpush1.bf16.msra.mxu0 0
  %11405 = vmatprep.subr.bf16.mxu0 0
  %11406 = vmatpush1.bf16.msra.mxu0 0
  %11407 = vmatprep.subr.bf16.mxu0 0
  %11408 = vmatpush1.bf16.msra.mxu0 0
  %11409 = vmatprep.subr.bf16.mxu0 0
  %11410 = vmatpush1.bf16.msra.mxu0 0
  %11411 = vmatprep.subr.bf16.mxu0 0
  %11412 = vmatpush1.bf16.msra.mxu0 0
  %11413 = vmatprep.subr.bf16.mxu0 0
  %11414 = vmatpush1.bf16.msra.mxu0 0
  %11415 = vmatprep.mubr.bf16.mxu0 0
  %11416 = vmatmul.mubr.bf16.gmra.mrb[0].mxu0 %v11296
  %v11417 = vpop.f32.mrb[0].mxu0
  %v11418 = vadd.f32 %v11333, %v11417
  %v11419 = vpop.f32.mrb[0].mxu0
  %v11420 = vpop.f32.mrb[0].mxu0
  %v11421 = vadd.f32 %v11333, %v11420
  %v11422 = vpop.f32.mrb[0].mxu0
  %11423 = vmatprep.mubr.bf16.mxu0 0
  %11424 = vmatmul.mubr.bf16.gmra.mrb[0].mxu0 %v11297
  %v11425 = vpop.f32.mrb[0].mxu0
  %v11426 = vadd.f32 %v11333, %v11425
  %v11427 = vpop.f32.mrb[0].mxu0
  %v11428 = vpop.f32.mrb[0].mxu0
  %v11429 = vadd.f32 %v11333, %v11428
  %v11430 = vpop.f32.mrb[0].mxu0
  %11431 = vmatprep.mubr.bf16.mxu0 0
  %11432 = vmatmul.mubr.bf16.gmra.mrb[0].mxu0 %v11298
  %v11433 = vpop.f32.mrb[0].mxu0
  %v11434 = vadd.f32 %v11333, %v11433
  %v11435 = vpop.f32.mrb[0].mxu0
  %v11436 = vpop.f32.mrb[0].mxu0
  %v11437 = vadd.f32 %v11333, %v11436
  %v11438 = vpop.f32.mrb[0].mxu0
  %11439 = vmatprep.mubr.bf16.mxu0 0
  %11440 = vmatmul.mubr.bf16.gmra.mrb[0].mxu0 %v11299
  %v11441 = vpop.f32.mrb[0].mxu0
  %v11442 = vadd.f32 %v11333, %v11441
  %v11443 = vpop.f32.mrb[0].mxu0
  %v11444 = vpop.f32.mrb[0].mxu0
  %v11445 = vadd.f32 %v11333, %v11444
  %v11446 = vpop.f32.mrb[0].mxu0
  %11447 = vmatprep.mubr.bf16.mxu0 0
  %11448 = vmatmul.mubr.bf16.gmra.mrb[0].mxu0 %v11300
  %v11449 = vpop.f32.mrb[0].mxu0
  %v11450 = vadd.f32 %v11333, %v11449
  %v11451 = vpop.f32.mrb[0].mxu0
  %v11452 = vpop.f32.mrb[0].mxu0
  %v11453 = vadd.f32 %v11333, %v11452
  %v11454 = vpop.f32.mrb[0].mxu0
  %11455 = vmatprep.mubr.bf16.mxu0 0
  %11456 = vmatmul.mubr.bf16.gmra.mrb[0].mxu0 %v11301
  %v11457 = vpop.f32.mrb[0].mxu0
  %v11458 = vadd.f32 %v11333, %v11457
  %v11459 = vpop.f32.mrb[0].mxu0
  %v11460 = vpop.f32.mrb[0].mxu0
  %v11461 = vadd.f32 %v11333, %v11460
  %v11462 = vpop.f32.mrb[0].mxu0
  %11463 = vmatprep.mubr.bf16.mxu0 0
  %11464 = vmatmul.mubr.bf16.gmra.mrb[0].mxu0 %v11302
  %v11465 = vpop.f32.mrb[0].mxu0
  %v11466 = vadd.f32 %v11333, %v11465
  %v11467 = vpop.f32.mrb[0].mxu0
  %v11468 = vpop.f32.mrb[0].mxu0
  %v11469 = vadd.f32 %v11333, %v11468
  %v11470 = vpop.f32.mrb[0].mxu0
  %11471 = vmatprep.mubr.bf16.mxu0 0
  %11472 = vmatmul.mubr.bf16.gmra.mrb[0].mxu0 %v11303
  %v11473 = vpop.f32.mrb[0].mxu0
  %v11474 = vadd.f32 %v11333, %v11473
  %v11475 = vpop.f32.mrb[0].mxu0
  %v11476 = vpop.f32.mrb[0].mxu0
  %v11477 = vadd.f32 %v11333, %v11476
  %v11478 = vpop.f32.mrb[0].mxu0
  %11479 = vmatprep.mubr.bf16.mxu0 0
  %11480 = vmatmul.mubr.bf16.gmra.mrb[0].mxu0 %v11304
  %v11481 = vpop.f32.mrb[0].mxu0
  %v11482 = vadd.f32 %v11333, %v11481
  %v11483 = vpop.f32.mrb[0].mxu0
  %v11484 = vpop.f32.mrb[0].mxu0
  %v11485 = vadd.f32 %v11333, %v11484
  %v11486 = vpop.f32.mrb[0].mxu0
  %11487 = vmatprep.mubr.bf16.mxu0 0
  %11488 = vmatmul.mubr.bf16.gmra.mrb[0].mxu0 %v11305
  %v11489 = vpop.f32.mrb[0].mxu0
  %v11490 = vadd.f32 %v11333, %v11489
  %v11491 = vpop.f32.mrb[0].mxu0
  %v11492 = vpop.f32.mrb[0].mxu0
  %v11493 = vadd.f32 %v11333, %v11492
  %v11494 = vpop.f32.mrb[0].mxu0
  %11495 = vmatprep.mubr.bf16.mxu0 0
  %11496 = vmatmul.mubr.bf16.gmra.mrb[0].mxu0 %v11306
  %v11497 = vpop.f32.mrb[0].mxu0
  %v11498 = vadd.f32 %v11333, %v11497
  %v11499 = vpop.f32.mrb[0].mxu0
  %v11500 = vpop.f32.mrb[0].mxu0
  %v11501 = vadd.f32 %v11333, %v11500
  %v11502 = vpop.f32.mrb[0].mxu0
  %11503 = vmatprep.mubr.bf16.mxu0 0
  %11504 = vmatmul.mubr.bf16.gmra.mrb[0].mxu0 %v11307
  %v11505 = vpop.f32.mrb[0].mxu0
  %v11506 = vadd.f32 %v11333, %v11505
  %v11507 = vpop.f32.mrb[0].mxu0
  %v11508 = vpop.f32.mrb[0].mxu0
  %v11509 = vadd.f32 %v11333, %v11508
  %v11510 = vpop.f32.mrb[0].mxu0
  %11511 = vmatprep.mubr.bf16.mxu0 0
  %11512 = vmatmul.mubr.bf16.gmra.mrb[0].mxu0 %v11308
  %v11513 = vpop.f32.mrb[0].mxu0
  %v11514 = vadd.f32 %v11333, %v11513
  %v11515 = vpop.f32.mrb[0].mxu0
  %v11516 = vpop.f32.mrb[0].mxu0
  %v11517 = vadd.f32 %v11333, %v11516
  %v11518 = vpop.f32.mrb[0].mxu0
  %11519 = vmatprep.mubr.bf16.mxu0 0
  %11520 = vmatmul.mubr.bf16.gmra.mrb[0].mxu0 %v11309
  %v11521 = vpop.f32.mrb[0].mxu0
  %v11522 = vadd.f32 %v11333, %v11521
  %v11523 = vpop.f32.mrb[0].mxu0
  %v11524 = vpop.f32.mrb[0].mxu0
  %v11525 = vadd.f32 %v11333, %v11524
  %v11526 = vpop.f32.mrb[0].mxu0
  %11527 = vmatprep.mubr.bf16.mxu0 0
  %11528 = vmatmul.mubr.bf16.gmra.mrb[0].mxu0 %v11310
  %v11529 = vpop.f32.mrb[0].mxu0
  %v11530 = vadd.f32 %v11333, %v11529
  %v11531 = vpop.f32.mrb[0].mxu0
  %v11532 = vpop.f32.mrb[0].mxu0
  %v11533 = vadd.f32 %v11333, %v11532
  %v11534 = vpop.f32.mrb[0].mxu0
  %11535 = vmatprep.mubr.bf16.mxu0 0
  %11536 = vmatmul.mubr.bf16.gmra.mrb[0].mxu0 %v11311
  %v11537 = vpop.f32.mrb[0].mxu0
  %v11538 = vadd.f32 %v11333, %v11537
  %v11539 = vpop.f32.mrb[0].mxu0
  %v11540 = vpop.f32.mrb[0].mxu0
  %v11541 = vadd.f32 %v11333, %v11540
  %v11542 = vpop.f32.mrb[0].mxu0
  %11543 = vdwg.mxu0
  %vm11544 = vcmask 23552
  %11545 = vst.msk [vmem:[%s15] sm:$0xff] %vm11544, %v11418
  %11546 = vst.msk [vmem:[%s15 + $0x8] sm:$0xff] %vm11544, %v11421
  %11547 = vst.msk [vmem:[%s15 + $0x10] sm:$0xff] %vm11544, %v11426
  %11548 = vst.msk [vmem:[%s15 + $0x18] sm:$0xff] %vm11544, %v11429
  %11549 = vst.msk [vmem:[%s15 + $0x20] sm:$0xff] %vm11544, %v11434
  %11550 = vst.msk [vmem:[%s15 + $0x28] sm:$0xff] %vm11544, %v11437
  %11551 = vst.msk [vmem:[%s15 + $0x30] sm:$0xff] %vm11544, %v11442
  %11552 = vst.msk [vmem:[%s15 + $0x38] sm:$0xff] %vm11544, %v11445
  %11553 = vst.msk [vmem:[%s15 + $0x40] sm:$0xff] %vm11544, %v11450
  %11554 = vst.msk [vmem:[%s15 + $0x48] sm:$0xff] %vm11544, %v11453
  %11555 = vst.msk [vmem:[%s15 + $0x50] sm:$0xff] %vm11544, %v11458
  %11556 = vst.msk [vmem:[%s15 + $0x58] sm:$0xff] %vm11544, %v11461
  %11557 = vst.msk [vmem:[%s15 + $0x60] sm:$0xff] %vm11544, %v11466
  %11558 = vst.msk [vmem:[%s15 + $0x68] sm:$0xff] %vm11544, %v11469
  %11559 = vst.msk [vmem:[%s15 + $0x70] sm:$0xff] %vm11544, %v11474
  %11560 = vst.msk [vmem:[%s15 + $0x78] sm:$0xff] %vm11544, %v11477
  %11561 = vst.msk [vmem:[%s15 + $0x80] sm:$0xff] %vm11544, %v11482
  %11562 = vst.msk [vmem:[%s15 + $0x88] sm:$0xff] %vm11544, %v11485
  %11563 = vst.msk [vmem:[%s15 + $0x90] sm:$0xff] %vm11544, %v11490
  %11564 = vst.msk [vmem:[%s15 + $0x98] sm:$0xff] %vm11544, %v11493
  %11565 = vst.msk [vmem:[%s15 + $0xa0] sm:$0xff] %vm11544, %v11498
  %11566 = vst.msk [vmem:[%s15 + $0xa8] sm:$0xff] %vm11544, %v11501
  %11567 = vst.msk [vmem:[%s15 + $0xb0] sm:$0xff] %vm11544, %v11506
  %11568 = vst.msk [vmem:[%s15 + $0xb8] sm:$0xff] %vm11544, %v11509
  %11569 = vst.msk [vmem:[%s15 + $0xc0] sm:$0xff] %vm11544, %v11514
  %11570 = vst.msk [vmem:[%s15 + $0xc8] sm:$0xff] %vm11544, %v11517
  %11571 = vst.msk [vmem:[%s15 + $0xd0] sm:$0xff] %vm11544, %v11522
  %11572 = vst.msk [vmem:[%s15 + $0xd8] sm:$0xff] %vm11544, %v11525
  %11573 = vst.msk [vmem:[%s15 + $0xe0] sm:$0xff] %vm11544, %v11530
  %11574 = vst.msk [vmem:[%s15 + $0xe8] sm:$0xff] %vm11544, %v11533
  %11575 = vst.msk [vmem:[%s15 + $0xf0] sm:$0xff] %vm11544, %v11538
  %11576 = vst.msk [vmem:[%s15 + $0xf8] sm:$0xff] %vm11544, %v11541
  // Predicated region
  $region62: #{delta_net_forward.1} parent=0 // pred_check
    _
  $region63: #{delta_net_forward.1} parent=0 // pred_check_branch
    %11578 = sbr.rel (0) target = $region65
  $region64: #{delta_net_forward.1} parent=0 // pred_region
    _
  $region65: #{delta_net_forward.1} parent=0 // pred_fallthru
    _
  // Predicated region
  $region66: #{delta_net_forward.1} parent=0 // pred_check
    _
  $region67: #{delta_net_forward.1} parent=0 // pred_check_branch
    %11580 = sbr.rel (0) target = $region69
  $region68: #{delta_net_forward.1} parent=0 // pred_region
    _
  $region69: #{delta_net_forward.1} parent=0 // pred_fallthru
    _

</llo_original>
